<compile_context>
chip_gen: v5e
topology: v5e:2x2
jax: 0.10.0
libtpu: 0.0.40
codegen_flags: <defaults>
</compile_context>

<pallas_src>
import math
from functools import partial
from types import SimpleNamespace

import jax
import jax.numpy as jnp
from jax.experimental import pallas as pl
from jax.experimental.pallas import tpu as pltpu

F32 = jnp.float32
BF16 = jnp.bfloat16
EPS = 1e-5
NEG_INF = -1e30                     # finite mask constant (diagonal never masked)
VMEM_LIMIT = 32 * 1024 * 1024       # plenty for ~3 MB resident weights, v7x-safe

# Canonical ordering of the (stacked) weight operands fed to the fused kernel.
_WEIGHT_ORDER = (
    'e_aln_g', 'e_aln_b', 'e_wqkv', 'e_wo', 'e_bo',
    'e_fln_g', 'e_fln_b', 'e_w1', 'e_b1', 'e_w2', 'e_b2',
    'enorm_g', 'enorm_b',
    'd_saln_g', 'd_saln_b', 'd_swqkv', 'd_swo', 'd_sbo',
    'd_caln_g', 'd_caln_b', 'd_cwqkv', 'd_cwo', 'd_cbo',
    'd_fln_g', 'd_fln_b', 'd_w1', 'd_b1', 'd_w2', 'd_b2',
    'dnorm_g', 'dnorm_b',
    'head_w', 'head_b',
)


# ---------------------------------------------------------------------------
# In-kernel helpers (pure jnp on values already loaded from VMEM refs)
# ---------------------------------------------------------------------------

def _layernorm(x, gamma, beta):
    """LayerNorm over the last dim, biased variance (matches the torch module)."""
    mean = jnp.mean(x, axis=-1, keepdims=True)
    var = jnp.mean(jnp.square(x - mean), axis=-1, keepdims=True)
    inv = jax.lax.rsqrt(var + EPS)                       # EUP rsqrt
    return (x - mean) * inv * gamma + beta


def _ffn(xn, w1, b1, w2, b2):
    """fc2(gelu(fc1(xn))); weights are bf16, accumulation and elementwise f32."""
    h = jnp.dot(xn.astype(BF16), w1, preferred_element_type=F32) + b1
    h = jax.nn.gelu(h, approximate=True)                 # TODO(synk): exact erf GELU
    return jnp.dot(h.astype(BF16), w2, preferred_element_type=F32) + b2


def _mha(xq, kv, bb, tq, tkv, wqkv, wo, bo, *, num_heads, causal):
    """Multi-head attention on batch-folded rows.

    xq : (bb*tq, D)  normalized query rows (f32).
    kv : (bb*tkv, D) key/value rows (f32), or None for self-attention.
    wqkv : (D, 2*Dkq + Dv) fused [Wq | Wk | Wv] (bf16).
    wo   : (Dv, Dout) (bf16);  bo : (1, Dout) (f32).
    """
    dv = wo.shape[0]
    dkq = (wqkv.shape[1] - dv) // 2
    hq = dkq // num_heads
    hv = dv // num_heads
    scale = 1.0 / math.sqrt(hq)

    xq16 = xq.astype(BF16)
    if kv is None:
        # Self-attention: one fused QKV matmul (N = 3*Dkq) — best MXU fill.
        qkv = jnp.dot(xq16, wqkv, preferred_element_type=F32)
        q, kvp = qkv[:, :dkq], qkv[:, dkq:]
    else:
        # Cross-attention: q from the decoder stream, fused KV from encoder memory.
        q = jnp.dot(xq16, wqkv[:, :dkq], preferred_element_type=F32)
        kvp = jnp.dot(kv.astype(BF16), wqkv[:, dkq:], preferred_element_type=F32)
    k, v = kvp[:, :dkq], kvp[:, dkq:]

    q3 = (q * scale).reshape(bb, tq, dkq).astype(BF16)   # fold 1/sqrt(hd) into q
    k3 = k.reshape(bb, tkv, dkq).astype(BF16)
    v3 = v.reshape(bb, tkv, dv).astype(BF16)

    # Per-head score einsums (K = head_dim is inherent to MHA), stacked so the
    # mask + softmax is issued ONCE for all heads.
    s_heads = [jnp.einsum('bqd,bkd->bqk',
                          q3[:, :, h * hq:(h + 1) * hq],
                          k3[:, :, h * hq:(h + 1) * hq],
                          preferred_element_type=F32)
               for h in range(num_heads)]
    s = jnp.concatenate(s_heads, axis=0)                 # (H*bb, tq, tkv) f32

    if causal:
        row = jax.lax.broadcasted_iota(jnp.int32, s.shape, 1)
        col = jax.lax.broadcasted_iota(jnp.int32, s.shape, 2)
        s = jnp.where(col <= row, s, NEG_INF)

    m = jnp.max(s, axis=-1, keepdims=True)
    e = jnp.exp(s - m)
    denom = jnp.sum(e, axis=-1, keepdims=True)
    p = (e * pl.reciprocal(denom, approx=False)).astype(BF16)   # exact recip (EUP)
    # TODO(synk): attention-prob dropout omitted (inference / eval mode identity).

    ctx_heads = [jnp.einsum('bqk,bkd->bqd',
                            p[h * bb:(h + 1) * bb],
                            v3[:, :, h * hv:(h + 1) * hv],
                            preferred_element_type=F32)
                 for h in range(num_heads)]
    # Lane-concat the heads so the output projection is ONE full-K (Dv) matmul.
    ctx = jnp.concatenate(ctx_heads, axis=-1).reshape(bb * tq, dv)
    return jnp.dot(ctx.astype(BF16), wo, preferred_element_type=F32) + bo


# ---------------------------------------------------------------------------
# The fused whole-model kernel (encoder + decoder + head), one batch block/step
# ---------------------------------------------------------------------------

def _mini_transformer_kernel(src_ref, tgt_ref, *refs, num_heads, num_layers):
    w = dict(zip(_WEIGHT_ORDER, refs[:-1]))
    out_ref = refs[-1]

    src = src_ref[...]                                   # (bb, Ts, D)
    tgt = tgt_ref[...]                                   # (bb, Tt, D)
    bb, Ts, D = src.shape
    Tt = tgt.shape[1]

    # ----------------------------- encoder --------------------------------
    x = src.reshape(bb * Ts, D)
    for l in range(num_layers):
        xn = _layernorm(x, w['e_aln_g'][l], w['e_aln_b'][l])
        x = x + _mha(xn, None, bb, Ts, Ts,
                     w['e_wqkv'][l], w['e_wo'][l], w['e_bo'][l],
                     num_heads=num_heads, causal=False)
        xn = _layernorm(x, w['e_fln_g'][l], w['e_fln_b'][l])
        x = x + _ffn(xn, w['e_w1'][l], w['e_b1'][l], w['e_w2'][l], w['e_b2'][l])
    mem = _layernorm(x, w['enorm_g'][...], w['enorm_b'][...])   # (bb*Ts, D)

    # ----------------------------- decoder --------------------------------
    y = tgt.reshape(bb * Tt, D)
    for l in range(num_layers):
        yn = _layernorm(y, w['d_saln_g'][l], w['d_saln_b'][l])
        y = y + _mha(yn, None, bb, Tt, Tt,
                     w['d_swqkv'][l], w['d_swo'][l], w['d_sbo'][l],
                     num_heads=num_heads, causal=True)
        yn = _layernorm(y, w['d_caln_g'][l], w['d_caln_b'][l])
        y = y + _mha(yn, mem, bb, Tt, Ts,
                     w['d_cwqkv'][l], w['d_cwo'][l], w['d_cbo'][l],
                     num_heads=num_heads, causal=False)
        yn = _layernorm(y, w['d_fln_g'][l], w['d_fln_b'][l])
        y = y + _ffn(yn, w['d_w1'][l], w['d_b1'][l], w['d_w2'][l], w['d_b2'][l])

    yn = _layernorm(y, w['dnorm_g'][...], w['dnorm_b'][...])
    logits = jnp.dot(yn.astype(BF16), w['head_w'][...],
                     preferred_element_type=F32) + w['head_b'][...]
    out_ref[...] = logits.reshape(bb, Tt, -1).astype(out_ref.dtype)


# ---------------------------------------------------------------------------
# pallas_call wrapper
# ---------------------------------------------------------------------------

def _full_spec(shape):
    """Whole-array, grid-invariant block: weights stay VMEM-resident (no re-DMA)."""
    zeros = (0,) * len(shape)
    return pl.BlockSpec(shape, lambda *_: zeros)


def _cost_estimate(cfg, B, Ts, Tt):
    E, Fd, V = cfg.embed_dim, cfg.feedforward_size, cfg.vocab_size
    L, H = cfg.num_layers, cfg.num_heads
    hd = E // H
    ms, mt = B * Ts, B * Tt

    def attn_flops(mq, mkv, tq, tkv):
        return (2 * mq * E * E + 4 * mkv * E * E        # q proj + fused kv proj
                + 4 * B * H * tq * tkv * hd             # scores + context
                + 2 * mq * E * E)                       # out proj

    def ffn_flops(m):
        return 4 * m * E * Fd

    flops = (L * (attn_flops(ms, ms, Ts, Ts) + ffn_flops(ms))
             + L * (attn_flops(mt, mt, Tt, Tt) + attn_flops(mt, ms, Tt, Ts)
                    + ffn_flops(mt))
             + 2 * mt * E * V)
    trans = L * B * H * (Ts * Ts + Tt * Tt + Tt * Ts) + L * (ms + mt) * Fd
    w_elems = L * (4 * E * E + 2 * E * Fd) + L * (8 * E * E + 2 * E * Fd) + E * V
    bytes_accessed = 4 * (ms * E + mt * E + mt * V) + 2 * w_elems
    return pl.CostEstimate(flops=flops, transcendentals=trans,
                           bytes_accessed=bytes_accessed)


def forward(packed, src_ids, tgt_ids, cfg):
    B, Ts = src_ids.shape
    _, Tt = tgt_ids.shape
    E, V, H, L = cfg.embed_dim, cfg.vocab_size, cfg.num_heads, cfg.num_layers

    # Embedding / positional gathers stay in XLA (no Pallas win at this scale);
    # embed_dropout is inference-mode identity.
    src = packed['src_embed'][src_ids] + packed['src_pos_embed'][:Ts][None]
    tgt = packed['tgt_embed'][tgt_ids] + packed['tgt_pos_embed'][:Tt][None]

    weights = [packed['w'][k] for k in _WEIGHT_ORDER]

    # >=2 "parallel" grid steps over batch halves so v7x's second TensorCore gets
    # work; weights are grid-invariant so the extra step is ~free on v5e/v6e.
    bb = max(1, (B + 1) // 2)
    grid = (pl.cdiv(B, bb),)

    kernel = partial(_mini_transformer_kernel, num_heads=H, num_layers=L)
    logits = pl.pallas_call(
        kernel,
        out_shape=jax.ShapeDtypeStruct((B, Tt, V), F32),
        grid_spec=pltpu.PrefetchScalarGridSpec(
            num_scalar_prefetch=0,
            grid=grid,
            in_specs=[pl.BlockSpec((bb, Ts, E), lambda i: (i, 0, 0)),
                      pl.BlockSpec((bb, Tt, E), lambda i: (i, 0, 0))]
                     + [_full_spec(a.shape) for a in weights],
            out_specs=pl.BlockSpec((bb, Tt, V), lambda i: (i, 0, 0))),
        compiler_params=pltpu.CompilerParams(
            dimension_semantics=("parallel",),
            vmem_limit_bytes=VMEM_LIMIT),
        cost_estimate=_cost_estimate(cfg, B, Ts, Tt),
    )(src, tgt, *weights)
    return logits


# ---------------------------------------------------------------------------
# Params: mirrors MiniTransformer._init_weights; linear weights stored (in, out)
# (== torch weight.T).  pack_params = one-time layout plumbing (stack per-layer,
# fuse QKV, bf16-cast MXU weights, (1, dim) rows for LN params / biases).
# ---------------------------------------------------------------------------

def init_params(key, cfg):
    E, V, C, Fd = cfg.embed_dim, cfg.vocab_size, cfg.context_length, cfg.feedforward_size
    keys = list(jax.random.split(key, 64))
    it = iter(keys)
    randn = lambda shape: 0.02 * jax.random.normal(next(it), shape, F32)

    def attn_params():
        return {'ln_g': jnp.ones((E,), F32), 'ln_b': jnp.zeros((E,), F32),
                'wq': randn((E, E)), 'wk': randn((E, E)), 'wv': randn((E, E)),
                'wo': randn((E, E)), 'bo': jnp.zeros((E,), F32)}

    def ffn_params():
        return {'ln_g': jnp.ones((E,), F32), 'ln_b': jnp.zeros((E,), F32),
                'w1': randn((E, Fd)), 'b1': jnp.zeros((Fd,), F32),
                'w2': randn((Fd, E)), 'b2': jnp.zeros((E,), F32)}

    return {
        'src_embed': randn((V, E)), 'src_pos_embed': randn((C, E)),
        'tgt_embed': randn((V, E)), 'tgt_pos_embed': randn((C, E)),
        'enc_layers': [{'attn': attn_params(), 'ffn': ffn_params()}
                       for _ in range(cfg.num_layers)],
        'enc_norm': {'g': jnp.ones((E,), F32), 'b': jnp.zeros((E,), F32)},
        'dec_layers': [{'self_attn': attn_params(), 'cross_attn': attn_params(),
                        'ffn': ffn_params()} for _ in range(cfg.num_layers)],
        'dec_norm': {'g': jnp.ones((E,), F32), 'b': jnp.zeros((E,), F32)},
        'head': {'w': randn((E, V)), 'b': jnp.zeros((V,), F32)},
    }


def pack_params(params, cfg):
    def row(v):                         # (dim,) -> (1, dim) f32
        return v.reshape(1, -1).astype(F32)

    def stack_rows(layers, get):        # -> (L, 1, dim) f32
        return jnp.stack([row(get(lp)) for lp in layers])

    def stack_mat(layers, get):         # -> (L, in, out) bf16 (MXU operands)
        return jnp.stack([get(lp).astype(BF16) for lp in layers])

    def qkv(ap):                        # fused (D, 3*D) = [Wq | Wk | Wv]
        return jnp.concatenate([ap['wq'], ap['wk'], ap['wv']], axis=1)

    enc, dec = params['enc_layers'], params['dec_layers']
    w = {
        'e_aln_g': stack_rows(enc, lambda lp: lp['attn']['ln_g']),
        'e_aln_b': stack_rows(enc, lambda lp: lp['attn']['ln_b']),
        'e_wqkv':  stack_mat(enc, lambda lp: qkv(lp['attn'])),
        'e_wo':    stack_mat(enc, lambda lp: lp['attn']['wo']),
        'e_bo':    stack_rows(enc, lambda lp: lp['attn']['bo']),
        'e_fln_g': stack_rows(enc, lambda lp: lp['ffn']['ln_g']),
        'e_fln_b': stack_rows(enc, lambda lp: lp['ffn']['ln_b']),
        'e_w1':    stack_mat(enc, lambda lp: lp['ffn']['w1']),
        'e_b1':    stack_rows(enc, lambda lp: lp['ffn']['b1']),
        'e_w2':    stack_mat(enc, lambda lp: lp['ffn']['w2']),
        'e_b2':    stack_rows(enc, lambda lp: lp['ffn']['b2']),
        'enorm_g': row(params['enc_norm']['g']),
        'enorm_b': row(params['enc_norm']['b']),
        'd_saln_g': stack_rows(dec, lambda lp: lp['self_attn']['ln_g']),
        'd_saln_b': stack_rows(dec, lambda lp: lp['self_attn']['ln_b']),
        'd_swqkv':  stack_mat(dec, lambda lp: qkv(lp['self_attn'])),
        'd_swo':    stack_mat(dec, lambda lp: lp['self_attn']['wo']),
        'd_sbo':    stack_rows(dec, lambda lp: lp['self_attn']['bo']),
        'd_caln_g': stack_rows(dec, lambda lp: lp['cross_attn']['ln_g']),
        'd_caln_b': stack_rows(dec, lambda lp: lp['cross_attn']['ln_b']),
        'd_cwqkv':  stack_mat(dec, lambda lp: qkv(lp['cross_attn'])),
        'd_cwo':    stack_mat(dec, lambda lp: lp['cross_attn']['wo']),
        'd_cbo':    stack_rows(dec, lambda lp: lp['cross_attn']['bo']),
        'd_fln_g': stack_rows(dec, lambda lp: lp['ffn']['ln_g']),
        'd_fln_b': stack_rows(dec, lambda lp: lp['ffn']['ln_b']),
        'd_w1':    stack_mat(dec, lambda lp: lp['ffn']['w1']),
        'd_b1':    stack_rows(dec, lambda lp: lp['ffn']['b1']),
        'd_w2':    stack_mat(dec, lambda lp: lp['ffn']['w2']),
        'd_b2':    stack_rows(dec, lambda lp: lp['ffn']['b2']),
        'dnorm_g': row(params['dec_norm']['g']),
        'dnorm_b': row(params['dec_norm']['b']),
        'head_w': params['head']['w'].astype(BF16),
        'head_b': row(params['head']['b']),
    }
    return {'src_embed': params['src_embed'], 'src_pos_embed': params['src_pos_embed'],
            'tgt_embed': params['tgt_embed'], 'tgt_pos_embed': params['tgt_pos_embed'],
            'w': w}


# ---------------------------------------------------------------------------
# Plain-JAX f32 reference mirroring the PyTorch forward (eval mode, exact GELU)
# ---------------------------------------------------------------------------

def _ref_layernorm(x, g, b):
    mean = jnp.mean(x, axis=-1, keepdims=True)
    var = jnp.mean(jnp.square(x - mean), axis=-1, keepdims=True)
    return g * (x - mean) / jnp.sqrt(var + EPS) + b


def _ref_mha(xq, xkv, p, num_heads, causal):
    q, k, v = xq @ p['wq'], xkv @ p['wk'], xkv @ p['wv']
    B, Tq, Dkq = q.shape
    Tkv, Dv = k.shape[1], v.shape[-1]
    hq, hv = Dkq // num_heads, Dv // num_heads
    q = q.reshape(B, Tq, num_heads, hq).transpose(0, 2, 1, 3)
    k = k.reshape(B, Tkv, num_heads, hq).transpose(0, 2, 1, 3)
    v = v.reshape(B, Tkv, num_heads, hv).transpose(0, 2, 1, 3)
    s = (q @ jnp.swapaxes(k, -1, -2)) / math.sqrt(hq)
    if causal and Tq == Tkv:
        row = jnp.arange(Tq)[:, None]
        col = jnp.arange(Tkv)[None, :]
        s = s + jnp.where(col > row, -jnp.inf, 0.0)[None, None]
    a = jax.nn.softmax(s, axis=-1)
    ctx = (a @ v).transpose(0, 2, 1, 3).reshape(B, Tq, Dv)
    return ctx @ p['wo'] + p['bo']


def _ref_ffn(x, p):
    h = x @ p['w1'] + p['b1']
    h = 0.5 * h * (1.0 + jax.lax.erf(h / math.sqrt(2.0)))   # exact GELU (torch default)
    return h @ p['w2'] + p['b2']


def reference_forward(params, src_ids, tgt_ids, cfg):
    B, Ts = src_ids.shape
    _, Tt = tgt_ids.shape
    H = cfg.num_heads
    src = params['src_embed'][src_ids] + params['src_pos_embed'][:Ts][None]
    for lp in params['enc_layers']:
        a, f = lp['attn'], lp['ffn']
        xn = _ref_layernorm(src, a['ln_g'], a['ln_b'])
        src = src + _ref_mha(xn, xn, a, H, False)
        src = src + _ref_ffn(_ref_layernorm(src, f['ln_g'], f['ln_b']), f)
    mem = _ref_layernorm(src, params['enc_norm']['g'], params['enc_norm']['b'])
    tgt = params['tgt_embed'][tgt_ids] + params['tgt_pos_embed'][:Tt][None]
    for lp in params['dec_layers']:
        a, c, f = lp['self_attn'], lp['cross_attn'], lp['ffn']
        xn = _ref_layernorm(tgt, a['ln_g'], a['ln_b'])
        tgt = tgt + _ref_mha(xn, xn, a, H, True)
        tgt = tgt + _ref_mha(_ref_layernorm(tgt, c['ln_g'], c['ln_b']), mem, c, H, False)
        tgt = tgt + _ref_ffn(_ref_layernorm(tgt, f['ln_g'], f['ln_b']), f)
    tgt = _ref_layernorm(tgt, params['dec_norm']['g'], params['dec_norm']['b'])
    return tgt @ params['head']['w'] + params['head']['b']


if __name__ == "__main__":
    cfg = SimpleNamespace(vocab_size=128, context_length=16, embed_dim=128,
                          num_heads=4, feedforward_size=256, num_layers=2,
                          embed_dropout=0.1, weight_tie=False)
    B, T_src, T_tgt = 2, 8, 8

    root = jax.random.PRNGKey(0)
    kp, ks, kt = jax.random.split(root, 3)
    params = init_params(kp, cfg)
    packed = pack_params(params, cfg)          # one-time layout plumbing (eager)
    src = jax.random.randint(ks, (B, T_src), 0, cfg.vocab_size, dtype=jnp.int32)
    tgt = jax.random.randint(kt, (B, T_tgt), 0, cfg.vocab_size, dtype=jnp.int32)

    fwd = jax.jit(partial(forward, cfg=cfg))
    logits = jax.block_until_ready(fwd(packed, src, tgt))
    assert logits.shape == (B, T_tgt, cfg.vocab_size)

    ref = reference_forward(params, src, tgt, cfg)
    err = float(jnp.max(jnp.abs(logits - ref)))
    # bf16 MXU operands (f32 accumulate) + tanh-GELU are the only deviations from
    # the exact f32/erf reference; expected max-abs error is ~1e-2 at these shapes.
    assert err < 5e-2, f"mismatch vs reference: max abs err = {err}"
    print("KERNEL_OK")
</pallas_src>

<mosaic_0001>
module attributes {stable_mosaic.version = 11 : i64} {
  func.func @_mini_transformer_kernel(%arg0: i32, %arg1: memref<1x8x128xf32, #tpu.memory_space<vmem>>, %arg2: memref<1x8x128xf32, #tpu.memory_space<vmem>>, %arg3: memref<2x1x128xf32, #tpu.memory_space<vmem>>, %arg4: memref<2x1x128xf32, #tpu.memory_space<vmem>>, %arg5: memref<2x128x384xbf16, #tpu.memory_space<vmem>>, %arg6: memref<2x128x128xbf16, #tpu.memory_space<vmem>>, %arg7: memref<2x1x128xf32, #tpu.memory_space<vmem>>, %arg8: memref<2x1x128xf32, #tpu.memory_space<vmem>>, %arg9: memref<2x1x128xf32, #tpu.memory_space<vmem>>, %arg10: memref<2x128x256xbf16, #tpu.memory_space<vmem>>, %arg11: memref<2x1x256xf32, #tpu.memory_space<vmem>>, %arg12: memref<2x256x128xbf16, #tpu.memory_space<vmem>>, %arg13: memref<2x1x128xf32, #tpu.memory_space<vmem>>, %arg14: memref<1x128xf32, #tpu.memory_space<vmem>>, %arg15: memref<1x128xf32, #tpu.memory_space<vmem>>, %arg16: memref<2x1x128xf32, #tpu.memory_space<vmem>>, %arg17: memref<2x1x128xf32, #tpu.memory_space<vmem>>, %arg18: memref<2x128x384xbf16, #tpu.memory_space<vmem>>, %arg19: memref<2x128x128xbf16, #tpu.memory_space<vmem>>, %arg20: memref<2x1x128xf32, #tpu.memory_space<vmem>>, %arg21: memref<2x1x128xf32, #tpu.memory_space<vmem>>, %arg22: memref<2x1x128xf32, #tpu.memory_space<vmem>>, %arg23: memref<2x128x384xbf16, #tpu.memory_space<vmem>>, %arg24: memref<2x128x128xbf16, #tpu.memory_space<vmem>>, %arg25: memref<2x1x128xf32, #tpu.memory_space<vmem>>, %arg26: memref<2x1x128xf32, #tpu.memory_space<vmem>>, %arg27: memref<2x1x128xf32, #tpu.memory_space<vmem>>, %arg28: memref<2x128x256xbf16, #tpu.memory_space<vmem>>, %arg29: memref<2x1x256xf32, #tpu.memory_space<vmem>>, %arg30: memref<2x256x128xbf16, #tpu.memory_space<vmem>>, %arg31: memref<2x1x128xf32, #tpu.memory_space<vmem>>, %arg32: memref<1x128xf32, #tpu.memory_space<vmem>>, %arg33: memref<1x128xf32, #tpu.memory_space<vmem>>, %arg34: memref<128x128xbf16, #tpu.memory_space<vmem>>, %arg35: memref<1x128xf32, #tpu.memory_space<vmem>>, %arg36: memref<1x8x128xf32, #tpu.memory_space<vmem>>) attributes {dimension_semantics = [#tpu.dimension_semantics<parallel>], iteration_bounds = array<i64: 2>, scalar_prefetch = 0 : i64, scratch_operands = 0 : i64, tpu.core_type = #tpu.core_type<tc>, window_params = [{transform_indices = @transform_0, window_bounds = array<i64: 1, 8, 128>}, {transform_indices = @transform_1, window_bounds = array<i64: 1, 8, 128>}, {pipeline_mode = #tpu.pipeline_mode<synchronous>, transform_indices = @transform_2, window_bounds = array<i64: 2, 1, 128>}, {pipeline_mode = #tpu.pipeline_mode<synchronous>, transform_indices = @transform_3, window_bounds = array<i64: 2, 1, 128>}, {pipeline_mode = #tpu.pipeline_mode<synchronous>, transform_indices = @transform_4, window_bounds = array<i64: 2, 128, 384>}, {pipeline_mode = #tpu.pipeline_mode<synchronous>, transform_indices = @transform_5, window_bounds = array<i64: 2, 128, 128>}, {pipeline_mode = #tpu.pipeline_mode<synchronous>, transform_indices = @transform_6, window_bounds = array<i64: 2, 1, 128>}, {pipeline_mode = #tpu.pipeline_mode<synchronous>, transform_indices = @transform_7, window_bounds = array<i64: 2, 1, 128>}, {pipeline_mode = #tpu.pipeline_mode<synchronous>, transform_indices = @transform_8, window_bounds = array<i64: 2, 1, 128>}, {pipeline_mode = #tpu.pipeline_mode<synchronous>, transform_indices = @transform_9, window_bounds = array<i64: 2, 128, 256>}, {pipeline_mode = #tpu.pipeline_mode<synchronous>, transform_indices = @transform_10, window_bounds = array<i64: 2, 1, 256>}, {pipeline_mode = #tpu.pipeline_mode<synchronous>, transform_indices = @transform_11, window_bounds = array<i64: 2, 256, 128>}, {pipeline_mode = #tpu.pipeline_mode<synchronous>, transform_indices = @transform_12, window_bounds = array<i64: 2, 1, 128>}, {pipeline_mode = #tpu.pipeline_mode<synchronous>, transform_indices = @transform_13, window_bounds = array<i64: 1, 128>}, {pipeline_mode = #tpu.pipeline_mode<synchronous>, transform_indices = @transform_14, window_bounds = array<i64: 1, 128>}, {pipeline_mode = #tpu.pipeline_mode<synchronous>, transform_indices = @transform_15, window_bounds = array<i64: 2, 1, 128>}, {pipeline_mode = #tpu.pipeline_mode<synchronous>, transform_indices = @transform_16, window_bounds = array<i64: 2, 1, 128>}, {pipeline_mode = #tpu.pipeline_mode<synchronous>, transform_indices = @transform_17, window_bounds = array<i64: 2, 128, 384>}, {pipeline_mode = #tpu.pipeline_mode<synchronous>, transform_indices = @transform_18, window_bounds = array<i64: 2, 128, 128>}, {pipeline_mode = #tpu.pipeline_mode<synchronous>, transform_indices = @transform_19, window_bounds = array<i64: 2, 1, 128>}, {pipeline_mode = #tpu.pipeline_mode<synchronous>, transform_indices = @transform_20, window_bounds = array<i64: 2, 1, 128>}, {pipeline_mode = #tpu.pipeline_mode<synchronous>, transform_indices = @transform_21, window_bounds = array<i64: 2, 1, 128>}, {pipeline_mode = #tpu.pipeline_mode<synchronous>, transform_indices = @transform_22, window_bounds = array<i64: 2, 128, 384>}, {pipeline_mode = #tpu.pipeline_mode<synchronous>, transform_indices = @transform_23, window_bounds = array<i64: 2, 128, 128>}, {pipeline_mode = #tpu.pipeline_mode<synchronous>, transform_indices = @transform_24, window_bounds = array<i64: 2, 1, 128>}, {pipeline_mode = #tpu.pipeline_mode<synchronous>, transform_indices = @transform_25, window_bounds = array<i64: 2, 1, 128>}, {pipeline_mode = #tpu.pipeline_mode<synchronous>, transform_indices = @transform_26, window_bounds = array<i64: 2, 1, 128>}, {pipeline_mode = #tpu.pipeline_mode<synchronous>, transform_indices = @transform_27, window_bounds = array<i64: 2, 128, 256>}, {pipeline_mode = #tpu.pipeline_mode<synchronous>, transform_indices = @transform_28, window_bounds = array<i64: 2, 1, 256>}, {pipeline_mode = #tpu.pipeline_mode<synchronous>, transform_indices = @transform_29, window_bounds = array<i64: 2, 256, 128>}, {pipeline_mode = #tpu.pipeline_mode<synchronous>, transform_indices = @transform_30, window_bounds = array<i64: 2, 1, 128>}, {pipeline_mode = #tpu.pipeline_mode<synchronous>, transform_indices = @transform_31, window_bounds = array<i64: 1, 128>}, {pipeline_mode = #tpu.pipeline_mode<synchronous>, transform_indices = @transform_32, window_bounds = array<i64: 1, 128>}, {pipeline_mode = #tpu.pipeline_mode<synchronous>, transform_indices = @transform_33, window_bounds = array<i64: 128, 128>}, {pipeline_mode = #tpu.pipeline_mode<synchronous>, transform_indices = @transform_34, window_bounds = array<i64: 1, 128>}, {transform_indices = @transform_35, window_bounds = array<i64: 1, 8, 128>}]} {
    %c0 = arith.constant 0 : index
    %c0_0 = arith.constant 0 : index
    %c0_1 = arith.constant 0 : index
    %0 = vector.load %arg1[%c0, %c0_0, %c0_1] : memref<1x8x128xf32, #tpu.memory_space<vmem>>, vector<1x8x128xf32>
    %c0_2 = arith.constant 0 : index
    %c0_3 = arith.constant 0 : index
    %c0_4 = arith.constant 0 : index
    %1 = vector.load %arg2[%c0_2, %c0_3, %c0_4] : memref<1x8x128xf32, #tpu.memory_space<vmem>>, vector<1x8x128xf32>
    %2 = vector.shape_cast %0 : vector<1x8x128xf32> to vector<8x128xf32>
    %c0_5 = arith.constant 0 : index
    %c0_6 = arith.constant 0 : index
    %c0_7 = arith.constant 0 : index
    %3 = vector.load %arg3[%c0_5, %c0_6, %c0_7] : memref<2x1x128xf32, #tpu.memory_space<vmem>>, vector<1x1x128xf32>
    %4 = vector.shape_cast %3 : vector<1x1x128xf32> to vector<1x128xf32>
    %c0_8 = arith.constant 0 : index
    %c0_9 = arith.constant 0 : index
    %c0_10 = arith.constant 0 : index
    %5 = vector.load %arg4[%c0_8, %c0_9, %c0_10] : memref<2x1x128xf32, #tpu.memory_space<vmem>>, vector<1x1x128xf32>
    %6 = vector.shape_cast %5 : vector<1x1x128xf32> to vector<1x128xf32>
    %cst = arith.constant dense<0.000000e+00> : vector<8xf32>
    %7 = vector.multi_reduction <add>, %2, %cst [1] : vector<8x128xf32> to vector<8xf32>
    %8 = vector.shape_cast %7 : vector<8xf32> to vector<8x1xf32>
    %cst_11 = arith.constant 1.280000e+02 : f32
    %9 = vector.broadcast %cst_11 : f32 to vector<8x1xf32>
    %10 = arith.divf %8, %9 : vector<8x1xf32>
    %11 = vector.broadcast %10 : vector<8x1xf32> to vector<8x128xf32>
    %12 = arith.subf %2, %11 : vector<8x128xf32>
    %13 = arith.mulf %12, %12 : vector<8x128xf32>
    %cst_12 = arith.constant dense<0.000000e+00> : vector<8xf32>
    %14 = vector.multi_reduction <add>, %13, %cst_12 [1] : vector<8x128xf32> to vector<8xf32>
    %15 = vector.shape_cast %14 : vector<8xf32> to vector<8x1xf32>
    %cst_13 = arith.constant 1.280000e+02 : f32
    %16 = vector.broadcast %cst_13 : f32 to vector<8x1xf32>
    %17 = arith.divf %15, %16 : vector<8x1xf32>
    %cst_14 = arith.constant 9.99999974E-6 : f32
    %18 = vector.broadcast %cst_14 : f32 to vector<8x1xf32>
    %19 = arith.addf %17, %18 : vector<8x1xf32>
    %20 = math.rsqrt %19 : vector<8x1xf32>
    %21 = vector.broadcast %10 : vector<8x1xf32> to vector<8x128xf32>
    %22 = arith.subf %2, %21 : vector<8x128xf32>
    %23 = vector.broadcast %20 : vector<8x1xf32> to vector<8x128xf32>
    %24 = arith.mulf %22, %23 : vector<8x128xf32>
    %25 = vector.broadcast %4 : vector<1x128xf32> to vector<8x128xf32>
    %26 = arith.mulf %24, %25 : vector<8x128xf32>
    %27 = vector.broadcast %6 : vector<1x128xf32> to vector<8x128xf32>
    %28 = arith.addf %26, %27 : vector<8x128xf32>
    %c0_15 = arith.constant 0 : index
    %c0_16 = arith.constant 0 : index
    %c0_17 = arith.constant 0 : index
    %29 = vector.load %arg5[%c0_15, %c0_16, %c0_17] : memref<2x128x384xbf16, #tpu.memory_space<vmem>>, vector<1x128x384xbf16>
    %30 = vector.shape_cast %29 : vector<1x128x384xbf16> to vector<128x384xbf16>
    %c0_18 = arith.constant 0 : index
    %c0_19 = arith.constant 0 : index
    %c0_20 = arith.constant 0 : index
    %31 = vector.load %arg6[%c0_18, %c0_19, %c0_20] : memref<2x128x128xbf16, #tpu.memory_space<vmem>>, vector<1x128x128xbf16>
    %32 = vector.shape_cast %31 : vector<1x128x128xbf16> to vector<128x128xbf16>
    %c0_21 = arith.constant 0 : index
    %c0_22 = arith.constant 0 : index
    %c0_23 = arith.constant 0 : index
    %33 = vector.load %arg7[%c0_21, %c0_22, %c0_23] : memref<2x1x128xf32, #tpu.memory_space<vmem>>, vector<1x1x128xf32>
    %34 = vector.shape_cast %33 : vector<1x1x128xf32> to vector<1x128xf32>
    %35 = arith.truncf %28 : vector<8x128xf32> to vector<8x128xbf16>
    %cst_24 = arith.constant dense<0.000000e+00> : vector<8x384xf32>
    %36 = tpu.matmul %35, %30, %cst_24 {dimension_numbers = #tpu.dot_dimension_numbers<[1], [0], [0], [1], [0, 0, 1, 1], [], []>} : vector<8x128xbf16>, vector<128x384xbf16>, vector<8x384xf32> -> vector<8x384xf32>
    %37 = vector.extract_strided_slice %36 {offsets = [0, 0], sizes = [8, 128], strides = [1, 1]} : vector<8x384xf32> to vector<8x128xf32>
    %38 = vector.extract_strided_slice %36 {offsets = [0, 128], sizes = [8, 256], strides = [1, 1]} : vector<8x384xf32> to vector<8x256xf32>
    %39 = vector.extract_strided_slice %38 {offsets = [0, 0], sizes = [8, 128], strides = [1, 1]} : vector<8x256xf32> to vector<8x128xf32>
    %40 = vector.extract_strided_slice %38 {offsets = [0, 128], sizes = [8, 128], strides = [1, 1]} : vector<8x256xf32> to vector<8x128xf32>
    %cst_25 = arith.constant 0.176776692 : f32
    %41 = vector.broadcast %cst_25 : f32 to vector<8x128xf32>
    %42 = arith.mulf %37, %41 : vector<8x128xf32>
    %43 = vector.shape_cast %42 : vector<8x128xf32> to vector<1x8x128xf32>
    %44 = arith.truncf %43 : vector<1x8x128xf32> to vector<1x8x128xbf16>
    %45 = vector.shape_cast %39 : vector<8x128xf32> to vector<1x8x128xf32>
    %46 = arith.truncf %45 : vector<1x8x128xf32> to vector<1x8x128xbf16>
    %47 = vector.shape_cast %40 : vector<8x128xf32> to vector<1x8x128xf32>
    %48 = arith.truncf %47 : vector<1x8x128xf32> to vector<1x8x128xbf16>
    %49 = vector.extract_strided_slice %44 {offsets = [0, 0, 0], sizes = [1, 8, 32], strides = [1, 1, 1]} : vector<1x8x128xbf16> to vector<1x8x32xbf16>
    %50 = vector.extract_strided_slice %46 {offsets = [0, 0, 0], sizes = [1, 8, 32], strides = [1, 1, 1]} : vector<1x8x128xbf16> to vector<1x8x32xbf16>
    "tpu.trace_start"() <{level = 10 : i32, message = "bqd,bkd->bqk"}> : () -> ()
    %cst_26 = arith.constant dense<0.000000e+00> : vector<1x8x8xf32>
    %51 = tpu.matmul %49, %50, %cst_26 {dimension_numbers = #tpu.dot_dimension_numbers<[2], [2], [1], [1], [0, 0, 0, 1, 1, 1], [0], [0]>} : vector<1x8x32xbf16>, vector<1x8x32xbf16>, vector<1x8x8xf32> -> vector<1x8x8xf32>
    "tpu.trace_stop"() : () -> ()
    %52 = vector.extract_strided_slice %44 {offsets = [0, 0, 32], sizes = [1, 8, 32], strides = [1, 1, 1]} : vector<1x8x128xbf16> to vector<1x8x32xbf16>
    %53 = vector.extract_strided_slice %46 {offsets = [0, 0, 32], sizes = [1, 8, 32], strides = [1, 1, 1]} : vector<1x8x128xbf16> to vector<1x8x32xbf16>
    "tpu.trace_start"() <{level = 10 : i32, message = "bqd,bkd->bqk"}> : () -> ()
    %cst_27 = arith.constant dense<0.000000e+00> : vector<1x8x8xf32>
    %54 = tpu.matmul %52, %53, %cst_27 {dimension_numbers = #tpu.dot_dimension_numbers<[2], [2], [1], [1], [0, 0, 0, 1, 1, 1], [0], [0]>} : vector<1x8x32xbf16>, vector<1x8x32xbf16>, vector<1x8x8xf32> -> vector<1x8x8xf32>
    "tpu.trace_stop"() : () -> ()
    %55 = vector.extract_strided_slice %44 {offsets = [0, 0, 64], sizes = [1, 8, 32], strides = [1, 1, 1]} : vector<1x8x128xbf16> to vector<1x8x32xbf16>
    %56 = vector.extract_strided_slice %46 {offsets = [0, 0, 64], sizes = [1, 8, 32], strides = [1, 1, 1]} : vector<1x8x128xbf16> to vector<1x8x32xbf16>
    "tpu.trace_start"() <{level = 10 : i32, message = "bqd,bkd->bqk"}> : () -> ()
    %cst_28 = arith.constant dense<0.000000e+00> : vector<1x8x8xf32>
    %57 = tpu.matmul %55, %56, %cst_28 {dimension_numbers = #tpu.dot_dimension_numbers<[2], [2], [1], [1], [0, 0, 0, 1, 1, 1], [0], [0]>} : vector<1x8x32xbf16>, vector<1x8x32xbf16>, vector<1x8x8xf32> -> vector<1x8x8xf32>
    "tpu.trace_stop"() : () -> ()
    %58 = vector.extract_strided_slice %44 {offsets = [0, 0, 96], sizes = [1, 8, 32], strides = [1, 1, 1]} : vector<1x8x128xbf16> to vector<1x8x32xbf16>
    %59 = vector.extract_strided_slice %46 {offsets = [0, 0, 96], sizes = [1, 8, 32], strides = [1, 1, 1]} : vector<1x8x128xbf16> to vector<1x8x32xbf16>
    "tpu.trace_start"() <{level = 10 : i32, message = "bqd,bkd->bqk"}> : () -> ()
    %cst_29 = arith.constant dense<0.000000e+00> : vector<1x8x8xf32>
    %60 = tpu.matmul %58, %59, %cst_29 {dimension_numbers = #tpu.dot_dimension_numbers<[2], [2], [1], [1], [0, 0, 0, 1, 1, 1], [0], [0]>} : vector<1x8x32xbf16>, vector<1x8x32xbf16>, vector<1x8x8xf32> -> vector<1x8x8xf32>
    "tpu.trace_stop"() : () -> ()
    %61 = tpu.concatenate %51, %54, %57, %60 in 0 : vector<1x8x8xf32>, vector<1x8x8xf32>, vector<1x8x8xf32>, vector<1x8x8xf32> -> vector<4x8x8xf32>
    %cst_30 = arith.constant dense<0xFF800000> : vector<4x8xf32>
    %62 = vector.multi_reduction <maximumf>, %61, %cst_30 [2] : vector<4x8x8xf32> to vector<4x8xf32>
    %63 = vector.shape_cast %62 : vector<4x8xf32> to vector<4x8x1xf32>
    %64 = vector.broadcast %63 : vector<4x8x1xf32> to vector<4x8x8xf32>
    %65 = arith.subf %61, %64 : vector<4x8x8xf32>
    %66 = math.exp %65 : vector<4x8x8xf32>
    %cst_31 = arith.constant dense<0.000000e+00> : vector<4x8xf32>
    %67 = vector.multi_reduction <add>, %66, %cst_31 [2] : vector<4x8x8xf32> to vector<4x8xf32>
    %68 = vector.shape_cast %67 : vector<4x8xf32> to vector<4x8x1xf32>
    %69 = tpu.reciprocal %68 : vector<4x8x1xf32> -> vector<4x8x1xf32>
    %70 = vector.broadcast %69 : vector<4x8x1xf32> to vector<4x8x8xf32>
    %71 = arith.mulf %66, %70 : vector<4x8x8xf32>
    %72 = arith.truncf %71 : vector<4x8x8xf32> to vector<4x8x8xbf16>
    %73 = vector.extract_strided_slice %72 {offsets = [0, 0, 0], sizes = [1, 8, 8], strides = [1, 1, 1]} : vector<4x8x8xbf16> to vector<1x8x8xbf16>
    %74 = vector.extract_strided_slice %48 {offsets = [0, 0, 0], sizes = [1, 8, 32], strides = [1, 1, 1]} : vector<1x8x128xbf16> to vector<1x8x32xbf16>
    "tpu.trace_start"() <{level = 10 : i32, message = "bqk,bkd->bqd"}> : () -> ()
    %cst_32 = arith.constant dense<0.000000e+00> : vector<1x8x32xf32>
    %75 = tpu.matmul %73, %74, %cst_32 {dimension_numbers = #tpu.dot_dimension_numbers<[2], [1], [1], [2], [0, 0, 0, 1, 1, 2], [0], [0]>} : vector<1x8x8xbf16>, vector<1x8x32xbf16>, vector<1x8x32xf32> -> vector<1x8x32xf32>
    "tpu.trace_stop"() : () -> ()
    %76 = vector.extract_strided_slice %72 {offsets = [1, 0, 0], sizes = [1, 8, 8], strides = [1, 1, 1]} : vector<4x8x8xbf16> to vector<1x8x8xbf16>
    %77 = vector.extract_strided_slice %48 {offsets = [0, 0, 32], sizes = [1, 8, 32], strides = [1, 1, 1]} : vector<1x8x128xbf16> to vector<1x8x32xbf16>
    "tpu.trace_start"() <{level = 10 : i32, message = "bqk,bkd->bqd"}> : () -> ()
    %cst_33 = arith.constant dense<0.000000e+00> : vector<1x8x32xf32>
    %78 = tpu.matmul %76, %77, %cst_33 {dimension_numbers = #tpu.dot_dimension_numbers<[2], [1], [1], [2], [0, 0, 0, 1, 1, 2], [0], [0]>} : vector<1x8x8xbf16>, vector<1x8x32xbf16>, vector<1x8x32xf32> -> vector<1x8x32xf32>
    "tpu.trace_stop"() : () -> ()
    %79 = vector.extract_strided_slice %72 {offsets = [2, 0, 0], sizes = [1, 8, 8], strides = [1, 1, 1]} : vector<4x8x8xbf16> to vector<1x8x8xbf16>
    %80 = vector.extract_strided_slice %48 {offsets = [0, 0, 64], sizes = [1, 8, 32], strides = [1, 1, 1]} : vector<1x8x128xbf16> to vector<1x8x32xbf16>
    "tpu.trace_start"() <{level = 10 : i32, message = "bqk,bkd->bqd"}> : () -> ()
    %cst_34 = arith.constant dense<0.000000e+00> : vector<1x8x32xf32>
    %81 = tpu.matmul %79, %80, %cst_34 {dimension_numbers = #tpu.dot_dimension_numbers<[2], [1], [1], [2], [0, 0, 0, 1, 1, 2], [0], [0]>} : vector<1x8x8xbf16>, vector<1x8x32xbf16>, vector<1x8x32xf32> -> vector<1x8x32xf32>
    "tpu.trace_stop"() : () -> ()
    %82 = vector.extract_strided_slice %72 {offsets = [3, 0, 0], sizes = [1, 8, 8], strides = [1, 1, 1]} : vector<4x8x8xbf16> to vector<1x8x8xbf16>
    %83 = vector.extract_strided_slice %48 {offsets = [0, 0, 96], sizes = [1, 8, 32], strides = [1, 1, 1]} : vector<1x8x128xbf16> to vector<1x8x32xbf16>
    "tpu.trace_start"() <{level = 10 : i32, message = "bqk,bkd->bqd"}> : () -> ()
    %cst_35 = arith.constant dense<0.000000e+00> : vector<1x8x32xf32>
    %84 = tpu.matmul %82, %83, %cst_35 {dimension_numbers = #tpu.dot_dimension_numbers<[2], [1], [1], [2], [0, 0, 0, 1, 1, 2], [0], [0]>} : vector<1x8x8xbf16>, vector<1x8x32xbf16>, vector<1x8x32xf32> -> vector<1x8x32xf32>
    "tpu.trace_stop"() : () -> ()
    %85 = tpu.concatenate %75, %78, %81, %84 in 2 : vector<1x8x32xf32>, vector<1x8x32xf32>, vector<1x8x32xf32>, vector<1x8x32xf32> -> vector<1x8x128xf32>
    %86 = vector.shape_cast %85 : vector<1x8x128xf32> to vector<8x128xf32>
    %87 = arith.truncf %86 : vector<8x128xf32> to vector<8x128xbf16>
    %cst_36 = arith.constant dense<0.000000e+00> : vector<8x128xf32>
    %88 = tpu.matmul %87, %32, %cst_36 {dimension_numbers = #tpu.dot_dimension_numbers<[1], [0], [0], [1], [0, 0, 1, 1], [], []>} : vector<8x128xbf16>, vector<128x128xbf16>, vector<8x128xf32> -> vector<8x128xf32>
    %89 = vector.broadcast %34 : vector<1x128xf32> to vector<8x128xf32>
    %90 = arith.addf %88, %89 : vector<8x128xf32>
    %91 = arith.addf %2, %90 : vector<8x128xf32>
    %c0_37 = arith.constant 0 : index
    %c0_38 = arith.constant 0 : index
    %c0_39 = arith.constant 0 : index
    %92 = vector.load %arg8[%c0_37, %c0_38, %c0_39] : memref<2x1x128xf32, #tpu.memory_space<vmem>>, vector<1x1x128xf32>
    %93 = vector.shape_cast %92 : vector<1x1x128xf32> to vector<1x128xf32>
    %c0_40 = arith.constant 0 : index
    %c0_41 = arith.constant 0 : index
    %c0_42 = arith.constant 0 : index
    %94 = vector.load %arg9[%c0_40, %c0_41, %c0_42] : memref<2x1x128xf32, #tpu.memory_space<vmem>>, vector<1x1x128xf32>
    %95 = vector.shape_cast %94 : vector<1x1x128xf32> to vector<1x128xf32>
    %cst_43 = arith.constant dense<0.000000e+00> : vector<8xf32>
    %96 = vector.multi_reduction <add>, %91, %cst_43 [1] : vector<8x128xf32> to vector<8xf32>
    %97 = vector.shape_cast %96 : vector<8xf32> to vector<8x1xf32>
    %cst_44 = arith.constant 1.280000e+02 : f32
    %98 = vector.broadcast %cst_44 : f32 to vector<8x1xf32>
    %99 = arith.divf %97, %98 : vector<8x1xf32>
    %100 = vector.broadcast %99 : vector<8x1xf32> to vector<8x128xf32>
    %101 = arith.subf %91, %100 : vector<8x128xf32>
    %102 = arith.mulf %101, %101 : vector<8x128xf32>
    %cst_45 = arith.constant dense<0.000000e+00> : vector<8xf32>
    %103 = vector.multi_reduction <add>, %102, %cst_45 [1] : vector<8x128xf32> to vector<8xf32>
    %104 = vector.shape_cast %103 : vector<8xf32> to vector<8x1xf32>
    %cst_46 = arith.constant 1.280000e+02 : f32
    %105 = vector.broadcast %cst_46 : f32 to vector<8x1xf32>
    %106 = arith.divf %104, %105 : vector<8x1xf32>
    %cst_47 = arith.constant 9.99999974E-6 : f32
    %107 = vector.broadcast %cst_47 : f32 to vector<8x1xf32>
    %108 = arith.addf %106, %107 : vector<8x1xf32>
    %109 = math.rsqrt %108 : vector<8x1xf32>
    %110 = vector.broadcast %99 : vector<8x1xf32> to vector<8x128xf32>
    %111 = arith.subf %91, %110 : vector<8x128xf32>
    %112 = vector.broadcast %109 : vector<8x1xf32> to vector<8x128xf32>
    %113 = arith.mulf %111, %112 : vector<8x128xf32>
    %114 = vector.broadcast %93 : vector<1x128xf32> to vector<8x128xf32>
    %115 = arith.mulf %113, %114 : vector<8x128xf32>
    %116 = vector.broadcast %95 : vector<1x128xf32> to vector<8x128xf32>
    %117 = arith.addf %115, %116 : vector<8x128xf32>
    %c0_48 = arith.constant 0 : index
    %c0_49 = arith.constant 0 : index
    %c0_50 = arith.constant 0 : index
    %118 = vector.load %arg10[%c0_48, %c0_49, %c0_50] : memref<2x128x256xbf16, #tpu.memory_space<vmem>>, vector<1x128x256xbf16>
    %119 = vector.shape_cast %118 : vector<1x128x256xbf16> to vector<128x256xbf16>
    %c0_51 = arith.constant 0 : index
    %c0_52 = arith.constant 0 : index
    %c0_53 = arith.constant 0 : index
    %120 = vector.load %arg11[%c0_51, %c0_52, %c0_53] : memref<2x1x256xf32, #tpu.memory_space<vmem>>, vector<1x1x256xf32>
    %121 = vector.shape_cast %120 : vector<1x1x256xf32> to vector<1x256xf32>
    %c0_54 = arith.constant 0 : index
    %c0_55 = arith.constant 0 : index
    %c0_56 = arith.constant 0 : index
    %122 = vector.load %arg12[%c0_54, %c0_55, %c0_56] : memref<2x256x128xbf16, #tpu.memory_space<vmem>>, vector<1x256x128xbf16>
    %123 = vector.shape_cast %122 : vector<1x256x128xbf16> to vector<256x128xbf16>
    %c0_57 = arith.constant 0 : index
    %c0_58 = arith.constant 0 : index
    %c0_59 = arith.constant 0 : index
    %124 = vector.load %arg13[%c0_57, %c0_58, %c0_59] : memref<2x1x128xf32, #tpu.memory_space<vmem>>, vector<1x1x128xf32>
    %125 = vector.shape_cast %124 : vector<1x1x128xf32> to vector<1x128xf32>
    %126 = arith.truncf %117 : vector<8x128xf32> to vector<8x128xbf16>
    %cst_60 = arith.constant dense<0.000000e+00> : vector<8x256xf32>
    %127 = tpu.matmul %126, %119, %cst_60 {dimension_numbers = #tpu.dot_dimension_numbers<[1], [0], [0], [1], [0, 0, 1, 1], [], []>} : vector<8x128xbf16>, vector<128x256xbf16>, vector<8x256xf32> -> vector<8x256xf32>
    %128 = vector.broadcast %121 : vector<1x256xf32> to vector<8x256xf32>
    %129 = arith.addf %127, %128 : vector<8x256xf32>
    %130 = arith.mulf %129, %129 : vector<8x256xf32>
    %131 = arith.mulf %129, %130 : vector<8x256xf32>
    %cst_61 = arith.constant 4.471500e-02 : f32
    %132 = vector.broadcast %cst_61 : f32 to vector<8x256xf32>
    %133 = arith.mulf %132, %131 : vector<8x256xf32>
    %134 = arith.addf %129, %133 : vector<8x256xf32>
    %cst_62 = arith.constant 0.797884583 : f32
    %135 = vector.broadcast %cst_62 : f32 to vector<8x256xf32>
    %136 = arith.mulf %135, %134 : vector<8x256xf32>
    %137 = math.tanh %136 : vector<8x256xf32>
    %cst_63 = arith.constant 1.000000e+00 : f32
    %138 = vector.broadcast %cst_63 : f32 to vector<8x256xf32>
    %139 = arith.addf %138, %137 : vector<8x256xf32>
    %cst_64 = arith.constant 5.000000e-01 : f32
    %140 = vector.broadcast %cst_64 : f32 to vector<8x256xf32>
    %141 = arith.mulf %140, %139 : vector<8x256xf32>
    %142 = arith.mulf %129, %141 : vector<8x256xf32>
    %143 = arith.truncf %142 : vector<8x256xf32> to vector<8x256xbf16>
    %cst_65 = arith.constant dense<0.000000e+00> : vector<8x128xf32>
    %144 = tpu.matmul %143, %123, %cst_65 {dimension_numbers = #tpu.dot_dimension_numbers<[1], [0], [0], [1], [0, 0, 1, 1], [], []>} : vector<8x256xbf16>, vector<256x128xbf16>, vector<8x128xf32> -> vector<8x128xf32>
    %145 = vector.broadcast %125 : vector<1x128xf32> to vector<8x128xf32>
    %146 = arith.addf %144, %145 : vector<8x128xf32>
    %147 = arith.addf %91, %146 : vector<8x128xf32>
    %c1 = arith.constant 1 : index
    %c0_66 = arith.constant 0 : index
    %c0_67 = arith.constant 0 : index
    %148 = vector.load %arg3[%c1, %c0_66, %c0_67] : memref<2x1x128xf32, #tpu.memory_space<vmem>>, vector<1x1x128xf32>
    %149 = vector.shape_cast %148 : vector<1x1x128xf32> to vector<1x128xf32>
    %c1_68 = arith.constant 1 : index
    %c0_69 = arith.constant 0 : index
    %c0_70 = arith.constant 0 : index
    %150 = vector.load %arg4[%c1_68, %c0_69, %c0_70] : memref<2x1x128xf32, #tpu.memory_space<vmem>>, vector<1x1x128xf32>
    %151 = vector.shape_cast %150 : vector<1x1x128xf32> to vector<1x128xf32>
    %cst_71 = arith.constant dense<0.000000e+00> : vector<8xf32>
    %152 = vector.multi_reduction <add>, %147, %cst_71 [1] : vector<8x128xf32> to vector<8xf32>
    %153 = vector.shape_cast %152 : vector<8xf32> to vector<8x1xf32>
    %cst_72 = arith.constant 1.280000e+02 : f32
    %154 = vector.broadcast %cst_72 : f32 to vector<8x1xf32>
    %155 = arith.divf %153, %154 : vector<8x1xf32>
    %156 = vector.broadcast %155 : vector<8x1xf32> to vector<8x128xf32>
    %157 = arith.subf %147, %156 : vector<8x128xf32>
    %158 = arith.mulf %157, %157 : vector<8x128xf32>
    %cst_73 = arith.constant dense<0.000000e+00> : vector<8xf32>
    %159 = vector.multi_reduction <add>, %158, %cst_73 [1] : vector<8x128xf32> to vector<8xf32>
    %160 = vector.shape_cast %159 : vector<8xf32> to vector<8x1xf32>
    %cst_74 = arith.constant 1.280000e+02 : f32
    %161 = vector.broadcast %cst_74 : f32 to vector<8x1xf32>
    %162 = arith.divf %160, %161 : vector<8x1xf32>
    %cst_75 = arith.constant 9.99999974E-6 : f32
    %163 = vector.broadcast %cst_75 : f32 to vector<8x1xf32>
    %164 = arith.addf %162, %163 : vector<8x1xf32>
    %165 = math.rsqrt %164 : vector<8x1xf32>
    %166 = vector.broadcast %155 : vector<8x1xf32> to vector<8x128xf32>
    %167 = arith.subf %147, %166 : vector<8x128xf32>
    %168 = vector.broadcast %165 : vector<8x1xf32> to vector<8x128xf32>
    %169 = arith.mulf %167, %168 : vector<8x128xf32>
    %170 = vector.broadcast %149 : vector<1x128xf32> to vector<8x128xf32>
    %171 = arith.mulf %169, %170 : vector<8x128xf32>
    %172 = vector.broadcast %151 : vector<1x128xf32> to vector<8x128xf32>
    %173 = arith.addf %171, %172 : vector<8x128xf32>
    %c1_76 = arith.constant 1 : index
    %c0_77 = arith.constant 0 : index
    %c0_78 = arith.constant 0 : index
    %174 = vector.load %arg5[%c1_76, %c0_77, %c0_78] : memref<2x128x384xbf16, #tpu.memory_space<vmem>>, vector<1x128x384xbf16>
    %175 = vector.shape_cast %174 : vector<1x128x384xbf16> to vector<128x384xbf16>
    %c1_79 = arith.constant 1 : index
    %c0_80 = arith.constant 0 : index
    %c0_81 = arith.constant 0 : index
    %176 = vector.load %arg6[%c1_79, %c0_80, %c0_81] : memref<2x128x128xbf16, #tpu.memory_space<vmem>>, vector<1x128x128xbf16>
    %177 = vector.shape_cast %176 : vector<1x128x128xbf16> to vector<128x128xbf16>
    %c1_82 = arith.constant 1 : index
    %c0_83 = arith.constant 0 : index
    %c0_84 = arith.constant 0 : index
    %178 = vector.load %arg7[%c1_82, %c0_83, %c0_84] : memref<2x1x128xf32, #tpu.memory_space<vmem>>, vector<1x1x128xf32>
    %179 = vector.shape_cast %178 : vector<1x1x128xf32> to vector<1x128xf32>
    %180 = arith.truncf %173 : vector<8x128xf32> to vector<8x128xbf16>
    %cst_85 = arith.constant dense<0.000000e+00> : vector<8x384xf32>
    %181 = tpu.matmul %180, %175, %cst_85 {dimension_numbers = #tpu.dot_dimension_numbers<[1], [0], [0], [1], [0, 0, 1, 1], [], []>} : vector<8x128xbf16>, vector<128x384xbf16>, vector<8x384xf32> -> vector<8x384xf32>
    %182 = vector.extract_strided_slice %181 {offsets = [0, 0], sizes = [8, 128], strides = [1, 1]} : vector<8x384xf32> to vector<8x128xf32>
    %183 = vector.extract_strided_slice %181 {offsets = [0, 128], sizes = [8, 256], strides = [1, 1]} : vector<8x384xf32> to vector<8x256xf32>
    %184 = vector.extract_strided_slice %183 {offsets = [0, 0], sizes = [8, 128], strides = [1, 1]} : vector<8x256xf32> to vector<8x128xf32>
    %185 = vector.extract_strided_slice %183 {offsets = [0, 128], sizes = [8, 128], strides = [1, 1]} : vector<8x256xf32> to vector<8x128xf32>
    %cst_86 = arith.constant 0.176776692 : f32
    %186 = vector.broadcast %cst_86 : f32 to vector<8x128xf32>
    %187 = arith.mulf %182, %186 : vector<8x128xf32>
    %188 = vector.shape_cast %187 : vector<8x128xf32> to vector<1x8x128xf32>
    %189 = arith.truncf %188 : vector<1x8x128xf32> to vector<1x8x128xbf16>
    %190 = vector.shape_cast %184 : vector<8x128xf32> to vector<1x8x128xf32>
    %191 = arith.truncf %190 : vector<1x8x128xf32> to vector<1x8x128xbf16>
    %192 = vector.shape_cast %185 : vector<8x128xf32> to vector<1x8x128xf32>
    %193 = arith.truncf %192 : vector<1x8x128xf32> to vector<1x8x128xbf16>
    %194 = vector.extract_strided_slice %189 {offsets = [0, 0, 0], sizes = [1, 8, 32], strides = [1, 1, 1]} : vector<1x8x128xbf16> to vector<1x8x32xbf16>
    %195 = vector.extract_strided_slice %191 {offsets = [0, 0, 0], sizes = [1, 8, 32], strides = [1, 1, 1]} : vector<1x8x128xbf16> to vector<1x8x32xbf16>
    "tpu.trace_start"() <{level = 10 : i32, message = "bqd,bkd->bqk"}> : () -> ()
    %cst_87 = arith.constant dense<0.000000e+00> : vector<1x8x8xf32>
    %196 = tpu.matmul %194, %195, %cst_87 {dimension_numbers = #tpu.dot_dimension_numbers<[2], [2], [1], [1], [0, 0, 0, 1, 1, 1], [0], [0]>} : vector<1x8x32xbf16>, vector<1x8x32xbf16>, vector<1x8x8xf32> -> vector<1x8x8xf32>
    "tpu.trace_stop"() : () -> ()
    %197 = vector.extract_strided_slice %189 {offsets = [0, 0, 32], sizes = [1, 8, 32], strides = [1, 1, 1]} : vector<1x8x128xbf16> to vector<1x8x32xbf16>
    %198 = vector.extract_strided_slice %191 {offsets = [0, 0, 32], sizes = [1, 8, 32], strides = [1, 1, 1]} : vector<1x8x128xbf16> to vector<1x8x32xbf16>
    "tpu.trace_start"() <{level = 10 : i32, message = "bqd,bkd->bqk"}> : () -> ()
    %cst_88 = arith.constant dense<0.000000e+00> : vector<1x8x8xf32>
    %199 = tpu.matmul %197, %198, %cst_88 {dimension_numbers = #tpu.dot_dimension_numbers<[2], [2], [1], [1], [0, 0, 0, 1, 1, 1], [0], [0]>} : vector<1x8x32xbf16>, vector<1x8x32xbf16>, vector<1x8x8xf32> -> vector<1x8x8xf32>
    "tpu.trace_stop"() : () -> ()
    %200 = vector.extract_strided_slice %189 {offsets = [0, 0, 64], sizes = [1, 8, 32], strides = [1, 1, 1]} : vector<1x8x128xbf16> to vector<1x8x32xbf16>
    %201 = vector.extract_strided_slice %191 {offsets = [0, 0, 64], sizes = [1, 8, 32], strides = [1, 1, 1]} : vector<1x8x128xbf16> to vector<1x8x32xbf16>
    "tpu.trace_start"() <{level = 10 : i32, message = "bqd,bkd->bqk"}> : () -> ()
    %cst_89 = arith.constant dense<0.000000e+00> : vector<1x8x8xf32>
    %202 = tpu.matmul %200, %201, %cst_89 {dimension_numbers = #tpu.dot_dimension_numbers<[2], [2], [1], [1], [0, 0, 0, 1, 1, 1], [0], [0]>} : vector<1x8x32xbf16>, vector<1x8x32xbf16>, vector<1x8x8xf32> -> vector<1x8x8xf32>
    "tpu.trace_stop"() : () -> ()
    %203 = vector.extract_strided_slice %189 {offsets = [0, 0, 96], sizes = [1, 8, 32], strides = [1, 1, 1]} : vector<1x8x128xbf16> to vector<1x8x32xbf16>
    %204 = vector.extract_strided_slice %191 {offsets = [0, 0, 96], sizes = [1, 8, 32], strides = [1, 1, 1]} : vector<1x8x128xbf16> to vector<1x8x32xbf16>
    "tpu.trace_start"() <{level = 10 : i32, message = "bqd,bkd->bqk"}> : () -> ()
    %cst_90 = arith.constant dense<0.000000e+00> : vector<1x8x8xf32>
    %205 = tpu.matmul %203, %204, %cst_90 {dimension_numbers = #tpu.dot_dimension_numbers<[2], [2], [1], [1], [0, 0, 0, 1, 1, 1], [0], [0]>} : vector<1x8x32xbf16>, vector<1x8x32xbf16>, vector<1x8x8xf32> -> vector<1x8x8xf32>
    "tpu.trace_stop"() : () -> ()
    %206 = tpu.concatenate %196, %199, %202, %205 in 0 : vector<1x8x8xf32>, vector<1x8x8xf32>, vector<1x8x8xf32>, vector<1x8x8xf32> -> vector<4x8x8xf32>
    %cst_91 = arith.constant dense<0xFF800000> : vector<4x8xf32>
    %207 = vector.multi_reduction <maximumf>, %206, %cst_91 [2] : vector<4x8x8xf32> to vector<4x8xf32>
    %208 = vector.shape_cast %207 : vector<4x8xf32> to vector<4x8x1xf32>
    %209 = vector.broadcast %208 : vector<4x8x1xf32> to vector<4x8x8xf32>
    %210 = arith.subf %206, %209 : vector<4x8x8xf32>
    %211 = math.exp %210 : vector<4x8x8xf32>
    %cst_92 = arith.constant dense<0.000000e+00> : vector<4x8xf32>
    %212 = vector.multi_reduction <add>, %211, %cst_92 [2] : vector<4x8x8xf32> to vector<4x8xf32>
    %213 = vector.shape_cast %212 : vector<4x8xf32> to vector<4x8x1xf32>
    %214 = tpu.reciprocal %213 : vector<4x8x1xf32> -> vector<4x8x1xf32>
    %215 = vector.broadcast %214 : vector<4x8x1xf32> to vector<4x8x8xf32>
    %216 = arith.mulf %211, %215 : vector<4x8x8xf32>
    %217 = arith.truncf %216 : vector<4x8x8xf32> to vector<4x8x8xbf16>
    %218 = vector.extract_strided_slice %217 {offsets = [0, 0, 0], sizes = [1, 8, 8], strides = [1, 1, 1]} : vector<4x8x8xbf16> to vector<1x8x8xbf16>
    %219 = vector.extract_strided_slice %193 {offsets = [0, 0, 0], sizes = [1, 8, 32], strides = [1, 1, 1]} : vector<1x8x128xbf16> to vector<1x8x32xbf16>
    "tpu.trace_start"() <{level = 10 : i32, message = "bqk,bkd->bqd"}> : () -> ()
    %cst_93 = arith.constant dense<0.000000e+00> : vector<1x8x32xf32>
    %220 = tpu.matmul %218, %219, %cst_93 {dimension_numbers = #tpu.dot_dimension_numbers<[2], [1], [1], [2], [0, 0, 0, 1, 1, 2], [0], [0]>} : vector<1x8x8xbf16>, vector<1x8x32xbf16>, vector<1x8x32xf32> -> vector<1x8x32xf32>
    "tpu.trace_stop"() : () -> ()
    %221 = vector.extract_strided_slice %217 {offsets = [1, 0, 0], sizes = [1, 8, 8], strides = [1, 1, 1]} : vector<4x8x8xbf16> to vector<1x8x8xbf16>
    %222 = vector.extract_strided_slice %193 {offsets = [0, 0, 32], sizes = [1, 8, 32], strides = [1, 1, 1]} : vector<1x8x128xbf16> to vector<1x8x32xbf16>
    "tpu.trace_start"() <{level = 10 : i32, message = "bqk,bkd->bqd"}> : () -> ()
    %cst_94 = arith.constant dense<0.000000e+00> : vector<1x8x32xf32>
    %223 = tpu.matmul %221, %222, %cst_94 {dimension_numbers = #tpu.dot_dimension_numbers<[2], [1], [1], [2], [0, 0, 0, 1, 1, 2], [0], [0]>} : vector<1x8x8xbf16>, vector<1x8x32xbf16>, vector<1x8x32xf32> -> vector<1x8x32xf32>
    "tpu.trace_stop"() : () -> ()
    %224 = vector.extract_strided_slice %217 {offsets = [2, 0, 0], sizes = [1, 8, 8], strides = [1, 1, 1]} : vector<4x8x8xbf16> to vector<1x8x8xbf16>
    %225 = vector.extract_strided_slice %193 {offsets = [0, 0, 64], sizes = [1, 8, 32], strides = [1, 1, 1]} : vector<1x8x128xbf16> to vector<1x8x32xbf16>
    "tpu.trace_start"() <{level = 10 : i32, message = "bqk,bkd->bqd"}> : () -> ()
    %cst_95 = arith.constant dense<0.000000e+00> : vector<1x8x32xf32>
    %226 = tpu.matmul %224, %225, %cst_95 {dimension_numbers = #tpu.dot_dimension_numbers<[2], [1], [1], [2], [0, 0, 0, 1, 1, 2], [0], [0]>} : vector<1x8x8xbf16>, vector<1x8x32xbf16>, vector<1x8x32xf32> -> vector<1x8x32xf32>
    "tpu.trace_stop"() : () -> ()
    %227 = vector.extract_strided_slice %217 {offsets = [3, 0, 0], sizes = [1, 8, 8], strides = [1, 1, 1]} : vector<4x8x8xbf16> to vector<1x8x8xbf16>
    %228 = vector.extract_strided_slice %193 {offsets = [0, 0, 96], sizes = [1, 8, 32], strides = [1, 1, 1]} : vector<1x8x128xbf16> to vector<1x8x32xbf16>
    "tpu.trace_start"() <{level = 10 : i32, message = "bqk,bkd->bqd"}> : () -> ()
    %cst_96 = arith.constant dense<0.000000e+00> : vector<1x8x32xf32>
    %229 = tpu.matmul %227, %228, %cst_96 {dimension_numbers = #tpu.dot_dimension_numbers<[2], [1], [1], [2], [0, 0, 0, 1, 1, 2], [0], [0]>} : vector<1x8x8xbf16>, vector<1x8x32xbf16>, vector<1x8x32xf32> -> vector<1x8x32xf32>
    "tpu.trace_stop"() : () -> ()
    %230 = tpu.concatenate %220, %223, %226, %229 in 2 : vector<1x8x32xf32>, vector<1x8x32xf32>, vector<1x8x32xf32>, vector<1x8x32xf32> -> vector<1x8x128xf32>
    %231 = vector.shape_cast %230 : vector<1x8x128xf32> to vector<8x128xf32>
    %232 = arith.truncf %231 : vector<8x128xf32> to vector<8x128xbf16>
    %cst_97 = arith.constant dense<0.000000e+00> : vector<8x128xf32>
    %233 = tpu.matmul %232, %177, %cst_97 {dimension_numbers = #tpu.dot_dimension_numbers<[1], [0], [0], [1], [0, 0, 1, 1], [], []>} : vector<8x128xbf16>, vector<128x128xbf16>, vector<8x128xf32> -> vector<8x128xf32>
    %234 = vector.broadcast %179 : vector<1x128xf32> to vector<8x128xf32>
    %235 = arith.addf %233, %234 : vector<8x128xf32>
    %236 = arith.addf %147, %235 : vector<8x128xf32>
    %c1_98 = arith.constant 1 : index
    %c0_99 = arith.constant 0 : index
    %c0_100 = arith.constant 0 : index
    %237 = vector.load %arg8[%c1_98, %c0_99, %c0_100] : memref<2x1x128xf32, #tpu.memory_space<vmem>>, vector<1x1x128xf32>
    %238 = vector.shape_cast %237 : vector<1x1x128xf32> to vector<1x128xf32>
    %c1_101 = arith.constant 1 : index
    %c0_102 = arith.constant 0 : index
    %c0_103 = arith.constant 0 : index
    %239 = vector.load %arg9[%c1_101, %c0_102, %c0_103] : memref<2x1x128xf32, #tpu.memory_space<vmem>>, vector<1x1x128xf32>
    %240 = vector.shape_cast %239 : vector<1x1x128xf32> to vector<1x128xf32>
    %cst_104 = arith.constant dense<0.000000e+00> : vector<8xf32>
    %241 = vector.multi_reduction <add>, %236, %cst_104 [1] : vector<8x128xf32> to vector<8xf32>
    %242 = vector.shape_cast %241 : vector<8xf32> to vector<8x1xf32>
    %cst_105 = arith.constant 1.280000e+02 : f32
    %243 = vector.broadcast %cst_105 : f32 to vector<8x1xf32>
    %244 = arith.divf %242, %243 : vector<8x1xf32>
    %245 = vector.broadcast %244 : vector<8x1xf32> to vector<8x128xf32>
    %246 = arith.subf %236, %245 : vector<8x128xf32>
    %247 = arith.mulf %246, %246 : vector<8x128xf32>
    %cst_106 = arith.constant dense<0.000000e+00> : vector<8xf32>
    %248 = vector.multi_reduction <add>, %247, %cst_106 [1] : vector<8x128xf32> to vector<8xf32>
    %249 = vector.shape_cast %248 : vector<8xf32> to vector<8x1xf32>
    %cst_107 = arith.constant 1.280000e+02 : f32
    %250 = vector.broadcast %cst_107 : f32 to vector<8x1xf32>
    %251 = arith.divf %249, %250 : vector<8x1xf32>
    %cst_108 = arith.constant 9.99999974E-6 : f32
    %252 = vector.broadcast %cst_108 : f32 to vector<8x1xf32>
    %253 = arith.addf %251, %252 : vector<8x1xf32>
    %254 = math.rsqrt %253 : vector<8x1xf32>
    %255 = vector.broadcast %244 : vector<8x1xf32> to vector<8x128xf32>
    %256 = arith.subf %236, %255 : vector<8x128xf32>
    %257 = vector.broadcast %254 : vector<8x1xf32> to vector<8x128xf32>
    %258 = arith.mulf %256, %257 : vector<8x128xf32>
    %259 = vector.broadcast %238 : vector<1x128xf32> to vector<8x128xf32>
    %260 = arith.mulf %258, %259 : vector<8x128xf32>
    %261 = vector.broadcast %240 : vector<1x128xf32> to vector<8x128xf32>
    %262 = arith.addf %260, %261 : vector<8x128xf32>
    %c1_109 = arith.constant 1 : index
    %c0_110 = arith.constant 0 : index
    %c0_111 = arith.constant 0 : index
    %263 = vector.load %arg10[%c1_109, %c0_110, %c0_111] : memref<2x128x256xbf16, #tpu.memory_space<vmem>>, vector<1x128x256xbf16>
    %264 = vector.shape_cast %263 : vector<1x128x256xbf16> to vector<128x256xbf16>
    %c1_112 = arith.constant 1 : index
    %c0_113 = arith.constant 0 : index
    %c0_114 = arith.constant 0 : index
    %265 = vector.load %arg11[%c1_112, %c0_113, %c0_114] : memref<2x1x256xf32, #tpu.memory_space<vmem>>, vector<1x1x256xf32>
    %266 = vector.shape_cast %265 : vector<1x1x256xf32> to vector<1x256xf32>
    %c1_115 = arith.constant 1 : index
    %c0_116 = arith.constant 0 : index
    %c0_117 = arith.constant 0 : index
    %267 = vector.load %arg12[%c1_115, %c0_116, %c0_117] : memref<2x256x128xbf16, #tpu.memory_space<vmem>>, vector<1x256x128xbf16>
    %268 = vector.shape_cast %267 : vector<1x256x128xbf16> to vector<256x128xbf16>
    %c1_118 = arith.constant 1 : index
    %c0_119 = arith.constant 0 : index
    %c0_120 = arith.constant 0 : index
    %269 = vector.load %arg13[%c1_118, %c0_119, %c0_120] : memref<2x1x128xf32, #tpu.memory_space<vmem>>, vector<1x1x128xf32>
    %270 = vector.shape_cast %269 : vector<1x1x128xf32> to vector<1x128xf32>
    %271 = arith.truncf %262 : vector<8x128xf32> to vector<8x128xbf16>
    %cst_121 = arith.constant dense<0.000000e+00> : vector<8x256xf32>
    %272 = tpu.matmul %271, %264, %cst_121 {dimension_numbers = #tpu.dot_dimension_numbers<[1], [0], [0], [1], [0, 0, 1, 1], [], []>} : vector<8x128xbf16>, vector<128x256xbf16>, vector<8x256xf32> -> vector<8x256xf32>
    %273 = vector.broadcast %266 : vector<1x256xf32> to vector<8x256xf32>
    %274 = arith.addf %272, %273 : vector<8x256xf32>
    %275 = arith.mulf %274, %274 : vector<8x256xf32>
    %276 = arith.mulf %274, %275 : vector<8x256xf32>
    %cst_122 = arith.constant 4.471500e-02 : f32
    %277 = vector.broadcast %cst_122 : f32 to vector<8x256xf32>
    %278 = arith.mulf %277, %276 : vector<8x256xf32>
    %279 = arith.addf %274, %278 : vector<8x256xf32>
    %cst_123 = arith.constant 0.797884583 : f32
    %280 = vector.broadcast %cst_123 : f32 to vector<8x256xf32>
    %281 = arith.mulf %280, %279 : vector<8x256xf32>
    %282 = math.tanh %281 : vector<8x256xf32>
    %cst_124 = arith.constant 1.000000e+00 : f32
    %283 = vector.broadcast %cst_124 : f32 to vector<8x256xf32>
    %284 = arith.addf %283, %282 : vector<8x256xf32>
    %cst_125 = arith.constant 5.000000e-01 : f32
    %285 = vector.broadcast %cst_125 : f32 to vector<8x256xf32>
    %286 = arith.mulf %285, %284 : vector<8x256xf32>
    %287 = arith.mulf %274, %286 : vector<8x256xf32>
    %288 = arith.truncf %287 : vector<8x256xf32> to vector<8x256xbf16>
    %cst_126 = arith.constant dense<0.000000e+00> : vector<8x128xf32>
    %289 = tpu.matmul %288, %268, %cst_126 {dimension_numbers = #tpu.dot_dimension_numbers<[1], [0], [0], [1], [0, 0, 1, 1], [], []>} : vector<8x256xbf16>, vector<256x128xbf16>, vector<8x128xf32> -> vector<8x128xf32>
    %290 = vector.broadcast %270 : vector<1x128xf32> to vector<8x128xf32>
    %291 = arith.addf %289, %290 : vector<8x128xf32>
    %292 = arith.addf %236, %291 : vector<8x128xf32>
    %c0_127 = arith.constant 0 : index
    %c0_128 = arith.constant 0 : index
    %293 = vector.load %arg14[%c0_127, %c0_128] : memref<1x128xf32, #tpu.memory_space<vmem>>, vector<1x128xf32>
    %c0_129 = arith.constant 0 : index
    %c0_130 = arith.constant 0 : index
    %294 = vector.load %arg15[%c0_129, %c0_130] : memref<1x128xf32, #tpu.memory_space<vmem>>, vector<1x128xf32>
    %cst_131 = arith.constant dense<0.000000e+00> : vector<8xf32>
    %295 = vector.multi_reduction <add>, %292, %cst_131 [1] : vector<8x128xf32> to vector<8xf32>
    %296 = vector.shape_cast %295 : vector<8xf32> to vector<8x1xf32>
    %cst_132 = arith.constant 1.280000e+02 : f32
    %297 = vector.broadcast %cst_132 : f32 to vector<8x1xf32>
    %298 = arith.divf %296, %297 : vector<8x1xf32>
    %299 = vector.broadcast %298 : vector<8x1xf32> to vector<8x128xf32>
    %300 = arith.subf %292, %299 : vector<8x128xf32>
    %301 = arith.mulf %300, %300 : vector<8x128xf32>
    %cst_133 = arith.constant dense<0.000000e+00> : vector<8xf32>
    %302 = vector.multi_reduction <add>, %301, %cst_133 [1] : vector<8x128xf32> to vector<8xf32>
    %303 = vector.shape_cast %302 : vector<8xf32> to vector<8x1xf32>
    %cst_134 = arith.constant 1.280000e+02 : f32
    %304 = vector.broadcast %cst_134 : f32 to vector<8x1xf32>
    %305 = arith.divf %303, %304 : vector<8x1xf32>
    %cst_135 = arith.constant 9.99999974E-6 : f32
    %306 = vector.broadcast %cst_135 : f32 to vector<8x1xf32>
    %307 = arith.addf %305, %306 : vector<8x1xf32>
    %308 = math.rsqrt %307 : vector<8x1xf32>
    %309 = vector.broadcast %298 : vector<8x1xf32> to vector<8x128xf32>
    %310 = arith.subf %292, %309 : vector<8x128xf32>
    %311 = vector.broadcast %308 : vector<8x1xf32> to vector<8x128xf32>
    %312 = arith.mulf %310, %311 : vector<8x128xf32>
    %313 = vector.broadcast %293 : vector<1x128xf32> to vector<8x128xf32>
    %314 = arith.mulf %312, %313 : vector<8x128xf32>
    %315 = vector.broadcast %294 : vector<1x128xf32> to vector<8x128xf32>
    %316 = arith.addf %314, %315 : vector<8x128xf32>
    %317 = vector.shape_cast %1 : vector<1x8x128xf32> to vector<8x128xf32>
    %c0_136 = arith.constant 0 : index
    %c0_137 = arith.constant 0 : index
    %c0_138 = arith.constant 0 : index
    %318 = vector.load %arg16[%c0_136, %c0_137, %c0_138] : memref<2x1x128xf32, #tpu.memory_space<vmem>>, vector<1x1x128xf32>
    %319 = vector.shape_cast %318 : vector<1x1x128xf32> to vector<1x128xf32>
    %c0_139 = arith.constant 0 : index
    %c0_140 = arith.constant 0 : index
    %c0_141 = arith.constant 0 : index
    %320 = vector.load %arg17[%c0_139, %c0_140, %c0_141] : memref<2x1x128xf32, #tpu.memory_space<vmem>>, vector<1x1x128xf32>
    %321 = vector.shape_cast %320 : vector<1x1x128xf32> to vector<1x128xf32>
    %cst_142 = arith.constant dense<0.000000e+00> : vector<8xf32>
    %322 = vector.multi_reduction <add>, %317, %cst_142 [1] : vector<8x128xf32> to vector<8xf32>
    %323 = vector.shape_cast %322 : vector<8xf32> to vector<8x1xf32>
    %cst_143 = arith.constant 1.280000e+02 : f32
    %324 = vector.broadcast %cst_143 : f32 to vector<8x1xf32>
    %325 = arith.divf %323, %324 : vector<8x1xf32>
    %326 = vector.broadcast %325 : vector<8x1xf32> to vector<8x128xf32>
    %327 = arith.subf %317, %326 : vector<8x128xf32>
    %328 = arith.mulf %327, %327 : vector<8x128xf32>
    %cst_144 = arith.constant dense<0.000000e+00> : vector<8xf32>
    %329 = vector.multi_reduction <add>, %328, %cst_144 [1] : vector<8x128xf32> to vector<8xf32>
    %330 = vector.shape_cast %329 : vector<8xf32> to vector<8x1xf32>
    %cst_145 = arith.constant 1.280000e+02 : f32
    %331 = vector.broadcast %cst_145 : f32 to vector<8x1xf32>
    %332 = arith.divf %330, %331 : vector<8x1xf32>
    %cst_146 = arith.constant 9.99999974E-6 : f32
    %333 = vector.broadcast %cst_146 : f32 to vector<8x1xf32>
    %334 = arith.addf %332, %333 : vector<8x1xf32>
    %335 = math.rsqrt %334 : vector<8x1xf32>
    %336 = vector.broadcast %325 : vector<8x1xf32> to vector<8x128xf32>
    %337 = arith.subf %317, %336 : vector<8x128xf32>
    %338 = vector.broadcast %335 : vector<8x1xf32> to vector<8x128xf32>
    %339 = arith.mulf %337, %338 : vector<8x128xf32>
    %340 = vector.broadcast %319 : vector<1x128xf32> to vector<8x128xf32>
    %341 = arith.mulf %339, %340 : vector<8x128xf32>
    %342 = vector.broadcast %321 : vector<1x128xf32> to vector<8x128xf32>
    %343 = arith.addf %341, %342 : vector<8x128xf32>
    %c0_147 = arith.constant 0 : index
    %c0_148 = arith.constant 0 : index
    %c0_149 = arith.constant 0 : index
    %344 = vector.load %arg18[%c0_147, %c0_148, %c0_149] : memref<2x128x384xbf16, #tpu.memory_space<vmem>>, vector<1x128x384xbf16>
    %345 = vector.shape_cast %344 : vector<1x128x384xbf16> to vector<128x384xbf16>
    %c0_150 = arith.constant 0 : index
    %c0_151 = arith.constant 0 : index
    %c0_152 = arith.constant 0 : index
    %346 = vector.load %arg19[%c0_150, %c0_151, %c0_152] : memref<2x128x128xbf16, #tpu.memory_space<vmem>>, vector<1x128x128xbf16>
    %347 = vector.shape_cast %346 : vector<1x128x128xbf16> to vector<128x128xbf16>
    %c0_153 = arith.constant 0 : index
    %c0_154 = arith.constant 0 : index
    %c0_155 = arith.constant 0 : index
    %348 = vector.load %arg20[%c0_153, %c0_154, %c0_155] : memref<2x1x128xf32, #tpu.memory_space<vmem>>, vector<1x1x128xf32>
    %349 = vector.shape_cast %348 : vector<1x1x128xf32> to vector<1x128xf32>
    %350 = arith.truncf %343 : vector<8x128xf32> to vector<8x128xbf16>
    %cst_156 = arith.constant dense<0.000000e+00> : vector<8x384xf32>
    %351 = tpu.matmul %350, %345, %cst_156 {dimension_numbers = #tpu.dot_dimension_numbers<[1], [0], [0], [1], [0, 0, 1, 1], [], []>} : vector<8x128xbf16>, vector<128x384xbf16>, vector<8x384xf32> -> vector<8x384xf32>
    %352 = vector.extract_strided_slice %351 {offsets = [0, 0], sizes = [8, 128], strides = [1, 1]} : vector<8x384xf32> to vector<8x128xf32>
    %353 = vector.extract_strided_slice %351 {offsets = [0, 128], sizes = [8, 256], strides = [1, 1]} : vector<8x384xf32> to vector<8x256xf32>
    %354 = vector.extract_strided_slice %353 {offsets = [0, 0], sizes = [8, 128], strides = [1, 1]} : vector<8x256xf32> to vector<8x128xf32>
    %355 = vector.extract_strided_slice %353 {offsets = [0, 128], sizes = [8, 128], strides = [1, 1]} : vector<8x256xf32> to vector<8x128xf32>
    %cst_157 = arith.constant 0.176776692 : f32
    %356 = vector.broadcast %cst_157 : f32 to vector<8x128xf32>
    %357 = arith.mulf %352, %356 : vector<8x128xf32>
    %358 = vector.shape_cast %357 : vector<8x128xf32> to vector<1x8x128xf32>
    %359 = arith.truncf %358 : vector<1x8x128xf32> to vector<1x8x128xbf16>
    %360 = vector.shape_cast %354 : vector<8x128xf32> to vector<1x8x128xf32>
    %361 = arith.truncf %360 : vector<1x8x128xf32> to vector<1x8x128xbf16>
    %362 = vector.shape_cast %355 : vector<8x128xf32> to vector<1x8x128xf32>
    %363 = arith.truncf %362 : vector<1x8x128xf32> to vector<1x8x128xbf16>
    %364 = vector.extract_strided_slice %359 {offsets = [0, 0, 0], sizes = [1, 8, 32], strides = [1, 1, 1]} : vector<1x8x128xbf16> to vector<1x8x32xbf16>
    %365 = vector.extract_strided_slice %361 {offsets = [0, 0, 0], sizes = [1, 8, 32], strides = [1, 1, 1]} : vector<1x8x128xbf16> to vector<1x8x32xbf16>
    "tpu.trace_start"() <{level = 10 : i32, message = "bqd,bkd->bqk"}> : () -> ()
    %cst_158 = arith.constant dense<0.000000e+00> : vector<1x8x8xf32>
    %366 = tpu.matmul %364, %365, %cst_158 {dimension_numbers = #tpu.dot_dimension_numbers<[2], [2], [1], [1], [0, 0, 0, 1, 1, 1], [0], [0]>} : vector<1x8x32xbf16>, vector<1x8x32xbf16>, vector<1x8x8xf32> -> vector<1x8x8xf32>
    "tpu.trace_stop"() : () -> ()
    %367 = vector.extract_strided_slice %359 {offsets = [0, 0, 32], sizes = [1, 8, 32], strides = [1, 1, 1]} : vector<1x8x128xbf16> to vector<1x8x32xbf16>
    %368 = vector.extract_strided_slice %361 {offsets = [0, 0, 32], sizes = [1, 8, 32], strides = [1, 1, 1]} : vector<1x8x128xbf16> to vector<1x8x32xbf16>
    "tpu.trace_start"() <{level = 10 : i32, message = "bqd,bkd->bqk"}> : () -> ()
    %cst_159 = arith.constant dense<0.000000e+00> : vector<1x8x8xf32>
    %369 = tpu.matmul %367, %368, %cst_159 {dimension_numbers = #tpu.dot_dimension_numbers<[2], [2], [1], [1], [0, 0, 0, 1, 1, 1], [0], [0]>} : vector<1x8x32xbf16>, vector<1x8x32xbf16>, vector<1x8x8xf32> -> vector<1x8x8xf32>
    "tpu.trace_stop"() : () -> ()
    %370 = vector.extract_strided_slice %359 {offsets = [0, 0, 64], sizes = [1, 8, 32], strides = [1, 1, 1]} : vector<1x8x128xbf16> to vector<1x8x32xbf16>
    %371 = vector.extract_strided_slice %361 {offsets = [0, 0, 64], sizes = [1, 8, 32], strides = [1, 1, 1]} : vector<1x8x128xbf16> to vector<1x8x32xbf16>
    "tpu.trace_start"() <{level = 10 : i32, message = "bqd,bkd->bqk"}> : () -> ()
    %cst_160 = arith.constant dense<0.000000e+00> : vector<1x8x8xf32>
    %372 = tpu.matmul %370, %371, %cst_160 {dimension_numbers = #tpu.dot_dimension_numbers<[2], [2], [1], [1], [0, 0, 0, 1, 1, 1], [0], [0]>} : vector<1x8x32xbf16>, vector<1x8x32xbf16>, vector<1x8x8xf32> -> vector<1x8x8xf32>
    "tpu.trace_stop"() : () -> ()
    %373 = vector.extract_strided_slice %359 {offsets = [0, 0, 96], sizes = [1, 8, 32], strides = [1, 1, 1]} : vector<1x8x128xbf16> to vector<1x8x32xbf16>
    %374 = vector.extract_strided_slice %361 {offsets = [0, 0, 96], sizes = [1, 8, 32], strides = [1, 1, 1]} : vector<1x8x128xbf16> to vector<1x8x32xbf16>
    "tpu.trace_start"() <{level = 10 : i32, message = "bqd,bkd->bqk"}> : () -> ()
    %cst_161 = arith.constant dense<0.000000e+00> : vector<1x8x8xf32>
    %375 = tpu.matmul %373, %374, %cst_161 {dimension_numbers = #tpu.dot_dimension_numbers<[2], [2], [1], [1], [0, 0, 0, 1, 1, 1], [0], [0]>} : vector<1x8x32xbf16>, vector<1x8x32xbf16>, vector<1x8x8xf32> -> vector<1x8x8xf32>
    "tpu.trace_stop"() : () -> ()
    %376 = tpu.concatenate %366, %369, %372, %375 in 0 : vector<1x8x8xf32>, vector<1x8x8xf32>, vector<1x8x8xf32>, vector<1x8x8xf32> -> vector<4x8x8xf32>
    %377 = tpu.iota {dimensions = array<i32: 1>} : vector<4x8x8xi32>
    %378 = tpu.iota {dimensions = array<i32: 2>} : vector<4x8x8xi32>
    %379 = arith.cmpi sle, %378, %377 : vector<4x8x8xi32>
    %cst_162 = arith.constant -1.000000e+30 : f32
    %380 = vector.broadcast %cst_162 : f32 to vector<4x8x8xf32>
    %381 = arith.select %379, %376, %380 : vector<4x8x8xi1>, vector<4x8x8xf32>
    %cst_163 = arith.constant dense<0xFF800000> : vector<4x8xf32>
    %382 = vector.multi_reduction <maximumf>, %381, %cst_163 [2] : vector<4x8x8xf32> to vector<4x8xf32>
    %383 = vector.shape_cast %382 : vector<4x8xf32> to vector<4x8x1xf32>
    %384 = vector.broadcast %383 : vector<4x8x1xf32> to vector<4x8x8xf32>
    %385 = arith.subf %381, %384 : vector<4x8x8xf32>
    %386 = math.exp %385 : vector<4x8x8xf32>
    %cst_164 = arith.constant dense<0.000000e+00> : vector<4x8xf32>
    %387 = vector.multi_reduction <add>, %386, %cst_164 [2] : vector<4x8x8xf32> to vector<4x8xf32>
    %388 = vector.shape_cast %387 : vector<4x8xf32> to vector<4x8x1xf32>
    %389 = tpu.reciprocal %388 : vector<4x8x1xf32> -> vector<4x8x1xf32>
    %390 = vector.broadcast %389 : vector<4x8x1xf32> to vector<4x8x8xf32>
    %391 = arith.mulf %386, %390 : vector<4x8x8xf32>
    %392 = arith.truncf %391 : vector<4x8x8xf32> to vector<4x8x8xbf16>
    %393 = vector.extract_strided_slice %392 {offsets = [0, 0, 0], sizes = [1, 8, 8], strides = [1, 1, 1]} : vector<4x8x8xbf16> to vector<1x8x8xbf16>
    %394 = vector.extract_strided_slice %363 {offsets = [0, 0, 0], sizes = [1, 8, 32], strides = [1, 1, 1]} : vector<1x8x128xbf16> to vector<1x8x32xbf16>
    "tpu.trace_start"() <{level = 10 : i32, message = "bqk,bkd->bqd"}> : () -> ()
    %cst_165 = arith.constant dense<0.000000e+00> : vector<1x8x32xf32>
    %395 = tpu.matmul %393, %394, %cst_165 {dimension_numbers = #tpu.dot_dimension_numbers<[2], [1], [1], [2], [0, 0, 0, 1, 1, 2], [0], [0]>} : vector<1x8x8xbf16>, vector<1x8x32xbf16>, vector<1x8x32xf32> -> vector<1x8x32xf32>
    "tpu.trace_stop"() : () -> ()
    %396 = vector.extract_strided_slice %392 {offsets = [1, 0, 0], sizes = [1, 8, 8], strides = [1, 1, 1]} : vector<4x8x8xbf16> to vector<1x8x8xbf16>
    %397 = vector.extract_strided_slice %363 {offsets = [0, 0, 32], sizes = [1, 8, 32], strides = [1, 1, 1]} : vector<1x8x128xbf16> to vector<1x8x32xbf16>
    "tpu.trace_start"() <{level = 10 : i32, message = "bqk,bkd->bqd"}> : () -> ()
    %cst_166 = arith.constant dense<0.000000e+00> : vector<1x8x32xf32>
    %398 = tpu.matmul %396, %397, %cst_166 {dimension_numbers = #tpu.dot_dimension_numbers<[2], [1], [1], [2], [0, 0, 0, 1, 1, 2], [0], [0]>} : vector<1x8x8xbf16>, vector<1x8x32xbf16>, vector<1x8x32xf32> -> vector<1x8x32xf32>
    "tpu.trace_stop"() : () -> ()
    %399 = vector.extract_strided_slice %392 {offsets = [2, 0, 0], sizes = [1, 8, 8], strides = [1, 1, 1]} : vector<4x8x8xbf16> to vector<1x8x8xbf16>
    %400 = vector.extract_strided_slice %363 {offsets = [0, 0, 64], sizes = [1, 8, 32], strides = [1, 1, 1]} : vector<1x8x128xbf16> to vector<1x8x32xbf16>
    "tpu.trace_start"() <{level = 10 : i32, message = "bqk,bkd->bqd"}> : () -> ()
    %cst_167 = arith.constant dense<0.000000e+00> : vector<1x8x32xf32>
    %401 = tpu.matmul %399, %400, %cst_167 {dimension_numbers = #tpu.dot_dimension_numbers<[2], [1], [1], [2], [0, 0, 0, 1, 1, 2], [0], [0]>} : vector<1x8x8xbf16>, vector<1x8x32xbf16>, vector<1x8x32xf32> -> vector<1x8x32xf32>
    "tpu.trace_stop"() : () -> ()
    %402 = vector.extract_strided_slice %392 {offsets = [3, 0, 0], sizes = [1, 8, 8], strides = [1, 1, 1]} : vector<4x8x8xbf16> to vector<1x8x8xbf16>
    %403 = vector.extract_strided_slice %363 {offsets = [0, 0, 96], sizes = [1, 8, 32], strides = [1, 1, 1]} : vector<1x8x128xbf16> to vector<1x8x32xbf16>
    "tpu.trace_start"() <{level = 10 : i32, message = "bqk,bkd->bqd"}> : () -> ()
    %cst_168 = arith.constant dense<0.000000e+00> : vector<1x8x32xf32>
    %404 = tpu.matmul %402, %403, %cst_168 {dimension_numbers = #tpu.dot_dimension_numbers<[2], [1], [1], [2], [0, 0, 0, 1, 1, 2], [0], [0]>} : vector<1x8x8xbf16>, vector<1x8x32xbf16>, vector<1x8x32xf32> -> vector<1x8x32xf32>
    "tpu.trace_stop"() : () -> ()
    %405 = tpu.concatenate %395, %398, %401, %404 in 2 : vector<1x8x32xf32>, vector<1x8x32xf32>, vector<1x8x32xf32>, vector<1x8x32xf32> -> vector<1x8x128xf32>
    %406 = vector.shape_cast %405 : vector<1x8x128xf32> to vector<8x128xf32>
    %407 = arith.truncf %406 : vector<8x128xf32> to vector<8x128xbf16>
    %cst_169 = arith.constant dense<0.000000e+00> : vector<8x128xf32>
    %408 = tpu.matmul %407, %347, %cst_169 {dimension_numbers = #tpu.dot_dimension_numbers<[1], [0], [0], [1], [0, 0, 1, 1], [], []>} : vector<8x128xbf16>, vector<128x128xbf16>, vector<8x128xf32> -> vector<8x128xf32>
    %409 = vector.broadcast %349 : vector<1x128xf32> to vector<8x128xf32>
    %410 = arith.addf %408, %409 : vector<8x128xf32>
    %411 = arith.addf %317, %410 : vector<8x128xf32>
    %c0_170 = arith.constant 0 : index
    %c0_171 = arith.constant 0 : index
    %c0_172 = arith.constant 0 : index
    %412 = vector.load %arg21[%c0_170, %c0_171, %c0_172] : memref<2x1x128xf32, #tpu.memory_space<vmem>>, vector<1x1x128xf32>
    %413 = vector.shape_cast %412 : vector<1x1x128xf32> to vector<1x128xf32>
    %c0_173 = arith.constant 0 : index
    %c0_174 = arith.constant 0 : index
    %c0_175 = arith.constant 0 : index
    %414 = vector.load %arg22[%c0_173, %c0_174, %c0_175] : memref<2x1x128xf32, #tpu.memory_space<vmem>>, vector<1x1x128xf32>
    %415 = vector.shape_cast %414 : vector<1x1x128xf32> to vector<1x128xf32>
    %cst_176 = arith.constant dense<0.000000e+00> : vector<8xf32>
    %416 = vector.multi_reduction <add>, %411, %cst_176 [1] : vector<8x128xf32> to vector<8xf32>
    %417 = vector.shape_cast %416 : vector<8xf32> to vector<8x1xf32>
    %cst_177 = arith.constant 1.280000e+02 : f32
    %418 = vector.broadcast %cst_177 : f32 to vector<8x1xf32>
    %419 = arith.divf %417, %418 : vector<8x1xf32>
    %420 = vector.broadcast %419 : vector<8x1xf32> to vector<8x128xf32>
    %421 = arith.subf %411, %420 : vector<8x128xf32>
    %422 = arith.mulf %421, %421 : vector<8x128xf32>
    %cst_178 = arith.constant dense<0.000000e+00> : vector<8xf32>
    %423 = vector.multi_reduction <add>, %422, %cst_178 [1] : vector<8x128xf32> to vector<8xf32>
    %424 = vector.shape_cast %423 : vector<8xf32> to vector<8x1xf32>
    %cst_179 = arith.constant 1.280000e+02 : f32
    %425 = vector.broadcast %cst_179 : f32 to vector<8x1xf32>
    %426 = arith.divf %424, %425 : vector<8x1xf32>
    %cst_180 = arith.constant 9.99999974E-6 : f32
    %427 = vector.broadcast %cst_180 : f32 to vector<8x1xf32>
    %428 = arith.addf %426, %427 : vector<8x1xf32>
    %429 = math.rsqrt %428 : vector<8x1xf32>
    %430 = vector.broadcast %419 : vector<8x1xf32> to vector<8x128xf32>
    %431 = arith.subf %411, %430 : vector<8x128xf32>
    %432 = vector.broadcast %429 : vector<8x1xf32> to vector<8x128xf32>
    %433 = arith.mulf %431, %432 : vector<8x128xf32>
    %434 = vector.broadcast %413 : vector<1x128xf32> to vector<8x128xf32>
    %435 = arith.mulf %433, %434 : vector<8x128xf32>
    %436 = vector.broadcast %415 : vector<1x128xf32> to vector<8x128xf32>
    %437 = arith.addf %435, %436 : vector<8x128xf32>
    %c0_181 = arith.constant 0 : index
    %c0_182 = arith.constant 0 : index
    %c0_183 = arith.constant 0 : index
    %438 = vector.load %arg23[%c0_181, %c0_182, %c0_183] : memref<2x128x384xbf16, #tpu.memory_space<vmem>>, vector<1x128x384xbf16>
    %439 = vector.shape_cast %438 : vector<1x128x384xbf16> to vector<128x384xbf16>
    %c0_184 = arith.constant 0 : index
    %c0_185 = arith.constant 0 : index
    %c0_186 = arith.constant 0 : index
    %440 = vector.load %arg24[%c0_184, %c0_185, %c0_186] : memref<2x128x128xbf16, #tpu.memory_space<vmem>>, vector<1x128x128xbf16>
    %441 = vector.shape_cast %440 : vector<1x128x128xbf16> to vector<128x128xbf16>
    %c0_187 = arith.constant 0 : index
    %c0_188 = arith.constant 0 : index
    %c0_189 = arith.constant 0 : index
    %442 = vector.load %arg25[%c0_187, %c0_188, %c0_189] : memref<2x1x128xf32, #tpu.memory_space<vmem>>, vector<1x1x128xf32>
    %443 = vector.shape_cast %442 : vector<1x1x128xf32> to vector<1x128xf32>
    %444 = arith.truncf %437 : vector<8x128xf32> to vector<8x128xbf16>
    %445 = vector.extract_strided_slice %439 {offsets = [0, 0], sizes = [128, 128], strides = [1, 1]} : vector<128x384xbf16> to vector<128x128xbf16>
    %cst_190 = arith.constant dense<0.000000e+00> : vector<8x128xf32>
    %446 = tpu.matmul %444, %445, %cst_190 {dimension_numbers = #tpu.dot_dimension_numbers<[1], [0], [0], [1], [0, 0, 1, 1], [], []>} : vector<8x128xbf16>, vector<128x128xbf16>, vector<8x128xf32> -> vector<8x128xf32>
    %447 = arith.truncf %316 : vector<8x128xf32> to vector<8x128xbf16>
    %448 = vector.extract_strided_slice %439 {offsets = [0, 128], sizes = [128, 256], strides = [1, 1]} : vector<128x384xbf16> to vector<128x256xbf16>
    %cst_191 = arith.constant dense<0.000000e+00> : vector<8x256xf32>
    %449 = tpu.matmul %447, %448, %cst_191 {dimension_numbers = #tpu.dot_dimension_numbers<[1], [0], [0], [1], [0, 0, 1, 1], [], []>} : vector<8x128xbf16>, vector<128x256xbf16>, vector<8x256xf32> -> vector<8x256xf32>
    %450 = vector.extract_strided_slice %449 {offsets = [0, 0], sizes = [8, 128], strides = [1, 1]} : vector<8x256xf32> to vector<8x128xf32>
    %451 = vector.extract_strided_slice %449 {offsets = [0, 128], sizes = [8, 128], strides = [1, 1]} : vector<8x256xf32> to vector<8x128xf32>
    %cst_192 = arith.constant 0.176776692 : f32
    %452 = vector.broadcast %cst_192 : f32 to vector<8x128xf32>
    %453 = arith.mulf %446, %452 : vector<8x128xf32>
    %454 = vector.shape_cast %453 : vector<8x128xf32> to vector<1x8x128xf32>
    %455 = arith.truncf %454 : vector<1x8x128xf32> to vector<1x8x128xbf16>
    %456 = vector.shape_cast %450 : vector<8x128xf32> to vector<1x8x128xf32>
    %457 = arith.truncf %456 : vector<1x8x128xf32> to vector<1x8x128xbf16>
    %458 = vector.shape_cast %451 : vector<8x128xf32> to vector<1x8x128xf32>
    %459 = arith.truncf %458 : vector<1x8x128xf32> to vector<1x8x128xbf16>
    %460 = vector.extract_strided_slice %455 {offsets = [0, 0, 0], sizes = [1, 8, 32], strides = [1, 1, 1]} : vector<1x8x128xbf16> to vector<1x8x32xbf16>
    %461 = vector.extract_strided_slice %457 {offsets = [0, 0, 0], sizes = [1, 8, 32], strides = [1, 1, 1]} : vector<1x8x128xbf16> to vector<1x8x32xbf16>
    "tpu.trace_start"() <{level = 10 : i32, message = "bqd,bkd->bqk"}> : () -> ()
    %cst_193 = arith.constant dense<0.000000e+00> : vector<1x8x8xf32>
    %462 = tpu.matmul %460, %461, %cst_193 {dimension_numbers = #tpu.dot_dimension_numbers<[2], [2], [1], [1], [0, 0, 0, 1, 1, 1], [0], [0]>} : vector<1x8x32xbf16>, vector<1x8x32xbf16>, vector<1x8x8xf32> -> vector<1x8x8xf32>
    "tpu.trace_stop"() : () -> ()
    %463 = vector.extract_strided_slice %455 {offsets = [0, 0, 32], sizes = [1, 8, 32], strides = [1, 1, 1]} : vector<1x8x128xbf16> to vector<1x8x32xbf16>
    %464 = vector.extract_strided_slice %457 {offsets = [0, 0, 32], sizes = [1, 8, 32], strides = [1, 1, 1]} : vector<1x8x128xbf16> to vector<1x8x32xbf16>
    "tpu.trace_start"() <{level = 10 : i32, message = "bqd,bkd->bqk"}> : () -> ()
    %cst_194 = arith.constant dense<0.000000e+00> : vector<1x8x8xf32>
    %465 = tpu.matmul %463, %464, %cst_194 {dimension_numbers = #tpu.dot_dimension_numbers<[2], [2], [1], [1], [0, 0, 0, 1, 1, 1], [0], [0]>} : vector<1x8x32xbf16>, vector<1x8x32xbf16>, vector<1x8x8xf32> -> vector<1x8x8xf32>
    "tpu.trace_stop"() : () -> ()
    %466 = vector.extract_strided_slice %455 {offsets = [0, 0, 64], sizes = [1, 8, 32], strides = [1, 1, 1]} : vector<1x8x128xbf16> to vector<1x8x32xbf16>
    %467 = vector.extract_strided_slice %457 {offsets = [0, 0, 64], sizes = [1, 8, 32], strides = [1, 1, 1]} : vector<1x8x128xbf16> to vector<1x8x32xbf16>
    "tpu.trace_start"() <{level = 10 : i32, message = "bqd,bkd->bqk"}> : () -> ()
    %cst_195 = arith.constant dense<0.000000e+00> : vector<1x8x8xf32>
    %468 = tpu.matmul %466, %467, %cst_195 {dimension_numbers = #tpu.dot_dimension_numbers<[2], [2], [1], [1], [0, 0, 0, 1, 1, 1], [0], [0]>} : vector<1x8x32xbf16>, vector<1x8x32xbf16>, vector<1x8x8xf32> -> vector<1x8x8xf32>
    "tpu.trace_stop"() : () -> ()
    %469 = vector.extract_strided_slice %455 {offsets = [0, 0, 96], sizes = [1, 8, 32], strides = [1, 1, 1]} : vector<1x8x128xbf16> to vector<1x8x32xbf16>
    %470 = vector.extract_strided_slice %457 {offsets = [0, 0, 96], sizes = [1, 8, 32], strides = [1, 1, 1]} : vector<1x8x128xbf16> to vector<1x8x32xbf16>
    "tpu.trace_start"() <{level = 10 : i32, message = "bqd,bkd->bqk"}> : () -> ()
    %cst_196 = arith.constant dense<0.000000e+00> : vector<1x8x8xf32>
    %471 = tpu.matmul %469, %470, %cst_196 {dimension_numbers = #tpu.dot_dimension_numbers<[2], [2], [1], [1], [0, 0, 0, 1, 1, 1], [0], [0]>} : vector<1x8x32xbf16>, vector<1x8x32xbf16>, vector<1x8x8xf32> -> vector<1x8x8xf32>
    "tpu.trace_stop"() : () -> ()
    %472 = tpu.concatenate %462, %465, %468, %471 in 0 : vector<1x8x8xf32>, vector<1x8x8xf32>, vector<1x8x8xf32>, vector<1x8x8xf32> -> vector<4x8x8xf32>
    %cst_197 = arith.constant dense<0xFF800000> : vector<4x8xf32>
    %473 = vector.multi_reduction <maximumf>, %472, %cst_197 [2] : vector<4x8x8xf32> to vector<4x8xf32>
    %474 = vector.shape_cast %473 : vector<4x8xf32> to vector<4x8x1xf32>
    %475 = vector.broadcast %474 : vector<4x8x1xf32> to vector<4x8x8xf32>
    %476 = arith.subf %472, %475 : vector<4x8x8xf32>
    %477 = math.exp %476 : vector<4x8x8xf32>
    %cst_198 = arith.constant dense<0.000000e+00> : vector<4x8xf32>
    %478 = vector.multi_reduction <add>, %477, %cst_198 [2] : vector<4x8x8xf32> to vector<4x8xf32>
    %479 = vector.shape_cast %478 : vector<4x8xf32> to vector<4x8x1xf32>
    %480 = tpu.reciprocal %479 : vector<4x8x1xf32> -> vector<4x8x1xf32>
    %481 = vector.broadcast %480 : vector<4x8x1xf32> to vector<4x8x8xf32>
    %482 = arith.mulf %477, %481 : vector<4x8x8xf32>
    %483 = arith.truncf %482 : vector<4x8x8xf32> to vector<4x8x8xbf16>
    %484 = vector.extract_strided_slice %483 {offsets = [0, 0, 0], sizes = [1, 8, 8], strides = [1, 1, 1]} : vector<4x8x8xbf16> to vector<1x8x8xbf16>
    %485 = vector.extract_strided_slice %459 {offsets = [0, 0, 0], sizes = [1, 8, 32], strides = [1, 1, 1]} : vector<1x8x128xbf16> to vector<1x8x32xbf16>
    "tpu.trace_start"() <{level = 10 : i32, message = "bqk,bkd->bqd"}> : () -> ()
    %cst_199 = arith.constant dense<0.000000e+00> : vector<1x8x32xf32>
    %486 = tpu.matmul %484, %485, %cst_199 {dimension_numbers = #tpu.dot_dimension_numbers<[2], [1], [1], [2], [0, 0, 0, 1, 1, 2], [0], [0]>} : vector<1x8x8xbf16>, vector<1x8x32xbf16>, vector<1x8x32xf32> -> vector<1x8x32xf32>
    "tpu.trace_stop"() : () -> ()
    %487 = vector.extract_strided_slice %483 {offsets = [1, 0, 0], sizes = [1, 8, 8], strides = [1, 1, 1]} : vector<4x8x8xbf16> to vector<1x8x8xbf16>
    %488 = vector.extract_strided_slice %459 {offsets = [0, 0, 32], sizes = [1, 8, 32], strides = [1, 1, 1]} : vector<1x8x128xbf16> to vector<1x8x32xbf16>
    "tpu.trace_start"() <{level = 10 : i32, message = "bqk,bkd->bqd"}> : () -> ()
    %cst_200 = arith.constant dense<0.000000e+00> : vector<1x8x32xf32>
    %489 = tpu.matmul %487, %488, %cst_200 {dimension_numbers = #tpu.dot_dimension_numbers<[2], [1], [1], [2], [0, 0, 0, 1, 1, 2], [0], [0]>} : vector<1x8x8xbf16>, vector<1x8x32xbf16>, vector<1x8x32xf32> -> vector<1x8x32xf32>
    "tpu.trace_stop"() : () -> ()
    %490 = vector.extract_strided_slice %483 {offsets = [2, 0, 0], sizes = [1, 8, 8], strides = [1, 1, 1]} : vector<4x8x8xbf16> to vector<1x8x8xbf16>
    %491 = vector.extract_strided_slice %459 {offsets = [0, 0, 64], sizes = [1, 8, 32], strides = [1, 1, 1]} : vector<1x8x128xbf16> to vector<1x8x32xbf16>
    "tpu.trace_start"() <{level = 10 : i32, message = "bqk,bkd->bqd"}> : () -> ()
    %cst_201 = arith.constant dense<0.000000e+00> : vector<1x8x32xf32>
    %492 = tpu.matmul %490, %491, %cst_201 {dimension_numbers = #tpu.dot_dimension_numbers<[2], [1], [1], [2], [0, 0, 0, 1, 1, 2], [0], [0]>} : vector<1x8x8xbf16>, vector<1x8x32xbf16>, vector<1x8x32xf32> -> vector<1x8x32xf32>
    "tpu.trace_stop"() : () -> ()
    %493 = vector.extract_strided_slice %483 {offsets = [3, 0, 0], sizes = [1, 8, 8], strides = [1, 1, 1]} : vector<4x8x8xbf16> to vector<1x8x8xbf16>
    %494 = vector.extract_strided_slice %459 {offsets = [0, 0, 96], sizes = [1, 8, 32], strides = [1, 1, 1]} : vector<1x8x128xbf16> to vector<1x8x32xbf16>
    "tpu.trace_start"() <{level = 10 : i32, message = "bqk,bkd->bqd"}> : () -> ()
    %cst_202 = arith.constant dense<0.000000e+00> : vector<1x8x32xf32>
    %495 = tpu.matmul %493, %494, %cst_202 {dimension_numbers = #tpu.dot_dimension_numbers<[2], [1], [1], [2], [0, 0, 0, 1, 1, 2], [0], [0]>} : vector<1x8x8xbf16>, vector<1x8x32xbf16>, vector<1x8x32xf32> -> vector<1x8x32xf32>
    "tpu.trace_stop"() : () -> ()
    %496 = tpu.concatenate %486, %489, %492, %495 in 2 : vector<1x8x32xf32>, vector<1x8x32xf32>, vector<1x8x32xf32>, vector<1x8x32xf32> -> vector<1x8x128xf32>
    %497 = vector.shape_cast %496 : vector<1x8x128xf32> to vector<8x128xf32>
    %498 = arith.truncf %497 : vector<8x128xf32> to vector<8x128xbf16>
    %cst_203 = arith.constant dense<0.000000e+00> : vector<8x128xf32>
    %499 = tpu.matmul %498, %441, %cst_203 {dimension_numbers = #tpu.dot_dimension_numbers<[1], [0], [0], [1], [0, 0, 1, 1], [], []>} : vector<8x128xbf16>, vector<128x128xbf16>, vector<8x128xf32> -> vector<8x128xf32>
    %500 = vector.broadcast %443 : vector<1x128xf32> to vector<8x128xf32>
    %501 = arith.addf %499, %500 : vector<8x128xf32>
    %502 = arith.addf %411, %501 : vector<8x128xf32>
    %c0_204 = arith.constant 0 : index
    %c0_205 = arith.constant 0 : index
    %c0_206 = arith.constant 0 : index
    %503 = vector.load %arg26[%c0_204, %c0_205, %c0_206] : memref<2x1x128xf32, #tpu.memory_space<vmem>>, vector<1x1x128xf32>
    %504 = vector.shape_cast %503 : vector<1x1x128xf32> to vector<1x128xf32>
    %c0_207 = arith.constant 0 : index
    %c0_208 = arith.constant 0 : index
    %c0_209 = arith.constant 0 : index
    %505 = vector.load %arg27[%c0_207, %c0_208, %c0_209] : memref<2x1x128xf32, #tpu.memory_space<vmem>>, vector<1x1x128xf32>
    %506 = vector.shape_cast %505 : vector<1x1x128xf32> to vector<1x128xf32>
    %cst_210 = arith.constant dense<0.000000e+00> : vector<8xf32>
    %507 = vector.multi_reduction <add>, %502, %cst_210 [1] : vector<8x128xf32> to vector<8xf32>
    %508 = vector.shape_cast %507 : vector<8xf32> to vector<8x1xf32>
    %cst_211 = arith.constant 1.280000e+02 : f32
    %509 = vector.broadcast %cst_211 : f32 to vector<8x1xf32>
    %510 = arith.divf %508, %509 : vector<8x1xf32>
    %511 = vector.broadcast %510 : vector<8x1xf32> to vector<8x128xf32>
    %512 = arith.subf %502, %511 : vector<8x128xf32>
    %513 = arith.mulf %512, %512 : vector<8x128xf32>
    %cst_212 = arith.constant dense<0.000000e+00> : vector<8xf32>
    %514 = vector.multi_reduction <add>, %513, %cst_212 [1] : vector<8x128xf32> to vector<8xf32>
    %515 = vector.shape_cast %514 : vector<8xf32> to vector<8x1xf32>
    %cst_213 = arith.constant 1.280000e+02 : f32
    %516 = vector.broadcast %cst_213 : f32 to vector<8x1xf32>
    %517 = arith.divf %515, %516 : vector<8x1xf32>
    %cst_214 = arith.constant 9.99999974E-6 : f32
    %518 = vector.broadcast %cst_214 : f32 to vector<8x1xf32>
    %519 = arith.addf %517, %518 : vector<8x1xf32>
    %520 = math.rsqrt %519 : vector<8x1xf32>
    %521 = vector.broadcast %510 : vector<8x1xf32> to vector<8x128xf32>
    %522 = arith.subf %502, %521 : vector<8x128xf32>
    %523 = vector.broadcast %520 : vector<8x1xf32> to vector<8x128xf32>
    %524 = arith.mulf %522, %523 : vector<8x128xf32>
    %525 = vector.broadcast %504 : vector<1x128xf32> to vector<8x128xf32>
    %526 = arith.mulf %524, %525 : vector<8x128xf32>
    %527 = vector.broadcast %506 : vector<1x128xf32> to vector<8x128xf32>
    %528 = arith.addf %526, %527 : vector<8x128xf32>
    %c0_215 = arith.constant 0 : index
    %c0_216 = arith.constant 0 : index
    %c0_217 = arith.constant 0 : index
    %529 = vector.load %arg28[%c0_215, %c0_216, %c0_217] : memref<2x128x256xbf16, #tpu.memory_space<vmem>>, vector<1x128x256xbf16>
    %530 = vector.shape_cast %529 : vector<1x128x256xbf16> to vector<128x256xbf16>
    %c0_218 = arith.constant 0 : index
    %c0_219 = arith.constant 0 : index
    %c0_220 = arith.constant 0 : index
    %531 = vector.load %arg29[%c0_218, %c0_219, %c0_220] : memref<2x1x256xf32, #tpu.memory_space<vmem>>, vector<1x1x256xf32>
    %532 = vector.shape_cast %531 : vector<1x1x256xf32> to vector<1x256xf32>
    %c0_221 = arith.constant 0 : index
    %c0_222 = arith.constant 0 : index
    %c0_223 = arith.constant 0 : index
    %533 = vector.load %arg30[%c0_221, %c0_222, %c0_223] : memref<2x256x128xbf16, #tpu.memory_space<vmem>>, vector<1x256x128xbf16>
    %534 = vector.shape_cast %533 : vector<1x256x128xbf16> to vector<256x128xbf16>
    %c0_224 = arith.constant 0 : index
    %c0_225 = arith.constant 0 : index
    %c0_226 = arith.constant 0 : index
    %535 = vector.load %arg31[%c0_224, %c0_225, %c0_226] : memref<2x1x128xf32, #tpu.memory_space<vmem>>, vector<1x1x128xf32>
    %536 = vector.shape_cast %535 : vector<1x1x128xf32> to vector<1x128xf32>
    %537 = arith.truncf %528 : vector<8x128xf32> to vector<8x128xbf16>
    %cst_227 = arith.constant dense<0.000000e+00> : vector<8x256xf32>
    %538 = tpu.matmul %537, %530, %cst_227 {dimension_numbers = #tpu.dot_dimension_numbers<[1], [0], [0], [1], [0, 0, 1, 1], [], []>} : vector<8x128xbf16>, vector<128x256xbf16>, vector<8x256xf32> -> vector<8x256xf32>
    %539 = vector.broadcast %532 : vector<1x256xf32> to vector<8x256xf32>
    %540 = arith.addf %538, %539 : vector<8x256xf32>
    %541 = arith.mulf %540, %540 : vector<8x256xf32>
    %542 = arith.mulf %540, %541 : vector<8x256xf32>
    %cst_228 = arith.constant 4.471500e-02 : f32
    %543 = vector.broadcast %cst_228 : f32 to vector<8x256xf32>
    %544 = arith.mulf %543, %542 : vector<8x256xf32>
    %545 = arith.addf %540, %544 : vector<8x256xf32>
    %cst_229 = arith.constant 0.797884583 : f32
    %546 = vector.broadcast %cst_229 : f32 to vector<8x256xf32>
    %547 = arith.mulf %546, %545 : vector<8x256xf32>
    %548 = math.tanh %547 : vector<8x256xf32>
    %cst_230 = arith.constant 1.000000e+00 : f32
    %549 = vector.broadcast %cst_230 : f32 to vector<8x256xf32>
    %550 = arith.addf %549, %548 : vector<8x256xf32>
    %cst_231 = arith.constant 5.000000e-01 : f32
    %551 = vector.broadcast %cst_231 : f32 to vector<8x256xf32>
    %552 = arith.mulf %551, %550 : vector<8x256xf32>
    %553 = arith.mulf %540, %552 : vector<8x256xf32>
    %554 = arith.truncf %553 : vector<8x256xf32> to vector<8x256xbf16>
    %cst_232 = arith.constant dense<0.000000e+00> : vector<8x128xf32>
    %555 = tpu.matmul %554, %534, %cst_232 {dimension_numbers = #tpu.dot_dimension_numbers<[1], [0], [0], [1], [0, 0, 1, 1], [], []>} : vector<8x256xbf16>, vector<256x128xbf16>, vector<8x128xf32> -> vector<8x128xf32>
    %556 = vector.broadcast %536 : vector<1x128xf32> to vector<8x128xf32>
    %557 = arith.addf %555, %556 : vector<8x128xf32>
    %558 = arith.addf %502, %557 : vector<8x128xf32>
    %c1_233 = arith.constant 1 : index
    %c0_234 = arith.constant 0 : index
    %c0_235 = arith.constant 0 : index
    %559 = vector.load %arg16[%c1_233, %c0_234, %c0_235] : memref<2x1x128xf32, #tpu.memory_space<vmem>>, vector<1x1x128xf32>
    %560 = vector.shape_cast %559 : vector<1x1x128xf32> to vector<1x128xf32>
    %c1_236 = arith.constant 1 : index
    %c0_237 = arith.constant 0 : index
    %c0_238 = arith.constant 0 : index
    %561 = vector.load %arg17[%c1_236, %c0_237, %c0_238] : memref<2x1x128xf32, #tpu.memory_space<vmem>>, vector<1x1x128xf32>
    %562 = vector.shape_cast %561 : vector<1x1x128xf32> to vector<1x128xf32>
    %cst_239 = arith.constant dense<0.000000e+00> : vector<8xf32>
    %563 = vector.multi_reduction <add>, %558, %cst_239 [1] : vector<8x128xf32> to vector<8xf32>
    %564 = vector.shape_cast %563 : vector<8xf32> to vector<8x1xf32>
    %cst_240 = arith.constant 1.280000e+02 : f32
    %565 = vector.broadcast %cst_240 : f32 to vector<8x1xf32>
    %566 = arith.divf %564, %565 : vector<8x1xf32>
    %567 = vector.broadcast %566 : vector<8x1xf32> to vector<8x128xf32>
    %568 = arith.subf %558, %567 : vector<8x128xf32>
    %569 = arith.mulf %568, %568 : vector<8x128xf32>
    %cst_241 = arith.constant dense<0.000000e+00> : vector<8xf32>
    %570 = vector.multi_reduction <add>, %569, %cst_241 [1] : vector<8x128xf32> to vector<8xf32>
    %571 = vector.shape_cast %570 : vector<8xf32> to vector<8x1xf32>
    %cst_242 = arith.constant 1.280000e+02 : f32
    %572 = vector.broadcast %cst_242 : f32 to vector<8x1xf32>
    %573 = arith.divf %571, %572 : vector<8x1xf32>
    %cst_243 = arith.constant 9.99999974E-6 : f32
    %574 = vector.broadcast %cst_243 : f32 to vector<8x1xf32>
    %575 = arith.addf %573, %574 : vector<8x1xf32>
    %576 = math.rsqrt %575 : vector<8x1xf32>
    %577 = vector.broadcast %566 : vector<8x1xf32> to vector<8x128xf32>
    %578 = arith.subf %558, %577 : vector<8x128xf32>
    %579 = vector.broadcast %576 : vector<8x1xf32> to vector<8x128xf32>
    %580 = arith.mulf %578, %579 : vector<8x128xf32>
    %581 = vector.broadcast %560 : vector<1x128xf32> to vector<8x128xf32>
    %582 = arith.mulf %580, %581 : vector<8x128xf32>
    %583 = vector.broadcast %562 : vector<1x128xf32> to vector<8x128xf32>
    %584 = arith.addf %582, %583 : vector<8x128xf32>
    %c1_244 = arith.constant 1 : index
    %c0_245 = arith.constant 0 : index
    %c0_246 = arith.constant 0 : index
    %585 = vector.load %arg18[%c1_244, %c0_245, %c0_246] : memref<2x128x384xbf16, #tpu.memory_space<vmem>>, vector<1x128x384xbf16>
    %586 = vector.shape_cast %585 : vector<1x128x384xbf16> to vector<128x384xbf16>
    %c1_247 = arith.constant 1 : index
    %c0_248 = arith.constant 0 : index
    %c0_249 = arith.constant 0 : index
    %587 = vector.load %arg19[%c1_247, %c0_248, %c0_249] : memref<2x128x128xbf16, #tpu.memory_space<vmem>>, vector<1x128x128xbf16>
    %588 = vector.shape_cast %587 : vector<1x128x128xbf16> to vector<128x128xbf16>
    %c1_250 = arith.constant 1 : index
    %c0_251 = arith.constant 0 : index
    %c0_252 = arith.constant 0 : index
    %589 = vector.load %arg20[%c1_250, %c0_251, %c0_252] : memref<2x1x128xf32, #tpu.memory_space<vmem>>, vector<1x1x128xf32>
    %590 = vector.shape_cast %589 : vector<1x1x128xf32> to vector<1x128xf32>
    %591 = arith.truncf %584 : vector<8x128xf32> to vector<8x128xbf16>
    %cst_253 = arith.constant dense<0.000000e+00> : vector<8x384xf32>
    %592 = tpu.matmul %591, %586, %cst_253 {dimension_numbers = #tpu.dot_dimension_numbers<[1], [0], [0], [1], [0, 0, 1, 1], [], []>} : vector<8x128xbf16>, vector<128x384xbf16>, vector<8x384xf32> -> vector<8x384xf32>
    %593 = vector.extract_strided_slice %592 {offsets = [0, 0], sizes = [8, 128], strides = [1, 1]} : vector<8x384xf32> to vector<8x128xf32>
    %594 = vector.extract_strided_slice %592 {offsets = [0, 128], sizes = [8, 256], strides = [1, 1]} : vector<8x384xf32> to vector<8x256xf32>
    %595 = vector.extract_strided_slice %594 {offsets = [0, 0], sizes = [8, 128], strides = [1, 1]} : vector<8x256xf32> to vector<8x128xf32>
    %596 = vector.extract_strided_slice %594 {offsets = [0, 128], sizes = [8, 128], strides = [1, 1]} : vector<8x256xf32> to vector<8x128xf32>
    %cst_254 = arith.constant 0.176776692 : f32
    %597 = vector.broadcast %cst_254 : f32 to vector<8x128xf32>
    %598 = arith.mulf %593, %597 : vector<8x128xf32>
    %599 = vector.shape_cast %598 : vector<8x128xf32> to vector<1x8x128xf32>
    %600 = arith.truncf %599 : vector<1x8x128xf32> to vector<1x8x128xbf16>
    %601 = vector.shape_cast %595 : vector<8x128xf32> to vector<1x8x128xf32>
    %602 = arith.truncf %601 : vector<1x8x128xf32> to vector<1x8x128xbf16>
    %603 = vector.shape_cast %596 : vector<8x128xf32> to vector<1x8x128xf32>
    %604 = arith.truncf %603 : vector<1x8x128xf32> to vector<1x8x128xbf16>
    %605 = vector.extract_strided_slice %600 {offsets = [0, 0, 0], sizes = [1, 8, 32], strides = [1, 1, 1]} : vector<1x8x128xbf16> to vector<1x8x32xbf16>
    %606 = vector.extract_strided_slice %602 {offsets = [0, 0, 0], sizes = [1, 8, 32], strides = [1, 1, 1]} : vector<1x8x128xbf16> to vector<1x8x32xbf16>
    "tpu.trace_start"() <{level = 10 : i32, message = "bqd,bkd->bqk"}> : () -> ()
    %cst_255 = arith.constant dense<0.000000e+00> : vector<1x8x8xf32>
    %607 = tpu.matmul %605, %606, %cst_255 {dimension_numbers = #tpu.dot_dimension_numbers<[2], [2], [1], [1], [0, 0, 0, 1, 1, 1], [0], [0]>} : vector<1x8x32xbf16>, vector<1x8x32xbf16>, vector<1x8x8xf32> -> vector<1x8x8xf32>
    "tpu.trace_stop"() : () -> ()
    %608 = vector.extract_strided_slice %600 {offsets = [0, 0, 32], sizes = [1, 8, 32], strides = [1, 1, 1]} : vector<1x8x128xbf16> to vector<1x8x32xbf16>
    %609 = vector.extract_strided_slice %602 {offsets = [0, 0, 32], sizes = [1, 8, 32], strides = [1, 1, 1]} : vector<1x8x128xbf16> to vector<1x8x32xbf16>
    "tpu.trace_start"() <{level = 10 : i32, message = "bqd,bkd->bqk"}> : () -> ()
    %cst_256 = arith.constant dense<0.000000e+00> : vector<1x8x8xf32>
    %610 = tpu.matmul %608, %609, %cst_256 {dimension_numbers = #tpu.dot_dimension_numbers<[2], [2], [1], [1], [0, 0, 0, 1, 1, 1], [0], [0]>} : vector<1x8x32xbf16>, vector<1x8x32xbf16>, vector<1x8x8xf32> -> vector<1x8x8xf32>
    "tpu.trace_stop"() : () -> ()
    %611 = vector.extract_strided_slice %600 {offsets = [0, 0, 64], sizes = [1, 8, 32], strides = [1, 1, 1]} : vector<1x8x128xbf16> to vector<1x8x32xbf16>
    %612 = vector.extract_strided_slice %602 {offsets = [0, 0, 64], sizes = [1, 8, 32], strides = [1, 1, 1]} : vector<1x8x128xbf16> to vector<1x8x32xbf16>
    "tpu.trace_start"() <{level = 10 : i32, message = "bqd,bkd->bqk"}> : () -> ()
    %cst_257 = arith.constant dense<0.000000e+00> : vector<1x8x8xf32>
    %613 = tpu.matmul %611, %612, %cst_257 {dimension_numbers = #tpu.dot_dimension_numbers<[2], [2], [1], [1], [0, 0, 0, 1, 1, 1], [0], [0]>} : vector<1x8x32xbf16>, vector<1x8x32xbf16>, vector<1x8x8xf32> -> vector<1x8x8xf32>
    "tpu.trace_stop"() : () -> ()
    %614 = vector.extract_strided_slice %600 {offsets = [0, 0, 96], sizes = [1, 8, 32], strides = [1, 1, 1]} : vector<1x8x128xbf16> to vector<1x8x32xbf16>
    %615 = vector.extract_strided_slice %602 {offsets = [0, 0, 96], sizes = [1, 8, 32], strides = [1, 1, 1]} : vector<1x8x128xbf16> to vector<1x8x32xbf16>
    "tpu.trace_start"() <{level = 10 : i32, message = "bqd,bkd->bqk"}> : () -> ()
    %cst_258 = arith.constant dense<0.000000e+00> : vector<1x8x8xf32>
    %616 = tpu.matmul %614, %615, %cst_258 {dimension_numbers = #tpu.dot_dimension_numbers<[2], [2], [1], [1], [0, 0, 0, 1, 1, 1], [0], [0]>} : vector<1x8x32xbf16>, vector<1x8x32xbf16>, vector<1x8x8xf32> -> vector<1x8x8xf32>
    "tpu.trace_stop"() : () -> ()
    %617 = tpu.concatenate %607, %610, %613, %616 in 0 : vector<1x8x8xf32>, vector<1x8x8xf32>, vector<1x8x8xf32>, vector<1x8x8xf32> -> vector<4x8x8xf32>
    %618 = tpu.iota {dimensions = array<i32: 1>} : vector<4x8x8xi32>
    %619 = tpu.iota {dimensions = array<i32: 2>} : vector<4x8x8xi32>
    %620 = arith.cmpi sle, %619, %618 : vector<4x8x8xi32>
    %cst_259 = arith.constant -1.000000e+30 : f32
    %621 = vector.broadcast %cst_259 : f32 to vector<4x8x8xf32>
    %622 = arith.select %620, %617, %621 : vector<4x8x8xi1>, vector<4x8x8xf32>
    %cst_260 = arith.constant dense<0xFF800000> : vector<4x8xf32>
    %623 = vector.multi_reduction <maximumf>, %622, %cst_260 [2] : vector<4x8x8xf32> to vector<4x8xf32>
    %624 = vector.shape_cast %623 : vector<4x8xf32> to vector<4x8x1xf32>
    %625 = vector.broadcast %624 : vector<4x8x1xf32> to vector<4x8x8xf32>
    %626 = arith.subf %622, %625 : vector<4x8x8xf32>
    %627 = math.exp %626 : vector<4x8x8xf32>
    %cst_261 = arith.constant dense<0.000000e+00> : vector<4x8xf32>
    %628 = vector.multi_reduction <add>, %627, %cst_261 [2] : vector<4x8x8xf32> to vector<4x8xf32>
    %629 = vector.shape_cast %628 : vector<4x8xf32> to vector<4x8x1xf32>
    %630 = tpu.reciprocal %629 : vector<4x8x1xf32> -> vector<4x8x1xf32>
    %631 = vector.broadcast %630 : vector<4x8x1xf32> to vector<4x8x8xf32>
    %632 = arith.mulf %627, %631 : vector<4x8x8xf32>
    %633 = arith.truncf %632 : vector<4x8x8xf32> to vector<4x8x8xbf16>
    %634 = vector.extract_strided_slice %633 {offsets = [0, 0, 0], sizes = [1, 8, 8], strides = [1, 1, 1]} : vector<4x8x8xbf16> to vector<1x8x8xbf16>
    %635 = vector.extract_strided_slice %604 {offsets = [0, 0, 0], sizes = [1, 8, 32], strides = [1, 1, 1]} : vector<1x8x128xbf16> to vector<1x8x32xbf16>
    "tpu.trace_start"() <{level = 10 : i32, message = "bqk,bkd->bqd"}> : () -> ()
    %cst_262 = arith.constant dense<0.000000e+00> : vector<1x8x32xf32>
    %636 = tpu.matmul %634, %635, %cst_262 {dimension_numbers = #tpu.dot_dimension_numbers<[2], [1], [1], [2], [0, 0, 0, 1, 1, 2], [0], [0]>} : vector<1x8x8xbf16>, vector<1x8x32xbf16>, vector<1x8x32xf32> -> vector<1x8x32xf32>
    "tpu.trace_stop"() : () -> ()
    %637 = vector.extract_strided_slice %633 {offsets = [1, 0, 0], sizes = [1, 8, 8], strides = [1, 1, 1]} : vector<4x8x8xbf16> to vector<1x8x8xbf16>
    %638 = vector.extract_strided_slice %604 {offsets = [0, 0, 32], sizes = [1, 8, 32], strides = [1, 1, 1]} : vector<1x8x128xbf16> to vector<1x8x32xbf16>
    "tpu.trace_start"() <{level = 10 : i32, message = "bqk,bkd->bqd"}> : () -> ()
    %cst_263 = arith.constant dense<0.000000e+00> : vector<1x8x32xf32>
    %639 = tpu.matmul %637, %638, %cst_263 {dimension_numbers = #tpu.dot_dimension_numbers<[2], [1], [1], [2], [0, 0, 0, 1, 1, 2], [0], [0]>} : vector<1x8x8xbf16>, vector<1x8x32xbf16>, vector<1x8x32xf32> -> vector<1x8x32xf32>
    "tpu.trace_stop"() : () -> ()
    %640 = vector.extract_strided_slice %633 {offsets = [2, 0, 0], sizes = [1, 8, 8], strides = [1, 1, 1]} : vector<4x8x8xbf16> to vector<1x8x8xbf16>
    %641 = vector.extract_strided_slice %604 {offsets = [0, 0, 64], sizes = [1, 8, 32], strides = [1, 1, 1]} : vector<1x8x128xbf16> to vector<1x8x32xbf16>
    "tpu.trace_start"() <{level = 10 : i32, message = "bqk,bkd->bqd"}> : () -> ()
    %cst_264 = arith.constant dense<0.000000e+00> : vector<1x8x32xf32>
    %642 = tpu.matmul %640, %641, %cst_264 {dimension_numbers = #tpu.dot_dimension_numbers<[2], [1], [1], [2], [0, 0, 0, 1, 1, 2], [0], [0]>} : vector<1x8x8xbf16>, vector<1x8x32xbf16>, vector<1x8x32xf32> -> vector<1x8x32xf32>
    "tpu.trace_stop"() : () -> ()
    %643 = vector.extract_strided_slice %633 {offsets = [3, 0, 0], sizes = [1, 8, 8], strides = [1, 1, 1]} : vector<4x8x8xbf16> to vector<1x8x8xbf16>
    %644 = vector.extract_strided_slice %604 {offsets = [0, 0, 96], sizes = [1, 8, 32], strides = [1, 1, 1]} : vector<1x8x128xbf16> to vector<1x8x32xbf16>
    "tpu.trace_start"() <{level = 10 : i32, message = "bqk,bkd->bqd"}> : () -> ()
    %cst_265 = arith.constant dense<0.000000e+00> : vector<1x8x32xf32>
    %645 = tpu.matmul %643, %644, %cst_265 {dimension_numbers = #tpu.dot_dimension_numbers<[2], [1], [1], [2], [0, 0, 0, 1, 1, 2], [0], [0]>} : vector<1x8x8xbf16>, vector<1x8x32xbf16>, vector<1x8x32xf32> -> vector<1x8x32xf32>
    "tpu.trace_stop"() : () -> ()
    %646 = tpu.concatenate %636, %639, %642, %645 in 2 : vector<1x8x32xf32>, vector<1x8x32xf32>, vector<1x8x32xf32>, vector<1x8x32xf32> -> vector<1x8x128xf32>
    %647 = vector.shape_cast %646 : vector<1x8x128xf32> to vector<8x128xf32>
    %648 = arith.truncf %647 : vector<8x128xf32> to vector<8x128xbf16>
    %cst_266 = arith.constant dense<0.000000e+00> : vector<8x128xf32>
    %649 = tpu.matmul %648, %588, %cst_266 {dimension_numbers = #tpu.dot_dimension_numbers<[1], [0], [0], [1], [0, 0, 1, 1], [], []>} : vector<8x128xbf16>, vector<128x128xbf16>, vector<8x128xf32> -> vector<8x128xf32>
    %650 = vector.broadcast %590 : vector<1x128xf32> to vector<8x128xf32>
    %651 = arith.addf %649, %650 : vector<8x128xf32>
    %652 = arith.addf %558, %651 : vector<8x128xf32>
    %c1_267 = arith.constant 1 : index
    %c0_268 = arith.constant 0 : index
    %c0_269 = arith.constant 0 : index
    %653 = vector.load %arg21[%c1_267, %c0_268, %c0_269] : memref<2x1x128xf32, #tpu.memory_space<vmem>>, vector<1x1x128xf32>
    %654 = vector.shape_cast %653 : vector<1x1x128xf32> to vector<1x128xf32>
    %c1_270 = arith.constant 1 : index
    %c0_271 = arith.constant 0 : index
    %c0_272 = arith.constant 0 : index
    %655 = vector.load %arg22[%c1_270, %c0_271, %c0_272] : memref<2x1x128xf32, #tpu.memory_space<vmem>>, vector<1x1x128xf32>
    %656 = vector.shape_cast %655 : vector<1x1x128xf32> to vector<1x128xf32>
    %cst_273 = arith.constant dense<0.000000e+00> : vector<8xf32>
    %657 = vector.multi_reduction <add>, %652, %cst_273 [1] : vector<8x128xf32> to vector<8xf32>
    %658 = vector.shape_cast %657 : vector<8xf32> to vector<8x1xf32>
    %cst_274 = arith.constant 1.280000e+02 : f32
    %659 = vector.broadcast %cst_274 : f32 to vector<8x1xf32>
    %660 = arith.divf %658, %659 : vector<8x1xf32>
    %661 = vector.broadcast %660 : vector<8x1xf32> to vector<8x128xf32>
    %662 = arith.subf %652, %661 : vector<8x128xf32>
    %663 = arith.mulf %662, %662 : vector<8x128xf32>
    %cst_275 = arith.constant dense<0.000000e+00> : vector<8xf32>
    %664 = vector.multi_reduction <add>, %663, %cst_275 [1] : vector<8x128xf32> to vector<8xf32>
    %665 = vector.shape_cast %664 : vector<8xf32> to vector<8x1xf32>
    %cst_276 = arith.constant 1.280000e+02 : f32
    %666 = vector.broadcast %cst_276 : f32 to vector<8x1xf32>
    %667 = arith.divf %665, %666 : vector<8x1xf32>
    %cst_277 = arith.constant 9.99999974E-6 : f32
    %668 = vector.broadcast %cst_277 : f32 to vector<8x1xf32>
    %669 = arith.addf %667, %668 : vector<8x1xf32>
    %670 = math.rsqrt %669 : vector<8x1xf32>
    %671 = vector.broadcast %660 : vector<8x1xf32> to vector<8x128xf32>
    %672 = arith.subf %652, %671 : vector<8x128xf32>
    %673 = vector.broadcast %670 : vector<8x1xf32> to vector<8x128xf32>
    %674 = arith.mulf %672, %673 : vector<8x128xf32>
    %675 = vector.broadcast %654 : vector<1x128xf32> to vector<8x128xf32>
    %676 = arith.mulf %674, %675 : vector<8x128xf32>
    %677 = vector.broadcast %656 : vector<1x128xf32> to vector<8x128xf32>
    %678 = arith.addf %676, %677 : vector<8x128xf32>
    %c1_278 = arith.constant 1 : index
    %c0_279 = arith.constant 0 : index
    %c0_280 = arith.constant 0 : index
    %679 = vector.load %arg23[%c1_278, %c0_279, %c0_280] : memref<2x128x384xbf16, #tpu.memory_space<vmem>>, vector<1x128x384xbf16>
    %680 = vector.shape_cast %679 : vector<1x128x384xbf16> to vector<128x384xbf16>
    %c1_281 = arith.constant 1 : index
    %c0_282 = arith.constant 0 : index
    %c0_283 = arith.constant 0 : index
    %681 = vector.load %arg24[%c1_281, %c0_282, %c0_283] : memref<2x128x128xbf16, #tpu.memory_space<vmem>>, vector<1x128x128xbf16>
    %682 = vector.shape_cast %681 : vector<1x128x128xbf16> to vector<128x128xbf16>
    %c1_284 = arith.constant 1 : index
    %c0_285 = arith.constant 0 : index
    %c0_286 = arith.constant 0 : index
    %683 = vector.load %arg25[%c1_284, %c0_285, %c0_286] : memref<2x1x128xf32, #tpu.memory_space<vmem>>, vector<1x1x128xf32>
    %684 = vector.shape_cast %683 : vector<1x1x128xf32> to vector<1x128xf32>
    %685 = arith.truncf %678 : vector<8x128xf32> to vector<8x128xbf16>
    %686 = vector.extract_strided_slice %680 {offsets = [0, 0], sizes = [128, 128], strides = [1, 1]} : vector<128x384xbf16> to vector<128x128xbf16>
    %cst_287 = arith.constant dense<0.000000e+00> : vector<8x128xf32>
    %687 = tpu.matmul %685, %686, %cst_287 {dimension_numbers = #tpu.dot_dimension_numbers<[1], [0], [0], [1], [0, 0, 1, 1], [], []>} : vector<8x128xbf16>, vector<128x128xbf16>, vector<8x128xf32> -> vector<8x128xf32>
    %688 = arith.truncf %316 : vector<8x128xf32> to vector<8x128xbf16>
    %689 = vector.extract_strided_slice %680 {offsets = [0, 128], sizes = [128, 256], strides = [1, 1]} : vector<128x384xbf16> to vector<128x256xbf16>
    %cst_288 = arith.constant dense<0.000000e+00> : vector<8x256xf32>
    %690 = tpu.matmul %688, %689, %cst_288 {dimension_numbers = #tpu.dot_dimension_numbers<[1], [0], [0], [1], [0, 0, 1, 1], [], []>} : vector<8x128xbf16>, vector<128x256xbf16>, vector<8x256xf32> -> vector<8x256xf32>
    %691 = vector.extract_strided_slice %690 {offsets = [0, 0], sizes = [8, 128], strides = [1, 1]} : vector<8x256xf32> to vector<8x128xf32>
    %692 = vector.extract_strided_slice %690 {offsets = [0, 128], sizes = [8, 128], strides = [1, 1]} : vector<8x256xf32> to vector<8x128xf32>
    %cst_289 = arith.constant 0.176776692 : f32
    %693 = vector.broadcast %cst_289 : f32 to vector<8x128xf32>
    %694 = arith.mulf %687, %693 : vector<8x128xf32>
    %695 = vector.shape_cast %694 : vector<8x128xf32> to vector<1x8x128xf32>
    %696 = arith.truncf %695 : vector<1x8x128xf32> to vector<1x8x128xbf16>
    %697 = vector.shape_cast %691 : vector<8x128xf32> to vector<1x8x128xf32>
    %698 = arith.truncf %697 : vector<1x8x128xf32> to vector<1x8x128xbf16>
    %699 = vector.shape_cast %692 : vector<8x128xf32> to vector<1x8x128xf32>
    %700 = arith.truncf %699 : vector<1x8x128xf32> to vector<1x8x128xbf16>
    %701 = vector.extract_strided_slice %696 {offsets = [0, 0, 0], sizes = [1, 8, 32], strides = [1, 1, 1]} : vector<1x8x128xbf16> to vector<1x8x32xbf16>
    %702 = vector.extract_strided_slice %698 {offsets = [0, 0, 0], sizes = [1, 8, 32], strides = [1, 1, 1]} : vector<1x8x128xbf16> to vector<1x8x32xbf16>
    "tpu.trace_start"() <{level = 10 : i32, message = "bqd,bkd->bqk"}> : () -> ()
    %cst_290 = arith.constant dense<0.000000e+00> : vector<1x8x8xf32>
    %703 = tpu.matmul %701, %702, %cst_290 {dimension_numbers = #tpu.dot_dimension_numbers<[2], [2], [1], [1], [0, 0, 0, 1, 1, 1], [0], [0]>} : vector<1x8x32xbf16>, vector<1x8x32xbf16>, vector<1x8x8xf32> -> vector<1x8x8xf32>
    "tpu.trace_stop"() : () -> ()
    %704 = vector.extract_strided_slice %696 {offsets = [0, 0, 32], sizes = [1, 8, 32], strides = [1, 1, 1]} : vector<1x8x128xbf16> to vector<1x8x32xbf16>
    %705 = vector.extract_strided_slice %698 {offsets = [0, 0, 32], sizes = [1, 8, 32], strides = [1, 1, 1]} : vector<1x8x128xbf16> to vector<1x8x32xbf16>
    "tpu.trace_start"() <{level = 10 : i32, message = "bqd,bkd->bqk"}> : () -> ()
    %cst_291 = arith.constant dense<0.000000e+00> : vector<1x8x8xf32>
    %706 = tpu.matmul %704, %705, %cst_291 {dimension_numbers = #tpu.dot_dimension_numbers<[2], [2], [1], [1], [0, 0, 0, 1, 1, 1], [0], [0]>} : vector<1x8x32xbf16>, vector<1x8x32xbf16>, vector<1x8x8xf32> -> vector<1x8x8xf32>
    "tpu.trace_stop"() : () -> ()
    %707 = vector.extract_strided_slice %696 {offsets = [0, 0, 64], sizes = [1, 8, 32], strides = [1, 1, 1]} : vector<1x8x128xbf16> to vector<1x8x32xbf16>
    %708 = vector.extract_strided_slice %698 {offsets = [0, 0, 64], sizes = [1, 8, 32], strides = [1, 1, 1]} : vector<1x8x128xbf16> to vector<1x8x32xbf16>
    "tpu.trace_start"() <{level = 10 : i32, message = "bqd,bkd->bqk"}> : () -> ()
    %cst_292 = arith.constant dense<0.000000e+00> : vector<1x8x8xf32>
    %709 = tpu.matmul %707, %708, %cst_292 {dimension_numbers = #tpu.dot_dimension_numbers<[2], [2], [1], [1], [0, 0, 0, 1, 1, 1], [0], [0]>} : vector<1x8x32xbf16>, vector<1x8x32xbf16>, vector<1x8x8xf32> -> vector<1x8x8xf32>
    "tpu.trace_stop"() : () -> ()
    %710 = vector.extract_strided_slice %696 {offsets = [0, 0, 96], sizes = [1, 8, 32], strides = [1, 1, 1]} : vector<1x8x128xbf16> to vector<1x8x32xbf16>
    %711 = vector.extract_strided_slice %698 {offsets = [0, 0, 96], sizes = [1, 8, 32], strides = [1, 1, 1]} : vector<1x8x128xbf16> to vector<1x8x32xbf16>
    "tpu.trace_start"() <{level = 10 : i32, message = "bqd,bkd->bqk"}> : () -> ()
    %cst_293 = arith.constant dense<0.000000e+00> : vector<1x8x8xf32>
    %712 = tpu.matmul %710, %711, %cst_293 {dimension_numbers = #tpu.dot_dimension_numbers<[2], [2], [1], [1], [0, 0, 0, 1, 1, 1], [0], [0]>} : vector<1x8x32xbf16>, vector<1x8x32xbf16>, vector<1x8x8xf32> -> vector<1x8x8xf32>
    "tpu.trace_stop"() : () -> ()
    %713 = tpu.concatenate %703, %706, %709, %712 in 0 : vector<1x8x8xf32>, vector<1x8x8xf32>, vector<1x8x8xf32>, vector<1x8x8xf32> -> vector<4x8x8xf32>
    %cst_294 = arith.constant dense<0xFF800000> : vector<4x8xf32>
    %714 = vector.multi_reduction <maximumf>, %713, %cst_294 [2] : vector<4x8x8xf32> to vector<4x8xf32>
    %715 = vector.shape_cast %714 : vector<4x8xf32> to vector<4x8x1xf32>
    %716 = vector.broadcast %715 : vector<4x8x1xf32> to vector<4x8x8xf32>
    %717 = arith.subf %713, %716 : vector<4x8x8xf32>
    %718 = math.exp %717 : vector<4x8x8xf32>
    %cst_295 = arith.constant dense<0.000000e+00> : vector<4x8xf32>
    %719 = vector.multi_reduction <add>, %718, %cst_295 [2] : vector<4x8x8xf32> to vector<4x8xf32>
    %720 = vector.shape_cast %719 : vector<4x8xf32> to vector<4x8x1xf32>
    %721 = tpu.reciprocal %720 : vector<4x8x1xf32> -> vector<4x8x1xf32>
    %722 = vector.broadcast %721 : vector<4x8x1xf32> to vector<4x8x8xf32>
    %723 = arith.mulf %718, %722 : vector<4x8x8xf32>
    %724 = arith.truncf %723 : vector<4x8x8xf32> to vector<4x8x8xbf16>
    %725 = vector.extract_strided_slice %724 {offsets = [0, 0, 0], sizes = [1, 8, 8], strides = [1, 1, 1]} : vector<4x8x8xbf16> to vector<1x8x8xbf16>
    %726 = vector.extract_strided_slice %700 {offsets = [0, 0, 0], sizes = [1, 8, 32], strides = [1, 1, 1]} : vector<1x8x128xbf16> to vector<1x8x32xbf16>
    "tpu.trace_start"() <{level = 10 : i32, message = "bqk,bkd->bqd"}> : () -> ()
    %cst_296 = arith.constant dense<0.000000e+00> : vector<1x8x32xf32>
    %727 = tpu.matmul %725, %726, %cst_296 {dimension_numbers = #tpu.dot_dimension_numbers<[2], [1], [1], [2], [0, 0, 0, 1, 1, 2], [0], [0]>} : vector<1x8x8xbf16>, vector<1x8x32xbf16>, vector<1x8x32xf32> -> vector<1x8x32xf32>
    "tpu.trace_stop"() : () -> ()
    %728 = vector.extract_strided_slice %724 {offsets = [1, 0, 0], sizes = [1, 8, 8], strides = [1, 1, 1]} : vector<4x8x8xbf16> to vector<1x8x8xbf16>
    %729 = vector.extract_strided_slice %700 {offsets = [0, 0, 32], sizes = [1, 8, 32], strides = [1, 1, 1]} : vector<1x8x128xbf16> to vector<1x8x32xbf16>
    "tpu.trace_start"() <{level = 10 : i32, message = "bqk,bkd->bqd"}> : () -> ()
    %cst_297 = arith.constant dense<0.000000e+00> : vector<1x8x32xf32>
    %730 = tpu.matmul %728, %729, %cst_297 {dimension_numbers = #tpu.dot_dimension_numbers<[2], [1], [1], [2], [0, 0, 0, 1, 1, 2], [0], [0]>} : vector<1x8x8xbf16>, vector<1x8x32xbf16>, vector<1x8x32xf32> -> vector<1x8x32xf32>
    "tpu.trace_stop"() : () -> ()
    %731 = vector.extract_strided_slice %724 {offsets = [2, 0, 0], sizes = [1, 8, 8], strides = [1, 1, 1]} : vector<4x8x8xbf16> to vector<1x8x8xbf16>
    %732 = vector.extract_strided_slice %700 {offsets = [0, 0, 64], sizes = [1, 8, 32], strides = [1, 1, 1]} : vector<1x8x128xbf16> to vector<1x8x32xbf16>
    "tpu.trace_start"() <{level = 10 : i32, message = "bqk,bkd->bqd"}> : () -> ()
    %cst_298 = arith.constant dense<0.000000e+00> : vector<1x8x32xf32>
    %733 = tpu.matmul %731, %732, %cst_298 {dimension_numbers = #tpu.dot_dimension_numbers<[2], [1], [1], [2], [0, 0, 0, 1, 1, 2], [0], [0]>} : vector<1x8x8xbf16>, vector<1x8x32xbf16>, vector<1x8x32xf32> -> vector<1x8x32xf32>
    "tpu.trace_stop"() : () -> ()
    %734 = vector.extract_strided_slice %724 {offsets = [3, 0, 0], sizes = [1, 8, 8], strides = [1, 1, 1]} : vector<4x8x8xbf16> to vector<1x8x8xbf16>
    %735 = vector.extract_strided_slice %700 {offsets = [0, 0, 96], sizes = [1, 8, 32], strides = [1, 1, 1]} : vector<1x8x128xbf16> to vector<1x8x32xbf16>
    "tpu.trace_start"() <{level = 10 : i32, message = "bqk,bkd->bqd"}> : () -> ()
    %cst_299 = arith.constant dense<0.000000e+00> : vector<1x8x32xf32>
    %736 = tpu.matmul %734, %735, %cst_299 {dimension_numbers = #tpu.dot_dimension_numbers<[2], [1], [1], [2], [0, 0, 0, 1, 1, 2], [0], [0]>} : vector<1x8x8xbf16>, vector<1x8x32xbf16>, vector<1x8x32xf32> -> vector<1x8x32xf32>
    "tpu.trace_stop"() : () -> ()
    %737 = tpu.concatenate %727, %730, %733, %736 in 2 : vector<1x8x32xf32>, vector<1x8x32xf32>, vector<1x8x32xf32>, vector<1x8x32xf32> -> vector<1x8x128xf32>
    %738 = vector.shape_cast %737 : vector<1x8x128xf32> to vector<8x128xf32>
    %739 = arith.truncf %738 : vector<8x128xf32> to vector<8x128xbf16>
    %cst_300 = arith.constant dense<0.000000e+00> : vector<8x128xf32>
    %740 = tpu.matmul %739, %682, %cst_300 {dimension_numbers = #tpu.dot_dimension_numbers<[1], [0], [0], [1], [0, 0, 1, 1], [], []>} : vector<8x128xbf16>, vector<128x128xbf16>, vector<8x128xf32> -> vector<8x128xf32>
    %741 = vector.broadcast %684 : vector<1x128xf32> to vector<8x128xf32>
    %742 = arith.addf %740, %741 : vector<8x128xf32>
    %743 = arith.addf %652, %742 : vector<8x128xf32>
    %c1_301 = arith.constant 1 : index
    %c0_302 = arith.constant 0 : index
    %c0_303 = arith.constant 0 : index
    %744 = vector.load %arg26[%c1_301, %c0_302, %c0_303] : memref<2x1x128xf32, #tpu.memory_space<vmem>>, vector<1x1x128xf32>
    %745 = vector.shape_cast %744 : vector<1x1x128xf32> to vector<1x128xf32>
    %c1_304 = arith.constant 1 : index
    %c0_305 = arith.constant 0 : index
    %c0_306 = arith.constant 0 : index
    %746 = vector.load %arg27[%c1_304, %c0_305, %c0_306] : memref<2x1x128xf32, #tpu.memory_space<vmem>>, vector<1x1x128xf32>
    %747 = vector.shape_cast %746 : vector<1x1x128xf32> to vector<1x128xf32>
    %cst_307 = arith.constant dense<0.000000e+00> : vector<8xf32>
    %748 = vector.multi_reduction <add>, %743, %cst_307 [1] : vector<8x128xf32> to vector<8xf32>
    %749 = vector.shape_cast %748 : vector<8xf32> to vector<8x1xf32>
    %cst_308 = arith.constant 1.280000e+02 : f32
    %750 = vector.broadcast %cst_308 : f32 to vector<8x1xf32>
    %751 = arith.divf %749, %750 : vector<8x1xf32>
    %752 = vector.broadcast %751 : vector<8x1xf32> to vector<8x128xf32>
    %753 = arith.subf %743, %752 : vector<8x128xf32>
    %754 = arith.mulf %753, %753 : vector<8x128xf32>
    %cst_309 = arith.constant dense<0.000000e+00> : vector<8xf32>
    %755 = vector.multi_reduction <add>, %754, %cst_309 [1] : vector<8x128xf32> to vector<8xf32>
    %756 = vector.shape_cast %755 : vector<8xf32> to vector<8x1xf32>
    %cst_310 = arith.constant 1.280000e+02 : f32
    %757 = vector.broadcast %cst_310 : f32 to vector<8x1xf32>
    %758 = arith.divf %756, %757 : vector<8x1xf32>
    %cst_311 = arith.constant 9.99999974E-6 : f32
    %759 = vector.broadcast %cst_311 : f32 to vector<8x1xf32>
    %760 = arith.addf %758, %759 : vector<8x1xf32>
    %761 = math.rsqrt %760 : vector<8x1xf32>
    %762 = vector.broadcast %751 : vector<8x1xf32> to vector<8x128xf32>
    %763 = arith.subf %743, %762 : vector<8x128xf32>
    %764 = vector.broadcast %761 : vector<8x1xf32> to vector<8x128xf32>
    %765 = arith.mulf %763, %764 : vector<8x128xf32>
    %766 = vector.broadcast %745 : vector<1x128xf32> to vector<8x128xf32>
    %767 = arith.mulf %765, %766 : vector<8x128xf32>
    %768 = vector.broadcast %747 : vector<1x128xf32> to vector<8x128xf32>
    %769 = arith.addf %767, %768 : vector<8x128xf32>
    %c1_312 = arith.constant 1 : index
    %c0_313 = arith.constant 0 : index
    %c0_314 = arith.constant 0 : index
    %770 = vector.load %arg28[%c1_312, %c0_313, %c0_314] : memref<2x128x256xbf16, #tpu.memory_space<vmem>>, vector<1x128x256xbf16>
    %771 = vector.shape_cast %770 : vector<1x128x256xbf16> to vector<128x256xbf16>
    %c1_315 = arith.constant 1 : index
    %c0_316 = arith.constant 0 : index
    %c0_317 = arith.constant 0 : index
    %772 = vector.load %arg29[%c1_315, %c0_316, %c0_317] : memref<2x1x256xf32, #tpu.memory_space<vmem>>, vector<1x1x256xf32>
    %773 = vector.shape_cast %772 : vector<1x1x256xf32> to vector<1x256xf32>
    %c1_318 = arith.constant 1 : index
    %c0_319 = arith.constant 0 : index
    %c0_320 = arith.constant 0 : index
    %774 = vector.load %arg30[%c1_318, %c0_319, %c0_320] : memref<2x256x128xbf16, #tpu.memory_space<vmem>>, vector<1x256x128xbf16>
    %775 = vector.shape_cast %774 : vector<1x256x128xbf16> to vector<256x128xbf16>
    %c1_321 = arith.constant 1 : index
    %c0_322 = arith.constant 0 : index
    %c0_323 = arith.constant 0 : index
    %776 = vector.load %arg31[%c1_321, %c0_322, %c0_323] : memref<2x1x128xf32, #tpu.memory_space<vmem>>, vector<1x1x128xf32>
    %777 = vector.shape_cast %776 : vector<1x1x128xf32> to vector<1x128xf32>
    %778 = arith.truncf %769 : vector<8x128xf32> to vector<8x128xbf16>
    %cst_324 = arith.constant dense<0.000000e+00> : vector<8x256xf32>
    %779 = tpu.matmul %778, %771, %cst_324 {dimension_numbers = #tpu.dot_dimension_numbers<[1], [0], [0], [1], [0, 0, 1, 1], [], []>} : vector<8x128xbf16>, vector<128x256xbf16>, vector<8x256xf32> -> vector<8x256xf32>
    %780 = vector.broadcast %773 : vector<1x256xf32> to vector<8x256xf32>
    %781 = arith.addf %779, %780 : vector<8x256xf32>
    %782 = arith.mulf %781, %781 : vector<8x256xf32>
    %783 = arith.mulf %781, %782 : vector<8x256xf32>
    %cst_325 = arith.constant 4.471500e-02 : f32
    %784 = vector.broadcast %cst_325 : f32 to vector<8x256xf32>
    %785 = arith.mulf %784, %783 : vector<8x256xf32>
    %786 = arith.addf %781, %785 : vector<8x256xf32>
    %cst_326 = arith.constant 0.797884583 : f32
    %787 = vector.broadcast %cst_326 : f32 to vector<8x256xf32>
    %788 = arith.mulf %787, %786 : vector<8x256xf32>
    %789 = math.tanh %788 : vector<8x256xf32>
    %cst_327 = arith.constant 1.000000e+00 : f32
    %790 = vector.broadcast %cst_327 : f32 to vector<8x256xf32>
    %791 = arith.addf %790, %789 : vector<8x256xf32>
    %cst_328 = arith.constant 5.000000e-01 : f32
    %792 = vector.broadcast %cst_328 : f32 to vector<8x256xf32>
    %793 = arith.mulf %792, %791 : vector<8x256xf32>
    %794 = arith.mulf %781, %793 : vector<8x256xf32>
    %795 = arith.truncf %794 : vector<8x256xf32> to vector<8x256xbf16>
    %cst_329 = arith.constant dense<0.000000e+00> : vector<8x128xf32>
    %796 = tpu.matmul %795, %775, %cst_329 {dimension_numbers = #tpu.dot_dimension_numbers<[1], [0], [0], [1], [0, 0, 1, 1], [], []>} : vector<8x256xbf16>, vector<256x128xbf16>, vector<8x128xf32> -> vector<8x128xf32>
    %797 = vector.broadcast %777 : vector<1x128xf32> to vector<8x128xf32>
    %798 = arith.addf %796, %797 : vector<8x128xf32>
    %799 = arith.addf %743, %798 : vector<8x128xf32>
    %c0_330 = arith.constant 0 : index
    %c0_331 = arith.constant 0 : index
    %800 = vector.load %arg32[%c0_330, %c0_331] : memref<1x128xf32, #tpu.memory_space<vmem>>, vector<1x128xf32>
    %c0_332 = arith.constant 0 : index
    %c0_333 = arith.constant 0 : index
    %801 = vector.load %arg33[%c0_332, %c0_333] : memref<1x128xf32, #tpu.memory_space<vmem>>, vector<1x128xf32>
    %cst_334 = arith.constant dense<0.000000e+00> : vector<8xf32>
    %802 = vector.multi_reduction <add>, %799, %cst_334 [1] : vector<8x128xf32> to vector<8xf32>
    %803 = vector.shape_cast %802 : vector<8xf32> to vector<8x1xf32>
    %cst_335 = arith.constant 1.280000e+02 : f32
    %804 = vector.broadcast %cst_335 : f32 to vector<8x1xf32>
    %805 = arith.divf %803, %804 : vector<8x1xf32>
    %806 = vector.broadcast %805 : vector<8x1xf32> to vector<8x128xf32>
    %807 = arith.subf %799, %806 : vector<8x128xf32>
    %808 = arith.mulf %807, %807 : vector<8x128xf32>
    %cst_336 = arith.constant dense<0.000000e+00> : vector<8xf32>
    %809 = vector.multi_reduction <add>, %808, %cst_336 [1] : vector<8x128xf32> to vector<8xf32>
    %810 = vector.shape_cast %809 : vector<8xf32> to vector<8x1xf32>
    %cst_337 = arith.constant 1.280000e+02 : f32
    %811 = vector.broadcast %cst_337 : f32 to vector<8x1xf32>
    %812 = arith.divf %810, %811 : vector<8x1xf32>
    %cst_338 = arith.constant 9.99999974E-6 : f32
    %813 = vector.broadcast %cst_338 : f32 to vector<8x1xf32>
    %814 = arith.addf %812, %813 : vector<8x1xf32>
    %815 = math.rsqrt %814 : vector<8x1xf32>
    %816 = vector.broadcast %805 : vector<8x1xf32> to vector<8x128xf32>
    %817 = arith.subf %799, %816 : vector<8x128xf32>
    %818 = vector.broadcast %815 : vector<8x1xf32> to vector<8x128xf32>
    %819 = arith.mulf %817, %818 : vector<8x128xf32>
    %820 = vector.broadcast %800 : vector<1x128xf32> to vector<8x128xf32>
    %821 = arith.mulf %819, %820 : vector<8x128xf32>
    %822 = vector.broadcast %801 : vector<1x128xf32> to vector<8x128xf32>
    %823 = arith.addf %821, %822 : vector<8x128xf32>
    %824 = arith.truncf %823 : vector<8x128xf32> to vector<8x128xbf16>
    %c0_339 = arith.constant 0 : index
    %c0_340 = arith.constant 0 : index
    %825 = vector.load %arg34[%c0_339, %c0_340] : memref<128x128xbf16, #tpu.memory_space<vmem>>, vector<128x128xbf16>
    %cst_341 = arith.constant dense<0.000000e+00> : vector<8x128xf32>
    %826 = tpu.matmul %824, %825, %cst_341 {dimension_numbers = #tpu.dot_dimension_numbers<[1], [0], [0], [1], [0, 0, 1, 1], [], []>} : vector<8x128xbf16>, vector<128x128xbf16>, vector<8x128xf32> -> vector<8x128xf32>
    %c0_342 = arith.constant 0 : index
    %c0_343 = arith.constant 0 : index
    %827 = vector.load %arg35[%c0_342, %c0_343] : memref<1x128xf32, #tpu.memory_space<vmem>>, vector<1x128xf32>
    %828 = vector.broadcast %827 : vector<1x128xf32> to vector<8x128xf32>
    %829 = arith.addf %826, %828 : vector<8x128xf32>
    %830 = vector.shape_cast %829 : vector<8x128xf32> to vector<1x8x128xf32>
    %c0_344 = arith.constant 0 : index
    %c0_345 = arith.constant 0 : index
    %c0_346 = arith.constant 0 : index
    %831 = vector.load %arg36[%c0_344, %c0_345, %c0_346] : memref<1x8x128xf32, #tpu.memory_space<vmem>>, vector<1x8x128xf32>
    tpu.vector_store %arg36[%c0_344, %c0_345, %c0_346], %830 {strides = array<i32>} : memref<1x8x128xf32, #tpu.memory_space<vmem>>, vector<1x8x128xf32>,
    return
  }
  func.func @transform_0(%arg0: i32) -> (i32, i32, i32) {
    %c0_i32 = arith.constant 0 : i32
    %c0_i32_0 = arith.constant 0 : i32
    %c0_i32_1 = arith.constant 0 : i32
    return %arg0, %c0_i32, %c0_i32_0 : i32, i32, i32
  }
  func.func @transform_1(%arg0: i32) -> (i32, i32, i32) {
    %c0_i32 = arith.constant 0 : i32
    %c0_i32_0 = arith.constant 0 : i32
    %c0_i32_1 = arith.constant 0 : i32
    return %arg0, %c0_i32, %c0_i32_0 : i32, i32, i32
  }
  func.func @transform_2(%arg0: i32) -> (i32, i32, i32) {
    %c0_i32 = arith.constant 0 : i32
    %c0_i32_0 = arith.constant 0 : i32
    %c0_i32_1 = arith.constant 0 : i32
    %c0_i32_2 = arith.constant 0 : i32
    return %c0_i32, %c0_i32_0, %c0_i32_1 : i32, i32, i32
  }
  func.func @transform_3(%arg0: i32) -> (i32, i32, i32) {
    %c0_i32 = arith.constant 0 : i32
    %c0_i32_0 = arith.constant 0 : i32
    %c0_i32_1 = arith.constant 0 : i32
    %c0_i32_2 = arith.constant 0 : i32
    return %c0_i32, %c0_i32_0, %c0_i32_1 : i32, i32, i32
  }
  func.func @transform_4(%arg0: i32) -> (i32, i32, i32) {
    %c0_i32 = arith.constant 0 : i32
    %c0_i32_0 = arith.constant 0 : i32
    %c0_i32_1 = arith.constant 0 : i32
    %c0_i32_2 = arith.constant 0 : i32
    return %c0_i32, %c0_i32_0, %c0_i32_1 : i32, i32, i32
  }
  func.func @transform_5(%arg0: i32) -> (i32, i32, i32) {
    %c0_i32 = arith.constant 0 : i32
    %c0_i32_0 = arith.constant 0 : i32
    %c0_i32_1 = arith.constant 0 : i32
    %c0_i32_2 = arith.constant 0 : i32
    return %c0_i32, %c0_i32_0, %c0_i32_1 : i32, i32, i32
  }
  func.func @transform_6(%arg0: i32) -> (i32, i32, i32) {
    %c0_i32 = arith.constant 0 : i32
    %c0_i32_0 = arith.constant 0 : i32
    %c0_i32_1 = arith.constant 0 : i32
    %c0_i32_2 = arith.constant 0 : i32
    return %c0_i32, %c0_i32_0, %c0_i32_1 : i32, i32, i32
  }
  func.func @transform_7(%arg0: i32) -> (i32, i32, i32) {
    %c0_i32 = arith.constant 0 : i32
    %c0_i32_0 = arith.constant 0 : i32
    %c0_i32_1 = arith.constant 0 : i32
    %c0_i32_2 = arith.constant 0 : i32
    return %c0_i32, %c0_i32_0, %c0_i32_1 : i32, i32, i32
  }
  func.func @transform_8(%arg0: i32) -> (i32, i32, i32) {
    %c0_i32 = arith.constant 0 : i32
    %c0_i32_0 = arith.constant 0 : i32
    %c0_i32_1 = arith.constant 0 : i32
    %c0_i32_2 = arith.constant 0 : i32
    return %c0_i32, %c0_i32_0, %c0_i32_1 : i32, i32, i32
  }
  func.func @transform_9(%arg0: i32) -> (i32, i32, i32) {
    %c0_i32 = arith.constant 0 : i32
    %c0_i32_0 = arith.constant 0 : i32
    %c0_i32_1 = arith.constant 0 : i32
    %c0_i32_2 = arith.constant 0 : i32
    return %c0_i32, %c0_i32_0, %c0_i32_1 : i32, i32, i32
  }
  func.func @transform_10(%arg0: i32) -> (i32, i32, i32) {
    %c0_i32 = arith.constant 0 : i32
    %c0_i32_0 = arith.constant 0 : i32
    %c0_i32_1 = arith.constant 0 : i32
    %c0_i32_2 = arith.constant 0 : i32
    return %c0_i32, %c0_i32_0, %c0_i32_1 : i32, i32, i32
  }
  func.func @transform_11(%arg0: i32) -> (i32, i32, i32) {
    %c0_i32 = arith.constant 0 : i32
    %c0_i32_0 = arith.constant 0 : i32
    %c0_i32_1 = arith.constant 0 : i32
    %c0_i32_2 = arith.constant 0 : i32
    return %c0_i32, %c0_i32_0, %c0_i32_1 : i32, i32, i32
  }
  func.func @transform_12(%arg0: i32) -> (i32, i32, i32) {
    %c0_i32 = arith.constant 0 : i32
    %c0_i32_0 = arith.constant 0 : i32
    %c0_i32_1 = arith.constant 0 : i32
    %c0_i32_2 = arith.constant 0 : i32
    return %c0_i32, %c0_i32_0, %c0_i32_1 : i32, i32, i32
  }
  func.func @transform_13(%arg0: i32) -> (i32, i32) {
    %c0_i32 = arith.constant 0 : i32
    %c0_i32_0 = arith.constant 0 : i32
    %c0_i32_1 = arith.constant 0 : i32
    return %c0_i32, %c0_i32_0 : i32, i32
  }
  func.func @transform_14(%arg0: i32) -> (i32, i32) {
    %c0_i32 = arith.constant 0 : i32
    %c0_i32_0 = arith.constant 0 : i32
    %c0_i32_1 = arith.constant 0 : i32
    return %c0_i32, %c0_i32_0 : i32, i32
  }
  func.func @transform_15(%arg0: i32) -> (i32, i32, i32) {
    %c0_i32 = arith.constant 0 : i32
    %c0_i32_0 = arith.constant 0 : i32
    %c0_i32_1 = arith.constant 0 : i32
    %c0_i32_2 = arith.constant 0 : i32
    return %c0_i32, %c0_i32_0, %c0_i32_1 : i32, i32, i32
  }
  func.func @transform_16(%arg0: i32) -> (i32, i32, i32) {
    %c0_i32 = arith.constant 0 : i32
    %c0_i32_0 = arith.constant 0 : i32
    %c0_i32_1 = arith.constant 0 : i32
    %c0_i32_2 = arith.constant 0 : i32
    return %c0_i32, %c0_i32_0, %c0_i32_1 : i32, i32, i32
  }
  func.func @transform_17(%arg0: i32) -> (i32, i32, i32) {
    %c0_i32 = arith.constant 0 : i32
    %c0_i32_0 = arith.constant 0 : i32
    %c0_i32_1 = arith.constant 0 : i32
    %c0_i32_2 = arith.constant 0 : i32
    return %c0_i32, %c0_i32_0, %c0_i32_1 : i32, i32, i32
  }
  func.func @transform_18(%arg0: i32) -> (i32, i32, i32) {
    %c0_i32 = arith.constant 0 : i32
    %c0_i32_0 = arith.constant 0 : i32
    %c0_i32_1 = arith.constant 0 : i32
    %c0_i32_2 = arith.constant 0 : i32
    return %c0_i32, %c0_i32_0, %c0_i32_1 : i32, i32, i32
  }
  func.func @transform_19(%arg0: i32) -> (i32, i32, i32) {
    %c0_i32 = arith.constant 0 : i32
    %c0_i32_0 = arith.constant 0 : i32
    %c0_i32_1 = arith.constant 0 : i32
    %c0_i32_2 = arith.constant 0 : i32
    return %c0_i32, %c0_i32_0, %c0_i32_1 : i32, i32, i32
  }
  func.func @transform_20(%arg0: i32) -> (i32, i32, i32) {
    %c0_i32 = arith.constant 0 : i32
    %c0_i32_0 = arith.constant 0 : i32
    %c0_i32_1 = arith.constant 0 : i32
    %c0_i32_2 = arith.constant 0 : i32
    return %c0_i32, %c0_i32_0, %c0_i32_1 : i32, i32, i32
  }
  func.func @transform_21(%arg0: i32) -> (i32, i32, i32) {
    %c0_i32 = arith.constant 0 : i32
    %c0_i32_0 = arith.constant 0 : i32
    %c0_i32_1 = arith.constant 0 : i32
    %c0_i32_2 = arith.constant 0 : i32
    return %c0_i32, %c0_i32_0, %c0_i32_1 : i32, i32, i32
  }
  func.func @transform_22(%arg0: i32) -> (i32, i32, i32) {
    %c0_i32 = arith.constant 0 : i32
    %c0_i32_0 = arith.constant 0 : i32
    %c0_i32_1 = arith.constant 0 : i32
    %c0_i32_2 = arith.constant 0 : i32
    return %c0_i32, %c0_i32_0, %c0_i32_1 : i32, i32, i32
  }
  func.func @transform_23(%arg0: i32) -> (i32, i32, i32) {
    %c0_i32 = arith.constant 0 : i32
    %c0_i32_0 = arith.constant 0 : i32
    %c0_i32_1 = arith.constant 0 : i32
    %c0_i32_2 = arith.constant 0 : i32
    return %c0_i32, %c0_i32_0, %c0_i32_1 : i32, i32, i32
  }
  func.func @transform_24(%arg0: i32) -> (i32, i32, i32) {
    %c0_i32 = arith.constant 0 : i32
    %c0_i32_0 = arith.constant 0 : i32
    %c0_i32_1 = arith.constant 0 : i32
    %c0_i32_2 = arith.constant 0 : i32
    return %c0_i32, %c0_i32_0, %c0_i32_1 : i32, i32, i32
  }
  func.func @transform_25(%arg0: i32) -> (i32, i32, i32) {
    %c0_i32 = arith.constant 0 : i32
    %c0_i32_0 = arith.constant 0 : i32
    %c0_i32_1 = arith.constant 0 : i32
    %c0_i32_2 = arith.constant 0 : i32
    return %c0_i32, %c0_i32_0, %c0_i32_1 : i32, i32, i32
  }
  func.func @transform_26(%arg0: i32) -> (i32, i32, i32) {
    %c0_i32 = arith.constant 0 : i32
    %c0_i32_0 = arith.constant 0 : i32
    %c0_i32_1 = arith.constant 0 : i32
    %c0_i32_2 = arith.constant 0 : i32
    return %c0_i32, %c0_i32_0, %c0_i32_1 : i32, i32, i32
  }
  func.func @transform_27(%arg0: i32) -> (i32, i32, i32) {
    %c0_i32 = arith.constant 0 : i32
    %c0_i32_0 = arith.constant 0 : i32
    %c0_i32_1 = arith.constant 0 : i32
    %c0_i32_2 = arith.constant 0 : i32
    return %c0_i32, %c0_i32_0, %c0_i32_1 : i32, i32, i32
  }
  func.func @transform_28(%arg0: i32) -> (i32, i32, i32) {
    %c0_i32 = arith.constant 0 : i32
    %c0_i32_0 = arith.constant 0 : i32
    %c0_i32_1 = arith.constant 0 : i32
    %c0_i32_2 = arith.constant 0 : i32
    return %c0_i32, %c0_i32_0, %c0_i32_1 : i32, i32, i32
  }
  func.func @transform_29(%arg0: i32) -> (i32, i32, i32) {
    %c0_i32 = arith.constant 0 : i32
    %c0_i32_0 = arith.constant 0 : i32
    %c0_i32_1 = arith.constant 0 : i32
    %c0_i32_2 = arith.constant 0 : i32
    return %c0_i32, %c0_i32_0, %c0_i32_1 : i32, i32, i32
  }
  func.func @transform_30(%arg0: i32) -> (i32, i32, i32) {
    %c0_i32 = arith.constant 0 : i32
    %c0_i32_0 = arith.constant 0 : i32
    %c0_i32_1 = arith.constant 0 : i32
    %c0_i32_2 = arith.constant 0 : i32
    return %c0_i32, %c0_i32_0, %c0_i32_1 : i32, i32, i32
  }
  func.func @transform_31(%arg0: i32) -> (i32, i32) {
    %c0_i32 = arith.constant 0 : i32
    %c0_i32_0 = arith.constant 0 : i32
    %c0_i32_1 = arith.constant 0 : i32
    return %c0_i32, %c0_i32_0 : i32, i32
  }
  func.func @transform_32(%arg0: i32) -> (i32, i32) {
    %c0_i32 = arith.constant 0 : i32
    %c0_i32_0 = arith.constant 0 : i32
    %c0_i32_1 = arith.constant 0 : i32
    return %c0_i32, %c0_i32_0 : i32, i32
  }
  func.func @transform_33(%arg0: i32) -> (i32, i32) {
    %c0_i32 = arith.constant 0 : i32
    %c0_i32_0 = arith.constant 0 : i32
    %c0_i32_1 = arith.constant 0 : i32
    return %c0_i32, %c0_i32_0 : i32, i32
  }
  func.func @transform_34(%arg0: i32) -> (i32, i32) {
    %c0_i32 = arith.constant 0 : i32
    %c0_i32_0 = arith.constant 0 : i32
    %c0_i32_1 = arith.constant 0 : i32
    return %c0_i32, %c0_i32_0 : i32, i32
  }
  func.func @transform_35(%arg0: i32) -> (i32, i32, i32) {
    %c0_i32 = arith.constant 0 : i32
    %c0_i32_0 = arith.constant 0 : i32
    %c0_i32_1 = arith.constant 0 : i32
    return %arg0, %c0_i32, %c0_i32_0 : i32, i32, i32
  }
}

</mosaic_0001>

<llo_original>
// kernel: forward.1
$region0: #{forward.1}
  #allocation0 [shape = 'u32[]', space=smem, size = 0x4, offset = 0x4, fixed_abs, tag = 'smem constant byte address 0x4 - core index']
  #allocation1 [shape = 'u32[72,128]{1,0:T(1,128)}', space=vmem, size = 0x9000, scoped, tag = 'internal scratch']
  %s0 = inlined_call_operand.smem [shape: u32[36], index: -1, kind: input, shape index: {}]
  %s1 = sld [smem:[%s0]]
  %s2 = scalar_lea.smem %s0, 1
  %s3 = sld [smem:[%s2]]
  %s4 = scalar_lea.smem %s0, 2
  %s5 = sld [smem:[%s4]]
  %s6 = scalar_lea.smem %s0, 3
  %s7 = sld [smem:[%s6]]
  %s8 = scalar_lea.smem %s0, 4
  %s9 = sld [smem:[%s8]]
  %s10 = scalar_lea.smem %s0, 5
  %s11 = sld [smem:[%s10]]
  %s12 = scalar_lea.smem %s0, 6
  %s13 = sld [smem:[%s12]]
  %s14 = scalar_lea.smem %s0, 7
  %s15 = sld [smem:[%s14]]
  %s16 = scalar_lea.smem %s0, 8
  %s17 = sld [smem:[%s16]]
  %s18 = scalar_lea.smem %s0, 9
  %s19 = sld [smem:[%s18]]
  %s20 = scalar_lea.smem %s0, 10
  %s21 = sld [smem:[%s20]]
  %s22 = scalar_lea.smem %s0, 11
  %s23 = sld [smem:[%s22]]
  %s24 = scalar_lea.smem %s0, 12
  %s25 = sld [smem:[%s24]]
  %s26 = scalar_lea.smem %s0, 13
  %s27 = sld [smem:[%s26]]
  %s28 = scalar_lea.smem %s0, 14
  %s29 = sld [smem:[%s28]]
  %s30 = scalar_lea.smem %s0, 15
  %s31 = sld [smem:[%s30]]
  %s32 = scalar_lea.smem %s0, 16
  %s33 = sld [smem:[%s32]]
  %s34 = scalar_lea.smem %s0, 17
  %s35 = sld [smem:[%s34]]
  %s36 = scalar_lea.smem %s0, 18
  %s37 = sld [smem:[%s36]]
  %s38 = scalar_lea.smem %s0, 19
  %s39 = sld [smem:[%s38]]
  %s40 = scalar_lea.smem %s0, 20
  %s41 = sld [smem:[%s40]]
  %s42 = scalar_lea.smem %s0, 21
  %s43 = sld [smem:[%s42]]
  %s44 = scalar_lea.smem %s0, 22
  %s45 = sld [smem:[%s44]]
  %s46 = scalar_lea.smem %s0, 23
  %s47 = sld [smem:[%s46]]
  %s48 = scalar_lea.smem %s0, 24
  %s49 = sld [smem:[%s48]]
  %s50 = scalar_lea.smem %s0, 25
  %s51 = sld [smem:[%s50]]
  %s52 = scalar_lea.smem %s0, 26
  %s53 = sld [smem:[%s52]]
  %s54 = scalar_lea.smem %s0, 27
  %s55 = sld [smem:[%s54]]
  %s56 = scalar_lea.smem %s0, 28
  %s57 = sld [smem:[%s56]]
  %s58 = scalar_lea.smem %s0, 29
  %s59 = sld [smem:[%s58]]
  %s60 = scalar_lea.smem %s0, 30
  %s61 = sld [smem:[%s60]]
  %s62 = scalar_lea.smem %s0, 31
  %s63 = sld [smem:[%s62]]
  %s64 = scalar_lea.smem %s0, 32
  %s65 = sld [smem:[%s64]]
  %s66 = scalar_lea.smem %s0, 33
  %s67 = sld [smem:[%s66]]
  %s68 = scalar_lea.smem %s0, 34
  %s69 = sld [smem:[%s68]]
  %s70 = scalar_lea.smem %s0, 35
  %s71 = sld [smem:[%s70]]
  %s72 = sld [smem:[#allocation0]]
  $region285: #{forward.1} parent=0
    _
  %s74 = ssub.s32 1, %s72
  %s75 = scalar_select 0, %s74, %s72
  $region1: #{forward.1} parent=0
    #allocation2 [shape = 'u8[1024]{0}', space=vmem, size = 0x400, scoped, tag = 'input window, operand 2, single buffered']
    #allocation3 [shape = 's32[2]{0}', space=sflag, size = 0x8, scoped, tag = 'scoped memory for forward.1']
    #allocation4 [shape = 's32[2]{0}', space=sflag, size = 0x8, scoped, tag = 'scoped memory for forward.1']
    #allocation5 [shape = 'u8[1024]{0}', space=vmem, size = 0x400, scoped, tag = 'input window, operand 3, single buffered']
    #allocation6 [shape = 's32[1]{0}', space=sflag, size = 0x4, scoped, tag = 'scoped memory for forward.1']
    #allocation7 [shape = 'u8[65536]{0}', space=vmem, size = 0x10000, scoped, tag = 'input window, operand 5, single buffered']
    #allocation8 [shape = 'u8[1024]{0}', space=vmem, size = 0x400, scoped, tag = 'input window, operand 6, single buffered']
    #allocation9 [shape = 's32[1]{0}', space=sflag, size = 0x4, scoped, tag = 'scoped memory for forward.1']
    #allocation10 [shape = 'u8[1024]{0}', space=vmem, size = 0x400, scoped, tag = 'input window, operand 7, single buffered']
    #allocation11 [shape = 'u8[1024]{0}', space=vmem, size = 0x400, scoped, tag = 'input window, operand 8, single buffered']
    #allocation12 [shape = 's32[1]{0}', space=sflag, size = 0x4, scoped, tag = 'scoped memory for forward.1']
    #allocation13 [shape = 'u8[131072]{0}', space=vmem, size = 0x20000, scoped, tag = 'input window, operand 9, single buffered']
    #allocation14 [shape = 'u8[131072]{0}', space=vmem, size = 0x20000, scoped, tag = 'input window, operand 11, single buffered']
    #allocation15 [shape = 's32[1]{0}', space=sflag, size = 0x4, scoped, tag = 'scoped memory for forward.1']
    #allocation16 [shape = 'u8[1024]{0}', space=vmem, size = 0x400, scoped, tag = 'input window, operand 12, single buffered']
    #allocation17 [shape = 'u8[512]{0}', space=vmem, size = 0x400, scoped, tag = 'input window, operand 13, single buffered']
    #allocation18 [shape = 's32[1]{0}', space=sflag, size = 0x4, scoped, tag = 'scoped memory for forward.1']
    #allocation19 [shape = 'u8[512]{0}', space=vmem, size = 0x400, scoped, tag = 'input window, operand 14, single buffered']
    #allocation20 [shape = 'u8[1024]{0}', space=vmem, size = 0x400, scoped, tag = 'input window, operand 15, single buffered']
    #allocation21 [shape = 's32[1]{0}', space=sflag, size = 0x4, scoped, tag = 'scoped memory for forward.1']
    #allocation22 [shape = 'u8[1024]{0}', space=vmem, size = 0x400, scoped, tag = 'input window, operand 16, single buffered']
    #allocation23 [shape = 'u8[196608]{0}', space=vmem, size = 0x30000, scoped, tag = 'input window, operand 17, single buffered']
    #allocation24 [shape = 's32[1]{0}', space=sflag, size = 0x4, scoped, tag = 'scoped memory for forward.1']
    #allocation25 [shape = 'u8[65536]{0}', space=vmem, size = 0x10000, scoped, tag = 'input window, operand 18, single buffered']
    #allocation26 [shape = 'u8[1024]{0}', space=vmem, size = 0x400, scoped, tag = 'input window, operand 19, single buffered']
    #allocation27 [shape = 's32[1]{0}', space=sflag, size = 0x4, scoped, tag = 'scoped memory for forward.1']
    #allocation28 [shape = 'u8[1024]{0}', space=vmem, size = 0x400, scoped, tag = 'input window, operand 20, single buffered']
    #allocation29 [shape = 'u8[1024]{0}', space=vmem, size = 0x400, scoped, tag = 'input window, operand 21, single buffered']
    #allocation30 [shape = 's32[1]{0}', space=sflag, size = 0x4, scoped, tag = 'scoped memory for forward.1']
    #allocation31 [shape = 'u8[196608]{0}', space=vmem, size = 0x30000, scoped, tag = 'input window, operand 22, single buffered']
    #allocation32 [shape = 'u8[65536]{0}', space=vmem, size = 0x10000, scoped, tag = 'input window, operand 23, single buffered']
    #allocation33 [shape = 's32[1]{0}', space=sflag, size = 0x4, scoped, tag = 'scoped memory for forward.1']
    #allocation34 [shape = 'u8[1024]{0}', space=vmem, size = 0x400, scoped, tag = 'input window, operand 24, single buffered']
    #allocation35 [shape = 'u8[1024]{0}', space=vmem, size = 0x400, scoped, tag = 'input window, operand 25, single buffered']
    #allocation36 [shape = 's32[1]{0}', space=sflag, size = 0x4, scoped, tag = 'scoped memory for forward.1']
    #allocation37 [shape = 'u8[1024]{0}', space=vmem, size = 0x400, scoped, tag = 'input window, operand 26, single buffered']
    #allocation38 [shape = 'u8[131072]{0}', space=vmem, size = 0x20000, scoped, tag = 'input window, operand 27, single buffered']
    #allocation39 [shape = 's32[1]{0}', space=sflag, size = 0x4, scoped, tag = 'scoped memory for forward.1']
    #allocation40 [shape = 'u8[131072]{0}', space=vmem, size = 0x20000, scoped, tag = 'input window, operand 29, single buffered']
    #allocation41 [shape = 'u8[1024]{0}', space=vmem, size = 0x400, scoped, tag = 'input window, operand 30, single buffered']
    #allocation42 [shape = 's32[1]{0}', space=sflag, size = 0x4, scoped, tag = 'scoped memory for forward.1']
    #allocation43 [shape = 'u8[512]{0}', space=vmem, size = 0x400, scoped, tag = 'input window, operand 31, single buffered']
    #allocation44 [shape = 'u8[512]{0}', space=vmem, size = 0x400, scoped, tag = 'input window, operand 32, single buffered']
    #allocation45 [shape = 's32[1]{0}', space=sflag, size = 0x4, scoped, tag = 'scoped memory for forward.1']
    #allocation46 [shape = 'u8[8192]{0}', space=vmem, size = 0x2000, scoped, tag = 'output window, operand 0']
    %76 = vsyncpa [#allocation3], 0
    %77 = vsyncpa [#allocation6], 0
    %78 = vsyncpa [#allocation9], 0
    %79 = vsyncpa [#allocation12], 0
    %80 = vsyncpa [#allocation15], 0
    %81 = vsyncpa [#allocation18], 0
    %82 = vsyncpa [#allocation21], 0
    %83 = vsyncpa [#allocation24], 0
    %84 = vsyncpa [#allocation27], 0
    %85 = vsyncpa [#allocation30], 0
    %86 = vsyncpa [#allocation33], 0
    %87 = vsyncpa [#allocation36], 0
    %88 = vsyncpa [#allocation39], 0
    %89 = vsyncpa [#allocation42], 0
    %90 = vsyncpa [#allocation45], 0
    %91 = vsyncpa [#allocation4], 0
    %s92 = scalar_lea.sflag [#allocation4], 1
    %93 = vsyncpa %s92, 0
    loop: start=0, step=1, limit=4
    $region2: #{forward.1} parent=1 // loop_pre_header
      _
    $region3: #{forward.1} parent=1 // loop_header
      %s95 = sphi 0, %s99
      %p96 = scmp.ge.s32.totalorder %s95, 4
      %s105 = sphi 0, %s107
      %s108 = sphi 0, %s105
      %s109 = sphi 0, %s108
      %s125 = sphi 0, %s109
      %s131 = sphi 0, %s133
      %s134 = sphi 0, %s131
      %s135 = sphi 0, %s134
      %s151 = sphi 0, %s135
      %s155 = sphi 0, %s155
      %s157 = sphi 0, %s155
      %s158 = sphi 0, %s157
      %s172 = sphi 0, %s158
      %s176 = sphi 0, %s176
      %s178 = sphi 0, %s176
      %s179 = sphi 0, %s178
      %s193 = sphi 0, %s179
      %s197 = sphi 0, %s197
      %s199 = sphi 0, %s197
      %s200 = sphi 0, %s199
      %s214 = sphi 0, %s200
      %s218 = sphi 0, %s218
      %s220 = sphi 0, %s218
      %s221 = sphi 0, %s220
      %s235 = sphi 0, %s221
      %s239 = sphi 0, %s239
      %s241 = sphi 0, %s239
      %s242 = sphi 0, %s241
      %s256 = sphi 0, %s242
      %s260 = sphi 0, %s260
      %s262 = sphi 0, %s260
      %s263 = sphi 0, %s262
      %s277 = sphi 0, %s263
      %s281 = sphi 0, %s281
      %s283 = sphi 0, %s281
      %s284 = sphi 0, %s283
      %s298 = sphi 0, %s284
      %s302 = sphi 0, %s302
      %s304 = sphi 0, %s302
      %s305 = sphi 0, %s304
      %s319 = sphi 0, %s305
      %s323 = sphi 0, %s323
      %s325 = sphi 0, %s323
      %s326 = sphi 0, %s325
      %s340 = sphi 0, %s326
      %s344 = sphi 0, %s344
      %s346 = sphi 0, %s344
      %s347 = sphi 0, %s346
      %s361 = sphi 0, %s347
      %s365 = sphi 0, %s365
      %s367 = sphi 0, %s365
      %s368 = sphi 0, %s367
      %s382 = sphi 0, %s368
      %s386 = sphi 0, %s386
      %s388 = sphi 0, %s386
      %s389 = sphi 0, %s388
      %s403 = sphi 0, %s389
      %s407 = sphi 0, %s407
      %s409 = sphi 0, %s407
      %s410 = sphi 0, %s409
      %s424 = sphi 0, %s410
      %s428 = sphi 0, %s428
      %s430 = sphi 0, %s428
      %s431 = sphi 0, %s430
      %s445 = sphi 0, %s431
      %s449 = sphi 0, %s449
      %s451 = sphi 0, %s449
      %s452 = sphi 0, %s451
      %s466 = sphi 0, %s452
      %s470 = sphi 0, %s470
      %s472 = sphi 0, %s470
      %s473 = sphi 0, %s472
      %s487 = sphi 0, %s473
      %s491 = sphi 0, %s491
      %s493 = sphi 0, %s491
      %s494 = sphi 0, %s493
      %s508 = sphi 0, %s494
      %s512 = sphi 0, %s512
      %s514 = sphi 0, %s512
      %s515 = sphi 0, %s514
      %s529 = sphi 0, %s515
      %s533 = sphi 0, %s533
      %s535 = sphi 0, %s533
      %s536 = sphi 0, %s535
      %s550 = sphi 0, %s536
      %s554 = sphi 0, %s554
      %s556 = sphi 0, %s554
      %s557 = sphi 0, %s556
      %s571 = sphi 0, %s557
      %s575 = sphi 0, %s575
      %s577 = sphi 0, %s575
      %s578 = sphi 0, %s577
      %s592 = sphi 0, %s578
      %s596 = sphi 0, %s596
      %s598 = sphi 0, %s596
      %s599 = sphi 0, %s598
      %s613 = sphi 0, %s599
      %s617 = sphi 0, %s617
      %s619 = sphi 0, %s617
      %s620 = sphi 0, %s619
      %s634 = sphi 0, %s620
      %s638 = sphi 0, %s638
      %s640 = sphi 0, %s638
      %s641 = sphi 0, %s640
      %s655 = sphi 0, %s641
      %s659 = sphi 0, %s659
      %s661 = sphi 0, %s659
      %s662 = sphi 0, %s661
      %s676 = sphi 0, %s662
      %s680 = sphi 0, %s680
      %s682 = sphi 0, %s680
      %s683 = sphi 0, %s682
      %s697 = sphi 0, %s683
      %s701 = sphi 0, %s701
      %s703 = sphi 0, %s701
      %s704 = sphi 0, %s703
      %s718 = sphi 0, %s704
      %s722 = sphi 0, %s722
      %s724 = sphi 0, %s722
      %s725 = sphi 0, %s724
      %s739 = sphi 0, %s725
      %s743 = sphi 0, %s743
      %s745 = sphi 0, %s743
      %s746 = sphi 0, %s745
      %s760 = sphi 0, %s746
      %s764 = sphi 0, %s764
      %s766 = sphi 0, %s764
      %s767 = sphi 0, %s766
      %s781 = sphi 0, %s767
      %s785 = sphi 0, %s785
      %s787 = sphi 0, %s785
      %s788 = sphi 0, %s787
      %s802 = sphi 0, %s788
      %s806 = sphi 0, %s806
      %s808 = sphi 0, %s806
      %s809 = sphi 0, %s808
      %s823 = sphi 0, %s809
      %s827 = sphi 0, %s827
      %s829 = sphi 0, %s827
      %s830 = sphi 0, %s829
      %s844 = sphi 0, %s830
      %s850 = sphi 0, %s852
      %s853 = sphi 0, %s850
      %s854 = sphi 0, %s853
      %s870 = sphi 0, %s854
    $region4: #{forward.1} parent=1 // loop_header_branch
      %98 = sbr.rel (%p96) target = $region8
    $region5: #{forward.1} parent=1 // loop_body
      %s100 = ssub.s32 %s95, 1
      %s101 = ssub.s32 %s95, 2
      %s102 = sadd.s32 %s95, 1
      %s103 = ssub.s32 %s95, %s102
      %p104 = scmp.eq.s32.totalorder %s103, 0
      %s106 = sadd.s32 %s105, 1
      %s107 = scalar_select %p104, %s105, %s106
      %p110 = pneg %p104
      %p111 = scmp.eq.s32.totalorder %s95, 1
      %p112 = por %p110, %p111
      %p113 = scmp.ne.s32.totalorder %s105, %s108
      %p114 = scmp.eq.s32.totalorder %s95, 0
      %p115 = por %p113, %p114
      %p116 = scmp.ne.s32.totalorder %s105, %s108
      %p117 = scmp.eq.s32.totalorder %s100, 1
      %p118 = por %p116, %p117
      %p119 = scmp.ne.s32.totalorder %s108, %s109
      %p120 = scmp.eq.s32.totalorder %s100, 0
      %p121 = por %p119, %p120
      %p122 = scmp.ne.s32.totalorder %s108, %s109
      %p123 = scmp.eq.s32.totalorder %s101, 1
      %p124 = por %p122, %p123
      %p126 = scmp.ne.s32.totalorder %s109, %s125
      %p127 = scmp.eq.s32.totalorder %s101, 0
      %p128 = por %p126, %p127
      %s129 = ssub.s32 %s95, %s102
      %p130 = scmp.eq.s32.totalorder %s129, 0
      %s132 = sadd.s32 %s131, 1
      %s133 = scalar_select %p130, %s131, %s132
      %p136 = pneg %p130
      %p137 = scmp.eq.s32.totalorder %s95, 1
      %p138 = por %p136, %p137
      %p139 = scmp.ne.s32.totalorder %s131, %s134
      %p140 = scmp.eq.s32.totalorder %s95, 0
      %p141 = por %p139, %p140
      %p142 = scmp.ne.s32.totalorder %s131, %s134
      %p143 = scmp.eq.s32.totalorder %s100, 1
      %p144 = por %p142, %p143
      %p145 = scmp.ne.s32.totalorder %s134, %s135
      %p146 = scmp.eq.s32.totalorder %s100, 0
      %p147 = por %p145, %p146
      %p148 = scmp.ne.s32.totalorder %s134, %s135
      %p149 = scmp.eq.s32.totalorder %s101, 1
      %p150 = por %p148, %p149
      %p152 = scmp.ne.s32.totalorder %s135, %s151
      %p153 = scmp.eq.s32.totalorder %s101, 0
      %p154 = por %p152, %p153
      %s156 = sadd.s32 %s155, 1
      %p159 = scmp.eq.s32.totalorder %s95, 1
      %p160 = scmp.ne.s32.totalorder %s155, %s157
      %p161 = scmp.eq.s32.totalorder %s95, 0
      %p162 = por %p160, %p161
      %p163 = scmp.ne.s32.totalorder %s155, %s157
      %p164 = scmp.eq.s32.totalorder %s100, 1
      %p165 = por %p163, %p164
      %p166 = scmp.ne.s32.totalorder %s157, %s158
      %p167 = scmp.eq.s32.totalorder %s100, 0
      %p168 = por %p166, %p167
      %p169 = scmp.ne.s32.totalorder %s157, %s158
      %p170 = scmp.eq.s32.totalorder %s101, 1
      %p171 = por %p169, %p170
      %p173 = scmp.ne.s32.totalorder %s158, %s172
      %p174 = scmp.eq.s32.totalorder %s101, 0
      %p175 = por %p173, %p174
      %s177 = sadd.s32 %s176, 1
      %p180 = scmp.eq.s32.totalorder %s95, 1
      %p181 = scmp.ne.s32.totalorder %s176, %s178
      %p182 = scmp.eq.s32.totalorder %s95, 0
      %p183 = por %p181, %p182
      %p184 = scmp.ne.s32.totalorder %s176, %s178
      %p185 = scmp.eq.s32.totalorder %s100, 1
      %p186 = por %p184, %p185
      %p187 = scmp.ne.s32.totalorder %s178, %s179
      %p188 = scmp.eq.s32.totalorder %s100, 0
      %p189 = por %p187, %p188
      %p190 = scmp.ne.s32.totalorder %s178, %s179
      %p191 = scmp.eq.s32.totalorder %s101, 1
      %p192 = por %p190, %p191
      %p194 = scmp.ne.s32.totalorder %s179, %s193
      %p195 = scmp.eq.s32.totalorder %s101, 0
      %p196 = por %p194, %p195
      %s198 = sadd.s32 %s197, 1
      %p201 = scmp.eq.s32.totalorder %s95, 1
      %p202 = scmp.ne.s32.totalorder %s197, %s199
      %p203 = scmp.eq.s32.totalorder %s95, 0
      %p204 = por %p202, %p203
      %p205 = scmp.ne.s32.totalorder %s197, %s199
      %p206 = scmp.eq.s32.totalorder %s100, 1
      %p207 = por %p205, %p206
      %p208 = scmp.ne.s32.totalorder %s199, %s200
      %p209 = scmp.eq.s32.totalorder %s100, 0
      %p210 = por %p208, %p209
      %p211 = scmp.ne.s32.totalorder %s199, %s200
      %p212 = scmp.eq.s32.totalorder %s101, 1
      %p213 = por %p211, %p212
      %p215 = scmp.ne.s32.totalorder %s200, %s214
      %p216 = scmp.eq.s32.totalorder %s101, 0
      %p217 = por %p215, %p216
      %s219 = sadd.s32 %s218, 1
      %p222 = scmp.eq.s32.totalorder %s95, 1
      %p223 = scmp.ne.s32.totalorder %s218, %s220
      %p224 = scmp.eq.s32.totalorder %s95, 0
      %p225 = por %p223, %p224
      %p226 = scmp.ne.s32.totalorder %s218, %s220
      %p227 = scmp.eq.s32.totalorder %s100, 1
      %p228 = por %p226, %p227
      %p229 = scmp.ne.s32.totalorder %s220, %s221
      %p230 = scmp.eq.s32.totalorder %s100, 0
      %p231 = por %p229, %p230
      %p232 = scmp.ne.s32.totalorder %s220, %s221
      %p233 = scmp.eq.s32.totalorder %s101, 1
      %p234 = por %p232, %p233
      %p236 = scmp.ne.s32.totalorder %s221, %s235
      %p237 = scmp.eq.s32.totalorder %s101, 0
      %p238 = por %p236, %p237
      %s240 = sadd.s32 %s239, 1
      %p243 = scmp.eq.s32.totalorder %s95, 1
      %p244 = scmp.ne.s32.totalorder %s239, %s241
      %p245 = scmp.eq.s32.totalorder %s95, 0
      %p246 = por %p244, %p245
      %p247 = scmp.ne.s32.totalorder %s239, %s241
      %p248 = scmp.eq.s32.totalorder %s100, 1
      %p249 = por %p247, %p248
      %p250 = scmp.ne.s32.totalorder %s241, %s242
      %p251 = scmp.eq.s32.totalorder %s100, 0
      %p252 = por %p250, %p251
      %p253 = scmp.ne.s32.totalorder %s241, %s242
      %p254 = scmp.eq.s32.totalorder %s101, 1
      %p255 = por %p253, %p254
      %p257 = scmp.ne.s32.totalorder %s242, %s256
      %p258 = scmp.eq.s32.totalorder %s101, 0
      %p259 = por %p257, %p258
      %s261 = sadd.s32 %s260, 1
      %p264 = scmp.eq.s32.totalorder %s95, 1
      %p265 = scmp.ne.s32.totalorder %s260, %s262
      %p266 = scmp.eq.s32.totalorder %s95, 0
      %p267 = por %p265, %p266
      %p268 = scmp.ne.s32.totalorder %s260, %s262
      %p269 = scmp.eq.s32.totalorder %s100, 1
      %p270 = por %p268, %p269
      %p271 = scmp.ne.s32.totalorder %s262, %s263
      %p272 = scmp.eq.s32.totalorder %s100, 0
      %p273 = por %p271, %p272
      %p274 = scmp.ne.s32.totalorder %s262, %s263
      %p275 = scmp.eq.s32.totalorder %s101, 1
      %p276 = por %p274, %p275
      %p278 = scmp.ne.s32.totalorder %s263, %s277
      %p279 = scmp.eq.s32.totalorder %s101, 0
      %p280 = por %p278, %p279
      %s282 = sadd.s32 %s281, 1
      %p285 = scmp.eq.s32.totalorder %s95, 1
      %p286 = scmp.ne.s32.totalorder %s281, %s283
      %p287 = scmp.eq.s32.totalorder %s95, 0
      %p288 = por %p286, %p287
      %p289 = scmp.ne.s32.totalorder %s281, %s283
      %p290 = scmp.eq.s32.totalorder %s100, 1
      %p291 = por %p289, %p290
      %p292 = scmp.ne.s32.totalorder %s283, %s284
      %p293 = scmp.eq.s32.totalorder %s100, 0
      %p294 = por %p292, %p293
      %p295 = scmp.ne.s32.totalorder %s283, %s284
      %p296 = scmp.eq.s32.totalorder %s101, 1
      %p297 = por %p295, %p296
      %p299 = scmp.ne.s32.totalorder %s284, %s298
      %p300 = scmp.eq.s32.totalorder %s101, 0
      %p301 = por %p299, %p300
      %s303 = sadd.s32 %s302, 1
      %p306 = scmp.eq.s32.totalorder %s95, 1
      %p307 = scmp.ne.s32.totalorder %s302, %s304
      %p308 = scmp.eq.s32.totalorder %s95, 0
      %p309 = por %p307, %p308
      %p310 = scmp.ne.s32.totalorder %s302, %s304
      %p311 = scmp.eq.s32.totalorder %s100, 1
      %p312 = por %p310, %p311
      %p313 = scmp.ne.s32.totalorder %s304, %s305
      %p314 = scmp.eq.s32.totalorder %s100, 0
      %p315 = por %p313, %p314
      %p316 = scmp.ne.s32.totalorder %s304, %s305
      %p317 = scmp.eq.s32.totalorder %s101, 1
      %p318 = por %p316, %p317
      %p320 = scmp.ne.s32.totalorder %s305, %s319
      %p321 = scmp.eq.s32.totalorder %s101, 0
      %p322 = por %p320, %p321
      %s324 = sadd.s32 %s323, 1
      %p327 = scmp.eq.s32.totalorder %s95, 1
      %p328 = scmp.ne.s32.totalorder %s323, %s325
      %p329 = scmp.eq.s32.totalorder %s95, 0
      %p330 = por %p328, %p329
      %p331 = scmp.ne.s32.totalorder %s323, %s325
      %p332 = scmp.eq.s32.totalorder %s100, 1
      %p333 = por %p331, %p332
      %p334 = scmp.ne.s32.totalorder %s325, %s326
      %p335 = scmp.eq.s32.totalorder %s100, 0
      %p336 = por %p334, %p335
      %p337 = scmp.ne.s32.totalorder %s325, %s326
      %p338 = scmp.eq.s32.totalorder %s101, 1
      %p339 = por %p337, %p338
      %p341 = scmp.ne.s32.totalorder %s326, %s340
      %p342 = scmp.eq.s32.totalorder %s101, 0
      %p343 = por %p341, %p342
      %s345 = sadd.s32 %s344, 1
      %p348 = scmp.eq.s32.totalorder %s95, 1
      %p349 = scmp.ne.s32.totalorder %s344, %s346
      %p350 = scmp.eq.s32.totalorder %s95, 0
      %p351 = por %p349, %p350
      %p352 = scmp.ne.s32.totalorder %s344, %s346
      %p353 = scmp.eq.s32.totalorder %s100, 1
      %p354 = por %p352, %p353
      %p355 = scmp.ne.s32.totalorder %s346, %s347
      %p356 = scmp.eq.s32.totalorder %s100, 0
      %p357 = por %p355, %p356
      %p358 = scmp.ne.s32.totalorder %s346, %s347
      %p359 = scmp.eq.s32.totalorder %s101, 1
      %p360 = por %p358, %p359
      %p362 = scmp.ne.s32.totalorder %s347, %s361
      %p363 = scmp.eq.s32.totalorder %s101, 0
      %p364 = por %p362, %p363
      %s366 = sadd.s32 %s365, 1
      %p369 = scmp.eq.s32.totalorder %s95, 1
      %p370 = scmp.ne.s32.totalorder %s365, %s367
      %p371 = scmp.eq.s32.totalorder %s95, 0
      %p372 = por %p370, %p371
      %p373 = scmp.ne.s32.totalorder %s365, %s367
      %p374 = scmp.eq.s32.totalorder %s100, 1
      %p375 = por %p373, %p374
      %p376 = scmp.ne.s32.totalorder %s367, %s368
      %p377 = scmp.eq.s32.totalorder %s100, 0
      %p378 = por %p376, %p377
      %p379 = scmp.ne.s32.totalorder %s367, %s368
      %p380 = scmp.eq.s32.totalorder %s101, 1
      %p381 = por %p379, %p380
      %p383 = scmp.ne.s32.totalorder %s368, %s382
      %p384 = scmp.eq.s32.totalorder %s101, 0
      %p385 = por %p383, %p384
      %s387 = sadd.s32 %s386, 1
      %p390 = scmp.eq.s32.totalorder %s95, 1
      %p391 = scmp.ne.s32.totalorder %s386, %s388
      %p392 = scmp.eq.s32.totalorder %s95, 0
      %p393 = por %p391, %p392
      %p394 = scmp.ne.s32.totalorder %s386, %s388
      %p395 = scmp.eq.s32.totalorder %s100, 1
      %p396 = por %p394, %p395
      %p397 = scmp.ne.s32.totalorder %s388, %s389
      %p398 = scmp.eq.s32.totalorder %s100, 0
      %p399 = por %p397, %p398
      %p400 = scmp.ne.s32.totalorder %s388, %s389
      %p401 = scmp.eq.s32.totalorder %s101, 1
      %p402 = por %p400, %p401
      %p404 = scmp.ne.s32.totalorder %s389, %s403
      %p405 = scmp.eq.s32.totalorder %s101, 0
      %p406 = por %p404, %p405
      %s408 = sadd.s32 %s407, 1
      %p411 = scmp.eq.s32.totalorder %s95, 1
      %p412 = scmp.ne.s32.totalorder %s407, %s409
      %p413 = scmp.eq.s32.totalorder %s95, 0
      %p414 = por %p412, %p413
      %p415 = scmp.ne.s32.totalorder %s407, %s409
      %p416 = scmp.eq.s32.totalorder %s100, 1
      %p417 = por %p415, %p416
      %p418 = scmp.ne.s32.totalorder %s409, %s410
      %p419 = scmp.eq.s32.totalorder %s100, 0
      %p420 = por %p418, %p419
      %p421 = scmp.ne.s32.totalorder %s409, %s410
      %p422 = scmp.eq.s32.totalorder %s101, 1
      %p423 = por %p421, %p422
      %p425 = scmp.ne.s32.totalorder %s410, %s424
      %p426 = scmp.eq.s32.totalorder %s101, 0
      %p427 = por %p425, %p426
      %s429 = sadd.s32 %s428, 1
      %p432 = scmp.eq.s32.totalorder %s95, 1
      %p433 = scmp.ne.s32.totalorder %s428, %s430
      %p434 = scmp.eq.s32.totalorder %s95, 0
      %p435 = por %p433, %p434
      %p436 = scmp.ne.s32.totalorder %s428, %s430
      %p437 = scmp.eq.s32.totalorder %s100, 1
      %p438 = por %p436, %p437
      %p439 = scmp.ne.s32.totalorder %s430, %s431
      %p440 = scmp.eq.s32.totalorder %s100, 0
      %p441 = por %p439, %p440
      %p442 = scmp.ne.s32.totalorder %s430, %s431
      %p443 = scmp.eq.s32.totalorder %s101, 1
      %p444 = por %p442, %p443
      %p446 = scmp.ne.s32.totalorder %s431, %s445
      %p447 = scmp.eq.s32.totalorder %s101, 0
      %p448 = por %p446, %p447
      %s450 = sadd.s32 %s449, 1
      %p453 = scmp.eq.s32.totalorder %s95, 1
      %p454 = scmp.ne.s32.totalorder %s449, %s451
      %p455 = scmp.eq.s32.totalorder %s95, 0
      %p456 = por %p454, %p455
      %p457 = scmp.ne.s32.totalorder %s449, %s451
      %p458 = scmp.eq.s32.totalorder %s100, 1
      %p459 = por %p457, %p458
      %p460 = scmp.ne.s32.totalorder %s451, %s452
      %p461 = scmp.eq.s32.totalorder %s100, 0
      %p462 = por %p460, %p461
      %p463 = scmp.ne.s32.totalorder %s451, %s452
      %p464 = scmp.eq.s32.totalorder %s101, 1
      %p465 = por %p463, %p464
      %p467 = scmp.ne.s32.totalorder %s452, %s466
      %p468 = scmp.eq.s32.totalorder %s101, 0
      %p469 = por %p467, %p468
      %s471 = sadd.s32 %s470, 1
      %p474 = scmp.eq.s32.totalorder %s95, 1
      %p475 = scmp.ne.s32.totalorder %s470, %s472
      %p476 = scmp.eq.s32.totalorder %s95, 0
      %p477 = por %p475, %p476
      %p478 = scmp.ne.s32.totalorder %s470, %s472
      %p479 = scmp.eq.s32.totalorder %s100, 1
      %p480 = por %p478, %p479
      %p481 = scmp.ne.s32.totalorder %s472, %s473
      %p482 = scmp.eq.s32.totalorder %s100, 0
      %p483 = por %p481, %p482
      %p484 = scmp.ne.s32.totalorder %s472, %s473
      %p485 = scmp.eq.s32.totalorder %s101, 1
      %p486 = por %p484, %p485
      %p488 = scmp.ne.s32.totalorder %s473, %s487
      %p489 = scmp.eq.s32.totalorder %s101, 0
      %p490 = por %p488, %p489
      %s492 = sadd.s32 %s491, 1
      %p495 = scmp.eq.s32.totalorder %s95, 1
      %p496 = scmp.ne.s32.totalorder %s491, %s493
      %p497 = scmp.eq.s32.totalorder %s95, 0
      %p498 = por %p496, %p497
      %p499 = scmp.ne.s32.totalorder %s491, %s493
      %p500 = scmp.eq.s32.totalorder %s100, 1
      %p501 = por %p499, %p500
      %p502 = scmp.ne.s32.totalorder %s493, %s494
      %p503 = scmp.eq.s32.totalorder %s100, 0
      %p504 = por %p502, %p503
      %p505 = scmp.ne.s32.totalorder %s493, %s494
      %p506 = scmp.eq.s32.totalorder %s101, 1
      %p507 = por %p505, %p506
      %p509 = scmp.ne.s32.totalorder %s494, %s508
      %p510 = scmp.eq.s32.totalorder %s101, 0
      %p511 = por %p509, %p510
      %s513 = sadd.s32 %s512, 1
      %p516 = scmp.eq.s32.totalorder %s95, 1
      %p517 = scmp.ne.s32.totalorder %s512, %s514
      %p518 = scmp.eq.s32.totalorder %s95, 0
      %p519 = por %p517, %p518
      %p520 = scmp.ne.s32.totalorder %s512, %s514
      %p521 = scmp.eq.s32.totalorder %s100, 1
      %p522 = por %p520, %p521
      %p523 = scmp.ne.s32.totalorder %s514, %s515
      %p524 = scmp.eq.s32.totalorder %s100, 0
      %p525 = por %p523, %p524
      %p526 = scmp.ne.s32.totalorder %s514, %s515
      %p527 = scmp.eq.s32.totalorder %s101, 1
      %p528 = por %p526, %p527
      %p530 = scmp.ne.s32.totalorder %s515, %s529
      %p531 = scmp.eq.s32.totalorder %s101, 0
      %p532 = por %p530, %p531
      %s534 = sadd.s32 %s533, 1
      %p537 = scmp.eq.s32.totalorder %s95, 1
      %p538 = scmp.ne.s32.totalorder %s533, %s535
      %p539 = scmp.eq.s32.totalorder %s95, 0
      %p540 = por %p538, %p539
      %p541 = scmp.ne.s32.totalorder %s533, %s535
      %p542 = scmp.eq.s32.totalorder %s100, 1
      %p543 = por %p541, %p542
      %p544 = scmp.ne.s32.totalorder %s535, %s536
      %p545 = scmp.eq.s32.totalorder %s100, 0
      %p546 = por %p544, %p545
      %p547 = scmp.ne.s32.totalorder %s535, %s536
      %p548 = scmp.eq.s32.totalorder %s101, 1
      %p549 = por %p547, %p548
      %p551 = scmp.ne.s32.totalorder %s536, %s550
      %p552 = scmp.eq.s32.totalorder %s101, 0
      %p553 = por %p551, %p552
      %s555 = sadd.s32 %s554, 1
      %p558 = scmp.eq.s32.totalorder %s95, 1
      %p559 = scmp.ne.s32.totalorder %s554, %s556
      %p560 = scmp.eq.s32.totalorder %s95, 0
      %p561 = por %p559, %p560
      %p562 = scmp.ne.s32.totalorder %s554, %s556
      %p563 = scmp.eq.s32.totalorder %s100, 1
      %p564 = por %p562, %p563
      %p565 = scmp.ne.s32.totalorder %s556, %s557
      %p566 = scmp.eq.s32.totalorder %s100, 0
      %p567 = por %p565, %p566
      %p568 = scmp.ne.s32.totalorder %s556, %s557
      %p569 = scmp.eq.s32.totalorder %s101, 1
      %p570 = por %p568, %p569
      %p572 = scmp.ne.s32.totalorder %s557, %s571
      %p573 = scmp.eq.s32.totalorder %s101, 0
      %p574 = por %p572, %p573
      %s576 = sadd.s32 %s575, 1
      %p579 = scmp.eq.s32.totalorder %s95, 1
      %p580 = scmp.ne.s32.totalorder %s575, %s577
      %p581 = scmp.eq.s32.totalorder %s95, 0
      %p582 = por %p580, %p581
      %p583 = scmp.ne.s32.totalorder %s575, %s577
      %p584 = scmp.eq.s32.totalorder %s100, 1
      %p585 = por %p583, %p584
      %p586 = scmp.ne.s32.totalorder %s577, %s578
      %p587 = scmp.eq.s32.totalorder %s100, 0
      %p588 = por %p586, %p587
      %p589 = scmp.ne.s32.totalorder %s577, %s578
      %p590 = scmp.eq.s32.totalorder %s101, 1
      %p591 = por %p589, %p590
      %p593 = scmp.ne.s32.totalorder %s578, %s592
      %p594 = scmp.eq.s32.totalorder %s101, 0
      %p595 = por %p593, %p594
      %s597 = sadd.s32 %s596, 1
      %p600 = scmp.eq.s32.totalorder %s95, 1
      %p601 = scmp.ne.s32.totalorder %s596, %s598
      %p602 = scmp.eq.s32.totalorder %s95, 0
      %p603 = por %p601, %p602
      %p604 = scmp.ne.s32.totalorder %s596, %s598
      %p605 = scmp.eq.s32.totalorder %s100, 1
      %p606 = por %p604, %p605
      %p607 = scmp.ne.s32.totalorder %s598, %s599
      %p608 = scmp.eq.s32.totalorder %s100, 0
      %p609 = por %p607, %p608
      %p610 = scmp.ne.s32.totalorder %s598, %s599
      %p611 = scmp.eq.s32.totalorder %s101, 1
      %p612 = por %p610, %p611
      %p614 = scmp.ne.s32.totalorder %s599, %s613
      %p615 = scmp.eq.s32.totalorder %s101, 0
      %p616 = por %p614, %p615
      %s618 = sadd.s32 %s617, 1
      %p621 = scmp.eq.s32.totalorder %s95, 1
      %p622 = scmp.ne.s32.totalorder %s617, %s619
      %p623 = scmp.eq.s32.totalorder %s95, 0
      %p624 = por %p622, %p623
      %p625 = scmp.ne.s32.totalorder %s617, %s619
      %p626 = scmp.eq.s32.totalorder %s100, 1
      %p627 = por %p625, %p626
      %p628 = scmp.ne.s32.totalorder %s619, %s620
      %p629 = scmp.eq.s32.totalorder %s100, 0
      %p630 = por %p628, %p629
      %p631 = scmp.ne.s32.totalorder %s619, %s620
      %p632 = scmp.eq.s32.totalorder %s101, 1
      %p633 = por %p631, %p632
      %p635 = scmp.ne.s32.totalorder %s620, %s634
      %p636 = scmp.eq.s32.totalorder %s101, 0
      %p637 = por %p635, %p636
      %s639 = sadd.s32 %s638, 1
      %p642 = scmp.eq.s32.totalorder %s95, 1
      %p643 = scmp.ne.s32.totalorder %s638, %s640
      %p644 = scmp.eq.s32.totalorder %s95, 0
      %p645 = por %p643, %p644
      %p646 = scmp.ne.s32.totalorder %s638, %s640
      %p647 = scmp.eq.s32.totalorder %s100, 1
      %p648 = por %p646, %p647
      %p649 = scmp.ne.s32.totalorder %s640, %s641
      %p650 = scmp.eq.s32.totalorder %s100, 0
      %p651 = por %p649, %p650
      %p652 = scmp.ne.s32.totalorder %s640, %s641
      %p653 = scmp.eq.s32.totalorder %s101, 1
      %p654 = por %p652, %p653
      %p656 = scmp.ne.s32.totalorder %s641, %s655
      %p657 = scmp.eq.s32.totalorder %s101, 0
      %p658 = por %p656, %p657
      %s660 = sadd.s32 %s659, 1
      %p663 = scmp.eq.s32.totalorder %s95, 1
      %p664 = scmp.ne.s32.totalorder %s659, %s661
      %p665 = scmp.eq.s32.totalorder %s95, 0
      %p666 = por %p664, %p665
      %p667 = scmp.ne.s32.totalorder %s659, %s661
      %p668 = scmp.eq.s32.totalorder %s100, 1
      %p669 = por %p667, %p668
      %p670 = scmp.ne.s32.totalorder %s661, %s662
      %p671 = scmp.eq.s32.totalorder %s100, 0
      %p672 = por %p670, %p671
      %p673 = scmp.ne.s32.totalorder %s661, %s662
      %p674 = scmp.eq.s32.totalorder %s101, 1
      %p675 = por %p673, %p674
      %p677 = scmp.ne.s32.totalorder %s662, %s676
      %p678 = scmp.eq.s32.totalorder %s101, 0
      %p679 = por %p677, %p678
      %s681 = sadd.s32 %s680, 1
      %p684 = scmp.eq.s32.totalorder %s95, 1
      %p685 = scmp.ne.s32.totalorder %s680, %s682
      %p686 = scmp.eq.s32.totalorder %s95, 0
      %p687 = por %p685, %p686
      %p688 = scmp.ne.s32.totalorder %s680, %s682
      %p689 = scmp.eq.s32.totalorder %s100, 1
      %p690 = por %p688, %p689
      %p691 = scmp.ne.s32.totalorder %s682, %s683
      %p692 = scmp.eq.s32.totalorder %s100, 0
      %p693 = por %p691, %p692
      %p694 = scmp.ne.s32.totalorder %s682, %s683
      %p695 = scmp.eq.s32.totalorder %s101, 1
      %p696 = por %p694, %p695
      %p698 = scmp.ne.s32.totalorder %s683, %s697
      %p699 = scmp.eq.s32.totalorder %s101, 0
      %p700 = por %p698, %p699
      %s702 = sadd.s32 %s701, 1
      %p705 = scmp.eq.s32.totalorder %s95, 1
      %p706 = scmp.ne.s32.totalorder %s701, %s703
      %p707 = scmp.eq.s32.totalorder %s95, 0
      %p708 = por %p706, %p707
      %p709 = scmp.ne.s32.totalorder %s701, %s703
      %p710 = scmp.eq.s32.totalorder %s100, 1
      %p711 = por %p709, %p710
      %p712 = scmp.ne.s32.totalorder %s703, %s704
      %p713 = scmp.eq.s32.totalorder %s100, 0
      %p714 = por %p712, %p713
      %p715 = scmp.ne.s32.totalorder %s703, %s704
      %p716 = scmp.eq.s32.totalorder %s101, 1
      %p717 = por %p715, %p716
      %p719 = scmp.ne.s32.totalorder %s704, %s718
      %p720 = scmp.eq.s32.totalorder %s101, 0
      %p721 = por %p719, %p720
      %s723 = sadd.s32 %s722, 1
      %p726 = scmp.eq.s32.totalorder %s95, 1
      %p727 = scmp.ne.s32.totalorder %s722, %s724
      %p728 = scmp.eq.s32.totalorder %s95, 0
      %p729 = por %p727, %p728
      %p730 = scmp.ne.s32.totalorder %s722, %s724
      %p731 = scmp.eq.s32.totalorder %s100, 1
      %p732 = por %p730, %p731
      %p733 = scmp.ne.s32.totalorder %s724, %s725
      %p734 = scmp.eq.s32.totalorder %s100, 0
      %p735 = por %p733, %p734
      %p736 = scmp.ne.s32.totalorder %s724, %s725
      %p737 = scmp.eq.s32.totalorder %s101, 1
      %p738 = por %p736, %p737
      %p740 = scmp.ne.s32.totalorder %s725, %s739
      %p741 = scmp.eq.s32.totalorder %s101, 0
      %p742 = por %p740, %p741
      %s744 = sadd.s32 %s743, 1
      %p747 = scmp.eq.s32.totalorder %s95, 1
      %p748 = scmp.ne.s32.totalorder %s743, %s745
      %p749 = scmp.eq.s32.totalorder %s95, 0
      %p750 = por %p748, %p749
      %p751 = scmp.ne.s32.totalorder %s743, %s745
      %p752 = scmp.eq.s32.totalorder %s100, 1
      %p753 = por %p751, %p752
      %p754 = scmp.ne.s32.totalorder %s745, %s746
      %p755 = scmp.eq.s32.totalorder %s100, 0
      %p756 = por %p754, %p755
      %p757 = scmp.ne.s32.totalorder %s745, %s746
      %p758 = scmp.eq.s32.totalorder %s101, 1
      %p759 = por %p757, %p758
      %p761 = scmp.ne.s32.totalorder %s746, %s760
      %p762 = scmp.eq.s32.totalorder %s101, 0
      %p763 = por %p761, %p762
      %s765 = sadd.s32 %s764, 1
      %p768 = scmp.eq.s32.totalorder %s95, 1
      %p769 = scmp.ne.s32.totalorder %s764, %s766
      %p770 = scmp.eq.s32.totalorder %s95, 0
      %p771 = por %p769, %p770
      %p772 = scmp.ne.s32.totalorder %s764, %s766
      %p773 = scmp.eq.s32.totalorder %s100, 1
      %p774 = por %p772, %p773
      %p775 = scmp.ne.s32.totalorder %s766, %s767
      %p776 = scmp.eq.s32.totalorder %s100, 0
      %p777 = por %p775, %p776
      %p778 = scmp.ne.s32.totalorder %s766, %s767
      %p779 = scmp.eq.s32.totalorder %s101, 1
      %p780 = por %p778, %p779
      %p782 = scmp.ne.s32.totalorder %s767, %s781
      %p783 = scmp.eq.s32.totalorder %s101, 0
      %p784 = por %p782, %p783
      %s786 = sadd.s32 %s785, 1
      %p789 = scmp.eq.s32.totalorder %s95, 1
      %p790 = scmp.ne.s32.totalorder %s785, %s787
      %p791 = scmp.eq.s32.totalorder %s95, 0
      %p792 = por %p790, %p791
      %p793 = scmp.ne.s32.totalorder %s785, %s787
      %p794 = scmp.eq.s32.totalorder %s100, 1
      %p795 = por %p793, %p794
      %p796 = scmp.ne.s32.totalorder %s787, %s788
      %p797 = scmp.eq.s32.totalorder %s100, 0
      %p798 = por %p796, %p797
      %p799 = scmp.ne.s32.totalorder %s787, %s788
      %p800 = scmp.eq.s32.totalorder %s101, 1
      %p801 = por %p799, %p800
      %p803 = scmp.ne.s32.totalorder %s788, %s802
      %p804 = scmp.eq.s32.totalorder %s101, 0
      %p805 = por %p803, %p804
      %s807 = sadd.s32 %s806, 1
      %p810 = scmp.eq.s32.totalorder %s95, 1
      %p811 = scmp.ne.s32.totalorder %s806, %s808
      %p812 = scmp.eq.s32.totalorder %s95, 0
      %p813 = por %p811, %p812
      %p814 = scmp.ne.s32.totalorder %s806, %s808
      %p815 = scmp.eq.s32.totalorder %s100, 1
      %p816 = por %p814, %p815
      %p817 = scmp.ne.s32.totalorder %s808, %s809
      %p818 = scmp.eq.s32.totalorder %s100, 0
      %p819 = por %p817, %p818
      %p820 = scmp.ne.s32.totalorder %s808, %s809
      %p821 = scmp.eq.s32.totalorder %s101, 1
      %p822 = por %p820, %p821
      %p824 = scmp.ne.s32.totalorder %s809, %s823
      %p825 = scmp.eq.s32.totalorder %s101, 0
      %p826 = por %p824, %p825
      %s828 = sadd.s32 %s827, 1
      %p831 = scmp.eq.s32.totalorder %s95, 1
      %p832 = scmp.ne.s32.totalorder %s827, %s829
      %p833 = scmp.eq.s32.totalorder %s95, 0
      %p834 = por %p832, %p833
      %p835 = scmp.ne.s32.totalorder %s827, %s829
      %p836 = scmp.eq.s32.totalorder %s100, 1
      %p837 = por %p835, %p836
      %p838 = scmp.ne.s32.totalorder %s829, %s830
      %p839 = scmp.eq.s32.totalorder %s100, 0
      %p840 = por %p838, %p839
      %p841 = scmp.ne.s32.totalorder %s829, %s830
      %p842 = scmp.eq.s32.totalorder %s101, 1
      %p843 = por %p841, %p842
      %p845 = scmp.ne.s32.totalorder %s830, %s844
      %p846 = scmp.eq.s32.totalorder %s101, 0
      %p847 = por %p845, %p846
      %s848 = ssub.s32 %s95, %s102
      %p849 = scmp.eq.s32.totalorder %s848, 0
      %s851 = sadd.s32 %s850, 1
      %s852 = scalar_select %p849, %s850, %s851
      %p855 = pneg %p849
      %p856 = scmp.eq.s32.totalorder %s95, 1
      %p857 = por %p855, %p856
      %p858 = scmp.ne.s32.totalorder %s850, %s853
      %p859 = scmp.eq.s32.totalorder %s95, 0
      %p860 = por %p858, %p859
      %p861 = scmp.ne.s32.totalorder %s850, %s853
      %p862 = scmp.eq.s32.totalorder %s100, 1
      %p863 = por %p861, %p862
      %p864 = scmp.ne.s32.totalorder %s853, %s854
      %p865 = scmp.eq.s32.totalorder %s100, 0
      %p866 = por %p864, %p865
      %p867 = scmp.ne.s32.totalorder %s853, %s854
      %p868 = scmp.eq.s32.totalorder %s101, 1
      %p869 = por %p867, %p868
      %p871 = scmp.ne.s32.totalorder %s854, %s870
      %p872 = scmp.eq.s32.totalorder %s101, 0
      %p873 = por %p871, %p872
      %p874 = scmp.le.s32.totalorder 1, %s95
      %p875 = scmp.lt.s32.totalorder %s95, 3
      %p876 = pnand %p874, %p875
      %p877 = pneg %p876
      // Predicated region
      $region9: #{forward.1} parent=5 // pred_check
        _
      $region10: #{forward.1} parent=5 // pred_check_branch
        %879 = sbr.rel (%p876) target = $region12
      $region11: #{forward.1} parent=5 // pred_region
        %s880 = ssub.s32 %s95, 1
        // Predicated region
        $region13: #{forward.1} parent=11 // pred_check
          %p881 = pneg %p168
        $region14: #{forward.1} parent=11 // pred_check_branch
          %883 = sbr.rel (%p881) target = $region16
        $region15: #{forward.1} parent=11 // pred_region
          %885 = vsyncadd [#allocation3], 0
          %s886 = sshll.u32 %s5, 4
          %s887 = int_to_ptr.hbm [resolvable:$true] %s886
          %s888 = sshll.u32 [#allocation2], 4
          %s889 = int_to_ptr.vmem [resolvable:$true] %s888
          %894 = dma.hbm_to_vmem [thread:$0]  %s887, 32, %s889, [#allocation3], 16, 16, 1
        $region16: #{forward.1} parent=11 // pred_fallthru
          _
        // Predicated region
        $region17: #{forward.1} parent=11 // pred_check
          %p895 = pneg %p189
        $region18: #{forward.1} parent=11 // pred_check_branch
          %897 = sbr.rel (%p895) target = $region20
        $region19: #{forward.1} parent=11 // pred_region
          %899 = vsyncadd [#allocation6], 0
          %s900 = sshll.u32 %s7, 4
          %s901 = int_to_ptr.hbm [resolvable:$true] %s900
          %s902 = sshll.u32 [#allocation5], 4
          %s903 = int_to_ptr.vmem [resolvable:$true] %s902
          %908 = dma.hbm_to_vmem [thread:$0]  %s901, 32, %s903, [#allocation6], 16, 16, 1
        $region20: #{forward.1} parent=11 // pred_fallthru
          _
        // Predicated region
        $region21: #{forward.1} parent=11 // pred_check
          %p909 = pneg %p210
        $region22: #{forward.1} parent=11 // pred_check_branch
          %911 = sbr.rel (%p909) target = $region24
        $region23: #{forward.1} parent=11 // pred_region
          _
        $region24: #{forward.1} parent=11 // pred_fallthru
          _
        // Predicated region
        $region25: #{forward.1} parent=11 // pred_check
          %p912 = pneg %p231
        $region26: #{forward.1} parent=11 // pred_check_branch
          %914 = sbr.rel (%p912) target = $region28
        $region27: #{forward.1} parent=11 // pred_region
          %916 = vsyncadd [#allocation6], 0
          %s917 = sshll.u32 %s11, 4
          %s918 = int_to_ptr.hbm [resolvable:$true] %s917
          %s919 = sshll.u32 [#allocation7], 4
          %s920 = int_to_ptr.vmem [resolvable:$true] %s919
          %925 = dma.hbm_to_vmem [thread:$0]  %s918, 2048, %s920, [#allocation6], 64, 64, 4
        $region28: #{forward.1} parent=11 // pred_fallthru
          _
        // Predicated region
        $region29: #{forward.1} parent=11 // pred_check
          %p926 = pneg %p252
        $region30: #{forward.1} parent=11 // pred_check_branch
          %928 = sbr.rel (%p926) target = $region32
        $region31: #{forward.1} parent=11 // pred_region
          %930 = vsyncadd [#allocation9], 0
          %s931 = sshll.u32 %s13, 4
          %s932 = int_to_ptr.hbm [resolvable:$true] %s931
          %s933 = sshll.u32 [#allocation8], 4
          %s934 = int_to_ptr.vmem [resolvable:$true] %s933
          %939 = dma.hbm_to_vmem [thread:$0]  %s932, 32, %s934, [#allocation9], 16, 16, 1
        $region32: #{forward.1} parent=11 // pred_fallthru
          _
        // Predicated region
        $region33: #{forward.1} parent=11 // pred_check
          %p940 = pneg %p273
        $region34: #{forward.1} parent=11 // pred_check_branch
          %942 = sbr.rel (%p940) target = $region36
        $region35: #{forward.1} parent=11 // pred_region
          %944 = vsyncadd [#allocation9], 0
          %s945 = sshll.u32 %s15, 4
          %s946 = int_to_ptr.hbm [resolvable:$true] %s945
          %s947 = sshll.u32 [#allocation10], 4
          %s948 = int_to_ptr.vmem [resolvable:$true] %s947
          %953 = dma.hbm_to_vmem [thread:$0]  %s946, 32, %s948, [#allocation9], 16, 16, 1
        $region36: #{forward.1} parent=11 // pred_fallthru
          _
        // Predicated region
        $region37: #{forward.1} parent=11 // pred_check
          %p954 = pneg %p294
        $region38: #{forward.1} parent=11 // pred_check_branch
          %956 = sbr.rel (%p954) target = $region40
        $region39: #{forward.1} parent=11 // pred_region
          %958 = vsyncadd [#allocation12], 0
          %s959 = sshll.u32 %s17, 4
          %s960 = int_to_ptr.hbm [resolvable:$true] %s959
          %s961 = sshll.u32 [#allocation11], 4
          %s962 = int_to_ptr.vmem [resolvable:$true] %s961
          %967 = dma.hbm_to_vmem [thread:$0]  %s960, 32, %s962, [#allocation12], 16, 16, 1
        $region40: #{forward.1} parent=11 // pred_fallthru
          _
        // Predicated region
        $region41: #{forward.1} parent=11 // pred_check
          %p968 = pneg %p315
        $region42: #{forward.1} parent=11 // pred_check_branch
          %970 = sbr.rel (%p968) target = $region44
        $region43: #{forward.1} parent=11 // pred_region
          %972 = vsyncadd [#allocation12], 0
          %s973 = sshll.u32 %s19, 4
          %s974 = int_to_ptr.hbm [resolvable:$true] %s973
          %s975 = sshll.u32 [#allocation13], 4
          %s976 = int_to_ptr.vmem [resolvable:$true] %s975
          %981 = dma.hbm_to_vmem [thread:$0]  %s974, 4096, %s976, [#allocation12], 128, 128, 8
        $region44: #{forward.1} parent=11 // pred_fallthru
          _
        // Predicated region
        $region45: #{forward.1} parent=11 // pred_check
          %p982 = pneg %p336
        $region46: #{forward.1} parent=11 // pred_check_branch
          %984 = sbr.rel (%p982) target = $region48
        $region47: #{forward.1} parent=11 // pred_region
          _
        $region48: #{forward.1} parent=11 // pred_fallthru
          _
        // Predicated region
        $region49: #{forward.1} parent=11 // pred_check
          %p985 = pneg %p357
        $region50: #{forward.1} parent=11 // pred_check_branch
          %987 = sbr.rel (%p985) target = $region52
        $region51: #{forward.1} parent=11 // pred_region
          %989 = vsyncadd [#allocation15], 0
          %s990 = sshll.u32 %s23, 4
          %s991 = int_to_ptr.hbm [resolvable:$true] %s990
          %s992 = sshll.u32 [#allocation14], 4
          %s993 = int_to_ptr.vmem [resolvable:$true] %s992
          %998 = dma.hbm_to_vmem [thread:$0]  %s991, 4096, %s993, [#allocation15], 64, 64, 4
        $region52: #{forward.1} parent=11 // pred_fallthru
          _
        // Predicated region
        $region53: #{forward.1} parent=11 // pred_check
          %p999 = pneg %p378
        $region54: #{forward.1} parent=11 // pred_check_branch
          %1001 = sbr.rel (%p999) target = $region56
        $region55: #{forward.1} parent=11 // pred_region
          %1003 = vsyncadd [#allocation15], 0
          %s1004 = sshll.u32 %s25, 4
          %s1005 = int_to_ptr.hbm [resolvable:$true] %s1004
          %s1006 = sshll.u32 [#allocation16], 4
          %s1007 = int_to_ptr.vmem [resolvable:$true] %s1006
          %1012 = dma.hbm_to_vmem [thread:$0]  %s1005, 32, %s1007, [#allocation15], 16, 16, 1
        $region56: #{forward.1} parent=11 // pred_fallthru
          _
        // Predicated region
        $region57: #{forward.1} parent=11 // pred_check
          %p1013 = pneg %p399
        $region58: #{forward.1} parent=11 // pred_check_branch
          %1015 = sbr.rel (%p1013) target = $region60
        $region59: #{forward.1} parent=11 // pred_region
          %1017 = vsyncadd [#allocation18], 0
          %s1019 = sshll.u32 %s27, 4
          %s1020 = int_to_ptr.hbm [resolvable:$true] %s1019
          %s1021 = sshll.u32 [#allocation17], 4
          %s1022 = int_to_ptr.vmem [resolvable:$true] %s1021
          %1024 = dma.hbm_to_vmem [thread:$0]  %s1020, 16, %s1022, [#allocation18]
        $region60: #{forward.1} parent=11 // pred_fallthru
          _
        // Predicated region
        $region61: #{forward.1} parent=11 // pred_check
          %p1025 = pneg %p420
        $region62: #{forward.1} parent=11 // pred_check_branch
          %1027 = sbr.rel (%p1025) target = $region64
        $region63: #{forward.1} parent=11 // pred_region
          %1029 = vsyncadd [#allocation18], 0
          %s1031 = sshll.u32 %s29, 4
          %s1032 = int_to_ptr.hbm [resolvable:$true] %s1031
          %s1033 = sshll.u32 [#allocation19], 4
          %s1034 = int_to_ptr.vmem [resolvable:$true] %s1033
          %1036 = dma.hbm_to_vmem [thread:$0]  %s1032, 16, %s1034, [#allocation18]
        $region64: #{forward.1} parent=11 // pred_fallthru
          _
        // Predicated region
        $region65: #{forward.1} parent=11 // pred_check
          %p1037 = pneg %p441
        $region66: #{forward.1} parent=11 // pred_check_branch
          %1039 = sbr.rel (%p1037) target = $region68
        $region67: #{forward.1} parent=11 // pred_region
          %1041 = vsyncadd [#allocation21], 0
          %s1042 = sshll.u32 %s31, 4
          %s1043 = int_to_ptr.hbm [resolvable:$true] %s1042
          %s1044 = sshll.u32 [#allocation20], 4
          %s1045 = int_to_ptr.vmem [resolvable:$true] %s1044
          %1050 = dma.hbm_to_vmem [thread:$0]  %s1043, 32, %s1045, [#allocation21], 16, 16, 1
        $region68: #{forward.1} parent=11 // pred_fallthru
          _
        // Predicated region
        $region69: #{forward.1} parent=11 // pred_check
          %p1051 = pneg %p462
        $region70: #{forward.1} parent=11 // pred_check_branch
          %1053 = sbr.rel (%p1051) target = $region72
        $region71: #{forward.1} parent=11 // pred_region
          %1055 = vsyncadd [#allocation21], 0
          %s1056 = sshll.u32 %s33, 4
          %s1057 = int_to_ptr.hbm [resolvable:$true] %s1056
          %s1058 = sshll.u32 [#allocation22], 4
          %s1059 = int_to_ptr.vmem [resolvable:$true] %s1058
          %1064 = dma.hbm_to_vmem [thread:$0]  %s1057, 32, %s1059, [#allocation21], 16, 16, 1
        $region72: #{forward.1} parent=11 // pred_fallthru
          _
        // Predicated region
        $region73: #{forward.1} parent=11 // pred_check
          %p1065 = pneg %p483
        $region74: #{forward.1} parent=11 // pred_check_branch
          %1067 = sbr.rel (%p1065) target = $region76
        $region75: #{forward.1} parent=11 // pred_region
          %1069 = vsyncadd [#allocation24], 0
          %s1070 = sshll.u32 %s35, 4
          %s1071 = int_to_ptr.hbm [resolvable:$true] %s1070
          %s1072 = sshll.u32 [#allocation23], 4
          %s1073 = int_to_ptr.vmem [resolvable:$true] %s1072
          %1078 = dma.hbm_to_vmem [thread:$0]  %s1071, 6144, %s1073, [#allocation24], 192, 192, 12
        $region76: #{forward.1} parent=11 // pred_fallthru
          _
        // Predicated region
        $region77: #{forward.1} parent=11 // pred_check
          %p1079 = pneg %p504
        $region78: #{forward.1} parent=11 // pred_check_branch
          %1081 = sbr.rel (%p1079) target = $region80
        $region79: #{forward.1} parent=11 // pred_region
          %1083 = vsyncadd [#allocation24], 0
          %s1084 = sshll.u32 %s37, 4
          %s1085 = int_to_ptr.hbm [resolvable:$true] %s1084
          %s1086 = sshll.u32 [#allocation25], 4
          %s1087 = int_to_ptr.vmem [resolvable:$true] %s1086
          %1092 = dma.hbm_to_vmem [thread:$0]  %s1085, 2048, %s1087, [#allocation24], 64, 64, 4
        $region80: #{forward.1} parent=11 // pred_fallthru
          _
        // Predicated region
        $region81: #{forward.1} parent=11 // pred_check
          %p1093 = pneg %p525
        $region82: #{forward.1} parent=11 // pred_check_branch
          %1095 = sbr.rel (%p1093) target = $region84
        $region83: #{forward.1} parent=11 // pred_region
          %1097 = vsyncadd [#allocation27], 0
          %s1098 = sshll.u32 %s39, 4
          %s1099 = int_to_ptr.hbm [resolvable:$true] %s1098
          %s1100 = sshll.u32 [#allocation26], 4
          %s1101 = int_to_ptr.vmem [resolvable:$true] %s1100
          %1106 = dma.hbm_to_vmem [thread:$0]  %s1099, 32, %s1101, [#allocation27], 16, 16, 1
        $region84: #{forward.1} parent=11 // pred_fallthru
          _
        // Predicated region
        $region85: #{forward.1} parent=11 // pred_check
          %p1107 = pneg %p546
        $region86: #{forward.1} parent=11 // pred_check_branch
          %1109 = sbr.rel (%p1107) target = $region88
        $region87: #{forward.1} parent=11 // pred_region
          %1111 = vsyncadd [#allocation27], 0
          %s1112 = sshll.u32 %s41, 4
          %s1113 = int_to_ptr.hbm [resolvable:$true] %s1112
          %s1114 = sshll.u32 [#allocation28], 4
          %s1115 = int_to_ptr.vmem [resolvable:$true] %s1114
          %1120 = dma.hbm_to_vmem [thread:$0]  %s1113, 32, %s1115, [#allocation27], 16, 16, 1
        $region88: #{forward.1} parent=11 // pred_fallthru
          _
        // Predicated region
        $region89: #{forward.1} parent=11 // pred_check
          %p1121 = pneg %p567
        $region90: #{forward.1} parent=11 // pred_check_branch
          %1123 = sbr.rel (%p1121) target = $region92
        $region91: #{forward.1} parent=11 // pred_region
          %1125 = vsyncadd [#allocation30], 0
          %s1126 = sshll.u32 %s43, 4
          %s1127 = int_to_ptr.hbm [resolvable:$true] %s1126
          %s1128 = sshll.u32 [#allocation29], 4
          %s1129 = int_to_ptr.vmem [resolvable:$true] %s1128
          %1134 = dma.hbm_to_vmem [thread:$0]  %s1127, 32, %s1129, [#allocation30], 16, 16, 1
        $region92: #{forward.1} parent=11 // pred_fallthru
          _
        // Predicated region
        $region93: #{forward.1} parent=11 // pred_check
          %p1135 = pneg %p588
        $region94: #{forward.1} parent=11 // pred_check_branch
          %1137 = sbr.rel (%p1135) target = $region96
        $region95: #{forward.1} parent=11 // pred_region
          %1139 = vsyncadd [#allocation30], 0
          %s1140 = sshll.u32 %s45, 4
          %s1141 = int_to_ptr.hbm [resolvable:$true] %s1140
          %s1142 = sshll.u32 [#allocation31], 4
          %s1143 = int_to_ptr.vmem [resolvable:$true] %s1142
          %1148 = dma.hbm_to_vmem [thread:$0]  %s1141, 6144, %s1143, [#allocation30], 192, 192, 12
        $region96: #{forward.1} parent=11 // pred_fallthru
          _
        // Predicated region
        $region97: #{forward.1} parent=11 // pred_check
          %p1149 = pneg %p609
        $region98: #{forward.1} parent=11 // pred_check_branch
          %1151 = sbr.rel (%p1149) target = $region100
        $region99: #{forward.1} parent=11 // pred_region
          %1153 = vsyncadd [#allocation33], 0
          %s1154 = sshll.u32 %s47, 4
          %s1155 = int_to_ptr.hbm [resolvable:$true] %s1154
          %s1156 = sshll.u32 [#allocation32], 4
          %s1157 = int_to_ptr.vmem [resolvable:$true] %s1156
          %1162 = dma.hbm_to_vmem [thread:$0]  %s1155, 2048, %s1157, [#allocation33], 64, 64, 4
        $region100: #{forward.1} parent=11 // pred_fallthru
          _
        // Predicated region
        $region101: #{forward.1} parent=11 // pred_check
          %p1163 = pneg %p630
        $region102: #{forward.1} parent=11 // pred_check_branch
          %1165 = sbr.rel (%p1163) target = $region104
        $region103: #{forward.1} parent=11 // pred_region
          %1167 = vsyncadd [#allocation33], 0
          %s1168 = sshll.u32 %s49, 4
          %s1169 = int_to_ptr.hbm [resolvable:$true] %s1168
          %s1170 = sshll.u32 [#allocation34], 4
          %s1171 = int_to_ptr.vmem [resolvable:$true] %s1170
          %1176 = dma.hbm_to_vmem [thread:$0]  %s1169, 32, %s1171, [#allocation33], 16, 16, 1
        $region104: #{forward.1} parent=11 // pred_fallthru
          _
        // Predicated region
        $region105: #{forward.1} parent=11 // pred_check
          %p1177 = pneg %p651
        $region106: #{forward.1} parent=11 // pred_check_branch
          %1179 = sbr.rel (%p1177) target = $region108
        $region107: #{forward.1} parent=11 // pred_region
          %1181 = vsyncadd [#allocation36], 0
          %s1182 = sshll.u32 %s51, 4
          %s1183 = int_to_ptr.hbm [resolvable:$true] %s1182
          %s1184 = sshll.u32 [#allocation35], 4
          %s1185 = int_to_ptr.vmem [resolvable:$true] %s1184
          %1190 = dma.hbm_to_vmem [thread:$0]  %s1183, 32, %s1185, [#allocation36], 16, 16, 1
        $region108: #{forward.1} parent=11 // pred_fallthru
          _
        // Predicated region
        $region109: #{forward.1} parent=11 // pred_check
          %p1191 = pneg %p672
        $region110: #{forward.1} parent=11 // pred_check_branch
          %1193 = sbr.rel (%p1191) target = $region112
        $region111: #{forward.1} parent=11 // pred_region
          %1195 = vsyncadd [#allocation36], 0
          %s1196 = sshll.u32 %s53, 4
          %s1197 = int_to_ptr.hbm [resolvable:$true] %s1196
          %s1198 = sshll.u32 [#allocation37], 4
          %s1199 = int_to_ptr.vmem [resolvable:$true] %s1198
          %1204 = dma.hbm_to_vmem [thread:$0]  %s1197, 32, %s1199, [#allocation36], 16, 16, 1
        $region112: #{forward.1} parent=11 // pred_fallthru
          _
        // Predicated region
        $region113: #{forward.1} parent=11 // pred_check
          %p1205 = pneg %p693
        $region114: #{forward.1} parent=11 // pred_check_branch
          %1207 = sbr.rel (%p1205) target = $region116
        $region115: #{forward.1} parent=11 // pred_region
          %1209 = vsyncadd [#allocation39], 0
          %s1210 = sshll.u32 %s55, 4
          %s1211 = int_to_ptr.hbm [resolvable:$true] %s1210
          %s1212 = sshll.u32 [#allocation38], 4
          %s1213 = int_to_ptr.vmem [resolvable:$true] %s1212
          %1218 = dma.hbm_to_vmem [thread:$0]  %s1211, 4096, %s1213, [#allocation39], 128, 128, 8
        $region116: #{forward.1} parent=11 // pred_fallthru
          _
        // Predicated region
        $region117: #{forward.1} parent=11 // pred_check
          %p1219 = pneg %p714
        $region118: #{forward.1} parent=11 // pred_check_branch
          %1221 = sbr.rel (%p1219) target = $region120
        $region119: #{forward.1} parent=11 // pred_region
          _
        $region120: #{forward.1} parent=11 // pred_fallthru
          _
        // Predicated region
        $region121: #{forward.1} parent=11 // pred_check
          %p1222 = pneg %p735
        $region122: #{forward.1} parent=11 // pred_check_branch
          %1224 = sbr.rel (%p1222) target = $region124
        $region123: #{forward.1} parent=11 // pred_region
          %1226 = vsyncadd [#allocation39], 0
          %s1227 = sshll.u32 %s59, 4
          %s1228 = int_to_ptr.hbm [resolvable:$true] %s1227
          %s1229 = sshll.u32 [#allocation40], 4
          %s1230 = int_to_ptr.vmem [resolvable:$true] %s1229
          %1235 = dma.hbm_to_vmem [thread:$0]  %s1228, 4096, %s1230, [#allocation39], 64, 64, 4
        $region124: #{forward.1} parent=11 // pred_fallthru
          _
        // Predicated region
        $region125: #{forward.1} parent=11 // pred_check
          %p1236 = pneg %p756
        $region126: #{forward.1} parent=11 // pred_check_branch
          %1238 = sbr.rel (%p1236) target = $region128
        $region127: #{forward.1} parent=11 // pred_region
          %1240 = vsyncadd [#allocation42], 0
          %s1241 = sshll.u32 %s61, 4
          %s1242 = int_to_ptr.hbm [resolvable:$true] %s1241
          %s1243 = sshll.u32 [#allocation41], 4
          %s1244 = int_to_ptr.vmem [resolvable:$true] %s1243
          %1249 = dma.hbm_to_vmem [thread:$0]  %s1242, 32, %s1244, [#allocation42], 16, 16, 1
        $region128: #{forward.1} parent=11 // pred_fallthru
          _
        // Predicated region
        $region129: #{forward.1} parent=11 // pred_check
          %p1250 = pneg %p777
        $region130: #{forward.1} parent=11 // pred_check_branch
          %1252 = sbr.rel (%p1250) target = $region132
        $region131: #{forward.1} parent=11 // pred_region
          %1254 = vsyncadd [#allocation42], 0
          %s1256 = sshll.u32 %s63, 4
          %s1257 = int_to_ptr.hbm [resolvable:$true] %s1256
          %s1258 = sshll.u32 [#allocation43], 4
          %s1259 = int_to_ptr.vmem [resolvable:$true] %s1258
          %1261 = dma.hbm_to_vmem [thread:$0]  %s1257, 16, %s1259, [#allocation42]
        $region132: #{forward.1} parent=11 // pred_fallthru
          _
        // Predicated region
        $region133: #{forward.1} parent=11 // pred_check
          %p1262 = pneg %p798
        $region134: #{forward.1} parent=11 // pred_check_branch
          %1264 = sbr.rel (%p1262) target = $region136
        $region135: #{forward.1} parent=11 // pred_region
          %1266 = vsyncadd [#allocation45], 0
          %s1268 = sshll.u32 %s65, 4
          %s1269 = int_to_ptr.hbm [resolvable:$true] %s1268
          %s1270 = sshll.u32 [#allocation44], 4
          %s1271 = int_to_ptr.vmem [resolvable:$true] %s1270
          %1273 = dma.hbm_to_vmem [thread:$0]  %s1269, 16, %s1271, [#allocation45]
        $region136: #{forward.1} parent=11 // pred_fallthru
          _
        // Predicated region
        $region137: #{forward.1} parent=11 // pred_check
          %p1274 = pneg %p819
        $region138: #{forward.1} parent=11 // pred_check_branch
          %1276 = sbr.rel (%p1274) target = $region140
        $region139: #{forward.1} parent=11 // pred_region
          _
        $region140: #{forward.1} parent=11 // pred_fallthru
          _
        // Predicated region
        $region141: #{forward.1} parent=11 // pred_check
          %p1277 = pneg %p840
        $region142: #{forward.1} parent=11 // pred_check_branch
          %1279 = sbr.rel (%p1277) target = $region144
        $region143: #{forward.1} parent=11 // pred_region
          _
        $region144: #{forward.1} parent=11 // pred_fallthru
          _
      $region12: #{forward.1} parent=5 // pred_fallthru
        _
      %p1280 = scmp.lt.s32.totalorder %s95, 2
      // Predicated region
      $region145: #{forward.1} parent=5 // pred_check
        %p1281 = pneg %p1280
      $region146: #{forward.1} parent=5 // pred_check_branch
        %1283 = sbr.rel (%p1281) target = $region148
      $region147: #{forward.1} parent=5 // pred_region
        // Predicated region
        $region149: #{forward.1} parent=147 // pred_check
          %p1284 = pneg %p115
        $region150: #{forward.1} parent=147 // pred_check_branch
          %1286 = sbr.rel (%p1284) target = $region152
        $region151: #{forward.1} parent=147 // pred_region
          %p1287 = scmp.lt.s32.totalorder %s95, 1
          %s1288 = scalar_select %p1287, %s95, 1
          %s1289 = smul.addr %s1288, 8
          %s1290 = scalar_lea.vmem %s1, %s1289
        $region152: #{forward.1} parent=147 // pred_fallthru
          _
        // Predicated region
        $region153: #{forward.1} parent=147 // pred_check
          %p1291 = pneg %p141
        $region154: #{forward.1} parent=147 // pred_check_branch
          %1293 = sbr.rel (%p1291) target = $region156
        $region155: #{forward.1} parent=147 // pred_region
          %p1294 = scmp.lt.s32.totalorder %s95, 1
          %s1295 = scalar_select %p1294, %s95, 1
          %s1296 = smul.addr %s1295, 8
          %s1297 = scalar_lea.vmem %s3, %s1296
        $region156: #{forward.1} parent=147 // pred_fallthru
          _
      $region148: #{forward.1} parent=5 // pred_fallthru
        _
      %p1298 = scmp.le.s32.totalorder 1, %s95
      %p1299 = scmp.lt.s32.totalorder %s95, 3
      %p1300 = pnand %p1298, %p1299
      %p1301 = pneg %p1300
      // Predicated region
      $region157: #{forward.1} parent=5 // pred_check
        _
      $region158: #{forward.1} parent=5 // pred_check_branch
        %1303 = sbr.rel (%p1300) target = $region160
      $region159: #{forward.1} parent=5 // pred_region
        %s1304 = ssub.s32 %s95, 1
        // Predicated region
        $region161: #{forward.1} parent=159 // pred_check
          %p1305 = pneg %p168
        $region162: #{forward.1} parent=159 // pred_check_branch
          %1307 = sbr.rel (%p1305) target = $region164
        $region163: #{forward.1} parent=159 // pred_region
          %1309 = dma.done [#allocation3], 32
        $region164: #{forward.1} parent=159 // pred_fallthru
          _
        // Predicated region
        $region165: #{forward.1} parent=159 // pred_check
          %p1310 = pneg %p189
        $region166: #{forward.1} parent=159 // pred_check_branch
          %1312 = sbr.rel (%p1310) target = $region168
        $region167: #{forward.1} parent=159 // pred_region
          %1314 = dma.done [#allocation6], 32
        $region168: #{forward.1} parent=159 // pred_fallthru
          _
        // Predicated region
        $region169: #{forward.1} parent=159 // pred_check
          %p1315 = pneg %p231
        $region170: #{forward.1} parent=159 // pred_check_branch
          %1317 = sbr.rel (%p1315) target = $region172
        $region171: #{forward.1} parent=159 // pred_region
          %1319 = dma.done [#allocation6], 2048
        $region172: #{forward.1} parent=159 // pred_fallthru
          _
        // Predicated region
        $region173: #{forward.1} parent=159 // pred_check
          %p1320 = pneg %p252
        $region174: #{forward.1} parent=159 // pred_check_branch
          %1322 = sbr.rel (%p1320) target = $region176
        $region175: #{forward.1} parent=159 // pred_region
          %1324 = dma.done [#allocation9], 32
        $region176: #{forward.1} parent=159 // pred_fallthru
          _
        // Predicated region
        $region177: #{forward.1} parent=159 // pred_check
          %p1325 = pneg %p273
        $region178: #{forward.1} parent=159 // pred_check_branch
          %1327 = sbr.rel (%p1325) target = $region180
        $region179: #{forward.1} parent=159 // pred_region
          %1329 = dma.done [#allocation9], 32
        $region180: #{forward.1} parent=159 // pred_fallthru
          _
        // Predicated region
        $region181: #{forward.1} parent=159 // pred_check
          %p1330 = pneg %p294
        $region182: #{forward.1} parent=159 // pred_check_branch
          %1332 = sbr.rel (%p1330) target = $region184
        $region183: #{forward.1} parent=159 // pred_region
          %1334 = dma.done [#allocation12], 32
        $region184: #{forward.1} parent=159 // pred_fallthru
          _
        // Predicated region
        $region185: #{forward.1} parent=159 // pred_check
          %p1335 = pneg %p315
        $region186: #{forward.1} parent=159 // pred_check_branch
          %1337 = sbr.rel (%p1335) target = $region188
        $region187: #{forward.1} parent=159 // pred_region
          %1339 = dma.done [#allocation12], 4096
        $region188: #{forward.1} parent=159 // pred_fallthru
          _
        // Predicated region
        $region189: #{forward.1} parent=159 // pred_check
          %p1340 = pneg %p357
        $region190: #{forward.1} parent=159 // pred_check_branch
          %1342 = sbr.rel (%p1340) target = $region192
        $region191: #{forward.1} parent=159 // pred_region
          %1344 = dma.done [#allocation15], 4096
        $region192: #{forward.1} parent=159 // pred_fallthru
          _
        // Predicated region
        $region193: #{forward.1} parent=159 // pred_check
          %p1345 = pneg %p378
        $region194: #{forward.1} parent=159 // pred_check_branch
          %1347 = sbr.rel (%p1345) target = $region196
        $region195: #{forward.1} parent=159 // pred_region
          %1349 = dma.done [#allocation15], 32
        $region196: #{forward.1} parent=159 // pred_fallthru
          _
        // Predicated region
        $region197: #{forward.1} parent=159 // pred_check
          %p1350 = pneg %p399
        $region198: #{forward.1} parent=159 // pred_check_branch
          %1352 = sbr.rel (%p1350) target = $region200
        $region199: #{forward.1} parent=159 // pred_region
          %1354 = dma.done [#allocation18], 16
        $region200: #{forward.1} parent=159 // pred_fallthru
          _
        // Predicated region
        $region201: #{forward.1} parent=159 // pred_check
          %p1355 = pneg %p420
        $region202: #{forward.1} parent=159 // pred_check_branch
          %1357 = sbr.rel (%p1355) target = $region204
        $region203: #{forward.1} parent=159 // pred_region
          %1359 = dma.done [#allocation18], 16
        $region204: #{forward.1} parent=159 // pred_fallthru
          _
        // Predicated region
        $region205: #{forward.1} parent=159 // pred_check
          %p1360 = pneg %p441
        $region206: #{forward.1} parent=159 // pred_check_branch
          %1362 = sbr.rel (%p1360) target = $region208
        $region207: #{forward.1} parent=159 // pred_region
          %1364 = dma.done [#allocation21], 32
        $region208: #{forward.1} parent=159 // pred_fallthru
          _
        // Predicated region
        $region209: #{forward.1} parent=159 // pred_check
          %p1365 = pneg %p462
        $region210: #{forward.1} parent=159 // pred_check_branch
          %1367 = sbr.rel (%p1365) target = $region212
        $region211: #{forward.1} parent=159 // pred_region
          %1369 = dma.done [#allocation21], 32
        $region212: #{forward.1} parent=159 // pred_fallthru
          _
        // Predicated region
        $region213: #{forward.1} parent=159 // pred_check
          %p1370 = pneg %p483
        $region214: #{forward.1} parent=159 // pred_check_branch
          %1372 = sbr.rel (%p1370) target = $region216
        $region215: #{forward.1} parent=159 // pred_region
          %1374 = dma.done [#allocation24], 6144
        $region216: #{forward.1} parent=159 // pred_fallthru
          _
        // Predicated region
        $region217: #{forward.1} parent=159 // pred_check
          %p1375 = pneg %p504
        $region218: #{forward.1} parent=159 // pred_check_branch
          %1377 = sbr.rel (%p1375) target = $region220
        $region219: #{forward.1} parent=159 // pred_region
          %1379 = dma.done [#allocation24], 2048
        $region220: #{forward.1} parent=159 // pred_fallthru
          _
        // Predicated region
        $region221: #{forward.1} parent=159 // pred_check
          %p1380 = pneg %p525
        $region222: #{forward.1} parent=159 // pred_check_branch
          %1382 = sbr.rel (%p1380) target = $region224
        $region223: #{forward.1} parent=159 // pred_region
          %1384 = dma.done [#allocation27], 32
        $region224: #{forward.1} parent=159 // pred_fallthru
          _
        // Predicated region
        $region225: #{forward.1} parent=159 // pred_check
          %p1385 = pneg %p546
        $region226: #{forward.1} parent=159 // pred_check_branch
          %1387 = sbr.rel (%p1385) target = $region228
        $region227: #{forward.1} parent=159 // pred_region
          %1389 = dma.done [#allocation27], 32
        $region228: #{forward.1} parent=159 // pred_fallthru
          _
        // Predicated region
        $region229: #{forward.1} parent=159 // pred_check
          %p1390 = pneg %p567
        $region230: #{forward.1} parent=159 // pred_check_branch
          %1392 = sbr.rel (%p1390) target = $region232
        $region231: #{forward.1} parent=159 // pred_region
          %1394 = dma.done [#allocation30], 32
        $region232: #{forward.1} parent=159 // pred_fallthru
          _
        // Predicated region
        $region233: #{forward.1} parent=159 // pred_check
          %p1395 = pneg %p588
        $region234: #{forward.1} parent=159 // pred_check_branch
          %1397 = sbr.rel (%p1395) target = $region236
        $region235: #{forward.1} parent=159 // pred_region
          %1399 = dma.done [#allocation30], 6144
        $region236: #{forward.1} parent=159 // pred_fallthru
          _
        // Predicated region
        $region237: #{forward.1} parent=159 // pred_check
          %p1400 = pneg %p609
        $region238: #{forward.1} parent=159 // pred_check_branch
          %1402 = sbr.rel (%p1400) target = $region240
        $region239: #{forward.1} parent=159 // pred_region
          %1404 = dma.done [#allocation33], 2048
        $region240: #{forward.1} parent=159 // pred_fallthru
          _
        // Predicated region
        $region241: #{forward.1} parent=159 // pred_check
          %p1405 = pneg %p630
        $region242: #{forward.1} parent=159 // pred_check_branch
          %1407 = sbr.rel (%p1405) target = $region244
        $region243: #{forward.1} parent=159 // pred_region
          %1409 = dma.done [#allocation33], 32
        $region244: #{forward.1} parent=159 // pred_fallthru
          _
        // Predicated region
        $region245: #{forward.1} parent=159 // pred_check
          %p1410 = pneg %p651
        $region246: #{forward.1} parent=159 // pred_check_branch
          %1412 = sbr.rel (%p1410) target = $region248
        $region247: #{forward.1} parent=159 // pred_region
          %1414 = dma.done [#allocation36], 32
        $region248: #{forward.1} parent=159 // pred_fallthru
          _
        // Predicated region
        $region249: #{forward.1} parent=159 // pred_check
          %p1415 = pneg %p672
        $region250: #{forward.1} parent=159 // pred_check_branch
          %1417 = sbr.rel (%p1415) target = $region252
        $region251: #{forward.1} parent=159 // pred_region
          %1419 = dma.done [#allocation36], 32
        $region252: #{forward.1} parent=159 // pred_fallthru
          _
        // Predicated region
        $region253: #{forward.1} parent=159 // pred_check
          %p1420 = pneg %p693
        $region254: #{forward.1} parent=159 // pred_check_branch
          %1422 = sbr.rel (%p1420) target = $region256
        $region255: #{forward.1} parent=159 // pred_region
          %1424 = dma.done [#allocation39], 4096
        $region256: #{forward.1} parent=159 // pred_fallthru
          _
        // Predicated region
        $region257: #{forward.1} parent=159 // pred_check
          %p1425 = pneg %p735
        $region258: #{forward.1} parent=159 // pred_check_branch
          %1427 = sbr.rel (%p1425) target = $region260
        $region259: #{forward.1} parent=159 // pred_region
          %1429 = dma.done [#allocation39], 4096
        $region260: #{forward.1} parent=159 // pred_fallthru
          _
        // Predicated region
        $region261: #{forward.1} parent=159 // pred_check
          %p1430 = pneg %p756
        $region262: #{forward.1} parent=159 // pred_check_branch
          %1432 = sbr.rel (%p1430) target = $region264
        $region263: #{forward.1} parent=159 // pred_region
          %1434 = dma.done [#allocation42], 32
        $region264: #{forward.1} parent=159 // pred_fallthru
          _
        // Predicated region
        $region265: #{forward.1} parent=159 // pred_check
          %p1435 = pneg %p777
        $region266: #{forward.1} parent=159 // pred_check_branch
          %1437 = sbr.rel (%p1435) target = $region268
        $region267: #{forward.1} parent=159 // pred_region
          %1439 = dma.done [#allocation42], 16
        $region268: #{forward.1} parent=159 // pred_fallthru
          _
        // Predicated region
        $region269: #{forward.1} parent=159 // pred_check
          %p1440 = pneg %p798
        $region270: #{forward.1} parent=159 // pred_check_branch
          %1442 = sbr.rel (%p1440) target = $region272
        $region271: #{forward.1} parent=159 // pred_region
          %1444 = dma.done [#allocation45], 16
        $region272: #{forward.1} parent=159 // pred_fallthru
          _
        %p1445 = scmp.lt.s32.totalorder %s100, 1
        %s1446 = scalar_select %p1445, %s100, 1
        %s1447 = smul.addr %s1446, 8
        %s1448 = scalar_lea.vmem %s1, %s1447
        %p1449 = pneg %p121
        %p1450 = pneg %p118
        %p1451 = scmp.lt.s32.totalorder %s100, 1
        %s1452 = scalar_select %p1451, %s100, 1
        %s1453 = smul.addr %s1452, 8
        %s1454 = scalar_lea.vmem %s3, %s1453
        %p1455 = pneg %p147
        %p1456 = pneg %p144
        %p1457 = pneg %p168
        %p1458 = pneg %p165
        %p1459 = pneg %p189
        %p1460 = pneg %p186
        %p1461 = pneg %p210
        %p1462 = pneg %p207
        %p1463 = pneg %p231
        %p1464 = pneg %p228
        %p1465 = pneg %p252
        %p1466 = pneg %p249
        %p1467 = pneg %p273
        %p1468 = pneg %p270
        %p1469 = pneg %p294
        %p1470 = pneg %p291
        %p1471 = pneg %p315
        %p1472 = pneg %p312
        %p1473 = pneg %p336
        %p1474 = pneg %p333
        %p1475 = pneg %p357
        %p1476 = pneg %p354
        %p1477 = pneg %p378
        %p1478 = pneg %p375
        %p1479 = pneg %p399
        %p1480 = pneg %p396
        %p1481 = pneg %p420
        %p1482 = pneg %p417
        %p1483 = pneg %p441
        %p1484 = pneg %p438
        %p1485 = pneg %p462
        %p1486 = pneg %p459
        %p1487 = pneg %p483
        %p1488 = pneg %p480
        %p1489 = pneg %p504
        %p1490 = pneg %p501
        %p1491 = pneg %p525
        %p1492 = pneg %p522
        %p1493 = pneg %p546
        %p1494 = pneg %p543
        %p1495 = pneg %p567
        %p1496 = pneg %p564
        %p1497 = pneg %p588
        %p1498 = pneg %p585
        %p1499 = pneg %p609
        %p1500 = pneg %p606
        %p1501 = pneg %p630
        %p1502 = pneg %p627
        %p1503 = pneg %p651
        %p1504 = pneg %p648
        %p1505 = pneg %p672
        %p1506 = pneg %p669
        %p1507 = pneg %p693
        %p1508 = pneg %p690
        %p1509 = pneg %p714
        %p1510 = pneg %p711
        %p1511 = pneg %p735
        %p1512 = pneg %p732
        %p1513 = pneg %p756
        %p1514 = pneg %p753
        %p1515 = pneg %p777
        %p1516 = pneg %p774
        %p1517 = pneg %p798
        %p1518 = pneg %p795
        %p1519 = pneg %p819
        %p1520 = pneg %p816
        %p1521 = pneg %p840
        %p1522 = pneg %p837
        %p1523 = pneg %p866
        %p1524 = pneg %p863
        %s1525 = sand.u32 %s853, 1
        %s1526 = scalar_lea.sflag [#allocation4], %s1525
        %s1527 = sand.u32 %s853, 1
        %s1528 = smul.addr %s1527, 8
        %s1529 = scalar_lea.vmem [#allocation46], %s1528
        %p1530 = scmp.lt.s32.totalorder %s100, 1
        %s1531 = scalar_select %p1530, %s100, 1
        %s1532 = smul.addr %s1531, 8
        %s1533 = scalar_lea.vmem %s1, %s1532
        %p1534 = scmp.lt.s32.totalorder %s100, 1
        %s1535 = scalar_select %p1534, %s100, 1
        %s1536 = smul.addr %s1535, 8
        %s1537 = scalar_lea.vmem %s3, %s1536
        %v1539 = vld [vmem:[%s1533] sm:$0xff]
        %v1540 = vld [vmem:[%s1537] sm:$0xff]
        %v1541 = vld [vmem:[#allocation2] sm:$0x1]
        %v1542 = vld [vmem:[#allocation5] sm:$0x1]
        %1543 = vadd.xlane.f32.xlu0 %v1539
        %v1544 = vpop.xlane.xlu0 %1543
        %v1545 = vrcp.pop 128.0
        %v1546 = vmul.f32 128.0, %v1545
        %v1547 = vsub.f32 1.0, %v1546
        %v1548 = vmul.f32 %v1545, %v1547
        %v1549 = vadd.f32 %v1545, %v1548
        %vm1550 = vweird.f32 %v1545
        %v1551 = vsel %vm1550, %v1545, %v1549
        %v1552 = vmul.f32 %v1544, %v1551
        %v1553 = vsub.f32 %v1539, %v1552
        %v1554 = vmul.f32 %v1553, %v1553
        %1555 = vadd.xlane.f32.xlu0 %v1554
        %v1556 = vpop.xlane.xlu0 %1555
        %v1557 = vmul.f32 %v1556, %v1551
        %v1558 = vadd.f32 %v1557, 1e-05
        %v1559 = vrsqrt.pop %v1558
        %v1560 = vmul.f32 %v1559, %v1558
        %v1561 = vmul.f32 %v1560, %v1559
        %v1562 = vmul.f32 0.5, %v1561
        %v1563 = vsub.f32 1.5, %v1562
        %v1564 = vmul.f32 %v1559, %v1563
        %vm1565 = vweird.f32 %v1558
        %vm1566 = vweird.f32 %v1559
        %vm1567 = vmor %vm1565, %vm1566
        %v1568 = vsel %vm1567, %v1559, %v1564
        %v1569 = vmul.f32 %v1553, %v1568
        %v1571 = vperm.slane %v1541, 0
        %v1573 = vmul.f32 %v1569, %v1571
        %v1575 = vperm.slane %v1542, 0
        %v1577 = vadd.f32 %v1573, %v1575
        %v1578 = vld [vmem:[%s9] sm:$0xff]
        %v1579 = vld [vmem:[%s9 + $0x8] sm:$0xf]
        %v1580 = vld [vmem:[%s9 + $0xc] sm:$0xff]
        %v1581 = vld [vmem:[%s9 + $0x14] sm:$0xf]
        %v1582 = vld [vmem:[%s9 + $0x18] sm:$0xff]
        %v1583 = vld [vmem:[%s9 + $0x20] sm:$0xf]
        %v1584 = vld [vmem:[%s9 + $0x24] sm:$0xff]
        %v1585 = vld [vmem:[%s9 + $0x2c] sm:$0xf]
        %v1586 = vld [vmem:[%s9 + $0x30] sm:$0xff]
        %v1587 = vld [vmem:[%s9 + $0x38] sm:$0xf]
        %v1588 = vld [vmem:[%s9 + $0x3c] sm:$0xff]
        %v1589 = vld [vmem:[%s9 + $0x44] sm:$0xf]
        %v1590 = vld [vmem:[%s9 + $0x48] sm:$0xff]
        %v1591 = vld [vmem:[%s9 + $0x50] sm:$0xf]
        %v1592 = vld [vmem:[%s9 + $0x54] sm:$0xff]
        %v1593 = vld [vmem:[%s9 + $0x5c] sm:$0xf]
        %v1594 = vld [vmem:[%s9 + $0x60] sm:$0xff]
        %v1595 = vld [vmem:[%s9 + $0x68] sm:$0xf]
        %v1596 = vld [vmem:[%s9 + $0x6c] sm:$0xff]
        %v1597 = vld [vmem:[%s9 + $0x74] sm:$0xf]
        %v1598 = vld [vmem:[%s9 + $0x78] sm:$0xff]
        %v1599 = vld [vmem:[%s9 + $0x80] sm:$0xf]
        %v1600 = vld [vmem:[%s9 + $0x84] sm:$0xff]
        %v1601 = vld [vmem:[%s9 + $0x8c] sm:$0xf]
        %v1602 = vld [vmem:[%s9 + $0x90] sm:$0xff]
        %v1603 = vld [vmem:[%s9 + $0x98] sm:$0xf]
        %v1604 = vld [vmem:[%s9 + $0x9c] sm:$0xff]
        %v1605 = vld [vmem:[%s9 + $0xa4] sm:$0xf]
        %v1606 = vld [vmem:[%s9 + $0xa8] sm:$0xff]
        %v1607 = vld [vmem:[%s9 + $0xb0] sm:$0xf]
        %v1608 = vld [vmem:[%s9 + $0xb4] sm:$0xff]
        %v1609 = vld [vmem:[%s9 + $0xbc] sm:$0xf]
        %v1610 = vld [vmem:[#allocation7] sm:$0xf]
        %v1611 = vld [vmem:[#allocation7 + $0x4] sm:$0xf]
        %v1612 = vld [vmem:[#allocation7 + $0x8] sm:$0xf]
        %v1613 = vld [vmem:[#allocation7 + $0xc] sm:$0xf]
        %v1614 = vld [vmem:[#allocation7 + $0x10] sm:$0xf]
        %v1615 = vld [vmem:[#allocation7 + $0x14] sm:$0xf]
        %v1616 = vld [vmem:[#allocation7 + $0x18] sm:$0xf]
        %v1617 = vld [vmem:[#allocation7 + $0x1c] sm:$0xf]
        %v1618 = vld [vmem:[#allocation7 + $0x20] sm:$0xf]
        %v1619 = vld [vmem:[#allocation7 + $0x24] sm:$0xf]
        %v1620 = vld [vmem:[#allocation7 + $0x28] sm:$0xf]
        %v1621 = vld [vmem:[#allocation7 + $0x2c] sm:$0xf]
        %v1622 = vld [vmem:[#allocation7 + $0x30] sm:$0xf]
        %v1623 = vld [vmem:[#allocation7 + $0x34] sm:$0xf]
        %v1624 = vld [vmem:[#allocation7 + $0x38] sm:$0xf]
        %v1625 = vld [vmem:[#allocation7 + $0x3c] sm:$0xf]
        %v1626 = vld [vmem:[#allocation8] sm:$0x1]
        %v1627 = vpack.c.bf16 %v1577, %v1577
        %v1660 = vunpack.c.l.b16 %v1578
        %v1661 = vunpack.c.h.b16 %v1578
        %v1662 = vunpack.c.l.b16 %v1579
        %v1663 = vunpack.c.l.b16 %v1580
        %v1664 = vunpack.c.h.b16 %v1580
        %v1665 = vunpack.c.l.b16 %v1581
        %v1666 = vunpack.c.l.b16 %v1582
        %v1667 = vunpack.c.h.b16 %v1582
        %v1668 = vunpack.c.l.b16 %v1583
        %v1669 = vunpack.c.l.b16 %v1584
        %v1670 = vunpack.c.h.b16 %v1584
        %v1671 = vunpack.c.l.b16 %v1585
        %v1672 = vunpack.c.l.b16 %v1586
        %v1673 = vunpack.c.h.b16 %v1586
        %v1674 = vunpack.c.l.b16 %v1587
        %v1675 = vunpack.c.l.b16 %v1588
        %v1676 = vunpack.c.h.b16 %v1588
        %v1677 = vunpack.c.l.b16 %v1589
        %v1678 = vunpack.c.l.b16 %v1590
        %v1679 = vunpack.c.h.b16 %v1590
        %v1680 = vunpack.c.l.b16 %v1591
        %v1681 = vunpack.c.l.b16 %v1592
        %v1682 = vunpack.c.h.b16 %v1592
        %v1683 = vunpack.c.l.b16 %v1593
        %v1684 = vunpack.c.l.b16 %v1594
        %v1685 = vunpack.c.h.b16 %v1594
        %v1686 = vunpack.c.l.b16 %v1595
        %v1687 = vunpack.c.l.b16 %v1596
        %v1688 = vunpack.c.h.b16 %v1596
        %v1689 = vunpack.c.l.b16 %v1597
        %v1690 = vunpack.c.l.b16 %v1598
        %v1691 = vunpack.c.h.b16 %v1598
        %v1692 = vunpack.c.l.b16 %v1599
        %v1693 = vunpack.c.l.b16 %v1600
        %v1694 = vunpack.c.h.b16 %v1600
        %v1695 = vunpack.c.l.b16 %v1601
        %v1696 = vunpack.c.l.b16 %v1602
        %v1697 = vunpack.c.h.b16 %v1602
        %v1698 = vunpack.c.l.b16 %v1603
        %v1699 = vunpack.c.l.b16 %v1604
        %v1700 = vunpack.c.h.b16 %v1604
        %v1701 = vunpack.c.l.b16 %v1605
        %v1702 = vunpack.c.l.b16 %v1606
        %v1703 = vunpack.c.h.b16 %v1606
        %v1704 = vunpack.c.l.b16 %v1607
        %v1705 = vunpack.c.l.b16 %v1608
        %v1706 = vunpack.c.h.b16 %v1608
        %v1707 = vunpack.c.l.b16 %v1609
        %v1708 = vpack.c.b16 %v1663, %v1660
        %v1709 = vpack.c.b16 %v1664, %v1661
        %v1710 = vpack.c.b16 %v1665, %v1662
        %v1711 = vpack.c.b16 %v1669, %v1666
        %v1712 = vpack.c.b16 %v1670, %v1667
        %v1713 = vpack.c.b16 %v1671, %v1668
        %v1714 = vpack.c.b16 %v1675, %v1672
        %v1715 = vpack.c.b16 %v1676, %v1673
        %v1716 = vpack.c.b16 %v1677, %v1674
        %v1717 = vpack.c.b16 %v1681, %v1678
        %v1718 = vpack.c.b16 %v1682, %v1679
        %v1719 = vpack.c.b16 %v1683, %v1680
        %v1720 = vpack.c.b16 %v1687, %v1684
        %v1721 = vpack.c.b16 %v1688, %v1685
        %v1722 = vpack.c.b16 %v1689, %v1686
        %v1723 = vpack.c.b16 %v1693, %v1690
        %v1724 = vpack.c.b16 %v1694, %v1691
        %v1725 = vpack.c.b16 %v1695, %v1692
        %v1726 = vpack.c.b16 %v1699, %v1696
        %v1727 = vpack.c.b16 %v1700, %v1697
        %v1728 = vpack.c.b16 %v1701, %v1698
        %v1729 = vpack.c.b16 %v1705, %v1702
        %v1730 = vpack.c.b16 %v1706, %v1703
        %v1731 = vpack.c.b16 %v1707, %v1704
        %1756 = vmatpush.bf16.msra.mxu0 %v1729
        %1757 = vmatpush.bf16.msra.mxu0 %v1726
        %1758 = vmatpush.bf16.msra.mxu0 %v1723
        %1759 = vmatpush.bf16.msra.mxu0 %v1720
        %1760 = vmatpush.bf16.msra.mxu0 %v1717
        %1761 = vmatpush.bf16.msra.mxu0 %v1714
        %1762 = vmatpush.bf16.msra.mxu0 %v1711
        %1763 = vmatpush.bf16.msra.mxu0 %v1708
        %1764 = vmatmul.bf16.gmra.mxu0 %v1627
        %v1765 = vpop.f32.mrf.mxu0
        %v1766 = vadd.f32 0.0, %v1765
        %v1767 = vpop.f32.mrf.mxu0
        %1768 = vdwg.mxu0
        %1769 = vmatpush.bf16.msra.mxu0 %v1730
        %1770 = vmatpush.bf16.msra.mxu0 %v1727
        %1771 = vmatpush.bf16.msra.mxu0 %v1724
        %1772 = vmatpush.bf16.msra.mxu0 %v1721
        %1773 = vmatpush.bf16.msra.mxu0 %v1718
        %1774 = vmatpush.bf16.msra.mxu0 %v1715
        %1775 = vmatpush.bf16.msra.mxu0 %v1712
        %1776 = vmatpush.bf16.msra.mxu0 %v1709
        %1777 = vmatmul.bf16.gmra.mxu0 %v1627
        %v1778 = vpop.f32.mrf.mxu0
        %v1779 = vadd.f32 0.0, %v1778
        %v1780 = vpop.f32.mrf.mxu0
        %1781 = vdwg.mxu0
        %1782 = vmatpush.bf16.msra.mxu0 %v1731
        %1783 = vmatpush.bf16.msra.mxu0 %v1728
        %1784 = vmatpush.bf16.msra.mxu0 %v1725
        %1785 = vmatpush.bf16.msra.mxu0 %v1722
        %1786 = vmatpush.bf16.msra.mxu0 %v1719
        %1787 = vmatpush.bf16.msra.mxu0 %v1716
        %1788 = vmatpush.bf16.msra.mxu0 %v1713
        %1789 = vmatpush.bf16.msra.mxu0 %v1710
        %1790 = vmatmul.bf16.gmra.mxu0 %v1627
        %v1791 = vpop.f32.mrf.mxu0
        %v1792 = vadd.f32 0.0, %v1791
        %v1793 = vpop.f32.mrf.mxu0
        %1794 = vdwg.mxu0
        %v1795 = vmul.f32 %v1766, 0.17677669
        %v1796 = vpack.c.bf16 %v1795, %v1795
        %v1797 = vpack.c.bf16 %v1779, %v1779
        %v1798 = vpack.c.bf16 %v1792, %v1792
        %vm1799 = vcmask 261120
        %v1801 = vsel %vm1799, %v1796, 0
        %v1804 = vsel %vm1799, %v1797, 0
        %1806 = vmatpush.bf16.xpose.msra.mxu0 0
        %1807 = vmatpush.bf16.xpose.msra.mxu0 0
        %1808 = vmatpush.bf16.xpose.msra.mxu0 0
        %1809 = vmatpush.bf16.xpose.msra.mxu0 0
        %1810 = vmatpush.bf16.xpose.msra.mxu0 0
        %1811 = vmatpush.bf16.xpose.msra.mxu0 0
        %1812 = vmatpush.bf16.xpose.msra.mxu0 0
        %1813 = vmatpush.bf16.xpose.msra.mxu0 %v1804
        %1814 = vmatmul.bf16.gmra.mxu0 %v1801
        %v1815 = vpop.f32.mrf.mxu0
        %v1816 = vadd.f32 0.0, %v1815
        %v1817 = vpop.f32.mrf.mxu0
        %1818 = vdwg.mxu0
        %v1820 = vunpack.c.l.b16 %v1796
        %v1821 = vpack.c.b16 %v1820, %v1820
        %1822 = vrot.lane.b32.xlu0 %v1821, 96
        %v1823 = vpop.permute.xlu0 %1822
        %v1825 = vunpack.c.l.b16 %v1797
        %v1826 = vpack.c.b16 %v1825, %v1825
        %1827 = vrot.lane.b32.xlu0 %v1826, 96
        %v1828 = vpop.permute.xlu0 %1827
        %v1830 = vsel %vm1799, %v1823, 0
        %v1833 = vsel %vm1799, %v1828, 0
        %1835 = vmatpush.bf16.xpose.msra.mxu0 0
        %1836 = vmatpush.bf16.xpose.msra.mxu0 0
        %1837 = vmatpush.bf16.xpose.msra.mxu0 0
        %1838 = vmatpush.bf16.xpose.msra.mxu0 0
        %1839 = vmatpush.bf16.xpose.msra.mxu0 0
        %1840 = vmatpush.bf16.xpose.msra.mxu0 0
        %1841 = vmatpush.bf16.xpose.msra.mxu0 0
        %1842 = vmatpush.bf16.xpose.msra.mxu0 %v1833
        %1843 = vmatmul.bf16.gmra.mxu0 %v1830
        %v1844 = vpop.f32.mrf.mxu0
        %v1845 = vadd.f32 0.0, %v1844
        %v1846 = vpop.f32.mrf.mxu0
        %1847 = vdwg.mxu0
        %1848 = vrot.lane.b32.xlu0 %v1821, 64
        %v1849 = vpop.permute.xlu0 %1848
        %1850 = vrot.lane.b32.xlu0 %v1826, 64
        %v1851 = vpop.permute.xlu0 %1850
        %v1853 = vsel %vm1799, %v1849, 0
        %v1856 = vsel %vm1799, %v1851, 0
        %1858 = vmatpush.bf16.xpose.msra.mxu0 0
        %1859 = vmatpush.bf16.xpose.msra.mxu0 0
        %1860 = vmatpush.bf16.xpose.msra.mxu0 0
        %1861 = vmatpush.bf16.xpose.msra.mxu0 0
        %1862 = vmatpush.bf16.xpose.msra.mxu0 0
        %1863 = vmatpush.bf16.xpose.msra.mxu0 0
        %1864 = vmatpush.bf16.xpose.msra.mxu0 0
        %1865 = vmatpush.bf16.xpose.msra.mxu0 %v1856
        %1866 = vmatmul.bf16.gmra.mxu0 %v1853
        %v1867 = vpop.f32.mrf.mxu0
        %v1868 = vadd.f32 0.0, %v1867
        %v1869 = vpop.f32.mrf.mxu0
        %1870 = vdwg.mxu0
        %1871 = vrot.lane.b32.xlu0 %v1821, 32
        %v1872 = vpop.permute.xlu0 %1871
        %1873 = vrot.lane.b32.xlu0 %v1826, 32
        %v1874 = vpop.permute.xlu0 %1873
        %v1876 = vsel %vm1799, %v1872, 0
        %v1879 = vsel %vm1799, %v1874, 0
        %1881 = vmatpush.bf16.xpose.msra.mxu0 0
        %1882 = vmatpush.bf16.xpose.msra.mxu0 0
        %1883 = vmatpush.bf16.xpose.msra.mxu0 0
        %1884 = vmatpush.bf16.xpose.msra.mxu0 0
        %1885 = vmatpush.bf16.xpose.msra.mxu0 0
        %1886 = vmatpush.bf16.xpose.msra.mxu0 0
        %1887 = vmatpush.bf16.xpose.msra.mxu0 0
        %1888 = vmatpush.bf16.xpose.msra.mxu0 %v1879
        %1889 = vmatmul.bf16.gmra.mxu0 %v1876
        %v1890 = vpop.f32.mrf.mxu0
        %v1891 = vadd.f32 0.0, %v1890
        %v1892 = vpop.f32.mrf.mxu0
        %1893 = vdwg.mxu0
        %vm1894 = vcmask 64512
        %v1895 = vsel %vm1894, %v1816, -inf
        %1896 = vmax.xlane.f32.xlu0 %v1895
        %v1897 = vpop.xlane.xlu0 %1896
        %v1898 = vsel %vm1894, %v1845, -inf
        %1899 = vmax.xlane.f32.xlu0 %v1898
        %v1900 = vpop.xlane.xlu0 %1899
        %v1901 = vsel %vm1894, %v1868, -inf
        %1902 = vmax.xlane.f32.xlu0 %v1901
        %v1903 = vpop.xlane.xlu0 %1902
        %v1904 = vsel %vm1894, %v1891, -inf
        %1905 = vmax.xlane.f32.xlu0 %v1904
        %v1906 = vpop.xlane.xlu0 %1905
        %v1907 = vsub.f32 %v1816, %v1897
        %v1908 = vsub.f32 %v1845, %v1900
        %v1909 = vsub.f32 %v1868, %v1903
        %v1910 = vsub.f32 %v1891, %v1906
        %v1911 = vmul.f32 %v1907, 1.442695
        %v1912 = vpow.pop %v1911
        %v1913 = vmul.f32 %v1908, 1.442695
        %v1914 = vpow.pop %v1913
        %v1915 = vmul.f32 %v1909, 1.442695
        %v1916 = vpow.pop %v1915
        %v1917 = vmul.f32 %v1910, 1.442695
        %v1918 = vpow.pop %v1917
        %v1919 = vsel %vm1894, %v1912, 0.0
        %1920 = vadd.xlane.f32.xlu0 %v1919
        %v1921 = vpop.xlane.xlu0 %1920
        %v1922 = vsel %vm1894, %v1914, 0.0
        %1923 = vadd.xlane.f32.xlu0 %v1922
        %v1924 = vpop.xlane.xlu0 %1923
        %v1925 = vsel %vm1894, %v1916, 0.0
        %1926 = vadd.xlane.f32.xlu0 %v1925
        %v1927 = vpop.xlane.xlu0 %1926
        %v1928 = vsel %vm1894, %v1918, 0.0
        %1929 = vadd.xlane.f32.xlu0 %v1928
        %v1930 = vpop.xlane.xlu0 %1929
        %v1931 = vrcp.pop %v1921
        %v1932 = vmul.f32 %v1921, %v1931
        %v1933 = vsub.f32 1.0, %v1932
        %v1934 = vmul.f32 %v1931, %v1933
        %v1935 = vadd.f32 %v1931, %v1934
        %vm1936 = vweird.f32 %v1921
        %vm1937 = vweird.f32 %v1931
        %vm1938 = vmor %vm1936, %vm1937
        %v1939 = vsel %vm1938, %v1931, %v1935
        %v1940 = vand.u32 2147483647, %v1921
        %vm1941 = vcmp.eq.f32.partialorder %v1940, 8.507059e+37
        %v1942 = vand.u32 %v1921, 2147483648
        %v1943 = vor.u32 1.1754944e-38, %v1942
        %v1944 = vsel %vm1941, %v1943, %v1939
        %v1945 = vrcp.pop %v1924
        %v1946 = vmul.f32 %v1924, %v1945
        %v1947 = vsub.f32 1.0, %v1946
        %v1948 = vmul.f32 %v1945, %v1947
        %v1949 = vadd.f32 %v1945, %v1948
        %vm1950 = vweird.f32 %v1924
        %vm1951 = vweird.f32 %v1945
        %vm1952 = vmor %vm1950, %vm1951
        %v1953 = vsel %vm1952, %v1945, %v1949
        %v1954 = vand.u32 2147483647, %v1924
        %vm1955 = vcmp.eq.f32.partialorder %v1954, 8.507059e+37
        %v1956 = vand.u32 %v1924, 2147483648
        %v1957 = vor.u32 1.1754944e-38, %v1956
        %v1958 = vsel %vm1955, %v1957, %v1953
        %v1959 = vrcp.pop %v1927
        %v1960 = vmul.f32 %v1927, %v1959
        %v1961 = vsub.f32 1.0, %v1960
        %v1962 = vmul.f32 %v1959, %v1961
        %v1963 = vadd.f32 %v1959, %v1962
        %vm1964 = vweird.f32 %v1927
        %vm1965 = vweird.f32 %v1959
        %vm1966 = vmor %vm1964, %vm1965
        %v1967 = vsel %vm1966, %v1959, %v1963
        %v1968 = vand.u32 2147483647, %v1927
        %vm1969 = vcmp.eq.f32.partialorder %v1968, 8.507059e+37
        %v1970 = vand.u32 %v1927, 2147483648
        %v1971 = vor.u32 1.1754944e-38, %v1970
        %v1972 = vsel %vm1969, %v1971, %v1967
        %v1973 = vrcp.pop %v1930
        %v1974 = vmul.f32 %v1930, %v1973
        %v1975 = vsub.f32 1.0, %v1974
        %v1976 = vmul.f32 %v1973, %v1975
        %v1977 = vadd.f32 %v1973, %v1976
        %vm1978 = vweird.f32 %v1930
        %vm1979 = vweird.f32 %v1973
        %vm1980 = vmor %vm1978, %vm1979
        %v1981 = vsel %vm1980, %v1973, %v1977
        %v1982 = vand.u32 2147483647, %v1930
        %vm1983 = vcmp.eq.f32.partialorder %v1982, 8.507059e+37
        %v1984 = vand.u32 %v1930, 2147483648
        %v1985 = vor.u32 1.1754944e-38, %v1984
        %v1986 = vsel %vm1983, %v1985, %v1981
        %v1987 = vmul.f32 %v1912, %v1944
        %v1988 = vmul.f32 %v1914, %v1958
        %v1989 = vmul.f32 %v1916, %v1972
        %v1990 = vmul.f32 %v1918, %v1986
        %v1991 = vpack.c.bf16 %v1987, %v1987
        %v1992 = vpack.c.bf16 %v1988, %v1988
        %v1993 = vpack.c.bf16 %v1989, %v1989
        %v1994 = vpack.c.bf16 %v1990, %v1990
        %v1996 = vsel %vm1894, %v1991, 0
        %vm1998 = vcmask 1043456
        %v2000 = vsel %vm1998, %v1798, 0
        %2002 = vmatpush.bf16.msra.mxu0 0
        %2003 = vmatpush.bf16.msra.mxu0 0
        %2004 = vmatpush.bf16.msra.mxu0 0
        %2005 = vmatpush.bf16.msra.mxu0 0
        %2006 = vmatpush.bf16.msra.mxu0 0
        %2007 = vmatpush.bf16.msra.mxu0 0
        %2008 = vmatpush.bf16.msra.mxu0 0
        %2009 = vmatpush.bf16.msra.mxu0 %v2000
        %2010 = vmatmul.bf16.gmra.mxu0 %v1996
        %v2011 = vpop.f32.mrf.mxu0
        %v2012 = vadd.f32 0.0, %v2011
        %v2013 = vpop.f32.mrf.mxu0
        %2014 = vdwg.mxu0
        %v2016 = vunpack.c.l.b16 %v1798
        %v2017 = vpack.c.b16 %v2016, %v2016
        %2018 = vrot.lane.b32.xlu0 %v2017, 96
        %v2019 = vpop.permute.xlu0 %2018
        %v2021 = vsel %vm1894, %v1992, 0
        %v2024 = vsel %vm1998, %v2019, 0
        %2026 = vmatpush.bf16.msra.mxu0 0
        %2027 = vmatpush.bf16.msra.mxu0 0
        %2028 = vmatpush.bf16.msra.mxu0 0
        %2029 = vmatpush.bf16.msra.mxu0 0
        %2030 = vmatpush.bf16.msra.mxu0 0
        %2031 = vmatpush.bf16.msra.mxu0 0
        %2032 = vmatpush.bf16.msra.mxu0 0
        %2033 = vmatpush.bf16.msra.mxu0 %v2024
        %2034 = vmatmul.bf16.gmra.mxu0 %v2021
        %v2035 = vpop.f32.mrf.mxu0
        %v2036 = vadd.f32 0.0, %v2035
        %v2037 = vpop.f32.mrf.mxu0
        %2038 = vdwg.mxu0
        %2039 = vrot.lane.b32.xlu0 %v2017, 64
        %v2040 = vpop.permute.xlu0 %2039
        %v2042 = vsel %vm1894, %v1993, 0
        %v2045 = vsel %vm1998, %v2040, 0
        %2047 = vmatpush.bf16.msra.mxu0 0
        %2048 = vmatpush.bf16.msra.mxu0 0
        %2049 = vmatpush.bf16.msra.mxu0 0
        %2050 = vmatpush.bf16.msra.mxu0 0
        %2051 = vmatpush.bf16.msra.mxu0 0
        %2052 = vmatpush.bf16.msra.mxu0 0
        %2053 = vmatpush.bf16.msra.mxu0 0
        %2054 = vmatpush.bf16.msra.mxu0 %v2045
        %2055 = vmatmul.bf16.gmra.mxu0 %v2042
        %v2056 = vpop.f32.mrf.mxu0
        %v2057 = vadd.f32 0.0, %v2056
        %v2058 = vpop.f32.mrf.mxu0
        %2059 = vdwg.mxu0
        %2060 = vrot.lane.b32.xlu0 %v2017, 32
        %v2061 = vpop.permute.xlu0 %2060
        %v2063 = vsel %vm1894, %v1994, 0
        %v2066 = vsel %vm1998, %v2061, 0
        %2068 = vmatpush.bf16.msra.mxu0 0
        %2069 = vmatpush.bf16.msra.mxu0 0
        %2070 = vmatpush.bf16.msra.mxu0 0
        %2071 = vmatpush.bf16.msra.mxu0 0
        %2072 = vmatpush.bf16.msra.mxu0 0
        %2073 = vmatpush.bf16.msra.mxu0 0
        %2074 = vmatpush.bf16.msra.mxu0 0
        %2075 = vmatpush.bf16.msra.mxu0 %v2066
        %2076 = vmatmul.bf16.gmra.mxu0 %v2063
        %v2077 = vpop.f32.mrf.mxu0
        %v2078 = vadd.f32 0.0, %v2077
        %v2079 = vpop.f32.mrf.mxu0
        %2080 = vdwg.mxu0
        %2082 = vrot.lane.b32.xlu0 %v2036, 32
        %v2083 = vpop.permute.xlu0 %2082
        %2086 = vrot.lane.b32.xlu0 %v2057, 64
        %v2087 = vpop.permute.xlu0 %2086
        %2090 = vrot.lane.b32.xlu0 %v2078, 96
        %v2091 = vpop.permute.xlu0 %2090
        %v2093 = vsel %vm1799, %v2012, %v2083
        %vm2094 = vcmask 523264
        %v2095 = vsel %vm2094, %v2093, %v2087
        %vm2096 = vcmask 785408
        %v2097 = vsel %vm2096, %v2095, %v2091
        %v2098 = vpack.c.bf16 %v2097, %v2097
        %v2100 = vperm.slane %v1626, 0
        %v2118 = vunpack.c.l.b16 %v1610
        %v2119 = vunpack.c.l.b16 %v1611
        %v2120 = vunpack.c.l.b16 %v1612
        %v2121 = vunpack.c.l.b16 %v1613
        %v2122 = vunpack.c.l.b16 %v1614
        %v2123 = vunpack.c.l.b16 %v1615
        %v2124 = vunpack.c.l.b16 %v1616
        %v2125 = vunpack.c.l.b16 %v1617
        %v2126 = vunpack.c.l.b16 %v1618
        %v2127 = vunpack.c.l.b16 %v1619
        %v2128 = vunpack.c.l.b16 %v1620
        %v2129 = vunpack.c.l.b16 %v1621
        %v2130 = vunpack.c.l.b16 %v1622
        %v2131 = vunpack.c.l.b16 %v1623
        %v2132 = vunpack.c.l.b16 %v1624
        %v2133 = vunpack.c.l.b16 %v1625
        %v2134 = vpack.c.b16 %v2119, %v2118
        %v2135 = vpack.c.b16 %v2121, %v2120
        %v2136 = vpack.c.b16 %v2123, %v2122
        %v2137 = vpack.c.b16 %v2125, %v2124
        %v2138 = vpack.c.b16 %v2127, %v2126
        %v2139 = vpack.c.b16 %v2129, %v2128
        %v2140 = vpack.c.b16 %v2131, %v2130
        %v2141 = vpack.c.b16 %v2133, %v2132
        %2150 = vmatpush.bf16.msra.mxu0 %v2141
        %2151 = vmatpush.bf16.msra.mxu0 %v2140
        %2152 = vmatpush.bf16.msra.mxu0 %v2139
        %2153 = vmatpush.bf16.msra.mxu0 %v2138
        %2154 = vmatpush.bf16.msra.mxu0 %v2137
        %2155 = vmatpush.bf16.msra.mxu0 %v2136
        %2156 = vmatpush.bf16.msra.mxu0 %v2135
        %2157 = vmatpush.bf16.msra.mxu0 %v2134
        %2158 = vmatmul.bf16.gmra.mxu0 %v2098
        %v2159 = vpop.f32.mrf.mxu0
        %v2160 = vadd.f32 %v2100, %v2159
        %v2161 = vpop.f32.mrf.mxu0
        %2162 = vdwg.mxu0
        %v2163 = vadd.f32 %v1539, %v2160
        %v2164 = vld [vmem:[#allocation10] sm:$0x1]
        %v2165 = vld [vmem:[#allocation11] sm:$0x1]
        %2166 = vadd.xlane.f32.xlu0 %v2163
        %v2167 = vpop.xlane.xlu0 %2166
        %v2168 = vmul.f32 %v2167, %v1551
        %v2169 = vsub.f32 %v2163, %v2168
        %v2170 = vmul.f32 %v2169, %v2169
        %2171 = vadd.xlane.f32.xlu0 %v2170
        %v2172 = vpop.xlane.xlu0 %2171
        %v2173 = vmul.f32 %v2172, %v1551
        %v2174 = vadd.f32 %v2173, 1e-05
        %v2175 = vrsqrt.pop %v2174
        %v2176 = vmul.f32 %v2175, %v2174
        %v2177 = vmul.f32 %v2176, %v2175
        %v2178 = vmul.f32 0.5, %v2177
        %v2179 = vsub.f32 1.5, %v2178
        %v2180 = vmul.f32 %v2175, %v2179
        %vm2181 = vweird.f32 %v2174
        %vm2182 = vweird.f32 %v2175
        %vm2183 = vmor %vm2181, %vm2182
        %v2184 = vsel %vm2183, %v2175, %v2180
        %v2185 = vmul.f32 %v2169, %v2184
        %v2187 = vperm.slane %v2164, 0
        %v2189 = vmul.f32 %v2185, %v2187
        %v2191 = vperm.slane %v2165, 0
        %v2193 = vadd.f32 %v2189, %v2191
        %v2194 = vld [vmem:[#allocation13] sm:$0xff]
        %v2195 = vld [vmem:[#allocation13 + $0x8] sm:$0xff]
        %v2196 = vld [vmem:[#allocation13 + $0x10] sm:$0xff]
        %v2197 = vld [vmem:[#allocation13 + $0x18] sm:$0xff]
        %v2198 = vld [vmem:[#allocation13 + $0x20] sm:$0xff]
        %v2199 = vld [vmem:[#allocation13 + $0x28] sm:$0xff]
        %v2200 = vld [vmem:[#allocation13 + $0x30] sm:$0xff]
        %v2201 = vld [vmem:[#allocation13 + $0x38] sm:$0xff]
        %v2202 = vld [vmem:[#allocation13 + $0x40] sm:$0xff]
        %v2203 = vld [vmem:[#allocation13 + $0x48] sm:$0xff]
        %v2204 = vld [vmem:[#allocation13 + $0x50] sm:$0xff]
        %v2205 = vld [vmem:[#allocation13 + $0x58] sm:$0xff]
        %v2206 = vld [vmem:[#allocation13 + $0x60] sm:$0xff]
        %v2207 = vld [vmem:[#allocation13 + $0x68] sm:$0xff]
        %v2208 = vld [vmem:[#allocation13 + $0x70] sm:$0xff]
        %v2209 = vld [vmem:[#allocation13 + $0x78] sm:$0xff]
        %v2210 = vld [vmem:[%s21] sm:$0x3]
        %v2211 = vld [vmem:[#allocation14] sm:$0xf]
        %v2212 = vld [vmem:[#allocation14 + $0x4] sm:$0xf]
        %v2213 = vld [vmem:[#allocation14 + $0x8] sm:$0xf]
        %v2214 = vld [vmem:[#allocation14 + $0xc] sm:$0xf]
        %v2215 = vld [vmem:[#allocation14 + $0x10] sm:$0xf]
        %v2216 = vld [vmem:[#allocation14 + $0x14] sm:$0xf]
        %v2217 = vld [vmem:[#allocation14 + $0x18] sm:$0xf]
        %v2218 = vld [vmem:[#allocation14 + $0x1c] sm:$0xf]
        %v2219 = vld [vmem:[#allocation14 + $0x20] sm:$0xf]
        %v2220 = vld [vmem:[#allocation14 + $0x24] sm:$0xf]
        %v2221 = vld [vmem:[#allocation14 + $0x28] sm:$0xf]
        %v2222 = vld [vmem:[#allocation14 + $0x2c] sm:$0xf]
        %v2223 = vld [vmem:[#allocation14 + $0x30] sm:$0xf]
        %v2224 = vld [vmem:[#allocation14 + $0x34] sm:$0xf]
        %v2225 = vld [vmem:[#allocation14 + $0x38] sm:$0xf]
        %v2226 = vld [vmem:[#allocation14 + $0x3c] sm:$0xf]
        %v2227 = vld [vmem:[#allocation14 + $0x40] sm:$0xf]
        %v2228 = vld [vmem:[#allocation14 + $0x44] sm:$0xf]
        %v2229 = vld [vmem:[#allocation14 + $0x48] sm:$0xf]
        %v2230 = vld [vmem:[#allocation14 + $0x4c] sm:$0xf]
        %v2231 = vld [vmem:[#allocation14 + $0x50] sm:$0xf]
        %v2232 = vld [vmem:[#allocation14 + $0x54] sm:$0xf]
        %v2233 = vld [vmem:[#allocation14 + $0x58] sm:$0xf]
        %v2234 = vld [vmem:[#allocation14 + $0x5c] sm:$0xf]
        %v2235 = vld [vmem:[#allocation14 + $0x60] sm:$0xf]
        %v2236 = vld [vmem:[#allocation14 + $0x64] sm:$0xf]
        %v2237 = vld [vmem:[#allocation14 + $0x68] sm:$0xf]
        %v2238 = vld [vmem:[#allocation14 + $0x6c] sm:$0xf]
        %v2239 = vld [vmem:[#allocation14 + $0x70] sm:$0xf]
        %v2240 = vld [vmem:[#allocation14 + $0x74] sm:$0xf]
        %v2241 = vld [vmem:[#allocation14 + $0x78] sm:$0xf]
        %v2242 = vld [vmem:[#allocation14 + $0x7c] sm:$0xf]
        %v2243 = vld [vmem:[#allocation16] sm:$0x1]
        %v2244 = vpack.c.bf16 %v2193, %v2193
        %v2246 = vperm.slane %v2210, 0
        %v2247 = vperm.slane %v2210, 1
        %v2266 = vunpack.c.l.b16 %v2194
        %v2267 = vunpack.c.h.b16 %v2194
        %v2268 = vunpack.c.l.b16 %v2195
        %v2269 = vunpack.c.h.b16 %v2195
        %v2270 = vunpack.c.l.b16 %v2196
        %v2271 = vunpack.c.h.b16 %v2196
        %v2272 = vunpack.c.l.b16 %v2197
        %v2273 = vunpack.c.h.b16 %v2197
        %v2274 = vunpack.c.l.b16 %v2198
        %v2275 = vunpack.c.h.b16 %v2198
        %v2276 = vunpack.c.l.b16 %v2199
        %v2277 = vunpack.c.h.b16 %v2199
        %v2278 = vunpack.c.l.b16 %v2200
        %v2279 = vunpack.c.h.b16 %v2200
        %v2280 = vunpack.c.l.b16 %v2201
        %v2281 = vunpack.c.h.b16 %v2201
        %v2282 = vunpack.c.l.b16 %v2202
        %v2283 = vunpack.c.h.b16 %v2202
        %v2284 = vunpack.c.l.b16 %v2203
        %v2285 = vunpack.c.h.b16 %v2203
        %v2286 = vunpack.c.l.b16 %v2204
        %v2287 = vunpack.c.h.b16 %v2204
        %v2288 = vunpack.c.l.b16 %v2205
        %v2289 = vunpack.c.h.b16 %v2205
        %v2290 = vunpack.c.l.b16 %v2206
        %v2291 = vunpack.c.h.b16 %v2206
        %v2292 = vunpack.c.l.b16 %v2207
        %v2293 = vunpack.c.h.b16 %v2207
        %v2294 = vunpack.c.l.b16 %v2208
        %v2295 = vunpack.c.h.b16 %v2208
        %v2296 = vunpack.c.l.b16 %v2209
        %v2297 = vunpack.c.h.b16 %v2209
        %v2298 = vpack.c.b16 %v2268, %v2266
        %v2299 = vpack.c.b16 %v2269, %v2267
        %v2300 = vpack.c.b16 %v2272, %v2270
        %v2301 = vpack.c.b16 %v2273, %v2271
        %v2302 = vpack.c.b16 %v2276, %v2274
        %v2303 = vpack.c.b16 %v2277, %v2275
        %v2304 = vpack.c.b16 %v2280, %v2278
        %v2305 = vpack.c.b16 %v2281, %v2279
        %v2306 = vpack.c.b16 %v2284, %v2282
        %v2307 = vpack.c.b16 %v2285, %v2283
        %v2308 = vpack.c.b16 %v2288, %v2286
        %v2309 = vpack.c.b16 %v2289, %v2287
        %v2310 = vpack.c.b16 %v2292, %v2290
        %v2311 = vpack.c.b16 %v2293, %v2291
        %v2312 = vpack.c.b16 %v2296, %v2294
        %v2313 = vpack.c.b16 %v2297, %v2295
        %2330 = vmatpush.bf16.msra.mxu0 %v2312
        %2331 = vmatpush.bf16.msra.mxu0 %v2310
        %2332 = vmatpush.bf16.msra.mxu0 %v2308
        %2333 = vmatpush.bf16.msra.mxu0 %v2306
        %2334 = vmatpush.bf16.msra.mxu0 %v2304
        %2335 = vmatpush.bf16.msra.mxu0 %v2302
        %2336 = vmatpush.bf16.msra.mxu0 %v2300
        %2337 = vmatpush.bf16.msra.mxu0 %v2298
        %2338 = vmatmul.bf16.gmra.mxu0 %v2244
        %v2339 = vpop.f32.mrf.mxu0
        %v2340 = vadd.f32 %v2246, %v2339
        %v2341 = vpop.f32.mrf.mxu0
        %2342 = vdwg.mxu0
        %2343 = vmatpush.bf16.msra.mxu0 %v2313
        %2344 = vmatpush.bf16.msra.mxu0 %v2311
        %2345 = vmatpush.bf16.msra.mxu0 %v2309
        %2346 = vmatpush.bf16.msra.mxu0 %v2307
        %2347 = vmatpush.bf16.msra.mxu0 %v2305
        %2348 = vmatpush.bf16.msra.mxu0 %v2303
        %2349 = vmatpush.bf16.msra.mxu0 %v2301
        %2350 = vmatpush.bf16.msra.mxu0 %v2299
        %2351 = vmatmul.bf16.gmra.mxu0 %v2244
        %v2352 = vpop.f32.mrf.mxu0
        %v2353 = vadd.f32 %v2247, %v2352
        %v2354 = vpop.f32.mrf.mxu0
        %2355 = vdwg.mxu0
        %v2356 = vmul.f32 %v2340, %v2340
        %v2357 = vmul.f32 %v2353, %v2353
        %v2358 = vmul.f32 %v2340, %v2356
        %v2359 = vmul.f32 %v2353, %v2357
        %v2360 = vmul.f32 %v2358, 0.044715
        %v2361 = vmul.f32 %v2359, 0.044715
        %v2362 = vadd.f32 %v2340, %v2360
        %v2363 = vadd.f32 %v2353, %v2361
        %v2364 = vmul.f32 %v2362, 0.7978846
        %v2365 = vmul.f32 %v2363, 0.7978846
        %v2366 = vtanh.pop %v2364
        %v2367 = vtanh.pop %v2365
        %v2368 = vadd.f32 %v2366, 1.0
        %v2369 = vadd.f32 %v2367, 1.0
        %v2370 = vmul.f32 %v2368, 0.5
        %v2371 = vmul.f32 %v2369, 0.5
        %v2372 = vmul.f32 %v2340, %v2370
        %v2373 = vmul.f32 %v2353, %v2371
        %v2374 = vpack.c.bf16 %v2372, %v2372
        %v2375 = vpack.c.bf16 %v2373, %v2373
        %v2377 = vperm.slane %v2243, 0
        %v2411 = vunpack.c.l.b16 %v2211
        %v2412 = vunpack.c.l.b16 %v2212
        %v2413 = vunpack.c.l.b16 %v2213
        %v2414 = vunpack.c.l.b16 %v2214
        %v2415 = vunpack.c.l.b16 %v2215
        %v2416 = vunpack.c.l.b16 %v2216
        %v2417 = vunpack.c.l.b16 %v2217
        %v2418 = vunpack.c.l.b16 %v2218
        %v2419 = vunpack.c.l.b16 %v2219
        %v2420 = vunpack.c.l.b16 %v2220
        %v2421 = vunpack.c.l.b16 %v2221
        %v2422 = vunpack.c.l.b16 %v2222
        %v2423 = vunpack.c.l.b16 %v2223
        %v2424 = vunpack.c.l.b16 %v2224
        %v2425 = vunpack.c.l.b16 %v2225
        %v2426 = vunpack.c.l.b16 %v2226
        %v2427 = vunpack.c.l.b16 %v2227
        %v2428 = vunpack.c.l.b16 %v2228
        %v2429 = vunpack.c.l.b16 %v2229
        %v2430 = vunpack.c.l.b16 %v2230
        %v2431 = vunpack.c.l.b16 %v2231
        %v2432 = vunpack.c.l.b16 %v2232
        %v2433 = vunpack.c.l.b16 %v2233
        %v2434 = vunpack.c.l.b16 %v2234
        %v2435 = vunpack.c.l.b16 %v2235
        %v2436 = vunpack.c.l.b16 %v2236
        %v2437 = vunpack.c.l.b16 %v2237
        %v2438 = vunpack.c.l.b16 %v2238
        %v2439 = vunpack.c.l.b16 %v2239
        %v2440 = vunpack.c.l.b16 %v2240
        %v2441 = vunpack.c.l.b16 %v2241
        %v2442 = vunpack.c.l.b16 %v2242
        %v2443 = vpack.c.b16 %v2412, %v2411
        %v2444 = vpack.c.b16 %v2414, %v2413
        %v2445 = vpack.c.b16 %v2416, %v2415
        %v2446 = vpack.c.b16 %v2418, %v2417
        %v2447 = vpack.c.b16 %v2420, %v2419
        %v2448 = vpack.c.b16 %v2422, %v2421
        %v2449 = vpack.c.b16 %v2424, %v2423
        %v2450 = vpack.c.b16 %v2426, %v2425
        %v2451 = vpack.c.b16 %v2428, %v2427
        %v2452 = vpack.c.b16 %v2430, %v2429
        %v2453 = vpack.c.b16 %v2432, %v2431
        %v2454 = vpack.c.b16 %v2434, %v2433
        %v2455 = vpack.c.b16 %v2436, %v2435
        %v2456 = vpack.c.b16 %v2438, %v2437
        %v2457 = vpack.c.b16 %v2440, %v2439
        %v2458 = vpack.c.b16 %v2442, %v2441
        %2475 = vmatpush.bf16.msra.mxu0 %v2450
        %2476 = vmatpush.bf16.msra.mxu0 %v2449
        %2477 = vmatpush.bf16.msra.mxu0 %v2448
        %2478 = vmatpush.bf16.msra.mxu0 %v2447
        %2479 = vmatpush.bf16.msra.mxu0 %v2446
        %2480 = vmatpush.bf16.msra.mxu0 %v2445
        %2481 = vmatpush.bf16.msra.mxu0 %v2444
        %2482 = vmatpush.bf16.msra.mxu0 %v2443
        %2483 = vmatmul.bf16.gmra.mxu0 %v2374
        %v2484 = vpop.f32.mrf.mxu0
        %v2485 = vadd.f32 %v2377, %v2484
        %v2486 = vpop.f32.mrf.mxu0
        %2487 = vdwg.mxu0
        %2488 = vmatpush.bf16.msra.mxu0 %v2458
        %2489 = vmatpush.bf16.msra.mxu0 %v2457
        %2490 = vmatpush.bf16.msra.mxu0 %v2456
        %2491 = vmatpush.bf16.msra.mxu0 %v2455
        %2492 = vmatpush.bf16.msra.mxu0 %v2454
        %2493 = vmatpush.bf16.msra.mxu0 %v2453
        %2494 = vmatpush.bf16.msra.mxu0 %v2452
        %2495 = vmatpush.bf16.msra.mxu0 %v2451
        %2496 = vmatmul.bf16.gmra.mxu0 %v2375
        %v2497 = vpop.f32.mrf.mxu0
        %v2498 = vadd.f32 %v2485, %v2497
        %v2499 = vpop.f32.mrf.mxu0
        %2500 = vdwg.mxu0
        %v2501 = vadd.f32 %v2163, %v2498
        %s2502 = scalar_lea.vmem [#allocation2], 1
        %v2503 = vld [vmem:[%s2502] sm:$0x1]
        %s2504 = scalar_lea.vmem [#allocation5], 1
        %v2505 = vld [vmem:[%s2504] sm:$0x1]
        %2506 = vadd.xlane.f32.xlu0 %v2501
        %v2507 = vpop.xlane.xlu0 %2506
        %v2508 = vmul.f32 %v2507, %v1551
        %v2509 = vsub.f32 %v2501, %v2508
        %v2510 = vmul.f32 %v2509, %v2509
        %2511 = vadd.xlane.f32.xlu0 %v2510
        %v2512 = vpop.xlane.xlu0 %2511
        %v2513 = vmul.f32 %v2512, %v1551
        %v2514 = vadd.f32 %v2513, 1e-05
        %v2515 = vrsqrt.pop %v2514
        %v2516 = vmul.f32 %v2515, %v2514
        %v2517 = vmul.f32 %v2516, %v2515
        %v2518 = vmul.f32 0.5, %v2517
        %v2519 = vsub.f32 1.5, %v2518
        %v2520 = vmul.f32 %v2515, %v2519
        %vm2521 = vweird.f32 %v2514
        %vm2522 = vweird.f32 %v2515
        %vm2523 = vmor %vm2521, %vm2522
        %v2524 = vsel %vm2523, %v2515, %v2520
        %v2525 = vmul.f32 %v2509, %v2524
        %v2527 = vperm.slane %v2503, 0
        %v2529 = vmul.f32 %v2525, %v2527
        %v2531 = vperm.slane %v2505, 0
        %v2533 = vadd.f32 %v2529, %v2531
        %s2534 = scalar_lea.vmem %s9, 192
        %v2535 = vld [vmem:[%s2534] sm:$0xff]
        %v2536 = vld [vmem:[%s2534 + $0x8] sm:$0xf]
        %v2537 = vld [vmem:[%s2534 + $0xc] sm:$0xff]
        %v2538 = vld [vmem:[%s2534 + $0x14] sm:$0xf]
        %v2539 = vld [vmem:[%s2534 + $0x18] sm:$0xff]
        %v2540 = vld [vmem:[%s2534 + $0x20] sm:$0xf]
        %v2541 = vld [vmem:[%s2534 + $0x24] sm:$0xff]
        %v2542 = vld [vmem:[%s2534 + $0x2c] sm:$0xf]
        %v2543 = vld [vmem:[%s2534 + $0x30] sm:$0xff]
        %v2544 = vld [vmem:[%s2534 + $0x38] sm:$0xf]
        %v2545 = vld [vmem:[%s2534 + $0x3c] sm:$0xff]
        %v2546 = vld [vmem:[%s2534 + $0x44] sm:$0xf]
        %v2547 = vld [vmem:[%s2534 + $0x48] sm:$0xff]
        %v2548 = vld [vmem:[%s2534 + $0x50] sm:$0xf]
        %v2549 = vld [vmem:[%s2534 + $0x54] sm:$0xff]
        %v2550 = vld [vmem:[%s2534 + $0x5c] sm:$0xf]
        %v2551 = vld [vmem:[%s2534 + $0x60] sm:$0xff]
        %v2552 = vld [vmem:[%s2534 + $0x68] sm:$0xf]
        %v2553 = vld [vmem:[%s2534 + $0x6c] sm:$0xff]
        %v2554 = vld [vmem:[%s2534 + $0x74] sm:$0xf]
        %v2555 = vld [vmem:[%s2534 + $0x78] sm:$0xff]
        %v2556 = vld [vmem:[%s2534 + $0x80] sm:$0xf]
        %v2557 = vld [vmem:[%s2534 + $0x84] sm:$0xff]
        %v2558 = vld [vmem:[%s2534 + $0x8c] sm:$0xf]
        %v2559 = vld [vmem:[%s2534 + $0x90] sm:$0xff]
        %v2560 = vld [vmem:[%s2534 + $0x98] sm:$0xf]
        %v2561 = vld [vmem:[%s2534 + $0x9c] sm:$0xff]
        %v2562 = vld [vmem:[%s2534 + $0xa4] sm:$0xf]
        %v2563 = vld [vmem:[%s2534 + $0xa8] sm:$0xff]
        %v2564 = vld [vmem:[%s2534 + $0xb0] sm:$0xf]
        %v2565 = vld [vmem:[%s2534 + $0xb4] sm:$0xff]
        %v2566 = vld [vmem:[%s2534 + $0xbc] sm:$0xf]
        %s2567 = scalar_lea.vmem [#allocation7], 64
        %v2568 = vld [vmem:[%s2567] sm:$0xf]
        %v2569 = vld [vmem:[%s2567 + $0x4] sm:$0xf]
        %v2570 = vld [vmem:[%s2567 + $0x8] sm:$0xf]
        %v2571 = vld [vmem:[%s2567 + $0xc] sm:$0xf]
        %v2572 = vld [vmem:[%s2567 + $0x10] sm:$0xf]
        %v2573 = vld [vmem:[%s2567 + $0x14] sm:$0xf]
        %v2574 = vld [vmem:[%s2567 + $0x18] sm:$0xf]
        %v2575 = vld [vmem:[%s2567 + $0x1c] sm:$0xf]
        %v2576 = vld [vmem:[%s2567 + $0x20] sm:$0xf]
        %v2577 = vld [vmem:[%s2567 + $0x24] sm:$0xf]
        %v2578 = vld [vmem:[%s2567 + $0x28] sm:$0xf]
        %v2579 = vld [vmem:[%s2567 + $0x2c] sm:$0xf]
        %v2580 = vld [vmem:[%s2567 + $0x30] sm:$0xf]
        %v2581 = vld [vmem:[%s2567 + $0x34] sm:$0xf]
        %v2582 = vld [vmem:[%s2567 + $0x38] sm:$0xf]
        %v2583 = vld [vmem:[%s2567 + $0x3c] sm:$0xf]
        %s2584 = scalar_lea.vmem [#allocation8], 1
        %v2585 = vld [vmem:[%s2584] sm:$0x1]
        %v2586 = vpack.c.bf16 %v2533, %v2533
        %v2619 = vunpack.c.l.b16 %v2535
        %v2620 = vunpack.c.h.b16 %v2535
        %v2621 = vunpack.c.l.b16 %v2536
        %v2622 = vunpack.c.l.b16 %v2537
        %v2623 = vunpack.c.h.b16 %v2537
        %v2624 = vunpack.c.l.b16 %v2538
        %v2625 = vunpack.c.l.b16 %v2539
        %v2626 = vunpack.c.h.b16 %v2539
        %v2627 = vunpack.c.l.b16 %v2540
        %v2628 = vunpack.c.l.b16 %v2541
        %v2629 = vunpack.c.h.b16 %v2541
        %v2630 = vunpack.c.l.b16 %v2542
        %v2631 = vunpack.c.l.b16 %v2543
        %v2632 = vunpack.c.h.b16 %v2543
        %v2633 = vunpack.c.l.b16 %v2544
        %v2634 = vunpack.c.l.b16 %v2545
        %v2635 = vunpack.c.h.b16 %v2545
        %v2636 = vunpack.c.l.b16 %v2546
        %v2637 = vunpack.c.l.b16 %v2547
        %v2638 = vunpack.c.h.b16 %v2547
        %v2639 = vunpack.c.l.b16 %v2548
        %v2640 = vunpack.c.l.b16 %v2549
        %v2641 = vunpack.c.h.b16 %v2549
        %v2642 = vunpack.c.l.b16 %v2550
        %v2643 = vunpack.c.l.b16 %v2551
        %v2644 = vunpack.c.h.b16 %v2551
        %v2645 = vunpack.c.l.b16 %v2552
        %v2646 = vunpack.c.l.b16 %v2553
        %v2647 = vunpack.c.h.b16 %v2553
        %v2648 = vunpack.c.l.b16 %v2554
        %v2649 = vunpack.c.l.b16 %v2555
        %v2650 = vunpack.c.h.b16 %v2555
        %v2651 = vunpack.c.l.b16 %v2556
        %v2652 = vunpack.c.l.b16 %v2557
        %v2653 = vunpack.c.h.b16 %v2557
        %v2654 = vunpack.c.l.b16 %v2558
        %v2655 = vunpack.c.l.b16 %v2559
        %v2656 = vunpack.c.h.b16 %v2559
        %v2657 = vunpack.c.l.b16 %v2560
        %v2658 = vunpack.c.l.b16 %v2561
        %v2659 = vunpack.c.h.b16 %v2561
        %v2660 = vunpack.c.l.b16 %v2562
        %v2661 = vunpack.c.l.b16 %v2563
        %v2662 = vunpack.c.h.b16 %v2563
        %v2663 = vunpack.c.l.b16 %v2564
        %v2664 = vunpack.c.l.b16 %v2565
        %v2665 = vunpack.c.h.b16 %v2565
        %v2666 = vunpack.c.l.b16 %v2566
        %v2667 = vpack.c.b16 %v2622, %v2619
        %v2668 = vpack.c.b16 %v2623, %v2620
        %v2669 = vpack.c.b16 %v2624, %v2621
        %v2670 = vpack.c.b16 %v2628, %v2625
        %v2671 = vpack.c.b16 %v2629, %v2626
        %v2672 = vpack.c.b16 %v2630, %v2627
        %v2673 = vpack.c.b16 %v2634, %v2631
        %v2674 = vpack.c.b16 %v2635, %v2632
        %v2675 = vpack.c.b16 %v2636, %v2633
        %v2676 = vpack.c.b16 %v2640, %v2637
        %v2677 = vpack.c.b16 %v2641, %v2638
        %v2678 = vpack.c.b16 %v2642, %v2639
        %v2679 = vpack.c.b16 %v2646, %v2643
        %v2680 = vpack.c.b16 %v2647, %v2644
        %v2681 = vpack.c.b16 %v2648, %v2645
        %v2682 = vpack.c.b16 %v2652, %v2649
        %v2683 = vpack.c.b16 %v2653, %v2650
        %v2684 = vpack.c.b16 %v2654, %v2651
        %v2685 = vpack.c.b16 %v2658, %v2655
        %v2686 = vpack.c.b16 %v2659, %v2656
        %v2687 = vpack.c.b16 %v2660, %v2657
        %v2688 = vpack.c.b16 %v2664, %v2661
        %v2689 = vpack.c.b16 %v2665, %v2662
        %v2690 = vpack.c.b16 %v2666, %v2663
        %2715 = vmatpush.bf16.msra.mxu0 %v2688
        %2716 = vmatpush.bf16.msra.mxu0 %v2685
        %2717 = vmatpush.bf16.msra.mxu0 %v2682
        %2718 = vmatpush.bf16.msra.mxu0 %v2679
        %2719 = vmatpush.bf16.msra.mxu0 %v2676
        %2720 = vmatpush.bf16.msra.mxu0 %v2673
        %2721 = vmatpush.bf16.msra.mxu0 %v2670
        %2722 = vmatpush.bf16.msra.mxu0 %v2667
        %2723 = vmatmul.bf16.gmra.mxu0 %v2586
        %v2724 = vpop.f32.mrf.mxu0
        %v2725 = vadd.f32 0.0, %v2724
        %v2726 = vpop.f32.mrf.mxu0
        %2727 = vdwg.mxu0
        %2728 = vmatpush.bf16.msra.mxu0 %v2689
        %2729 = vmatpush.bf16.msra.mxu0 %v2686
        %2730 = vmatpush.bf16.msra.mxu0 %v2683
        %2731 = vmatpush.bf16.msra.mxu0 %v2680
        %2732 = vmatpush.bf16.msra.mxu0 %v2677
        %2733 = vmatpush.bf16.msra.mxu0 %v2674
        %2734 = vmatpush.bf16.msra.mxu0 %v2671
        %2735 = vmatpush.bf16.msra.mxu0 %v2668
        %2736 = vmatmul.bf16.gmra.mxu0 %v2586
        %v2737 = vpop.f32.mrf.mxu0
        %v2738 = vadd.f32 0.0, %v2737
        %v2739 = vpop.f32.mrf.mxu0
        %2740 = vdwg.mxu0
        %2741 = vmatpush.bf16.msra.mxu0 %v2690
        %2742 = vmatpush.bf16.msra.mxu0 %v2687
        %2743 = vmatpush.bf16.msra.mxu0 %v2684
        %2744 = vmatpush.bf16.msra.mxu0 %v2681
        %2745 = vmatpush.bf16.msra.mxu0 %v2678
        %2746 = vmatpush.bf16.msra.mxu0 %v2675
        %2747 = vmatpush.bf16.msra.mxu0 %v2672
        %2748 = vmatpush.bf16.msra.mxu0 %v2669
        %2749 = vmatmul.bf16.gmra.mxu0 %v2586
        %v2750 = vpop.f32.mrf.mxu0
        %v2751 = vadd.f32 0.0, %v2750
        %v2752 = vpop.f32.mrf.mxu0
        %2753 = vdwg.mxu0
        %v2754 = vmul.f32 %v2725, 0.17677669
        %v2755 = vpack.c.bf16 %v2754, %v2754
        %v2756 = vpack.c.bf16 %v2738, %v2738
        %v2757 = vpack.c.bf16 %v2751, %v2751
        %v2759 = vsel %vm1799, %v2755, 0
        %v2762 = vsel %vm1799, %v2756, 0
        %2764 = vmatpush.bf16.xpose.msra.mxu0 0
        %2765 = vmatpush.bf16.xpose.msra.mxu0 0
        %2766 = vmatpush.bf16.xpose.msra.mxu0 0
        %2767 = vmatpush.bf16.xpose.msra.mxu0 0
        %2768 = vmatpush.bf16.xpose.msra.mxu0 0
        %2769 = vmatpush.bf16.xpose.msra.mxu0 0
        %2770 = vmatpush.bf16.xpose.msra.mxu0 0
        %2771 = vmatpush.bf16.xpose.msra.mxu0 %v2762
        %2772 = vmatmul.bf16.gmra.mxu0 %v2759
        %v2773 = vpop.f32.mrf.mxu0
        %v2774 = vadd.f32 0.0, %v2773
        %v2775 = vpop.f32.mrf.mxu0
        %2776 = vdwg.mxu0
        %v2778 = vunpack.c.l.b16 %v2755
        %v2779 = vpack.c.b16 %v2778, %v2778
        %2780 = vrot.lane.b32.xlu0 %v2779, 96
        %v2781 = vpop.permute.xlu0 %2780
        %v2783 = vunpack.c.l.b16 %v2756
        %v2784 = vpack.c.b16 %v2783, %v2783
        %2785 = vrot.lane.b32.xlu0 %v2784, 96
        %v2786 = vpop.permute.xlu0 %2785
        %v2788 = vsel %vm1799, %v2781, 0
        %v2791 = vsel %vm1799, %v2786, 0
        %2793 = vmatpush.bf16.xpose.msra.mxu0 0
        %2794 = vmatpush.bf16.xpose.msra.mxu0 0
        %2795 = vmatpush.bf16.xpose.msra.mxu0 0
        %2796 = vmatpush.bf16.xpose.msra.mxu0 0
        %2797 = vmatpush.bf16.xpose.msra.mxu0 0
        %2798 = vmatpush.bf16.xpose.msra.mxu0 0
        %2799 = vmatpush.bf16.xpose.msra.mxu0 0
        %2800 = vmatpush.bf16.xpose.msra.mxu0 %v2791
        %2801 = vmatmul.bf16.gmra.mxu0 %v2788
        %v2802 = vpop.f32.mrf.mxu0
        %v2803 = vadd.f32 0.0, %v2802
        %v2804 = vpop.f32.mrf.mxu0
        %2805 = vdwg.mxu0
        %2806 = vrot.lane.b32.xlu0 %v2779, 64
        %v2807 = vpop.permute.xlu0 %2806
        %2808 = vrot.lane.b32.xlu0 %v2784, 64
        %v2809 = vpop.permute.xlu0 %2808
        %v2811 = vsel %vm1799, %v2807, 0
        %v2814 = vsel %vm1799, %v2809, 0
        %2816 = vmatpush.bf16.xpose.msra.mxu0 0
        %2817 = vmatpush.bf16.xpose.msra.mxu0 0
        %2818 = vmatpush.bf16.xpose.msra.mxu0 0
        %2819 = vmatpush.bf16.xpose.msra.mxu0 0
        %2820 = vmatpush.bf16.xpose.msra.mxu0 0
        %2821 = vmatpush.bf16.xpose.msra.mxu0 0
        %2822 = vmatpush.bf16.xpose.msra.mxu0 0
        %2823 = vmatpush.bf16.xpose.msra.mxu0 %v2814
        %2824 = vmatmul.bf16.gmra.mxu0 %v2811
        %v2825 = vpop.f32.mrf.mxu0
        %v2826 = vadd.f32 0.0, %v2825
        %v2827 = vpop.f32.mrf.mxu0
        %2828 = vdwg.mxu0
        %2829 = vrot.lane.b32.xlu0 %v2779, 32
        %v2830 = vpop.permute.xlu0 %2829
        %2831 = vrot.lane.b32.xlu0 %v2784, 32
        %v2832 = vpop.permute.xlu0 %2831
        %v2834 = vsel %vm1799, %v2830, 0
        %v2837 = vsel %vm1799, %v2832, 0
        %2839 = vmatpush.bf16.xpose.msra.mxu0 0
        %2840 = vmatpush.bf16.xpose.msra.mxu0 0
        %2841 = vmatpush.bf16.xpose.msra.mxu0 0
        %2842 = vmatpush.bf16.xpose.msra.mxu0 0
        %2843 = vmatpush.bf16.xpose.msra.mxu0 0
        %2844 = vmatpush.bf16.xpose.msra.mxu0 0
        %2845 = vmatpush.bf16.xpose.msra.mxu0 0
        %2846 = vmatpush.bf16.xpose.msra.mxu0 %v2837
        %2847 = vmatmul.bf16.gmra.mxu0 %v2834
        %v2848 = vpop.f32.mrf.mxu0
        %v2849 = vadd.f32 0.0, %v2848
        %v2850 = vpop.f32.mrf.mxu0
        %2851 = vdwg.mxu0
        %v2852 = vsel %vm1894, %v2774, -inf
        %2853 = vmax.xlane.f32.xlu0 %v2852
        %v2854 = vpop.xlane.xlu0 %2853
        %v2855 = vsel %vm1894, %v2803, -inf
        %2856 = vmax.xlane.f32.xlu0 %v2855
        %v2857 = vpop.xlane.xlu0 %2856
        %v2858 = vsel %vm1894, %v2826, -inf
        %2859 = vmax.xlane.f32.xlu0 %v2858
        %v2860 = vpop.xlane.xlu0 %2859
        %v2861 = vsel %vm1894, %v2849, -inf
        %2862 = vmax.xlane.f32.xlu0 %v2861
        %v2863 = vpop.xlane.xlu0 %2862
        %v2864 = vsub.f32 %v2774, %v2854
        %v2865 = vsub.f32 %v2803, %v2857
        %v2866 = vsub.f32 %v2826, %v2860
        %v2867 = vsub.f32 %v2849, %v2863
        %v2868 = vmul.f32 %v2864, 1.442695
        %v2869 = vpow.pop %v2868
        %v2870 = vmul.f32 %v2865, 1.442695
        %v2871 = vpow.pop %v2870
        %v2872 = vmul.f32 %v2866, 1.442695
        %v2873 = vpow.pop %v2872
        %v2874 = vmul.f32 %v2867, 1.442695
        %v2875 = vpow.pop %v2874
        %v2876 = vsel %vm1894, %v2869, 0.0
        %2877 = vadd.xlane.f32.xlu0 %v2876
        %v2878 = vpop.xlane.xlu0 %2877
        %v2879 = vsel %vm1894, %v2871, 0.0
        %2880 = vadd.xlane.f32.xlu0 %v2879
        %v2881 = vpop.xlane.xlu0 %2880
        %v2882 = vsel %vm1894, %v2873, 0.0
        %2883 = vadd.xlane.f32.xlu0 %v2882
        %v2884 = vpop.xlane.xlu0 %2883
        %v2885 = vsel %vm1894, %v2875, 0.0
        %2886 = vadd.xlane.f32.xlu0 %v2885
        %v2887 = vpop.xlane.xlu0 %2886
        %v2888 = vrcp.pop %v2878
        %v2889 = vmul.f32 %v2878, %v2888
        %v2890 = vsub.f32 1.0, %v2889
        %v2891 = vmul.f32 %v2888, %v2890
        %v2892 = vadd.f32 %v2888, %v2891
        %vm2893 = vweird.f32 %v2878
        %vm2894 = vweird.f32 %v2888
        %vm2895 = vmor %vm2893, %vm2894
        %v2896 = vsel %vm2895, %v2888, %v2892
        %v2897 = vand.u32 2147483647, %v2878
        %vm2898 = vcmp.eq.f32.partialorder %v2897, 8.507059e+37
        %v2899 = vand.u32 %v2878, 2147483648
        %v2900 = vor.u32 1.1754944e-38, %v2899
        %v2901 = vsel %vm2898, %v2900, %v2896
        %v2902 = vrcp.pop %v2881
        %v2903 = vmul.f32 %v2881, %v2902
        %v2904 = vsub.f32 1.0, %v2903
        %v2905 = vmul.f32 %v2902, %v2904
        %v2906 = vadd.f32 %v2902, %v2905
        %vm2907 = vweird.f32 %v2881
        %vm2908 = vweird.f32 %v2902
        %vm2909 = vmor %vm2907, %vm2908
        %v2910 = vsel %vm2909, %v2902, %v2906
        %v2911 = vand.u32 2147483647, %v2881
        %vm2912 = vcmp.eq.f32.partialorder %v2911, 8.507059e+37
        %v2913 = vand.u32 %v2881, 2147483648
        %v2914 = vor.u32 1.1754944e-38, %v2913
        %v2915 = vsel %vm2912, %v2914, %v2910
        %v2916 = vrcp.pop %v2884
        %v2917 = vmul.f32 %v2884, %v2916
        %v2918 = vsub.f32 1.0, %v2917
        %v2919 = vmul.f32 %v2916, %v2918
        %v2920 = vadd.f32 %v2916, %v2919
        %vm2921 = vweird.f32 %v2884
        %vm2922 = vweird.f32 %v2916
        %vm2923 = vmor %vm2921, %vm2922
        %v2924 = vsel %vm2923, %v2916, %v2920
        %v2925 = vand.u32 2147483647, %v2884
        %vm2926 = vcmp.eq.f32.partialorder %v2925, 8.507059e+37
        %v2927 = vand.u32 %v2884, 2147483648
        %v2928 = vor.u32 1.1754944e-38, %v2927
        %v2929 = vsel %vm2926, %v2928, %v2924
        %v2930 = vrcp.pop %v2887
        %v2931 = vmul.f32 %v2887, %v2930
        %v2932 = vsub.f32 1.0, %v2931
        %v2933 = vmul.f32 %v2930, %v2932
        %v2934 = vadd.f32 %v2930, %v2933
        %vm2935 = vweird.f32 %v2887
        %vm2936 = vweird.f32 %v2930
        %vm2937 = vmor %vm2935, %vm2936
        %v2938 = vsel %vm2937, %v2930, %v2934
        %v2939 = vand.u32 2147483647, %v2887
        %vm2940 = vcmp.eq.f32.partialorder %v2939, 8.507059e+37
        %v2941 = vand.u32 %v2887, 2147483648
        %v2942 = vor.u32 1.1754944e-38, %v2941
        %v2943 = vsel %vm2940, %v2942, %v2938
        %v2944 = vmul.f32 %v2869, %v2901
        %v2945 = vmul.f32 %v2871, %v2915
        %v2946 = vmul.f32 %v2873, %v2929
        %v2947 = vmul.f32 %v2875, %v2943
        %v2948 = vpack.c.bf16 %v2944, %v2944
        %v2949 = vpack.c.bf16 %v2945, %v2945
        %v2950 = vpack.c.bf16 %v2946, %v2946
        %v2951 = vpack.c.bf16 %v2947, %v2947
        %v2953 = vsel %vm1894, %v2948, 0
        %v2956 = vsel %vm1998, %v2757, 0
        %2958 = vmatpush.bf16.msra.mxu0 0
        %2959 = vmatpush.bf16.msra.mxu0 0
        %2960 = vmatpush.bf16.msra.mxu0 0
        %2961 = vmatpush.bf16.msra.mxu0 0
        %2962 = vmatpush.bf16.msra.mxu0 0
        %2963 = vmatpush.bf16.msra.mxu0 0
        %2964 = vmatpush.bf16.msra.mxu0 0
        %2965 = vmatpush.bf16.msra.mxu0 %v2956
        %2966 = vmatmul.bf16.gmra.mxu0 %v2953
        %v2967 = vpop.f32.mrf.mxu0
        %v2968 = vadd.f32 0.0, %v2967
        %v2969 = vpop.f32.mrf.mxu0
        %2970 = vdwg.mxu0
        %v2972 = vunpack.c.l.b16 %v2757
        %v2973 = vpack.c.b16 %v2972, %v2972
        %2974 = vrot.lane.b32.xlu0 %v2973, 96
        %v2975 = vpop.permute.xlu0 %2974
        %v2977 = vsel %vm1894, %v2949, 0
        %v2980 = vsel %vm1998, %v2975, 0
        %2982 = vmatpush.bf16.msra.mxu0 0
        %2983 = vmatpush.bf16.msra.mxu0 0
        %2984 = vmatpush.bf16.msra.mxu0 0
        %2985 = vmatpush.bf16.msra.mxu0 0
        %2986 = vmatpush.bf16.msra.mxu0 0
        %2987 = vmatpush.bf16.msra.mxu0 0
        %2988 = vmatpush.bf16.msra.mxu0 0
        %2989 = vmatpush.bf16.msra.mxu0 %v2980
        %2990 = vmatmul.bf16.gmra.mxu0 %v2977
        %v2991 = vpop.f32.mrf.mxu0
        %v2992 = vadd.f32 0.0, %v2991
        %v2993 = vpop.f32.mrf.mxu0
        %2994 = vdwg.mxu0
        %2995 = vrot.lane.b32.xlu0 %v2973, 64
        %v2996 = vpop.permute.xlu0 %2995
        %v2998 = vsel %vm1894, %v2950, 0
        %v3001 = vsel %vm1998, %v2996, 0
        %3003 = vmatpush.bf16.msra.mxu0 0
        %3004 = vmatpush.bf16.msra.mxu0 0
        %3005 = vmatpush.bf16.msra.mxu0 0
        %3006 = vmatpush.bf16.msra.mxu0 0
        %3007 = vmatpush.bf16.msra.mxu0 0
        %3008 = vmatpush.bf16.msra.mxu0 0
        %3009 = vmatpush.bf16.msra.mxu0 0
        %3010 = vmatpush.bf16.msra.mxu0 %v3001
        %3011 = vmatmul.bf16.gmra.mxu0 %v2998
        %v3012 = vpop.f32.mrf.mxu0
        %v3013 = vadd.f32 0.0, %v3012
        %v3014 = vpop.f32.mrf.mxu0
        %3015 = vdwg.mxu0
        %3016 = vrot.lane.b32.xlu0 %v2973, 32
        %v3017 = vpop.permute.xlu0 %3016
        %v3019 = vsel %vm1894, %v2951, 0
        %v3022 = vsel %vm1998, %v3017, 0
        %3024 = vmatpush.bf16.msra.mxu0 0
        %3025 = vmatpush.bf16.msra.mxu0 0
        %3026 = vmatpush.bf16.msra.mxu0 0
        %3027 = vmatpush.bf16.msra.mxu0 0
        %3028 = vmatpush.bf16.msra.mxu0 0
        %3029 = vmatpush.bf16.msra.mxu0 0
        %3030 = vmatpush.bf16.msra.mxu0 0
        %3031 = vmatpush.bf16.msra.mxu0 %v3022
        %3032 = vmatmul.bf16.gmra.mxu0 %v3019
        %v3033 = vpop.f32.mrf.mxu0
        %v3034 = vadd.f32 0.0, %v3033
        %v3035 = vpop.f32.mrf.mxu0
        %3036 = vdwg.mxu0
        %3038 = vrot.lane.b32.xlu0 %v2992, 32
        %v3039 = vpop.permute.xlu0 %3038
        %3042 = vrot.lane.b32.xlu0 %v3013, 64
        %v3043 = vpop.permute.xlu0 %3042
        %3046 = vrot.lane.b32.xlu0 %v3034, 96
        %v3047 = vpop.permute.xlu0 %3046
        %v3049 = vsel %vm1799, %v2968, %v3039
        %v3050 = vsel %vm2094, %v3049, %v3043
        %v3051 = vsel %vm2096, %v3050, %v3047
        %v3052 = vpack.c.bf16 %v3051, %v3051
        %v3054 = vperm.slane %v2585, 0
        %v3072 = vunpack.c.l.b16 %v2568
        %v3073 = vunpack.c.l.b16 %v2569
        %v3074 = vunpack.c.l.b16 %v2570
        %v3075 = vunpack.c.l.b16 %v2571
        %v3076 = vunpack.c.l.b16 %v2572
        %v3077 = vunpack.c.l.b16 %v2573
        %v3078 = vunpack.c.l.b16 %v2574
        %v3079 = vunpack.c.l.b16 %v2575
        %v3080 = vunpack.c.l.b16 %v2576
        %v3081 = vunpack.c.l.b16 %v2577
        %v3082 = vunpack.c.l.b16 %v2578
        %v3083 = vunpack.c.l.b16 %v2579
        %v3084 = vunpack.c.l.b16 %v2580
        %v3085 = vunpack.c.l.b16 %v2581
        %v3086 = vunpack.c.l.b16 %v2582
        %v3087 = vunpack.c.l.b16 %v2583
        %v3088 = vpack.c.b16 %v3073, %v3072
        %v3089 = vpack.c.b16 %v3075, %v3074
        %v3090 = vpack.c.b16 %v3077, %v3076
        %v3091 = vpack.c.b16 %v3079, %v3078
        %v3092 = vpack.c.b16 %v3081, %v3080
        %v3093 = vpack.c.b16 %v3083, %v3082
        %v3094 = vpack.c.b16 %v3085, %v3084
        %v3095 = vpack.c.b16 %v3087, %v3086
        %3104 = vmatpush.bf16.msra.mxu0 %v3095
        %3105 = vmatpush.bf16.msra.mxu0 %v3094
        %3106 = vmatpush.bf16.msra.mxu0 %v3093
        %3107 = vmatpush.bf16.msra.mxu0 %v3092
        %3108 = vmatpush.bf16.msra.mxu0 %v3091
        %3109 = vmatpush.bf16.msra.mxu0 %v3090
        %3110 = vmatpush.bf16.msra.mxu0 %v3089
        %3111 = vmatpush.bf16.msra.mxu0 %v3088
        %3112 = vmatmul.bf16.gmra.mxu0 %v3052
        %v3113 = vpop.f32.mrf.mxu0
        %v3114 = vadd.f32 %v3054, %v3113
        %v3115 = vpop.f32.mrf.mxu0
        %3116 = vdwg.mxu0
        %v3117 = vadd.f32 %v2501, %v3114
        %s3118 = scalar_lea.vmem [#allocation10], 1
        %v3119 = vld [vmem:[%s3118] sm:$0x1]
        %s3120 = scalar_lea.vmem [#allocation11], 1
        %v3121 = vld [vmem:[%s3120] sm:$0x1]
        %3122 = vadd.xlane.f32.xlu0 %v3117
        %v3123 = vpop.xlane.xlu0 %3122
        %v3124 = vmul.f32 %v3123, %v1551
        %v3125 = vsub.f32 %v3117, %v3124
        %v3126 = vmul.f32 %v3125, %v3125
        %3127 = vadd.xlane.f32.xlu0 %v3126
        %v3128 = vpop.xlane.xlu0 %3127
        %v3129 = vmul.f32 %v3128, %v1551
        %v3130 = vadd.f32 %v3129, 1e-05
        %v3131 = vrsqrt.pop %v3130
        %v3132 = vmul.f32 %v3131, %v3130
        %v3133 = vmul.f32 %v3132, %v3131
        %v3134 = vmul.f32 0.5, %v3133
        %v3135 = vsub.f32 1.5, %v3134
        %v3136 = vmul.f32 %v3131, %v3135
        %vm3137 = vweird.f32 %v3130
        %vm3138 = vweird.f32 %v3131
        %vm3139 = vmor %vm3137, %vm3138
        %v3140 = vsel %vm3139, %v3131, %v3136
        %v3141 = vmul.f32 %v3125, %v3140
        %v3143 = vperm.slane %v3119, 0
        %v3145 = vmul.f32 %v3141, %v3143
        %v3147 = vperm.slane %v3121, 0
        %v3149 = vadd.f32 %v3145, %v3147
        %s3150 = scalar_lea.vmem [#allocation13], 128
        %v3151 = vld [vmem:[%s3150] sm:$0xff]
        %v3152 = vld [vmem:[%s3150 + $0x8] sm:$0xff]
        %v3153 = vld [vmem:[%s3150 + $0x10] sm:$0xff]
        %v3154 = vld [vmem:[%s3150 + $0x18] sm:$0xff]
        %v3155 = vld [vmem:[%s3150 + $0x20] sm:$0xff]
        %v3156 = vld [vmem:[%s3150 + $0x28] sm:$0xff]
        %v3157 = vld [vmem:[%s3150 + $0x30] sm:$0xff]
        %v3158 = vld [vmem:[%s3150 + $0x38] sm:$0xff]
        %v3159 = vld [vmem:[%s3150 + $0x40] sm:$0xff]
        %v3160 = vld [vmem:[%s3150 + $0x48] sm:$0xff]
        %v3161 = vld [vmem:[%s3150 + $0x50] sm:$0xff]
        %v3162 = vld [vmem:[%s3150 + $0x58] sm:$0xff]
        %v3163 = vld [vmem:[%s3150 + $0x60] sm:$0xff]
        %v3164 = vld [vmem:[%s3150 + $0x68] sm:$0xff]
        %v3165 = vld [vmem:[%s3150 + $0x70] sm:$0xff]
        %v3166 = vld [vmem:[%s3150 + $0x78] sm:$0xff]
        %s3167 = scalar_lea.vmem %s21, 2
        %v3168 = vld [vmem:[%s3167] sm:$0x3]
        %s3169 = scalar_lea.vmem [#allocation14], 128
        %v3170 = vld [vmem:[%s3169] sm:$0xf]
        %v3171 = vld [vmem:[%s3169 + $0x4] sm:$0xf]
        %v3172 = vld [vmem:[%s3169 + $0x8] sm:$0xf]
        %v3173 = vld [vmem:[%s3169 + $0xc] sm:$0xf]
        %v3174 = vld [vmem:[%s3169 + $0x10] sm:$0xf]
        %v3175 = vld [vmem:[%s3169 + $0x14] sm:$0xf]
        %v3176 = vld [vmem:[%s3169 + $0x18] sm:$0xf]
        %v3177 = vld [vmem:[%s3169 + $0x1c] sm:$0xf]
        %v3178 = vld [vmem:[%s3169 + $0x20] sm:$0xf]
        %v3179 = vld [vmem:[%s3169 + $0x24] sm:$0xf]
        %v3180 = vld [vmem:[%s3169 + $0x28] sm:$0xf]
        %v3181 = vld [vmem:[%s3169 + $0x2c] sm:$0xf]
        %v3182 = vld [vmem:[%s3169 + $0x30] sm:$0xf]
        %v3183 = vld [vmem:[%s3169 + $0x34] sm:$0xf]
        %v3184 = vld [vmem:[%s3169 + $0x38] sm:$0xf]
        %v3185 = vld [vmem:[%s3169 + $0x3c] sm:$0xf]
        %v3186 = vld [vmem:[%s3169 + $0x40] sm:$0xf]
        %v3187 = vld [vmem:[%s3169 + $0x44] sm:$0xf]
        %v3188 = vld [vmem:[%s3169 + $0x48] sm:$0xf]
        %v3189 = vld [vmem:[%s3169 + $0x4c] sm:$0xf]
        %v3190 = vld [vmem:[%s3169 + $0x50] sm:$0xf]
        %v3191 = vld [vmem:[%s3169 + $0x54] sm:$0xf]
        %v3192 = vld [vmem:[%s3169 + $0x58] sm:$0xf]
        %v3193 = vld [vmem:[%s3169 + $0x5c] sm:$0xf]
        %v3194 = vld [vmem:[%s3169 + $0x60] sm:$0xf]
        %v3195 = vld [vmem:[%s3169 + $0x64] sm:$0xf]
        %v3196 = vld [vmem:[%s3169 + $0x68] sm:$0xf]
        %v3197 = vld [vmem:[%s3169 + $0x6c] sm:$0xf]
        %v3198 = vld [vmem:[%s3169 + $0x70] sm:$0xf]
        %v3199 = vld [vmem:[%s3169 + $0x74] sm:$0xf]
        %v3200 = vld [vmem:[%s3169 + $0x78] sm:$0xf]
        %v3201 = vld [vmem:[%s3169 + $0x7c] sm:$0xf]
        %s3202 = scalar_lea.vmem [#allocation16], 1
        %v3203 = vld [vmem:[%s3202] sm:$0x1]
        %v3204 = vpack.c.bf16 %v3149, %v3149
        %v3206 = vperm.slane %v3168, 0
        %v3207 = vperm.slane %v3168, 1
        %v3226 = vunpack.c.l.b16 %v3151
        %v3227 = vunpack.c.h.b16 %v3151
        %v3228 = vunpack.c.l.b16 %v3152
        %v3229 = vunpack.c.h.b16 %v3152
        %v3230 = vunpack.c.l.b16 %v3153
        %v3231 = vunpack.c.h.b16 %v3153
        %v3232 = vunpack.c.l.b16 %v3154
        %v3233 = vunpack.c.h.b16 %v3154
        %v3234 = vunpack.c.l.b16 %v3155
        %v3235 = vunpack.c.h.b16 %v3155
        %v3236 = vunpack.c.l.b16 %v3156
        %v3237 = vunpack.c.h.b16 %v3156
        %v3238 = vunpack.c.l.b16 %v3157
        %v3239 = vunpack.c.h.b16 %v3157
        %v3240 = vunpack.c.l.b16 %v3158
        %v3241 = vunpack.c.h.b16 %v3158
        %v3242 = vunpack.c.l.b16 %v3159
        %v3243 = vunpack.c.h.b16 %v3159
        %v3244 = vunpack.c.l.b16 %v3160
        %v3245 = vunpack.c.h.b16 %v3160
        %v3246 = vunpack.c.l.b16 %v3161
        %v3247 = vunpack.c.h.b16 %v3161
        %v3248 = vunpack.c.l.b16 %v3162
        %v3249 = vunpack.c.h.b16 %v3162
        %v3250 = vunpack.c.l.b16 %v3163
        %v3251 = vunpack.c.h.b16 %v3163
        %v3252 = vunpack.c.l.b16 %v3164
        %v3253 = vunpack.c.h.b16 %v3164
        %v3254 = vunpack.c.l.b16 %v3165
        %v3255 = vunpack.c.h.b16 %v3165
        %v3256 = vunpack.c.l.b16 %v3166
        %v3257 = vunpack.c.h.b16 %v3166
        %v3258 = vpack.c.b16 %v3228, %v3226
        %v3259 = vpack.c.b16 %v3229, %v3227
        %v3260 = vpack.c.b16 %v3232, %v3230
        %v3261 = vpack.c.b16 %v3233, %v3231
        %v3262 = vpack.c.b16 %v3236, %v3234
        %v3263 = vpack.c.b16 %v3237, %v3235
        %v3264 = vpack.c.b16 %v3240, %v3238
        %v3265 = vpack.c.b16 %v3241, %v3239
        %v3266 = vpack.c.b16 %v3244, %v3242
        %v3267 = vpack.c.b16 %v3245, %v3243
        %v3268 = vpack.c.b16 %v3248, %v3246
        %v3269 = vpack.c.b16 %v3249, %v3247
        %v3270 = vpack.c.b16 %v3252, %v3250
        %v3271 = vpack.c.b16 %v3253, %v3251
        %v3272 = vpack.c.b16 %v3256, %v3254
        %v3273 = vpack.c.b16 %v3257, %v3255
        %3290 = vmatpush.bf16.msra.mxu0 %v3272
        %3291 = vmatpush.bf16.msra.mxu0 %v3270
        %3292 = vmatpush.bf16.msra.mxu0 %v3268
        %3293 = vmatpush.bf16.msra.mxu0 %v3266
        %3294 = vmatpush.bf16.msra.mxu0 %v3264
        %3295 = vmatpush.bf16.msra.mxu0 %v3262
        %3296 = vmatpush.bf16.msra.mxu0 %v3260
        %3297 = vmatpush.bf16.msra.mxu0 %v3258
        %3298 = vmatmul.bf16.gmra.mxu0 %v3204
        %v3299 = vpop.f32.mrf.mxu0
        %v3300 = vadd.f32 %v3206, %v3299
        %v3301 = vpop.f32.mrf.mxu0
        %3302 = vdwg.mxu0
        %3303 = vmatpush.bf16.msra.mxu0 %v3273
        %3304 = vmatpush.bf16.msra.mxu0 %v3271
        %3305 = vmatpush.bf16.msra.mxu0 %v3269
        %3306 = vmatpush.bf16.msra.mxu0 %v3267
        %3307 = vmatpush.bf16.msra.mxu0 %v3265
        %3308 = vmatpush.bf16.msra.mxu0 %v3263
        %3309 = vmatpush.bf16.msra.mxu0 %v3261
        %3310 = vmatpush.bf16.msra.mxu0 %v3259
        %3311 = vmatmul.bf16.gmra.mxu0 %v3204
        %v3312 = vpop.f32.mrf.mxu0
        %v3313 = vadd.f32 %v3207, %v3312
        %v3314 = vpop.f32.mrf.mxu0
        %3315 = vdwg.mxu0
        %v3316 = vmul.f32 %v3300, %v3300
        %v3317 = vmul.f32 %v3313, %v3313
        %v3318 = vmul.f32 %v3300, %v3316
        %v3319 = vmul.f32 %v3313, %v3317
        %v3320 = vmul.f32 %v3318, 0.044715
        %v3321 = vmul.f32 %v3319, 0.044715
        %v3322 = vadd.f32 %v3300, %v3320
        %v3323 = vadd.f32 %v3313, %v3321
        %v3324 = vmul.f32 %v3322, 0.7978846
        %v3325 = vmul.f32 %v3323, 0.7978846
        %v3326 = vtanh.pop %v3324
        %v3327 = vtanh.pop %v3325
        %v3328 = vadd.f32 %v3326, 1.0
        %v3329 = vadd.f32 %v3327, 1.0
        %v3330 = vmul.f32 %v3328, 0.5
        %v3331 = vmul.f32 %v3329, 0.5
        %v3332 = vmul.f32 %v3300, %v3330
        %v3333 = vmul.f32 %v3313, %v3331
        %v3334 = vpack.c.bf16 %v3332, %v3332
        %v3335 = vpack.c.bf16 %v3333, %v3333
        %v3337 = vperm.slane %v3203, 0
        %v3371 = vunpack.c.l.b16 %v3170
        %v3372 = vunpack.c.l.b16 %v3171
        %v3373 = vunpack.c.l.b16 %v3172
        %v3374 = vunpack.c.l.b16 %v3173
        %v3375 = vunpack.c.l.b16 %v3174
        %v3376 = vunpack.c.l.b16 %v3175
        %v3377 = vunpack.c.l.b16 %v3176
        %v3378 = vunpack.c.l.b16 %v3177
        %v3379 = vunpack.c.l.b16 %v3178
        %v3380 = vunpack.c.l.b16 %v3179
        %v3381 = vunpack.c.l.b16 %v3180
        %v3382 = vunpack.c.l.b16 %v3181
        %v3383 = vunpack.c.l.b16 %v3182
        %v3384 = vunpack.c.l.b16 %v3183
        %v3385 = vunpack.c.l.b16 %v3184
        %v3386 = vunpack.c.l.b16 %v3185
        %v3387 = vunpack.c.l.b16 %v3186
        %v3388 = vunpack.c.l.b16 %v3187
        %v3389 = vunpack.c.l.b16 %v3188
        %v3390 = vunpack.c.l.b16 %v3189
        %v3391 = vunpack.c.l.b16 %v3190
        %v3392 = vunpack.c.l.b16 %v3191
        %v3393 = vunpack.c.l.b16 %v3192
        %v3394 = vunpack.c.l.b16 %v3193
        %v3395 = vunpack.c.l.b16 %v3194
        %v3396 = vunpack.c.l.b16 %v3195
        %v3397 = vunpack.c.l.b16 %v3196
        %v3398 = vunpack.c.l.b16 %v3197
        %v3399 = vunpack.c.l.b16 %v3198
        %v3400 = vunpack.c.l.b16 %v3199
        %v3401 = vunpack.c.l.b16 %v3200
        %v3402 = vunpack.c.l.b16 %v3201
        %v3403 = vpack.c.b16 %v3372, %v3371
        %v3404 = vpack.c.b16 %v3374, %v3373
        %v3405 = vpack.c.b16 %v3376, %v3375
        %v3406 = vpack.c.b16 %v3378, %v3377
        %v3407 = vpack.c.b16 %v3380, %v3379
        %v3408 = vpack.c.b16 %v3382, %v3381
        %v3409 = vpack.c.b16 %v3384, %v3383
        %v3410 = vpack.c.b16 %v3386, %v3385
        %v3411 = vpack.c.b16 %v3388, %v3387
        %v3412 = vpack.c.b16 %v3390, %v3389
        %v3413 = vpack.c.b16 %v3392, %v3391
        %v3414 = vpack.c.b16 %v3394, %v3393
        %v3415 = vpack.c.b16 %v3396, %v3395
        %v3416 = vpack.c.b16 %v3398, %v3397
        %v3417 = vpack.c.b16 %v3400, %v3399
        %v3418 = vpack.c.b16 %v3402, %v3401
        %3435 = vmatpush.bf16.msra.mxu0 %v3410
        %3436 = vmatpush.bf16.msra.mxu0 %v3409
        %3437 = vmatpush.bf16.msra.mxu0 %v3408
        %3438 = vmatpush.bf16.msra.mxu0 %v3407
        %3439 = vmatpush.bf16.msra.mxu0 %v3406
        %3440 = vmatpush.bf16.msra.mxu0 %v3405
        %3441 = vmatpush.bf16.msra.mxu0 %v3404
        %3442 = vmatpush.bf16.msra.mxu0 %v3403
        %3443 = vmatmul.bf16.gmra.mxu0 %v3334
        %v3444 = vpop.f32.mrf.mxu0
        %v3445 = vadd.f32 %v3337, %v3444
        %v3446 = vpop.f32.mrf.mxu0
        %3447 = vdwg.mxu0
        %3448 = vmatpush.bf16.msra.mxu0 %v3418
        %3449 = vmatpush.bf16.msra.mxu0 %v3417
        %3450 = vmatpush.bf16.msra.mxu0 %v3416
        %3451 = vmatpush.bf16.msra.mxu0 %v3415
        %3452 = vmatpush.bf16.msra.mxu0 %v3414
        %3453 = vmatpush.bf16.msra.mxu0 %v3413
        %3454 = vmatpush.bf16.msra.mxu0 %v3412
        %3455 = vmatpush.bf16.msra.mxu0 %v3411
        %3456 = vmatmul.bf16.gmra.mxu0 %v3335
        %v3457 = vpop.f32.mrf.mxu0
        %v3458 = vadd.f32 %v3445, %v3457
        %v3459 = vpop.f32.mrf.mxu0
        %3460 = vdwg.mxu0
        %v3461 = vadd.f32 %v3117, %v3458
        %v3462 = vld [vmem:[#allocation17] sm:$0x1]
        %v3463 = vld [vmem:[#allocation19] sm:$0x1]
        %3464 = vadd.xlane.f32.xlu0 %v3461
        %v3465 = vpop.xlane.xlu0 %3464
        %v3466 = vmul.f32 %v3465, %v1551
        %v3467 = vsub.f32 %v3461, %v3466
        %v3468 = vmul.f32 %v3467, %v3467
        %3469 = vadd.xlane.f32.xlu0 %v3468
        %v3470 = vpop.xlane.xlu0 %3469
        %v3471 = vmul.f32 %v3470, %v1551
        %v3472 = vadd.f32 %v3471, 1e-05
        %v3473 = vrsqrt.pop %v3472
        %v3474 = vmul.f32 %v3473, %v3472
        %v3475 = vmul.f32 %v3474, %v3473
        %v3476 = vmul.f32 0.5, %v3475
        %v3477 = vsub.f32 1.5, %v3476
        %v3478 = vmul.f32 %v3473, %v3477
        %vm3479 = vweird.f32 %v3472
        %vm3480 = vweird.f32 %v3473
        %vm3481 = vmor %vm3479, %vm3480
        %v3482 = vsel %vm3481, %v3473, %v3478
        %v3483 = vmul.f32 %v3467, %v3482
        %v3485 = vperm.slane %v3462, 0
        %v3487 = vmul.f32 %v3483, %v3485
        %v3489 = vperm.slane %v3463, 0
        %v3491 = vadd.f32 %v3487, %v3489
        %v3492 = vld [vmem:[#allocation20] sm:$0x1]
        %v3493 = vld [vmem:[#allocation22] sm:$0x1]
        %3494 = vadd.xlane.f32.xlu0 %v1540
        %v3495 = vpop.xlane.xlu0 %3494
        %v3496 = vmul.f32 %v3495, %v1551
        %v3497 = vsub.f32 %v1540, %v3496
        %v3498 = vmul.f32 %v3497, %v3497
        %3499 = vadd.xlane.f32.xlu0 %v3498
        %v3500 = vpop.xlane.xlu0 %3499
        %v3501 = vmul.f32 %v3500, %v1551
        %v3502 = vadd.f32 %v3501, 1e-05
        %v3503 = vrsqrt.pop %v3502
        %v3504 = vmul.f32 %v3503, %v3502
        %v3505 = vmul.f32 %v3504, %v3503
        %v3506 = vmul.f32 0.5, %v3505
        %v3507 = vsub.f32 1.5, %v3506
        %v3508 = vmul.f32 %v3503, %v3507
        %vm3509 = vweird.f32 %v3502
        %vm3510 = vweird.f32 %v3503
        %vm3511 = vmor %vm3509, %vm3510
        %v3512 = vsel %vm3511, %v3503, %v3508
        %v3513 = vmul.f32 %v3497, %v3512
        %v3515 = vperm.slane %v3492, 0
        %v3517 = vmul.f32 %v3513, %v3515
        %v3519 = vperm.slane %v3493, 0
        %v3521 = vadd.f32 %v3517, %v3519
        %v3522 = vld [vmem:[#allocation23] sm:$0xff]
        %v3523 = vld [vmem:[#allocation23 + $0x8] sm:$0xf]
        %v3524 = vld [vmem:[#allocation23 + $0xc] sm:$0xff]
        %v3525 = vld [vmem:[#allocation23 + $0x14] sm:$0xf]
        %v3526 = vld [vmem:[#allocation23 + $0x18] sm:$0xff]
        %v3527 = vld [vmem:[#allocation23 + $0x20] sm:$0xf]
        %v3528 = vld [vmem:[#allocation23 + $0x24] sm:$0xff]
        %v3529 = vld [vmem:[#allocation23 + $0x2c] sm:$0xf]
        %v3530 = vld [vmem:[#allocation23 + $0x30] sm:$0xff]
        %v3531 = vld [vmem:[#allocation23 + $0x38] sm:$0xf]
        %v3532 = vld [vmem:[#allocation23 + $0x3c] sm:$0xff]
        %v3533 = vld [vmem:[#allocation23 + $0x44] sm:$0xf]
        %v3534 = vld [vmem:[#allocation23 + $0x48] sm:$0xff]
        %v3535 = vld [vmem:[#allocation23 + $0x50] sm:$0xf]
        %v3536 = vld [vmem:[#allocation23 + $0x54] sm:$0xff]
        %v3537 = vld [vmem:[#allocation23 + $0x5c] sm:$0xf]
        %v3538 = vld [vmem:[#allocation23 + $0x60] sm:$0xff]
        %v3539 = vld [vmem:[#allocation23 + $0x68] sm:$0xf]
        %v3540 = vld [vmem:[#allocation23 + $0x6c] sm:$0xff]
        %v3541 = vld [vmem:[#allocation23 + $0x74] sm:$0xf]
        %v3542 = vld [vmem:[#allocation23 + $0x78] sm:$0xff]
        %v3543 = vld [vmem:[#allocation23 + $0x80] sm:$0xf]
        %v3544 = vld [vmem:[#allocation23 + $0x84] sm:$0xff]
        %v3545 = vld [vmem:[#allocation23 + $0x8c] sm:$0xf]
        %v3546 = vld [vmem:[#allocation23 + $0x90] sm:$0xff]
        %v3547 = vld [vmem:[#allocation23 + $0x98] sm:$0xf]
        %v3548 = vld [vmem:[#allocation23 + $0x9c] sm:$0xff]
        %v3549 = vld [vmem:[#allocation23 + $0xa4] sm:$0xf]
        %v3550 = vld [vmem:[#allocation23 + $0xa8] sm:$0xff]
        %v3551 = vld [vmem:[#allocation23 + $0xb0] sm:$0xf]
        %v3552 = vld [vmem:[#allocation23 + $0xb4] sm:$0xff]
        %v3553 = vld [vmem:[#allocation23 + $0xbc] sm:$0xf]
        %v3554 = vld [vmem:[#allocation25] sm:$0xf]
        %v3555 = vld [vmem:[#allocation25 + $0x4] sm:$0xf]
        %v3556 = vld [vmem:[#allocation25 + $0x8] sm:$0xf]
        %v3557 = vld [vmem:[#allocation25 + $0xc] sm:$0xf]
        %v3558 = vld [vmem:[#allocation25 + $0x10] sm:$0xf]
        %v3559 = vld [vmem:[#allocation25 + $0x14] sm:$0xf]
        %v3560 = vld [vmem:[#allocation25 + $0x18] sm:$0xf]
        %v3561 = vld [vmem:[#allocation25 + $0x1c] sm:$0xf]
        %v3562 = vld [vmem:[#allocation25 + $0x20] sm:$0xf]
        %v3563 = vld [vmem:[#allocation25 + $0x24] sm:$0xf]
        %v3564 = vld [vmem:[#allocation25 + $0x28] sm:$0xf]
        %v3565 = vld [vmem:[#allocation25 + $0x2c] sm:$0xf]
        %v3566 = vld [vmem:[#allocation25 + $0x30] sm:$0xf]
        %v3567 = vld [vmem:[#allocation25 + $0x34] sm:$0xf]
        %v3568 = vld [vmem:[#allocation25 + $0x38] sm:$0xf]
        %v3569 = vld [vmem:[#allocation25 + $0x3c] sm:$0xf]
        %v3570 = vld [vmem:[#allocation26] sm:$0x1]
        %v3571 = vpack.c.bf16 %v3521, %v3521
        %v3604 = vunpack.c.l.b16 %v3522
        %v3605 = vunpack.c.h.b16 %v3522
        %v3606 = vunpack.c.l.b16 %v3523
        %v3607 = vunpack.c.l.b16 %v3524
        %v3608 = vunpack.c.h.b16 %v3524
        %v3609 = vunpack.c.l.b16 %v3525
        %v3610 = vunpack.c.l.b16 %v3526
        %v3611 = vunpack.c.h.b16 %v3526
        %v3612 = vunpack.c.l.b16 %v3527
        %v3613 = vunpack.c.l.b16 %v3528
        %v3614 = vunpack.c.h.b16 %v3528
        %v3615 = vunpack.c.l.b16 %v3529
        %v3616 = vunpack.c.l.b16 %v3530
        %v3617 = vunpack.c.h.b16 %v3530
        %v3618 = vunpack.c.l.b16 %v3531
        %v3619 = vunpack.c.l.b16 %v3532
        %v3620 = vunpack.c.h.b16 %v3532
        %v3621 = vunpack.c.l.b16 %v3533
        %v3622 = vunpack.c.l.b16 %v3534
        %v3623 = vunpack.c.h.b16 %v3534
        %v3624 = vunpack.c.l.b16 %v3535
        %v3625 = vunpack.c.l.b16 %v3536
        %v3626 = vunpack.c.h.b16 %v3536
        %v3627 = vunpack.c.l.b16 %v3537
        %v3628 = vunpack.c.l.b16 %v3538
        %v3629 = vunpack.c.h.b16 %v3538
        %v3630 = vunpack.c.l.b16 %v3539
        %v3631 = vunpack.c.l.b16 %v3540
        %v3632 = vunpack.c.h.b16 %v3540
        %v3633 = vunpack.c.l.b16 %v3541
        %v3634 = vunpack.c.l.b16 %v3542
        %v3635 = vunpack.c.h.b16 %v3542
        %v3636 = vunpack.c.l.b16 %v3543
        %v3637 = vunpack.c.l.b16 %v3544
        %v3638 = vunpack.c.h.b16 %v3544
        %v3639 = vunpack.c.l.b16 %v3545
        %v3640 = vunpack.c.l.b16 %v3546
        %v3641 = vunpack.c.h.b16 %v3546
        %v3642 = vunpack.c.l.b16 %v3547
        %v3643 = vunpack.c.l.b16 %v3548
        %v3644 = vunpack.c.h.b16 %v3548
        %v3645 = vunpack.c.l.b16 %v3549
        %v3646 = vunpack.c.l.b16 %v3550
        %v3647 = vunpack.c.h.b16 %v3550
        %v3648 = vunpack.c.l.b16 %v3551
        %v3649 = vunpack.c.l.b16 %v3552
        %v3650 = vunpack.c.h.b16 %v3552
        %v3651 = vunpack.c.l.b16 %v3553
        %v3652 = vpack.c.b16 %v3607, %v3604
        %v3653 = vpack.c.b16 %v3608, %v3605
        %v3654 = vpack.c.b16 %v3609, %v3606
        %v3655 = vpack.c.b16 %v3613, %v3610
        %v3656 = vpack.c.b16 %v3614, %v3611
        %v3657 = vpack.c.b16 %v3615, %v3612
        %v3658 = vpack.c.b16 %v3619, %v3616
        %v3659 = vpack.c.b16 %v3620, %v3617
        %v3660 = vpack.c.b16 %v3621, %v3618
        %v3661 = vpack.c.b16 %v3625, %v3622
        %v3662 = vpack.c.b16 %v3626, %v3623
        %v3663 = vpack.c.b16 %v3627, %v3624
        %v3664 = vpack.c.b16 %v3631, %v3628
        %v3665 = vpack.c.b16 %v3632, %v3629
        %v3666 = vpack.c.b16 %v3633, %v3630
        %v3667 = vpack.c.b16 %v3637, %v3634
        %v3668 = vpack.c.b16 %v3638, %v3635
        %v3669 = vpack.c.b16 %v3639, %v3636
        %v3670 = vpack.c.b16 %v3643, %v3640
        %v3671 = vpack.c.b16 %v3644, %v3641
        %v3672 = vpack.c.b16 %v3645, %v3642
        %v3673 = vpack.c.b16 %v3649, %v3646
        %v3674 = vpack.c.b16 %v3650, %v3647
        %v3675 = vpack.c.b16 %v3651, %v3648
        %3700 = vmatpush.bf16.msra.mxu0 %v3673
        %3701 = vmatpush.bf16.msra.mxu0 %v3670
        %3702 = vmatpush.bf16.msra.mxu0 %v3667
        %3703 = vmatpush.bf16.msra.mxu0 %v3664
        %3704 = vmatpush.bf16.msra.mxu0 %v3661
        %3705 = vmatpush.bf16.msra.mxu0 %v3658
        %3706 = vmatpush.bf16.msra.mxu0 %v3655
        %3707 = vmatpush.bf16.msra.mxu0 %v3652
        %3708 = vmatmul.bf16.gmra.mxu0 %v3571
        %v3709 = vpop.f32.mrf.mxu0
        %v3710 = vadd.f32 0.0, %v3709
        %v3711 = vpop.f32.mrf.mxu0
        %3712 = vdwg.mxu0
        %3713 = vmatpush.bf16.msra.mxu0 %v3674
        %3714 = vmatpush.bf16.msra.mxu0 %v3671
        %3715 = vmatpush.bf16.msra.mxu0 %v3668
        %3716 = vmatpush.bf16.msra.mxu0 %v3665
        %3717 = vmatpush.bf16.msra.mxu0 %v3662
        %3718 = vmatpush.bf16.msra.mxu0 %v3659
        %3719 = vmatpush.bf16.msra.mxu0 %v3656
        %3720 = vmatpush.bf16.msra.mxu0 %v3653
        %3721 = vmatmul.bf16.gmra.mxu0 %v3571
        %v3722 = vpop.f32.mrf.mxu0
        %v3723 = vadd.f32 0.0, %v3722
        %v3724 = vpop.f32.mrf.mxu0
        %3725 = vdwg.mxu0
        %3726 = vmatpush.bf16.msra.mxu0 %v3675
        %3727 = vmatpush.bf16.msra.mxu0 %v3672
        %3728 = vmatpush.bf16.msra.mxu0 %v3669
        %3729 = vmatpush.bf16.msra.mxu0 %v3666
        %3730 = vmatpush.bf16.msra.mxu0 %v3663
        %3731 = vmatpush.bf16.msra.mxu0 %v3660
        %3732 = vmatpush.bf16.msra.mxu0 %v3657
        %3733 = vmatpush.bf16.msra.mxu0 %v3654
        %3734 = vmatmul.bf16.gmra.mxu0 %v3571
        %v3735 = vpop.f32.mrf.mxu0
        %v3736 = vadd.f32 0.0, %v3735
        %v3737 = vpop.f32.mrf.mxu0
        %3738 = vdwg.mxu0
        %v3739 = vmul.f32 %v3710, 0.17677669
        %v3740 = vpack.c.bf16 %v3739, %v3739
        %v3741 = vpack.c.bf16 %v3723, %v3723
        %v3742 = vpack.c.bf16 %v3736, %v3736
        %v3744 = vsel %vm1799, %v3740, 0
        %v3747 = vsel %vm1799, %v3741, 0
        %3749 = vmatpush.bf16.xpose.msra.mxu0 0
        %3750 = vmatpush.bf16.xpose.msra.mxu0 0
        %3751 = vmatpush.bf16.xpose.msra.mxu0 0
        %3752 = vmatpush.bf16.xpose.msra.mxu0 0
        %3753 = vmatpush.bf16.xpose.msra.mxu0 0
        %3754 = vmatpush.bf16.xpose.msra.mxu0 0
        %3755 = vmatpush.bf16.xpose.msra.mxu0 0
        %3756 = vmatpush.bf16.xpose.msra.mxu0 %v3747
        %3757 = vmatmul.bf16.gmra.mxu0 %v3744
        %v3758 = vpop.f32.mrf.mxu0
        %v3759 = vadd.f32 0.0, %v3758
        %v3760 = vpop.f32.mrf.mxu0
        %3761 = vdwg.mxu0
        %v3763 = vunpack.c.l.b16 %v3740
        %v3764 = vpack.c.b16 %v3763, %v3763
        %3765 = vrot.lane.b32.xlu0 %v3764, 96
        %v3766 = vpop.permute.xlu0 %3765
        %v3768 = vunpack.c.l.b16 %v3741
        %v3769 = vpack.c.b16 %v3768, %v3768
        %3770 = vrot.lane.b32.xlu0 %v3769, 96
        %v3771 = vpop.permute.xlu0 %3770
        %v3773 = vsel %vm1799, %v3766, 0
        %v3776 = vsel %vm1799, %v3771, 0
        %3778 = vmatpush.bf16.xpose.msra.mxu0 0
        %3779 = vmatpush.bf16.xpose.msra.mxu0 0
        %3780 = vmatpush.bf16.xpose.msra.mxu0 0
        %3781 = vmatpush.bf16.xpose.msra.mxu0 0
        %3782 = vmatpush.bf16.xpose.msra.mxu0 0
        %3783 = vmatpush.bf16.xpose.msra.mxu0 0
        %3784 = vmatpush.bf16.xpose.msra.mxu0 0
        %3785 = vmatpush.bf16.xpose.msra.mxu0 %v3776
        %3786 = vmatmul.bf16.gmra.mxu0 %v3773
        %v3787 = vpop.f32.mrf.mxu0
        %v3788 = vadd.f32 0.0, %v3787
        %v3789 = vpop.f32.mrf.mxu0
        %3790 = vdwg.mxu0
        %3791 = vrot.lane.b32.xlu0 %v3764, 64
        %v3792 = vpop.permute.xlu0 %3791
        %3793 = vrot.lane.b32.xlu0 %v3769, 64
        %v3794 = vpop.permute.xlu0 %3793
        %v3796 = vsel %vm1799, %v3792, 0
        %v3799 = vsel %vm1799, %v3794, 0
        %3801 = vmatpush.bf16.xpose.msra.mxu0 0
        %3802 = vmatpush.bf16.xpose.msra.mxu0 0
        %3803 = vmatpush.bf16.xpose.msra.mxu0 0
        %3804 = vmatpush.bf16.xpose.msra.mxu0 0
        %3805 = vmatpush.bf16.xpose.msra.mxu0 0
        %3806 = vmatpush.bf16.xpose.msra.mxu0 0
        %3807 = vmatpush.bf16.xpose.msra.mxu0 0
        %3808 = vmatpush.bf16.xpose.msra.mxu0 %v3799
        %3809 = vmatmul.bf16.gmra.mxu0 %v3796
        %v3810 = vpop.f32.mrf.mxu0
        %v3811 = vadd.f32 0.0, %v3810
        %v3812 = vpop.f32.mrf.mxu0
        %3813 = vdwg.mxu0
        %3814 = vrot.lane.b32.xlu0 %v3764, 32
        %v3815 = vpop.permute.xlu0 %3814
        %3816 = vrot.lane.b32.xlu0 %v3769, 32
        %v3817 = vpop.permute.xlu0 %3816
        %v3819 = vsel %vm1799, %v3815, 0
        %v3822 = vsel %vm1799, %v3817, 0
        %3824 = vmatpush.bf16.xpose.msra.mxu0 0
        %3825 = vmatpush.bf16.xpose.msra.mxu0 0
        %3826 = vmatpush.bf16.xpose.msra.mxu0 0
        %3827 = vmatpush.bf16.xpose.msra.mxu0 0
        %3828 = vmatpush.bf16.xpose.msra.mxu0 0
        %3829 = vmatpush.bf16.xpose.msra.mxu0 0
        %3830 = vmatpush.bf16.xpose.msra.mxu0 0
        %3831 = vmatpush.bf16.xpose.msra.mxu0 %v3822
        %3832 = vmatmul.bf16.gmra.mxu0 %v3819
        %v3833 = vpop.f32.mrf.mxu0
        %v3834 = vadd.f32 0.0, %v3833
        %v3835 = vpop.f32.mrf.mxu0
        %3836 = vdwg.mxu0
        %v3837 = vlaneseq
        %v3838 = vshrl.u32 %v3837, 7
        %v3839 = vlaneseq
        %v3840 = vand.u32 %v3839, 127
        %vm3841 = vcmp.le.s32.totalorder %v3840, %v3838
        %v3842 = vsel %vm3841, %v3759, -1e+30
        %v3843 = vsel %vm3841, %v3788, -1e+30
        %v3844 = vsel %vm3841, %v3811, -1e+30
        %v3845 = vsel %vm3841, %v3834, -1e+30
        %v3846 = vsel %vm1894, %v3842, -inf
        %3847 = vmax.xlane.f32.xlu0 %v3846
        %v3848 = vpop.xlane.xlu0 %3847
        %v3849 = vsel %vm1894, %v3843, -inf
        %3850 = vmax.xlane.f32.xlu0 %v3849
        %v3851 = vpop.xlane.xlu0 %3850
        %v3852 = vsel %vm1894, %v3844, -inf
        %3853 = vmax.xlane.f32.xlu0 %v3852
        %v3854 = vpop.xlane.xlu0 %3853
        %v3855 = vsel %vm1894, %v3845, -inf
        %3856 = vmax.xlane.f32.xlu0 %v3855
        %v3857 = vpop.xlane.xlu0 %3856
        %v3858 = vsub.f32 %v3842, %v3848
        %v3859 = vsub.f32 %v3843, %v3851
        %v3860 = vsub.f32 %v3844, %v3854
        %v3861 = vsub.f32 %v3845, %v3857
        %v3862 = vmul.f32 %v3858, 1.442695
        %v3863 = vpow.pop %v3862
        %v3864 = vmul.f32 %v3859, 1.442695
        %v3865 = vpow.pop %v3864
        %v3866 = vmul.f32 %v3860, 1.442695
        %v3867 = vpow.pop %v3866
        %v3868 = vmul.f32 %v3861, 1.442695
        %v3869 = vpow.pop %v3868
        %v3870 = vsel %vm1894, %v3863, 0.0
        %3871 = vadd.xlane.f32.xlu0 %v3870
        %v3872 = vpop.xlane.xlu0 %3871
        %v3873 = vsel %vm1894, %v3865, 0.0
        %3874 = vadd.xlane.f32.xlu0 %v3873
        %v3875 = vpop.xlane.xlu0 %3874
        %v3876 = vsel %vm1894, %v3867, 0.0
        %3877 = vadd.xlane.f32.xlu0 %v3876
        %v3878 = vpop.xlane.xlu0 %3877
        %v3879 = vsel %vm1894, %v3869, 0.0
        %3880 = vadd.xlane.f32.xlu0 %v3879
        %v3881 = vpop.xlane.xlu0 %3880
        %v3882 = vrcp.pop %v3872
        %v3883 = vmul.f32 %v3872, %v3882
        %v3884 = vsub.f32 1.0, %v3883
        %v3885 = vmul.f32 %v3882, %v3884
        %v3886 = vadd.f32 %v3882, %v3885
        %vm3887 = vweird.f32 %v3872
        %vm3888 = vweird.f32 %v3882
        %vm3889 = vmor %vm3887, %vm3888
        %v3890 = vsel %vm3889, %v3882, %v3886
        %v3891 = vand.u32 2147483647, %v3872
        %vm3892 = vcmp.eq.f32.partialorder %v3891, 8.507059e+37
        %v3893 = vand.u32 %v3872, 2147483648
        %v3894 = vor.u32 1.1754944e-38, %v3893
        %v3895 = vsel %vm3892, %v3894, %v3890
        %v3896 = vrcp.pop %v3875
        %v3897 = vmul.f32 %v3875, %v3896
        %v3898 = vsub.f32 1.0, %v3897
        %v3899 = vmul.f32 %v3896, %v3898
        %v3900 = vadd.f32 %v3896, %v3899
        %vm3901 = vweird.f32 %v3875
        %vm3902 = vweird.f32 %v3896
        %vm3903 = vmor %vm3901, %vm3902
        %v3904 = vsel %vm3903, %v3896, %v3900
        %v3905 = vand.u32 2147483647, %v3875
        %vm3906 = vcmp.eq.f32.partialorder %v3905, 8.507059e+37
        %v3907 = vand.u32 %v3875, 2147483648
        %v3908 = vor.u32 1.1754944e-38, %v3907
        %v3909 = vsel %vm3906, %v3908, %v3904
        %v3910 = vrcp.pop %v3878
        %v3911 = vmul.f32 %v3878, %v3910
        %v3912 = vsub.f32 1.0, %v3911
        %v3913 = vmul.f32 %v3910, %v3912
        %v3914 = vadd.f32 %v3910, %v3913
        %vm3915 = vweird.f32 %v3878
        %vm3916 = vweird.f32 %v3910
        %vm3917 = vmor %vm3915, %vm3916
        %v3918 = vsel %vm3917, %v3910, %v3914
        %v3919 = vand.u32 2147483647, %v3878
        %vm3920 = vcmp.eq.f32.partialorder %v3919, 8.507059e+37
        %v3921 = vand.u32 %v3878, 2147483648
        %v3922 = vor.u32 1.1754944e-38, %v3921
        %v3923 = vsel %vm3920, %v3922, %v3918
        %v3924 = vrcp.pop %v3881
        %v3925 = vmul.f32 %v3881, %v3924
        %v3926 = vsub.f32 1.0, %v3925
        %v3927 = vmul.f32 %v3924, %v3926
        %v3928 = vadd.f32 %v3924, %v3927
        %vm3929 = vweird.f32 %v3881
        %vm3930 = vweird.f32 %v3924
        %vm3931 = vmor %vm3929, %vm3930
        %v3932 = vsel %vm3931, %v3924, %v3928
        %v3933 = vand.u32 2147483647, %v3881
        %vm3934 = vcmp.eq.f32.partialorder %v3933, 8.507059e+37
        %v3935 = vand.u32 %v3881, 2147483648
        %v3936 = vor.u32 1.1754944e-38, %v3935
        %v3937 = vsel %vm3934, %v3936, %v3932
        %v3938 = vmul.f32 %v3863, %v3895
        %v3939 = vmul.f32 %v3865, %v3909
        %v3940 = vmul.f32 %v3867, %v3923
        %v3941 = vmul.f32 %v3869, %v3937
        %v3942 = vpack.c.bf16 %v3938, %v3938
        %v3943 = vpack.c.bf16 %v3939, %v3939
        %v3944 = vpack.c.bf16 %v3940, %v3940
        %v3945 = vpack.c.bf16 %v3941, %v3941
        %v3947 = vsel %vm1894, %v3942, 0
        %v3950 = vsel %vm1998, %v3742, 0
        %3952 = vmatpush.bf16.msra.mxu0 0
        %3953 = vmatpush.bf16.msra.mxu0 0
        %3954 = vmatpush.bf16.msra.mxu0 0
        %3955 = vmatpush.bf16.msra.mxu0 0
        %3956 = vmatpush.bf16.msra.mxu0 0
        %3957 = vmatpush.bf16.msra.mxu0 0
        %3958 = vmatpush.bf16.msra.mxu0 0
        %3959 = vmatpush.bf16.msra.mxu0 %v3950
        %3960 = vmatmul.bf16.gmra.mxu0 %v3947
        %v3961 = vpop.f32.mrf.mxu0
        %v3962 = vadd.f32 0.0, %v3961
        %v3963 = vpop.f32.mrf.mxu0
        %3964 = vdwg.mxu0
        %v3966 = vunpack.c.l.b16 %v3742
        %v3967 = vpack.c.b16 %v3966, %v3966
        %3968 = vrot.lane.b32.xlu0 %v3967, 96
        %v3969 = vpop.permute.xlu0 %3968
        %v3971 = vsel %vm1894, %v3943, 0
        %v3974 = vsel %vm1998, %v3969, 0
        %3976 = vmatpush.bf16.msra.mxu0 0
        %3977 = vmatpush.bf16.msra.mxu0 0
        %3978 = vmatpush.bf16.msra.mxu0 0
        %3979 = vmatpush.bf16.msra.mxu0 0
        %3980 = vmatpush.bf16.msra.mxu0 0
        %3981 = vmatpush.bf16.msra.mxu0 0
        %3982 = vmatpush.bf16.msra.mxu0 0
        %3983 = vmatpush.bf16.msra.mxu0 %v3974
        %3984 = vmatmul.bf16.gmra.mxu0 %v3971
        %v3985 = vpop.f32.mrf.mxu0
        %v3986 = vadd.f32 0.0, %v3985
        %v3987 = vpop.f32.mrf.mxu0
        %3988 = vdwg.mxu0
        %3989 = vrot.lane.b32.xlu0 %v3967, 64
        %v3990 = vpop.permute.xlu0 %3989
        %v3992 = vsel %vm1894, %v3944, 0
        %v3995 = vsel %vm1998, %v3990, 0
        %3997 = vmatpush.bf16.msra.mxu0 0
        %3998 = vmatpush.bf16.msra.mxu0 0
        %3999 = vmatpush.bf16.msra.mxu0 0
        %4000 = vmatpush.bf16.msra.mxu0 0
        %4001 = vmatpush.bf16.msra.mxu0 0
        %4002 = vmatpush.bf16.msra.mxu0 0
        %4003 = vmatpush.bf16.msra.mxu0 0
        %4004 = vmatpush.bf16.msra.mxu0 %v3995
        %4005 = vmatmul.bf16.gmra.mxu0 %v3992
        %v4006 = vpop.f32.mrf.mxu0
        %v4007 = vadd.f32 0.0, %v4006
        %v4008 = vpop.f32.mrf.mxu0
        %4009 = vdwg.mxu0
        %4010 = vrot.lane.b32.xlu0 %v3967, 32
        %v4011 = vpop.permute.xlu0 %4010
        %v4013 = vsel %vm1894, %v3945, 0
        %v4016 = vsel %vm1998, %v4011, 0
        %4018 = vmatpush.bf16.msra.mxu0 0
        %4019 = vmatpush.bf16.msra.mxu0 0
        %4020 = vmatpush.bf16.msra.mxu0 0
        %4021 = vmatpush.bf16.msra.mxu0 0
        %4022 = vmatpush.bf16.msra.mxu0 0
        %4023 = vmatpush.bf16.msra.mxu0 0
        %4024 = vmatpush.bf16.msra.mxu0 0
        %4025 = vmatpush.bf16.msra.mxu0 %v4016
        %4026 = vmatmul.bf16.gmra.mxu0 %v4013
        %v4027 = vpop.f32.mrf.mxu0
        %v4028 = vadd.f32 0.0, %v4027
        %v4029 = vpop.f32.mrf.mxu0
        %4030 = vdwg.mxu0
        %4032 = vrot.lane.b32.xlu0 %v3986, 32
        %v4033 = vpop.permute.xlu0 %4032
        %4036 = vrot.lane.b32.xlu0 %v4007, 64
        %v4037 = vpop.permute.xlu0 %4036
        %4040 = vrot.lane.b32.xlu0 %v4028, 96
        %v4041 = vpop.permute.xlu0 %4040
        %v4043 = vsel %vm1799, %v3962, %v4033
        %v4044 = vsel %vm2094, %v4043, %v4037
        %v4045 = vsel %vm2096, %v4044, %v4041
        %v4046 = vpack.c.bf16 %v4045, %v4045
        %v4048 = vperm.slane %v3570, 0
        %v4066 = vunpack.c.l.b16 %v3554
        %v4067 = vunpack.c.l.b16 %v3555
        %v4068 = vunpack.c.l.b16 %v3556
        %v4069 = vunpack.c.l.b16 %v3557
        %v4070 = vunpack.c.l.b16 %v3558
        %v4071 = vunpack.c.l.b16 %v3559
        %v4072 = vunpack.c.l.b16 %v3560
        %v4073 = vunpack.c.l.b16 %v3561
        %v4074 = vunpack.c.l.b16 %v3562
        %v4075 = vunpack.c.l.b16 %v3563
        %v4076 = vunpack.c.l.b16 %v3564
        %v4077 = vunpack.c.l.b16 %v3565
        %v4078 = vunpack.c.l.b16 %v3566
        %v4079 = vunpack.c.l.b16 %v3567
        %v4080 = vunpack.c.l.b16 %v3568
        %v4081 = vunpack.c.l.b16 %v3569
        %v4082 = vpack.c.b16 %v4067, %v4066
        %v4083 = vpack.c.b16 %v4069, %v4068
        %v4084 = vpack.c.b16 %v4071, %v4070
        %v4085 = vpack.c.b16 %v4073, %v4072
        %v4086 = vpack.c.b16 %v4075, %v4074
        %v4087 = vpack.c.b16 %v4077, %v4076
        %v4088 = vpack.c.b16 %v4079, %v4078
        %v4089 = vpack.c.b16 %v4081, %v4080
        %4098 = vmatpush.bf16.msra.mxu0 %v4089
        %4099 = vmatpush.bf16.msra.mxu0 %v4088
        %4100 = vmatpush.bf16.msra.mxu0 %v4087
        %4101 = vmatpush.bf16.msra.mxu0 %v4086
        %4102 = vmatpush.bf16.msra.mxu0 %v4085
        %4103 = vmatpush.bf16.msra.mxu0 %v4084
        %4104 = vmatpush.bf16.msra.mxu0 %v4083
        %4105 = vmatpush.bf16.msra.mxu0 %v4082
        %4106 = vmatmul.bf16.gmra.mxu0 %v4046
        %v4107 = vpop.f32.mrf.mxu0
        %v4108 = vadd.f32 %v4048, %v4107
        %v4109 = vpop.f32.mrf.mxu0
        %4110 = vdwg.mxu0
        %v4111 = vadd.f32 %v1540, %v4108
        %v4112 = vld [vmem:[#allocation28] sm:$0x1]
        %v4113 = vld [vmem:[#allocation29] sm:$0x1]
        %4114 = vadd.xlane.f32.xlu0 %v4111
        %v4115 = vpop.xlane.xlu0 %4114
        %v4116 = vmul.f32 %v4115, %v1551
        %v4117 = vsub.f32 %v4111, %v4116
        %v4118 = vmul.f32 %v4117, %v4117
        %4119 = vadd.xlane.f32.xlu0 %v4118
        %v4120 = vpop.xlane.xlu0 %4119
        %v4121 = vmul.f32 %v4120, %v1551
        %v4122 = vadd.f32 %v4121, 1e-05
        %v4123 = vrsqrt.pop %v4122
        %v4124 = vmul.f32 %v4123, %v4122
        %v4125 = vmul.f32 %v4124, %v4123
        %v4126 = vmul.f32 0.5, %v4125
        %v4127 = vsub.f32 1.5, %v4126
        %v4128 = vmul.f32 %v4123, %v4127
        %vm4129 = vweird.f32 %v4122
        %vm4130 = vweird.f32 %v4123
        %vm4131 = vmor %vm4129, %vm4130
        %v4132 = vsel %vm4131, %v4123, %v4128
        %v4133 = vmul.f32 %v4117, %v4132
        %v4135 = vperm.slane %v4112, 0
        %v4137 = vmul.f32 %v4133, %v4135
        %v4139 = vperm.slane %v4113, 0
        %v4141 = vadd.f32 %v4137, %v4139
        %v4142 = vld [vmem:[#allocation31] sm:$0xff]
        %v4143 = vld [vmem:[#allocation31 + $0x8] sm:$0xf]
        %v4144 = vld [vmem:[#allocation31 + $0xc] sm:$0xff]
        %v4145 = vld [vmem:[#allocation31 + $0x14] sm:$0xf]
        %v4146 = vld [vmem:[#allocation31 + $0x18] sm:$0xff]
        %v4147 = vld [vmem:[#allocation31 + $0x20] sm:$0xf]
        %v4148 = vld [vmem:[#allocation31 + $0x24] sm:$0xff]
        %v4149 = vld [vmem:[#allocation31 + $0x2c] sm:$0xf]
        %v4150 = vld [vmem:[#allocation31 + $0x30] sm:$0xff]
        %v4151 = vld [vmem:[#allocation31 + $0x38] sm:$0xf]
        %v4152 = vld [vmem:[#allocation31 + $0x3c] sm:$0xff]
        %v4153 = vld [vmem:[#allocation31 + $0x44] sm:$0xf]
        %v4154 = vld [vmem:[#allocation31 + $0x48] sm:$0xff]
        %v4155 = vld [vmem:[#allocation31 + $0x50] sm:$0xf]
        %v4156 = vld [vmem:[#allocation31 + $0x54] sm:$0xff]
        %v4157 = vld [vmem:[#allocation31 + $0x5c] sm:$0xf]
        %v4158 = vld [vmem:[#allocation31 + $0x60] sm:$0xff]
        %v4159 = vld [vmem:[#allocation31 + $0x68] sm:$0xf]
        %v4160 = vld [vmem:[#allocation31 + $0x6c] sm:$0xff]
        %v4161 = vld [vmem:[#allocation31 + $0x74] sm:$0xf]
        %v4162 = vld [vmem:[#allocation31 + $0x78] sm:$0xff]
        %v4163 = vld [vmem:[#allocation31 + $0x80] sm:$0xf]
        %v4164 = vld [vmem:[#allocation31 + $0x84] sm:$0xff]
        %v4165 = vld [vmem:[#allocation31 + $0x8c] sm:$0xf]
        %v4166 = vld [vmem:[#allocation31 + $0x90] sm:$0xff]
        %v4167 = vld [vmem:[#allocation31 + $0x98] sm:$0xf]
        %v4168 = vld [vmem:[#allocation31 + $0x9c] sm:$0xff]
        %v4169 = vld [vmem:[#allocation31 + $0xa4] sm:$0xf]
        %v4170 = vld [vmem:[#allocation31 + $0xa8] sm:$0xff]
        %v4171 = vld [vmem:[#allocation31 + $0xb0] sm:$0xf]
        %v4172 = vld [vmem:[#allocation31 + $0xb4] sm:$0xff]
        %v4173 = vld [vmem:[#allocation31 + $0xbc] sm:$0xf]
        %v4174 = vld [vmem:[#allocation32] sm:$0xf]
        %v4175 = vld [vmem:[#allocation32 + $0x4] sm:$0xf]
        %v4176 = vld [vmem:[#allocation32 + $0x8] sm:$0xf]
        %v4177 = vld [vmem:[#allocation32 + $0xc] sm:$0xf]
        %v4178 = vld [vmem:[#allocation32 + $0x10] sm:$0xf]
        %v4179 = vld [vmem:[#allocation32 + $0x14] sm:$0xf]
        %v4180 = vld [vmem:[#allocation32 + $0x18] sm:$0xf]
        %v4181 = vld [vmem:[#allocation32 + $0x1c] sm:$0xf]
        %v4182 = vld [vmem:[#allocation32 + $0x20] sm:$0xf]
        %v4183 = vld [vmem:[#allocation32 + $0x24] sm:$0xf]
        %v4184 = vld [vmem:[#allocation32 + $0x28] sm:$0xf]
        %v4185 = vld [vmem:[#allocation32 + $0x2c] sm:$0xf]
        %v4186 = vld [vmem:[#allocation32 + $0x30] sm:$0xf]
        %v4187 = vld [vmem:[#allocation32 + $0x34] sm:$0xf]
        %v4188 = vld [vmem:[#allocation32 + $0x38] sm:$0xf]
        %v4189 = vld [vmem:[#allocation32 + $0x3c] sm:$0xf]
        %v4190 = vld [vmem:[#allocation34] sm:$0x1]
        %v4191 = vpack.c.bf16 %v4141, %v4141
        %v4208 = vunpack.c.l.b16 %v4142
        %v4209 = vunpack.c.l.b16 %v4144
        %v4210 = vunpack.c.l.b16 %v4146
        %v4211 = vunpack.c.l.b16 %v4148
        %v4212 = vunpack.c.l.b16 %v4150
        %v4213 = vunpack.c.l.b16 %v4152
        %v4214 = vunpack.c.l.b16 %v4154
        %v4215 = vunpack.c.l.b16 %v4156
        %v4216 = vunpack.c.l.b16 %v4158
        %v4217 = vunpack.c.l.b16 %v4160
        %v4218 = vunpack.c.l.b16 %v4162
        %v4219 = vunpack.c.l.b16 %v4164
        %v4220 = vunpack.c.l.b16 %v4166
        %v4221 = vunpack.c.l.b16 %v4168
        %v4222 = vunpack.c.l.b16 %v4170
        %v4223 = vunpack.c.l.b16 %v4172
        %v4224 = vpack.c.b16 %v4209, %v4208
        %v4225 = vpack.c.b16 %v4211, %v4210
        %v4226 = vpack.c.b16 %v4213, %v4212
        %v4227 = vpack.c.b16 %v4215, %v4214
        %v4228 = vpack.c.b16 %v4217, %v4216
        %v4229 = vpack.c.b16 %v4219, %v4218
        %v4230 = vpack.c.b16 %v4221, %v4220
        %v4231 = vpack.c.b16 %v4223, %v4222
        %4240 = vmatpush.bf16.msra.mxu0 %v4231
        %4241 = vmatpush.bf16.msra.mxu0 %v4230
        %4242 = vmatpush.bf16.msra.mxu0 %v4229
        %4243 = vmatpush.bf16.msra.mxu0 %v4228
        %4244 = vmatpush.bf16.msra.mxu0 %v4227
        %4245 = vmatpush.bf16.msra.mxu0 %v4226
        %4246 = vmatpush.bf16.msra.mxu0 %v4225
        %4247 = vmatpush.bf16.msra.mxu0 %v4224
        %4248 = vmatmul.bf16.gmra.mxu0 %v4191
        %v4249 = vpop.f32.mrf.mxu0
        %v4250 = vadd.f32 0.0, %v4249
        %v4251 = vpop.f32.mrf.mxu0
        %4252 = vdwg.mxu0
        %v4253 = vpack.c.bf16 %v3491, %v3491
        %v4270 = vunpack.c.h.b16 %v4142
        %v4271 = vunpack.c.l.b16 %v4143
        %v4272 = vunpack.c.h.b16 %v4144
        %v4273 = vunpack.c.l.b16 %v4145
        %v4274 = vunpack.c.h.b16 %v4146
        %v4275 = vunpack.c.l.b16 %v4147
        %v4276 = vunpack.c.h.b16 %v4148
        %v4277 = vunpack.c.l.b16 %v4149
        %v4278 = vunpack.c.h.b16 %v4150
        %v4279 = vunpack.c.l.b16 %v4151
        %v4280 = vunpack.c.h.b16 %v4152
        %v4281 = vunpack.c.l.b16 %v4153
        %v4282 = vunpack.c.h.b16 %v4154
        %v4283 = vunpack.c.l.b16 %v4155
        %v4284 = vunpack.c.h.b16 %v4156
        %v4285 = vunpack.c.l.b16 %v4157
        %v4286 = vunpack.c.h.b16 %v4158
        %v4287 = vunpack.c.l.b16 %v4159
        %v4288 = vunpack.c.h.b16 %v4160
        %v4289 = vunpack.c.l.b16 %v4161
        %v4290 = vunpack.c.h.b16 %v4162
        %v4291 = vunpack.c.l.b16 %v4163
        %v4292 = vunpack.c.h.b16 %v4164
        %v4293 = vunpack.c.l.b16 %v4165
        %v4294 = vunpack.c.h.b16 %v4166
        %v4295 = vunpack.c.l.b16 %v4167
        %v4296 = vunpack.c.h.b16 %v4168
        %v4297 = vunpack.c.l.b16 %v4169
        %v4298 = vunpack.c.h.b16 %v4170
        %v4299 = vunpack.c.l.b16 %v4171
        %v4300 = vunpack.c.h.b16 %v4172
        %v4301 = vunpack.c.l.b16 %v4173
        %v4302 = vpack.c.b16 %v4272, %v4270
        %v4303 = vpack.c.b16 %v4273, %v4271
        %v4304 = vpack.c.b16 %v4276, %v4274
        %v4305 = vpack.c.b16 %v4277, %v4275
        %v4306 = vpack.c.b16 %v4280, %v4278
        %v4307 = vpack.c.b16 %v4281, %v4279
        %v4308 = vpack.c.b16 %v4284, %v4282
        %v4309 = vpack.c.b16 %v4285, %v4283
        %v4310 = vpack.c.b16 %v4288, %v4286
        %v4311 = vpack.c.b16 %v4289, %v4287
        %v4312 = vpack.c.b16 %v4292, %v4290
        %v4313 = vpack.c.b16 %v4293, %v4291
        %v4314 = vpack.c.b16 %v4296, %v4294
        %v4315 = vpack.c.b16 %v4297, %v4295
        %v4316 = vpack.c.b16 %v4300, %v4298
        %v4317 = vpack.c.b16 %v4301, %v4299
        %4334 = vmatpush.bf16.msra.mxu0 %v4316
        %4335 = vmatpush.bf16.msra.mxu0 %v4314
        %4336 = vmatpush.bf16.msra.mxu0 %v4312
        %4337 = vmatpush.bf16.msra.mxu0 %v4310
        %4338 = vmatpush.bf16.msra.mxu0 %v4308
        %4339 = vmatpush.bf16.msra.mxu0 %v4306
        %4340 = vmatpush.bf16.msra.mxu0 %v4304
        %4341 = vmatpush.bf16.msra.mxu0 %v4302
        %4342 = vmatmul.bf16.gmra.mxu0 %v4253
        %v4343 = vpop.f32.mrf.mxu0
        %v4344 = vadd.f32 0.0, %v4343
        %v4345 = vpop.f32.mrf.mxu0
        %4346 = vdwg.mxu0
        %4347 = vmatpush.bf16.msra.mxu0 %v4317
        %4348 = vmatpush.bf16.msra.mxu0 %v4315
        %4349 = vmatpush.bf16.msra.mxu0 %v4313
        %4350 = vmatpush.bf16.msra.mxu0 %v4311
        %4351 = vmatpush.bf16.msra.mxu0 %v4309
        %4352 = vmatpush.bf16.msra.mxu0 %v4307
        %4353 = vmatpush.bf16.msra.mxu0 %v4305
        %4354 = vmatpush.bf16.msra.mxu0 %v4303
        %4355 = vmatmul.bf16.gmra.mxu0 %v4253
        %v4356 = vpop.f32.mrf.mxu0
        %v4357 = vadd.f32 0.0, %v4356
        %v4358 = vpop.f32.mrf.mxu0
        %4359 = vdwg.mxu0
        %v4360 = vmul.f32 %v4250, 0.17677669
        %v4361 = vpack.c.bf16 %v4360, %v4360
        %v4362 = vpack.c.bf16 %v4344, %v4344
        %v4363 = vpack.c.bf16 %v4357, %v4357
        %v4365 = vsel %vm1799, %v4361, 0
        %v4368 = vsel %vm1799, %v4362, 0
        %4370 = vmatpush.bf16.xpose.msra.mxu0 0
        %4371 = vmatpush.bf16.xpose.msra.mxu0 0
        %4372 = vmatpush.bf16.xpose.msra.mxu0 0
        %4373 = vmatpush.bf16.xpose.msra.mxu0 0
        %4374 = vmatpush.bf16.xpose.msra.mxu0 0
        %4375 = vmatpush.bf16.xpose.msra.mxu0 0
        %4376 = vmatpush.bf16.xpose.msra.mxu0 0
        %4377 = vmatpush.bf16.xpose.msra.mxu0 %v4368
        %4378 = vmatmul.bf16.gmra.mxu0 %v4365
        %v4379 = vpop.f32.mrf.mxu0
        %v4380 = vadd.f32 0.0, %v4379
        %v4381 = vpop.f32.mrf.mxu0
        %4382 = vdwg.mxu0
        %v4384 = vunpack.c.l.b16 %v4361
        %v4385 = vpack.c.b16 %v4384, %v4384
        %4386 = vrot.lane.b32.xlu0 %v4385, 96
        %v4387 = vpop.permute.xlu0 %4386
        %v4389 = vunpack.c.l.b16 %v4362
        %v4390 = vpack.c.b16 %v4389, %v4389
        %4391 = vrot.lane.b32.xlu0 %v4390, 96
        %v4392 = vpop.permute.xlu0 %4391
        %v4394 = vsel %vm1799, %v4387, 0
        %v4397 = vsel %vm1799, %v4392, 0
        %4399 = vmatpush.bf16.xpose.msra.mxu0 0
        %4400 = vmatpush.bf16.xpose.msra.mxu0 0
        %4401 = vmatpush.bf16.xpose.msra.mxu0 0
        %4402 = vmatpush.bf16.xpose.msra.mxu0 0
        %4403 = vmatpush.bf16.xpose.msra.mxu0 0
        %4404 = vmatpush.bf16.xpose.msra.mxu0 0
        %4405 = vmatpush.bf16.xpose.msra.mxu0 0
        %4406 = vmatpush.bf16.xpose.msra.mxu0 %v4397
        %4407 = vmatmul.bf16.gmra.mxu0 %v4394
        %v4408 = vpop.f32.mrf.mxu0
        %v4409 = vadd.f32 0.0, %v4408
        %v4410 = vpop.f32.mrf.mxu0
        %4411 = vdwg.mxu0
        %4412 = vrot.lane.b32.xlu0 %v4385, 64
        %v4413 = vpop.permute.xlu0 %4412
        %4414 = vrot.lane.b32.xlu0 %v4390, 64
        %v4415 = vpop.permute.xlu0 %4414
        %v4417 = vsel %vm1799, %v4413, 0
        %v4420 = vsel %vm1799, %v4415, 0
        %4422 = vmatpush.bf16.xpose.msra.mxu0 0
        %4423 = vmatpush.bf16.xpose.msra.mxu0 0
        %4424 = vmatpush.bf16.xpose.msra.mxu0 0
        %4425 = vmatpush.bf16.xpose.msra.mxu0 0
        %4426 = vmatpush.bf16.xpose.msra.mxu0 0
        %4427 = vmatpush.bf16.xpose.msra.mxu0 0
        %4428 = vmatpush.bf16.xpose.msra.mxu0 0
        %4429 = vmatpush.bf16.xpose.msra.mxu0 %v4420
        %4430 = vmatmul.bf16.gmra.mxu0 %v4417
        %v4431 = vpop.f32.mrf.mxu0
        %v4432 = vadd.f32 0.0, %v4431
        %v4433 = vpop.f32.mrf.mxu0
        %4434 = vdwg.mxu0
        %4435 = vrot.lane.b32.xlu0 %v4385, 32
        %v4436 = vpop.permute.xlu0 %4435
        %4437 = vrot.lane.b32.xlu0 %v4390, 32
        %v4438 = vpop.permute.xlu0 %4437
        %v4440 = vsel %vm1799, %v4436, 0
        %v4443 = vsel %vm1799, %v4438, 0
        %4445 = vmatpush.bf16.xpose.msra.mxu0 0
        %4446 = vmatpush.bf16.xpose.msra.mxu0 0
        %4447 = vmatpush.bf16.xpose.msra.mxu0 0
        %4448 = vmatpush.bf16.xpose.msra.mxu0 0
        %4449 = vmatpush.bf16.xpose.msra.mxu0 0
        %4450 = vmatpush.bf16.xpose.msra.mxu0 0
        %4451 = vmatpush.bf16.xpose.msra.mxu0 0
        %4452 = vmatpush.bf16.xpose.msra.mxu0 %v4443
        %4453 = vmatmul.bf16.gmra.mxu0 %v4440
        %v4454 = vpop.f32.mrf.mxu0
        %v4455 = vadd.f32 0.0, %v4454
        %v4456 = vpop.f32.mrf.mxu0
        %4457 = vdwg.mxu0
        %v4458 = vsel %vm1894, %v4380, -inf
        %4459 = vmax.xlane.f32.xlu0 %v4458
        %v4460 = vpop.xlane.xlu0 %4459
        %v4461 = vsel %vm1894, %v4409, -inf
        %4462 = vmax.xlane.f32.xlu0 %v4461
        %v4463 = vpop.xlane.xlu0 %4462
        %v4464 = vsel %vm1894, %v4432, -inf
        %4465 = vmax.xlane.f32.xlu0 %v4464
        %v4466 = vpop.xlane.xlu0 %4465
        %v4467 = vsel %vm1894, %v4455, -inf
        %4468 = vmax.xlane.f32.xlu0 %v4467
        %v4469 = vpop.xlane.xlu0 %4468
        %v4470 = vsub.f32 %v4380, %v4460
        %v4471 = vsub.f32 %v4409, %v4463
        %v4472 = vsub.f32 %v4432, %v4466
        %v4473 = vsub.f32 %v4455, %v4469
        %v4474 = vmul.f32 %v4470, 1.442695
        %v4475 = vpow.pop %v4474
        %v4476 = vmul.f32 %v4471, 1.442695
        %v4477 = vpow.pop %v4476
        %v4478 = vmul.f32 %v4472, 1.442695
        %v4479 = vpow.pop %v4478
        %v4480 = vmul.f32 %v4473, 1.442695
        %v4481 = vpow.pop %v4480
        %v4482 = vsel %vm1894, %v4475, 0.0
        %4483 = vadd.xlane.f32.xlu0 %v4482
        %v4484 = vpop.xlane.xlu0 %4483
        %v4485 = vsel %vm1894, %v4477, 0.0
        %4486 = vadd.xlane.f32.xlu0 %v4485
        %v4487 = vpop.xlane.xlu0 %4486
        %v4488 = vsel %vm1894, %v4479, 0.0
        %4489 = vadd.xlane.f32.xlu0 %v4488
        %v4490 = vpop.xlane.xlu0 %4489
        %v4491 = vsel %vm1894, %v4481, 0.0
        %4492 = vadd.xlane.f32.xlu0 %v4491
        %v4493 = vpop.xlane.xlu0 %4492
        %v4494 = vrcp.pop %v4484
        %v4495 = vmul.f32 %v4484, %v4494
        %v4496 = vsub.f32 1.0, %v4495
        %v4497 = vmul.f32 %v4494, %v4496
        %v4498 = vadd.f32 %v4494, %v4497
        %vm4499 = vweird.f32 %v4484
        %vm4500 = vweird.f32 %v4494
        %vm4501 = vmor %vm4499, %vm4500
        %v4502 = vsel %vm4501, %v4494, %v4498
        %v4503 = vand.u32 2147483647, %v4484
        %vm4504 = vcmp.eq.f32.partialorder %v4503, 8.507059e+37
        %v4505 = vand.u32 %v4484, 2147483648
        %v4506 = vor.u32 1.1754944e-38, %v4505
        %v4507 = vsel %vm4504, %v4506, %v4502
        %v4508 = vrcp.pop %v4487
        %v4509 = vmul.f32 %v4487, %v4508
        %v4510 = vsub.f32 1.0, %v4509
        %v4511 = vmul.f32 %v4508, %v4510
        %v4512 = vadd.f32 %v4508, %v4511
        %vm4513 = vweird.f32 %v4487
        %vm4514 = vweird.f32 %v4508
        %vm4515 = vmor %vm4513, %vm4514
        %v4516 = vsel %vm4515, %v4508, %v4512
        %v4517 = vand.u32 2147483647, %v4487
        %vm4518 = vcmp.eq.f32.partialorder %v4517, 8.507059e+37
        %v4519 = vand.u32 %v4487, 2147483648
        %v4520 = vor.u32 1.1754944e-38, %v4519
        %v4521 = vsel %vm4518, %v4520, %v4516
        %v4522 = vrcp.pop %v4490
        %v4523 = vmul.f32 %v4490, %v4522
        %v4524 = vsub.f32 1.0, %v4523
        %v4525 = vmul.f32 %v4522, %v4524
        %v4526 = vadd.f32 %v4522, %v4525
        %vm4527 = vweird.f32 %v4490
        %vm4528 = vweird.f32 %v4522
        %vm4529 = vmor %vm4527, %vm4528
        %v4530 = vsel %vm4529, %v4522, %v4526
        %v4531 = vand.u32 2147483647, %v4490
        %vm4532 = vcmp.eq.f32.partialorder %v4531, 8.507059e+37
        %v4533 = vand.u32 %v4490, 2147483648
        %v4534 = vor.u32 1.1754944e-38, %v4533
        %v4535 = vsel %vm4532, %v4534, %v4530
        %v4536 = vrcp.pop %v4493
        %v4537 = vmul.f32 %v4493, %v4536
        %v4538 = vsub.f32 1.0, %v4537
        %v4539 = vmul.f32 %v4536, %v4538
        %v4540 = vadd.f32 %v4536, %v4539
        %vm4541 = vweird.f32 %v4493
        %vm4542 = vweird.f32 %v4536
        %vm4543 = vmor %vm4541, %vm4542
        %v4544 = vsel %vm4543, %v4536, %v4540
        %v4545 = vand.u32 2147483647, %v4493
        %vm4546 = vcmp.eq.f32.partialorder %v4545, 8.507059e+37
        %v4547 = vand.u32 %v4493, 2147483648
        %v4548 = vor.u32 1.1754944e-38, %v4547
        %v4549 = vsel %vm4546, %v4548, %v4544
        %v4550 = vmul.f32 %v4475, %v4507
        %v4551 = vmul.f32 %v4477, %v4521
        %v4552 = vmul.f32 %v4479, %v4535
        %v4553 = vmul.f32 %v4481, %v4549
        %v4554 = vpack.c.bf16 %v4550, %v4550
        %v4555 = vpack.c.bf16 %v4551, %v4551
        %v4556 = vpack.c.bf16 %v4552, %v4552
        %v4557 = vpack.c.bf16 %v4553, %v4553
        %v4559 = vsel %vm1894, %v4554, 0
        %v4562 = vsel %vm1998, %v4363, 0
        %4564 = vmatpush.bf16.msra.mxu0 0
        %4565 = vmatpush.bf16.msra.mxu0 0
        %4566 = vmatpush.bf16.msra.mxu0 0
        %4567 = vmatpush.bf16.msra.mxu0 0
        %4568 = vmatpush.bf16.msra.mxu0 0
        %4569 = vmatpush.bf16.msra.mxu0 0
        %4570 = vmatpush.bf16.msra.mxu0 0
        %4571 = vmatpush.bf16.msra.mxu0 %v4562
        %4572 = vmatmul.bf16.gmra.mxu0 %v4559
        %v4573 = vpop.f32.mrf.mxu0
        %v4574 = vadd.f32 0.0, %v4573
        %v4575 = vpop.f32.mrf.mxu0
        %4576 = vdwg.mxu0
        %v4578 = vunpack.c.l.b16 %v4363
        %v4579 = vpack.c.b16 %v4578, %v4578
        %4580 = vrot.lane.b32.xlu0 %v4579, 96
        %v4581 = vpop.permute.xlu0 %4580
        %v4583 = vsel %vm1894, %v4555, 0
        %v4586 = vsel %vm1998, %v4581, 0
        %4588 = vmatpush.bf16.msra.mxu0 0
        %4589 = vmatpush.bf16.msra.mxu0 0
        %4590 = vmatpush.bf16.msra.mxu0 0
        %4591 = vmatpush.bf16.msra.mxu0 0
        %4592 = vmatpush.bf16.msra.mxu0 0
        %4593 = vmatpush.bf16.msra.mxu0 0
        %4594 = vmatpush.bf16.msra.mxu0 0
        %4595 = vmatpush.bf16.msra.mxu0 %v4586
        %4596 = vmatmul.bf16.gmra.mxu0 %v4583
        %v4597 = vpop.f32.mrf.mxu0
        %v4598 = vadd.f32 0.0, %v4597
        %v4599 = vpop.f32.mrf.mxu0
        %4600 = vdwg.mxu0
        %4601 = vrot.lane.b32.xlu0 %v4579, 64
        %v4602 = vpop.permute.xlu0 %4601
        %v4604 = vsel %vm1894, %v4556, 0
        %v4607 = vsel %vm1998, %v4602, 0
        %4609 = vmatpush.bf16.msra.mxu0 0
        %4610 = vmatpush.bf16.msra.mxu0 0
        %4611 = vmatpush.bf16.msra.mxu0 0
        %4612 = vmatpush.bf16.msra.mxu0 0
        %4613 = vmatpush.bf16.msra.mxu0 0
        %4614 = vmatpush.bf16.msra.mxu0 0
        %4615 = vmatpush.bf16.msra.mxu0 0
        %4616 = vmatpush.bf16.msra.mxu0 %v4607
        %4617 = vmatmul.bf16.gmra.mxu0 %v4604
        %v4618 = vpop.f32.mrf.mxu0
        %v4619 = vadd.f32 0.0, %v4618
        %v4620 = vpop.f32.mrf.mxu0
        %4621 = vdwg.mxu0
        %4622 = vrot.lane.b32.xlu0 %v4579, 32
        %v4623 = vpop.permute.xlu0 %4622
        %v4625 = vsel %vm1894, %v4557, 0
        %v4628 = vsel %vm1998, %v4623, 0
        %4630 = vmatpush.bf16.msra.mxu0 0
        %4631 = vmatpush.bf16.msra.mxu0 0
        %4632 = vmatpush.bf16.msra.mxu0 0
        %4633 = vmatpush.bf16.msra.mxu0 0
        %4634 = vmatpush.bf16.msra.mxu0 0
        %4635 = vmatpush.bf16.msra.mxu0 0
        %4636 = vmatpush.bf16.msra.mxu0 0
        %4637 = vmatpush.bf16.msra.mxu0 %v4628
        %4638 = vmatmul.bf16.gmra.mxu0 %v4625
        %v4639 = vpop.f32.mrf.mxu0
        %v4640 = vadd.f32 0.0, %v4639
        %v4641 = vpop.f32.mrf.mxu0
        %4642 = vdwg.mxu0
        %4644 = vrot.lane.b32.xlu0 %v4598, 32
        %v4645 = vpop.permute.xlu0 %4644
        %4648 = vrot.lane.b32.xlu0 %v4619, 64
        %v4649 = vpop.permute.xlu0 %4648
        %4652 = vrot.lane.b32.xlu0 %v4640, 96
        %v4653 = vpop.permute.xlu0 %4652
        %v4655 = vsel %vm1799, %v4574, %v4645
        %v4656 = vsel %vm2094, %v4655, %v4649
        %v4657 = vsel %vm2096, %v4656, %v4653
        %v4658 = vpack.c.bf16 %v4657, %v4657
        %v4660 = vperm.slane %v4190, 0
        %v4678 = vunpack.c.l.b16 %v4174
        %v4679 = vunpack.c.l.b16 %v4175
        %v4680 = vunpack.c.l.b16 %v4176
        %v4681 = vunpack.c.l.b16 %v4177
        %v4682 = vunpack.c.l.b16 %v4178
        %v4683 = vunpack.c.l.b16 %v4179
        %v4684 = vunpack.c.l.b16 %v4180
        %v4685 = vunpack.c.l.b16 %v4181
        %v4686 = vunpack.c.l.b16 %v4182
        %v4687 = vunpack.c.l.b16 %v4183
        %v4688 = vunpack.c.l.b16 %v4184
        %v4689 = vunpack.c.l.b16 %v4185
        %v4690 = vunpack.c.l.b16 %v4186
        %v4691 = vunpack.c.l.b16 %v4187
        %v4692 = vunpack.c.l.b16 %v4188
        %v4693 = vunpack.c.l.b16 %v4189
        %v4694 = vpack.c.b16 %v4679, %v4678
        %v4695 = vpack.c.b16 %v4681, %v4680
        %v4696 = vpack.c.b16 %v4683, %v4682
        %v4697 = vpack.c.b16 %v4685, %v4684
        %v4698 = vpack.c.b16 %v4687, %v4686
        %v4699 = vpack.c.b16 %v4689, %v4688
        %v4700 = vpack.c.b16 %v4691, %v4690
        %v4701 = vpack.c.b16 %v4693, %v4692
        %4710 = vmatpush.bf16.msra.mxu0 %v4701
        %4711 = vmatpush.bf16.msra.mxu0 %v4700
        %4712 = vmatpush.bf16.msra.mxu0 %v4699
        %4713 = vmatpush.bf16.msra.mxu0 %v4698
        %4714 = vmatpush.bf16.msra.mxu0 %v4697
        %4715 = vmatpush.bf16.msra.mxu0 %v4696
        %4716 = vmatpush.bf16.msra.mxu0 %v4695
        %4717 = vmatpush.bf16.msra.mxu0 %v4694
        %4718 = vmatmul.bf16.gmra.mxu0 %v4658
        %v4719 = vpop.f32.mrf.mxu0
        %v4720 = vadd.f32 %v4660, %v4719
        %v4721 = vpop.f32.mrf.mxu0
        %4722 = vdwg.mxu0
        %v4723 = vadd.f32 %v4111, %v4720
        %v4724 = vld [vmem:[#allocation35] sm:$0x1]
        %v4725 = vld [vmem:[#allocation37] sm:$0x1]
        %4726 = vadd.xlane.f32.xlu0 %v4723
        %v4727 = vpop.xlane.xlu0 %4726
        %v4728 = vmul.f32 %v4727, %v1551
        %v4729 = vsub.f32 %v4723, %v4728
        %v4730 = vmul.f32 %v4729, %v4729
        %4731 = vadd.xlane.f32.xlu0 %v4730
        %v4732 = vpop.xlane.xlu0 %4731
        %v4733 = vmul.f32 %v4732, %v1551
        %v4734 = vadd.f32 %v4733, 1e-05
        %v4735 = vrsqrt.pop %v4734
        %v4736 = vmul.f32 %v4735, %v4734
        %v4737 = vmul.f32 %v4736, %v4735
        %v4738 = vmul.f32 0.5, %v4737
        %v4739 = vsub.f32 1.5, %v4738
        %v4740 = vmul.f32 %v4735, %v4739
        %vm4741 = vweird.f32 %v4734
        %vm4742 = vweird.f32 %v4735
        %vm4743 = vmor %vm4741, %vm4742
        %v4744 = vsel %vm4743, %v4735, %v4740
        %v4745 = vmul.f32 %v4729, %v4744
        %v4747 = vperm.slane %v4724, 0
        %v4749 = vmul.f32 %v4745, %v4747
        %v4751 = vperm.slane %v4725, 0
        %v4753 = vadd.f32 %v4749, %v4751
        %v4754 = vld [vmem:[#allocation38] sm:$0xff]
        %v4755 = vld [vmem:[#allocation38 + $0x8] sm:$0xff]
        %v4756 = vld [vmem:[#allocation38 + $0x10] sm:$0xff]
        %v4757 = vld [vmem:[#allocation38 + $0x18] sm:$0xff]
        %v4758 = vld [vmem:[#allocation38 + $0x20] sm:$0xff]
        %v4759 = vld [vmem:[#allocation38 + $0x28] sm:$0xff]
        %v4760 = vld [vmem:[#allocation38 + $0x30] sm:$0xff]
        %v4761 = vld [vmem:[#allocation38 + $0x38] sm:$0xff]
        %v4762 = vld [vmem:[#allocation38 + $0x40] sm:$0xff]
        %v4763 = vld [vmem:[#allocation38 + $0x48] sm:$0xff]
        %v4764 = vld [vmem:[#allocation38 + $0x50] sm:$0xff]
        %v4765 = vld [vmem:[#allocation38 + $0x58] sm:$0xff]
        %v4766 = vld [vmem:[#allocation38 + $0x60] sm:$0xff]
        %v4767 = vld [vmem:[#allocation38 + $0x68] sm:$0xff]
        %v4768 = vld [vmem:[#allocation38 + $0x70] sm:$0xff]
        %v4769 = vld [vmem:[#allocation38 + $0x78] sm:$0xff]
        %v4770 = vld [vmem:[%s57] sm:$0x3]
        %v4771 = vld [vmem:[#allocation40] sm:$0xf]
        %v4772 = vld [vmem:[#allocation40 + $0x4] sm:$0xf]
        %v4773 = vld [vmem:[#allocation40 + $0x8] sm:$0xf]
        %v4774 = vld [vmem:[#allocation40 + $0xc] sm:$0xf]
        %v4775 = vld [vmem:[#allocation40 + $0x10] sm:$0xf]
        %v4776 = vld [vmem:[#allocation40 + $0x14] sm:$0xf]
        %v4777 = vld [vmem:[#allocation40 + $0x18] sm:$0xf]
        %v4778 = vld [vmem:[#allocation40 + $0x1c] sm:$0xf]
        %v4779 = vld [vmem:[#allocation40 + $0x20] sm:$0xf]
        %v4780 = vld [vmem:[#allocation40 + $0x24] sm:$0xf]
        %v4781 = vld [vmem:[#allocation40 + $0x28] sm:$0xf]
        %v4782 = vld [vmem:[#allocation40 + $0x2c] sm:$0xf]
        %v4783 = vld [vmem:[#allocation40 + $0x30] sm:$0xf]
        %v4784 = vld [vmem:[#allocation40 + $0x34] sm:$0xf]
        %v4785 = vld [vmem:[#allocation40 + $0x38] sm:$0xf]
        %v4786 = vld [vmem:[#allocation40 + $0x3c] sm:$0xf]
        %v4787 = vld [vmem:[#allocation40 + $0x40] sm:$0xf]
        %v4788 = vld [vmem:[#allocation40 + $0x44] sm:$0xf]
        %v4789 = vld [vmem:[#allocation40 + $0x48] sm:$0xf]
        %v4790 = vld [vmem:[#allocation40 + $0x4c] sm:$0xf]
        %v4791 = vld [vmem:[#allocation40 + $0x50] sm:$0xf]
        %v4792 = vld [vmem:[#allocation40 + $0x54] sm:$0xf]
        %v4793 = vld [vmem:[#allocation40 + $0x58] sm:$0xf]
        %v4794 = vld [vmem:[#allocation40 + $0x5c] sm:$0xf]
        %v4795 = vld [vmem:[#allocation40 + $0x60] sm:$0xf]
        %v4796 = vld [vmem:[#allocation40 + $0x64] sm:$0xf]
        %v4797 = vld [vmem:[#allocation40 + $0x68] sm:$0xf]
        %v4798 = vld [vmem:[#allocation40 + $0x6c] sm:$0xf]
        %v4799 = vld [vmem:[#allocation40 + $0x70] sm:$0xf]
        %v4800 = vld [vmem:[#allocation40 + $0x74] sm:$0xf]
        %v4801 = vld [vmem:[#allocation40 + $0x78] sm:$0xf]
        %v4802 = vld [vmem:[#allocation40 + $0x7c] sm:$0xf]
        %v4803 = vld [vmem:[#allocation41] sm:$0x1]
        %v4804 = vpack.c.bf16 %v4753, %v4753
        %v4806 = vperm.slane %v4770, 0
        %v4807 = vperm.slane %v4770, 1
        %v4826 = vunpack.c.l.b16 %v4754
        %v4827 = vunpack.c.h.b16 %v4754
        %v4828 = vunpack.c.l.b16 %v4755
        %v4829 = vunpack.c.h.b16 %v4755
        %v4830 = vunpack.c.l.b16 %v4756
        %v4831 = vunpack.c.h.b16 %v4756
        %v4832 = vunpack.c.l.b16 %v4757
        %v4833 = vunpack.c.h.b16 %v4757
        %v4834 = vunpack.c.l.b16 %v4758
        %v4835 = vunpack.c.h.b16 %v4758
        %v4836 = vunpack.c.l.b16 %v4759
        %v4837 = vunpack.c.h.b16 %v4759
        %v4838 = vunpack.c.l.b16 %v4760
        %v4839 = vunpack.c.h.b16 %v4760
        %v4840 = vunpack.c.l.b16 %v4761
        %v4841 = vunpack.c.h.b16 %v4761
        %v4842 = vunpack.c.l.b16 %v4762
        %v4843 = vunpack.c.h.b16 %v4762
        %v4844 = vunpack.c.l.b16 %v4763
        %v4845 = vunpack.c.h.b16 %v4763
        %v4846 = vunpack.c.l.b16 %v4764
        %v4847 = vunpack.c.h.b16 %v4764
        %v4848 = vunpack.c.l.b16 %v4765
        %v4849 = vunpack.c.h.b16 %v4765
        %v4850 = vunpack.c.l.b16 %v4766
        %v4851 = vunpack.c.h.b16 %v4766
        %v4852 = vunpack.c.l.b16 %v4767
        %v4853 = vunpack.c.h.b16 %v4767
        %v4854 = vunpack.c.l.b16 %v4768
        %v4855 = vunpack.c.h.b16 %v4768
        %v4856 = vunpack.c.l.b16 %v4769
        %v4857 = vunpack.c.h.b16 %v4769
        %v4858 = vpack.c.b16 %v4828, %v4826
        %v4859 = vpack.c.b16 %v4829, %v4827
        %v4860 = vpack.c.b16 %v4832, %v4830
        %v4861 = vpack.c.b16 %v4833, %v4831
        %v4862 = vpack.c.b16 %v4836, %v4834
        %v4863 = vpack.c.b16 %v4837, %v4835
        %v4864 = vpack.c.b16 %v4840, %v4838
        %v4865 = vpack.c.b16 %v4841, %v4839
        %v4866 = vpack.c.b16 %v4844, %v4842
        %v4867 = vpack.c.b16 %v4845, %v4843
        %v4868 = vpack.c.b16 %v4848, %v4846
        %v4869 = vpack.c.b16 %v4849, %v4847
        %v4870 = vpack.c.b16 %v4852, %v4850
        %v4871 = vpack.c.b16 %v4853, %v4851
        %v4872 = vpack.c.b16 %v4856, %v4854
        %v4873 = vpack.c.b16 %v4857, %v4855
        %4890 = vmatpush.bf16.msra.mxu0 %v4872
        %4891 = vmatpush.bf16.msra.mxu0 %v4870
        %4892 = vmatpush.bf16.msra.mxu0 %v4868
        %4893 = vmatpush.bf16.msra.mxu0 %v4866
        %4894 = vmatpush.bf16.msra.mxu0 %v4864
        %4895 = vmatpush.bf16.msra.mxu0 %v4862
        %4896 = vmatpush.bf16.msra.mxu0 %v4860
        %4897 = vmatpush.bf16.msra.mxu0 %v4858
        %4898 = vmatmul.bf16.gmra.mxu0 %v4804
        %v4899 = vpop.f32.mrf.mxu0
        %v4900 = vadd.f32 %v4806, %v4899
        %v4901 = vpop.f32.mrf.mxu0
        %4902 = vdwg.mxu0
        %4903 = vmatpush.bf16.msra.mxu0 %v4873
        %4904 = vmatpush.bf16.msra.mxu0 %v4871
        %4905 = vmatpush.bf16.msra.mxu0 %v4869
        %4906 = vmatpush.bf16.msra.mxu0 %v4867
        %4907 = vmatpush.bf16.msra.mxu0 %v4865
        %4908 = vmatpush.bf16.msra.mxu0 %v4863
        %4909 = vmatpush.bf16.msra.mxu0 %v4861
        %4910 = vmatpush.bf16.msra.mxu0 %v4859
        %4911 = vmatmul.bf16.gmra.mxu0 %v4804
        %v4912 = vpop.f32.mrf.mxu0
        %v4913 = vadd.f32 %v4807, %v4912
        %v4914 = vpop.f32.mrf.mxu0
        %4915 = vdwg.mxu0
        %v4916 = vmul.f32 %v4900, %v4900
        %v4917 = vmul.f32 %v4913, %v4913
        %v4918 = vmul.f32 %v4900, %v4916
        %v4919 = vmul.f32 %v4913, %v4917
        %v4920 = vmul.f32 %v4918, 0.044715
        %v4921 = vmul.f32 %v4919, 0.044715
        %v4922 = vadd.f32 %v4900, %v4920
        %v4923 = vadd.f32 %v4913, %v4921
        %v4924 = vmul.f32 %v4922, 0.7978846
        %v4925 = vmul.f32 %v4923, 0.7978846
        %v4926 = vtanh.pop %v4924
        %v4927 = vtanh.pop %v4925
        %v4928 = vadd.f32 %v4926, 1.0
        %v4929 = vadd.f32 %v4927, 1.0
        %v4930 = vmul.f32 %v4928, 0.5
        %v4931 = vmul.f32 %v4929, 0.5
        %v4932 = vmul.f32 %v4900, %v4930
        %v4933 = vmul.f32 %v4913, %v4931
        %v4934 = vpack.c.bf16 %v4932, %v4932
        %v4935 = vpack.c.bf16 %v4933, %v4933
        %v4937 = vperm.slane %v4803, 0
        %v4971 = vunpack.c.l.b16 %v4771
        %v4972 = vunpack.c.l.b16 %v4772
        %v4973 = vunpack.c.l.b16 %v4773
        %v4974 = vunpack.c.l.b16 %v4774
        %v4975 = vunpack.c.l.b16 %v4775
        %v4976 = vunpack.c.l.b16 %v4776
        %v4977 = vunpack.c.l.b16 %v4777
        %v4978 = vunpack.c.l.b16 %v4778
        %v4979 = vunpack.c.l.b16 %v4779
        %v4980 = vunpack.c.l.b16 %v4780
        %v4981 = vunpack.c.l.b16 %v4781
        %v4982 = vunpack.c.l.b16 %v4782
        %v4983 = vunpack.c.l.b16 %v4783
        %v4984 = vunpack.c.l.b16 %v4784
        %v4985 = vunpack.c.l.b16 %v4785
        %v4986 = vunpack.c.l.b16 %v4786
        %v4987 = vunpack.c.l.b16 %v4787
        %v4988 = vunpack.c.l.b16 %v4788
        %v4989 = vunpack.c.l.b16 %v4789
        %v4990 = vunpack.c.l.b16 %v4790
        %v4991 = vunpack.c.l.b16 %v4791
        %v4992 = vunpack.c.l.b16 %v4792
        %v4993 = vunpack.c.l.b16 %v4793
        %v4994 = vunpack.c.l.b16 %v4794
        %v4995 = vunpack.c.l.b16 %v4795
        %v4996 = vunpack.c.l.b16 %v4796
        %v4997 = vunpack.c.l.b16 %v4797
        %v4998 = vunpack.c.l.b16 %v4798
        %v4999 = vunpack.c.l.b16 %v4799
        %v5000 = vunpack.c.l.b16 %v4800
        %v5001 = vunpack.c.l.b16 %v4801
        %v5002 = vunpack.c.l.b16 %v4802
        %v5003 = vpack.c.b16 %v4972, %v4971
        %v5004 = vpack.c.b16 %v4974, %v4973
        %v5005 = vpack.c.b16 %v4976, %v4975
        %v5006 = vpack.c.b16 %v4978, %v4977
        %v5007 = vpack.c.b16 %v4980, %v4979
        %v5008 = vpack.c.b16 %v4982, %v4981
        %v5009 = vpack.c.b16 %v4984, %v4983
        %v5010 = vpack.c.b16 %v4986, %v4985
        %v5011 = vpack.c.b16 %v4988, %v4987
        %v5012 = vpack.c.b16 %v4990, %v4989
        %v5013 = vpack.c.b16 %v4992, %v4991
        %v5014 = vpack.c.b16 %v4994, %v4993
        %v5015 = vpack.c.b16 %v4996, %v4995
        %v5016 = vpack.c.b16 %v4998, %v4997
        %v5017 = vpack.c.b16 %v5000, %v4999
        %v5018 = vpack.c.b16 %v5002, %v5001
        %5035 = vmatpush.bf16.msra.mxu0 %v5010
        %5036 = vmatpush.bf16.msra.mxu0 %v5009
        %5037 = vmatpush.bf16.msra.mxu0 %v5008
        %5038 = vmatpush.bf16.msra.mxu0 %v5007
        %5039 = vmatpush.bf16.msra.mxu0 %v5006
        %5040 = vmatpush.bf16.msra.mxu0 %v5005
        %5041 = vmatpush.bf16.msra.mxu0 %v5004
        %5042 = vmatpush.bf16.msra.mxu0 %v5003
        %5043 = vmatmul.bf16.gmra.mxu0 %v4934
        %v5044 = vpop.f32.mrf.mxu0
        %v5045 = vadd.f32 %v4937, %v5044
        %v5046 = vpop.f32.mrf.mxu0
        %5047 = vdwg.mxu0
        %5048 = vmatpush.bf16.msra.mxu0 %v5018
        %5049 = vmatpush.bf16.msra.mxu0 %v5017
        %5050 = vmatpush.bf16.msra.mxu0 %v5016
        %5051 = vmatpush.bf16.msra.mxu0 %v5015
        %5052 = vmatpush.bf16.msra.mxu0 %v5014
        %5053 = vmatpush.bf16.msra.mxu0 %v5013
        %5054 = vmatpush.bf16.msra.mxu0 %v5012
        %5055 = vmatpush.bf16.msra.mxu0 %v5011
        %5056 = vmatmul.bf16.gmra.mxu0 %v4935
        %v5057 = vpop.f32.mrf.mxu0
        %v5058 = vadd.f32 %v5045, %v5057
        %v5059 = vpop.f32.mrf.mxu0
        %5060 = vdwg.mxu0
        %v5061 = vadd.f32 %v4723, %v5058
        %s5062 = scalar_lea.vmem [#allocation20], 1
        %v5063 = vld [vmem:[%s5062] sm:$0x1]
        %s5064 = scalar_lea.vmem [#allocation22], 1
        %v5065 = vld [vmem:[%s5064] sm:$0x1]
        %5066 = vadd.xlane.f32.xlu0 %v5061
        %v5067 = vpop.xlane.xlu0 %5066
        %v5068 = vmul.f32 %v5067, %v1551
        %v5069 = vsub.f32 %v5061, %v5068
        %v5070 = vmul.f32 %v5069, %v5069
        %5071 = vadd.xlane.f32.xlu0 %v5070
        %v5072 = vpop.xlane.xlu0 %5071
        %v5073 = vmul.f32 %v5072, %v1551
        %v5074 = vadd.f32 %v5073, 1e-05
        %v5075 = vrsqrt.pop %v5074
        %v5076 = vmul.f32 %v5075, %v5074
        %v5077 = vmul.f32 %v5076, %v5075
        %v5078 = vmul.f32 0.5, %v5077
        %v5079 = vsub.f32 1.5, %v5078
        %v5080 = vmul.f32 %v5075, %v5079
        %vm5081 = vweird.f32 %v5074
        %vm5082 = vweird.f32 %v5075
        %vm5083 = vmor %vm5081, %vm5082
        %v5084 = vsel %vm5083, %v5075, %v5080
        %v5085 = vmul.f32 %v5069, %v5084
        %v5087 = vperm.slane %v5063, 0
        %v5089 = vmul.f32 %v5085, %v5087
        %v5091 = vperm.slane %v5065, 0
        %v5093 = vadd.f32 %v5089, %v5091
        %s5094 = scalar_lea.vmem [#allocation23], 192
        %v5095 = vld [vmem:[%s5094] sm:$0xff]
        %v5096 = vld [vmem:[%s5094 + $0x8] sm:$0xf]
        %v5097 = vld [vmem:[%s5094 + $0xc] sm:$0xff]
        %v5098 = vld [vmem:[%s5094 + $0x14] sm:$0xf]
        %v5099 = vld [vmem:[%s5094 + $0x18] sm:$0xff]
        %v5100 = vld [vmem:[%s5094 + $0x20] sm:$0xf]
        %v5101 = vld [vmem:[%s5094 + $0x24] sm:$0xff]
        %v5102 = vld [vmem:[%s5094 + $0x2c] sm:$0xf]
        %v5103 = vld [vmem:[%s5094 + $0x30] sm:$0xff]
        %v5104 = vld [vmem:[%s5094 + $0x38] sm:$0xf]
        %v5105 = vld [vmem:[%s5094 + $0x3c] sm:$0xff]
        %v5106 = vld [vmem:[%s5094 + $0x44] sm:$0xf]
        %v5107 = vld [vmem:[%s5094 + $0x48] sm:$0xff]
        %v5108 = vld [vmem:[%s5094 + $0x50] sm:$0xf]
        %v5109 = vld [vmem:[%s5094 + $0x54] sm:$0xff]
        %v5110 = vld [vmem:[%s5094 + $0x5c] sm:$0xf]
        %v5111 = vld [vmem:[%s5094 + $0x60] sm:$0xff]
        %v5112 = vld [vmem:[%s5094 + $0x68] sm:$0xf]
        %v5113 = vld [vmem:[%s5094 + $0x6c] sm:$0xff]
        %v5114 = vld [vmem:[%s5094 + $0x74] sm:$0xf]
        %v5115 = vld [vmem:[%s5094 + $0x78] sm:$0xff]
        %v5116 = vld [vmem:[%s5094 + $0x80] sm:$0xf]
        %v5117 = vld [vmem:[%s5094 + $0x84] sm:$0xff]
        %v5118 = vld [vmem:[%s5094 + $0x8c] sm:$0xf]
        %v5119 = vld [vmem:[%s5094 + $0x90] sm:$0xff]
        %v5120 = vld [vmem:[%s5094 + $0x98] sm:$0xf]
        %v5121 = vld [vmem:[%s5094 + $0x9c] sm:$0xff]
        %v5122 = vld [vmem:[%s5094 + $0xa4] sm:$0xf]
        %v5123 = vld [vmem:[%s5094 + $0xa8] sm:$0xff]
        %v5124 = vld [vmem:[%s5094 + $0xb0] sm:$0xf]
        %v5125 = vld [vmem:[%s5094 + $0xb4] sm:$0xff]
        %v5126 = vld [vmem:[%s5094 + $0xbc] sm:$0xf]
        %s5127 = scalar_lea.vmem [#allocation25], 64
        %v5128 = vld [vmem:[%s5127] sm:$0xf]
        %v5129 = vld [vmem:[%s5127 + $0x4] sm:$0xf]
        %v5130 = vld [vmem:[%s5127 + $0x8] sm:$0xf]
        %v5131 = vld [vmem:[%s5127 + $0xc] sm:$0xf]
        %v5132 = vld [vmem:[%s5127 + $0x10] sm:$0xf]
        %v5133 = vld [vmem:[%s5127 + $0x14] sm:$0xf]
        %v5134 = vld [vmem:[%s5127 + $0x18] sm:$0xf]
        %v5135 = vld [vmem:[%s5127 + $0x1c] sm:$0xf]
        %v5136 = vld [vmem:[%s5127 + $0x20] sm:$0xf]
        %v5137 = vld [vmem:[%s5127 + $0x24] sm:$0xf]
        %v5138 = vld [vmem:[%s5127 + $0x28] sm:$0xf]
        %v5139 = vld [vmem:[%s5127 + $0x2c] sm:$0xf]
        %v5140 = vld [vmem:[%s5127 + $0x30] sm:$0xf]
        %v5141 = vld [vmem:[%s5127 + $0x34] sm:$0xf]
        %v5142 = vld [vmem:[%s5127 + $0x38] sm:$0xf]
        %v5143 = vld [vmem:[%s5127 + $0x3c] sm:$0xf]
        %s5144 = scalar_lea.vmem [#allocation26], 1
        %v5145 = vld [vmem:[%s5144] sm:$0x1]
        %v5146 = vpack.c.bf16 %v5093, %v5093
        %v5179 = vunpack.c.l.b16 %v5095
        %v5180 = vunpack.c.h.b16 %v5095
        %v5181 = vunpack.c.l.b16 %v5096
        %v5182 = vunpack.c.l.b16 %v5097
        %v5183 = vunpack.c.h.b16 %v5097
        %v5184 = vunpack.c.l.b16 %v5098
        %v5185 = vunpack.c.l.b16 %v5099
        %v5186 = vunpack.c.h.b16 %v5099
        %v5187 = vunpack.c.l.b16 %v5100
        %v5188 = vunpack.c.l.b16 %v5101
        %v5189 = vunpack.c.h.b16 %v5101
        %v5190 = vunpack.c.l.b16 %v5102
        %v5191 = vunpack.c.l.b16 %v5103
        %v5192 = vunpack.c.h.b16 %v5103
        %v5193 = vunpack.c.l.b16 %v5104
        %v5194 = vunpack.c.l.b16 %v5105
        %v5195 = vunpack.c.h.b16 %v5105
        %v5196 = vunpack.c.l.b16 %v5106
        %v5197 = vunpack.c.l.b16 %v5107
        %v5198 = vunpack.c.h.b16 %v5107
        %v5199 = vunpack.c.l.b16 %v5108
        %v5200 = vunpack.c.l.b16 %v5109
        %v5201 = vunpack.c.h.b16 %v5109
        %v5202 = vunpack.c.l.b16 %v5110
        %v5203 = vunpack.c.l.b16 %v5111
        %v5204 = vunpack.c.h.b16 %v5111
        %v5205 = vunpack.c.l.b16 %v5112
        %v5206 = vunpack.c.l.b16 %v5113
        %v5207 = vunpack.c.h.b16 %v5113
        %v5208 = vunpack.c.l.b16 %v5114
        %v5209 = vunpack.c.l.b16 %v5115
        %v5210 = vunpack.c.h.b16 %v5115
        %v5211 = vunpack.c.l.b16 %v5116
        %v5212 = vunpack.c.l.b16 %v5117
        %v5213 = vunpack.c.h.b16 %v5117
        %v5214 = vunpack.c.l.b16 %v5118
        %v5215 = vunpack.c.l.b16 %v5119
        %v5216 = vunpack.c.h.b16 %v5119
        %v5217 = vunpack.c.l.b16 %v5120
        %v5218 = vunpack.c.l.b16 %v5121
        %v5219 = vunpack.c.h.b16 %v5121
        %v5220 = vunpack.c.l.b16 %v5122
        %v5221 = vunpack.c.l.b16 %v5123
        %v5222 = vunpack.c.h.b16 %v5123
        %v5223 = vunpack.c.l.b16 %v5124
        %v5224 = vunpack.c.l.b16 %v5125
        %v5225 = vunpack.c.h.b16 %v5125
        %v5226 = vunpack.c.l.b16 %v5126
        %v5227 = vpack.c.b16 %v5182, %v5179
        %v5228 = vpack.c.b16 %v5183, %v5180
        %v5229 = vpack.c.b16 %v5184, %v5181
        %v5230 = vpack.c.b16 %v5188, %v5185
        %v5231 = vpack.c.b16 %v5189, %v5186
        %v5232 = vpack.c.b16 %v5190, %v5187
        %v5233 = vpack.c.b16 %v5194, %v5191
        %v5234 = vpack.c.b16 %v5195, %v5192
        %v5235 = vpack.c.b16 %v5196, %v5193
        %v5236 = vpack.c.b16 %v5200, %v5197
        %v5237 = vpack.c.b16 %v5201, %v5198
        %v5238 = vpack.c.b16 %v5202, %v5199
        %v5239 = vpack.c.b16 %v5206, %v5203
        %v5240 = vpack.c.b16 %v5207, %v5204
        %v5241 = vpack.c.b16 %v5208, %v5205
        %v5242 = vpack.c.b16 %v5212, %v5209
        %v5243 = vpack.c.b16 %v5213, %v5210
        %v5244 = vpack.c.b16 %v5214, %v5211
        %v5245 = vpack.c.b16 %v5218, %v5215
        %v5246 = vpack.c.b16 %v5219, %v5216
        %v5247 = vpack.c.b16 %v5220, %v5217
        %v5248 = vpack.c.b16 %v5224, %v5221
        %v5249 = vpack.c.b16 %v5225, %v5222
        %v5250 = vpack.c.b16 %v5226, %v5223
        %5275 = vmatpush.bf16.msra.mxu0 %v5248
        %5276 = vmatpush.bf16.msra.mxu0 %v5245
        %5277 = vmatpush.bf16.msra.mxu0 %v5242
        %5278 = vmatpush.bf16.msra.mxu0 %v5239
        %5279 = vmatpush.bf16.msra.mxu0 %v5236
        %5280 = vmatpush.bf16.msra.mxu0 %v5233
        %5281 = vmatpush.bf16.msra.mxu0 %v5230
        %5282 = vmatpush.bf16.msra.mxu0 %v5227
        %5283 = vmatmul.bf16.gmra.mxu0 %v5146
        %v5284 = vpop.f32.mrf.mxu0
        %v5285 = vadd.f32 0.0, %v5284
        %v5286 = vpop.f32.mrf.mxu0
        %5287 = vdwg.mxu0
        %5288 = vmatpush.bf16.msra.mxu0 %v5249
        %5289 = vmatpush.bf16.msra.mxu0 %v5246
        %5290 = vmatpush.bf16.msra.mxu0 %v5243
        %5291 = vmatpush.bf16.msra.mxu0 %v5240
        %5292 = vmatpush.bf16.msra.mxu0 %v5237
        %5293 = vmatpush.bf16.msra.mxu0 %v5234
        %5294 = vmatpush.bf16.msra.mxu0 %v5231
        %5295 = vmatpush.bf16.msra.mxu0 %v5228
        %5296 = vmatmul.bf16.gmra.mxu0 %v5146
        %v5297 = vpop.f32.mrf.mxu0
        %v5298 = vadd.f32 0.0, %v5297
        %v5299 = vpop.f32.mrf.mxu0
        %5300 = vdwg.mxu0
        %5301 = vmatpush.bf16.msra.mxu0 %v5250
        %5302 = vmatpush.bf16.msra.mxu0 %v5247
        %5303 = vmatpush.bf16.msra.mxu0 %v5244
        %5304 = vmatpush.bf16.msra.mxu0 %v5241
        %5305 = vmatpush.bf16.msra.mxu0 %v5238
        %5306 = vmatpush.bf16.msra.mxu0 %v5235
        %5307 = vmatpush.bf16.msra.mxu0 %v5232
        %5308 = vmatpush.bf16.msra.mxu0 %v5229
        %5309 = vmatmul.bf16.gmra.mxu0 %v5146
        %v5310 = vpop.f32.mrf.mxu0
        %v5311 = vadd.f32 0.0, %v5310
        %v5312 = vpop.f32.mrf.mxu0
        %5313 = vdwg.mxu0
        %v5314 = vmul.f32 %v5285, 0.17677669
        %v5315 = vpack.c.bf16 %v5314, %v5314
        %v5316 = vpack.c.bf16 %v5298, %v5298
        %v5317 = vpack.c.bf16 %v5311, %v5311
        %v5319 = vsel %vm1799, %v5315, 0
        %v5322 = vsel %vm1799, %v5316, 0
        %5324 = vmatpush.bf16.xpose.msra.mxu0 0
        %5325 = vmatpush.bf16.xpose.msra.mxu0 0
        %5326 = vmatpush.bf16.xpose.msra.mxu0 0
        %5327 = vmatpush.bf16.xpose.msra.mxu0 0
        %5328 = vmatpush.bf16.xpose.msra.mxu0 0
        %5329 = vmatpush.bf16.xpose.msra.mxu0 0
        %5330 = vmatpush.bf16.xpose.msra.mxu0 0
        %5331 = vmatpush.bf16.xpose.msra.mxu0 %v5322
        %5332 = vmatmul.bf16.gmra.mxu0 %v5319
        %v5333 = vpop.f32.mrf.mxu0
        %v5334 = vadd.f32 0.0, %v5333
        %v5335 = vpop.f32.mrf.mxu0
        %5336 = vdwg.mxu0
        %v5338 = vunpack.c.l.b16 %v5315
        %v5339 = vpack.c.b16 %v5338, %v5338
        %5340 = vrot.lane.b32.xlu0 %v5339, 96
        %v5341 = vpop.permute.xlu0 %5340
        %v5343 = vunpack.c.l.b16 %v5316
        %v5344 = vpack.c.b16 %v5343, %v5343
        %5345 = vrot.lane.b32.xlu0 %v5344, 96
        %v5346 = vpop.permute.xlu0 %5345
        %v5348 = vsel %vm1799, %v5341, 0
        %v5351 = vsel %vm1799, %v5346, 0
        %5353 = vmatpush.bf16.xpose.msra.mxu0 0
        %5354 = vmatpush.bf16.xpose.msra.mxu0 0
        %5355 = vmatpush.bf16.xpose.msra.mxu0 0
        %5356 = vmatpush.bf16.xpose.msra.mxu0 0
        %5357 = vmatpush.bf16.xpose.msra.mxu0 0
        %5358 = vmatpush.bf16.xpose.msra.mxu0 0
        %5359 = vmatpush.bf16.xpose.msra.mxu0 0
        %5360 = vmatpush.bf16.xpose.msra.mxu0 %v5351
        %5361 = vmatmul.bf16.gmra.mxu0 %v5348
        %v5362 = vpop.f32.mrf.mxu0
        %v5363 = vadd.f32 0.0, %v5362
        %v5364 = vpop.f32.mrf.mxu0
        %5365 = vdwg.mxu0
        %5366 = vrot.lane.b32.xlu0 %v5339, 64
        %v5367 = vpop.permute.xlu0 %5366
        %5368 = vrot.lane.b32.xlu0 %v5344, 64
        %v5369 = vpop.permute.xlu0 %5368
        %v5371 = vsel %vm1799, %v5367, 0
        %v5374 = vsel %vm1799, %v5369, 0
        %5376 = vmatpush.bf16.xpose.msra.mxu0 0
        %5377 = vmatpush.bf16.xpose.msra.mxu0 0
        %5378 = vmatpush.bf16.xpose.msra.mxu0 0
        %5379 = vmatpush.bf16.xpose.msra.mxu0 0
        %5380 = vmatpush.bf16.xpose.msra.mxu0 0
        %5381 = vmatpush.bf16.xpose.msra.mxu0 0
        %5382 = vmatpush.bf16.xpose.msra.mxu0 0
        %5383 = vmatpush.bf16.xpose.msra.mxu0 %v5374
        %5384 = vmatmul.bf16.gmra.mxu0 %v5371
        %v5385 = vpop.f32.mrf.mxu0
        %v5386 = vadd.f32 0.0, %v5385
        %v5387 = vpop.f32.mrf.mxu0
        %5388 = vdwg.mxu0
        %5389 = vrot.lane.b32.xlu0 %v5339, 32
        %v5390 = vpop.permute.xlu0 %5389
        %5391 = vrot.lane.b32.xlu0 %v5344, 32
        %v5392 = vpop.permute.xlu0 %5391
        %v5394 = vsel %vm1799, %v5390, 0
        %v5397 = vsel %vm1799, %v5392, 0
        %5399 = vmatpush.bf16.xpose.msra.mxu0 0
        %5400 = vmatpush.bf16.xpose.msra.mxu0 0
        %5401 = vmatpush.bf16.xpose.msra.mxu0 0
        %5402 = vmatpush.bf16.xpose.msra.mxu0 0
        %5403 = vmatpush.bf16.xpose.msra.mxu0 0
        %5404 = vmatpush.bf16.xpose.msra.mxu0 0
        %5405 = vmatpush.bf16.xpose.msra.mxu0 0
        %5406 = vmatpush.bf16.xpose.msra.mxu0 %v5397
        %5407 = vmatmul.bf16.gmra.mxu0 %v5394
        %v5408 = vpop.f32.mrf.mxu0
        %v5409 = vadd.f32 0.0, %v5408
        %v5410 = vpop.f32.mrf.mxu0
        %5411 = vdwg.mxu0
        %v5412 = vsel %vm3841, %v5334, -1e+30
        %v5413 = vsel %vm3841, %v5363, -1e+30
        %v5414 = vsel %vm3841, %v5386, -1e+30
        %v5415 = vsel %vm3841, %v5409, -1e+30
        %v5416 = vsel %vm1894, %v5412, -inf
        %5417 = vmax.xlane.f32.xlu0 %v5416
        %v5418 = vpop.xlane.xlu0 %5417
        %v5419 = vsel %vm1894, %v5413, -inf
        %5420 = vmax.xlane.f32.xlu0 %v5419
        %v5421 = vpop.xlane.xlu0 %5420
        %v5422 = vsel %vm1894, %v5414, -inf
        %5423 = vmax.xlane.f32.xlu0 %v5422
        %v5424 = vpop.xlane.xlu0 %5423
        %v5425 = vsel %vm1894, %v5415, -inf
        %5426 = vmax.xlane.f32.xlu0 %v5425
        %v5427 = vpop.xlane.xlu0 %5426
        %v5428 = vsub.f32 %v5412, %v5418
        %v5429 = vsub.f32 %v5413, %v5421
        %v5430 = vsub.f32 %v5414, %v5424
        %v5431 = vsub.f32 %v5415, %v5427
        %v5432 = vmul.f32 %v5428, 1.442695
        %v5433 = vpow.pop %v5432
        %v5434 = vmul.f32 %v5429, 1.442695
        %v5435 = vpow.pop %v5434
        %v5436 = vmul.f32 %v5430, 1.442695
        %v5437 = vpow.pop %v5436
        %v5438 = vmul.f32 %v5431, 1.442695
        %v5439 = vpow.pop %v5438
        %v5440 = vsel %vm1894, %v5433, 0.0
        %5441 = vadd.xlane.f32.xlu0 %v5440
        %v5442 = vpop.xlane.xlu0 %5441
        %v5443 = vsel %vm1894, %v5435, 0.0
        %5444 = vadd.xlane.f32.xlu0 %v5443
        %v5445 = vpop.xlane.xlu0 %5444
        %v5446 = vsel %vm1894, %v5437, 0.0
        %5447 = vadd.xlane.f32.xlu0 %v5446
        %v5448 = vpop.xlane.xlu0 %5447
        %v5449 = vsel %vm1894, %v5439, 0.0
        %5450 = vadd.xlane.f32.xlu0 %v5449
        %v5451 = vpop.xlane.xlu0 %5450
        %v5452 = vrcp.pop %v5442
        %v5453 = vmul.f32 %v5442, %v5452
        %v5454 = vsub.f32 1.0, %v5453
        %v5455 = vmul.f32 %v5452, %v5454
        %v5456 = vadd.f32 %v5452, %v5455
        %vm5457 = vweird.f32 %v5442
        %vm5458 = vweird.f32 %v5452
        %vm5459 = vmor %vm5457, %vm5458
        %v5460 = vsel %vm5459, %v5452, %v5456
        %v5461 = vand.u32 2147483647, %v5442
        %vm5462 = vcmp.eq.f32.partialorder %v5461, 8.507059e+37
        %v5463 = vand.u32 %v5442, 2147483648
        %v5464 = vor.u32 1.1754944e-38, %v5463
        %v5465 = vsel %vm5462, %v5464, %v5460
        %v5466 = vrcp.pop %v5445
        %v5467 = vmul.f32 %v5445, %v5466
        %v5468 = vsub.f32 1.0, %v5467
        %v5469 = vmul.f32 %v5466, %v5468
        %v5470 = vadd.f32 %v5466, %v5469
        %vm5471 = vweird.f32 %v5445
        %vm5472 = vweird.f32 %v5466
        %vm5473 = vmor %vm5471, %vm5472
        %v5474 = vsel %vm5473, %v5466, %v5470
        %v5475 = vand.u32 2147483647, %v5445
        %vm5476 = vcmp.eq.f32.partialorder %v5475, 8.507059e+37
        %v5477 = vand.u32 %v5445, 2147483648
        %v5478 = vor.u32 1.1754944e-38, %v5477
        %v5479 = vsel %vm5476, %v5478, %v5474
        %v5480 = vrcp.pop %v5448
        %v5481 = vmul.f32 %v5448, %v5480
        %v5482 = vsub.f32 1.0, %v5481
        %v5483 = vmul.f32 %v5480, %v5482
        %v5484 = vadd.f32 %v5480, %v5483
        %vm5485 = vweird.f32 %v5448
        %vm5486 = vweird.f32 %v5480
        %vm5487 = vmor %vm5485, %vm5486
        %v5488 = vsel %vm5487, %v5480, %v5484
        %v5489 = vand.u32 2147483647, %v5448
        %vm5490 = vcmp.eq.f32.partialorder %v5489, 8.507059e+37
        %v5491 = vand.u32 %v5448, 2147483648
        %v5492 = vor.u32 1.1754944e-38, %v5491
        %v5493 = vsel %vm5490, %v5492, %v5488
        %v5494 = vrcp.pop %v5451
        %v5495 = vmul.f32 %v5451, %v5494
        %v5496 = vsub.f32 1.0, %v5495
        %v5497 = vmul.f32 %v5494, %v5496
        %v5498 = vadd.f32 %v5494, %v5497
        %vm5499 = vweird.f32 %v5451
        %vm5500 = vweird.f32 %v5494
        %vm5501 = vmor %vm5499, %vm5500
        %v5502 = vsel %vm5501, %v5494, %v5498
        %v5503 = vand.u32 2147483647, %v5451
        %vm5504 = vcmp.eq.f32.partialorder %v5503, 8.507059e+37
        %v5505 = vand.u32 %v5451, 2147483648
        %v5506 = vor.u32 1.1754944e-38, %v5505
        %v5507 = vsel %vm5504, %v5506, %v5502
        %v5508 = vmul.f32 %v5433, %v5465
        %v5509 = vmul.f32 %v5435, %v5479
        %v5510 = vmul.f32 %v5437, %v5493
        %v5511 = vmul.f32 %v5439, %v5507
        %v5512 = vpack.c.bf16 %v5508, %v5508
        %v5513 = vpack.c.bf16 %v5509, %v5509
        %v5514 = vpack.c.bf16 %v5510, %v5510
        %v5515 = vpack.c.bf16 %v5511, %v5511
        %v5517 = vsel %vm1894, %v5512, 0
        %v5520 = vsel %vm1998, %v5317, 0
        %5522 = vmatpush.bf16.msra.mxu0 0
        %5523 = vmatpush.bf16.msra.mxu0 0
        %5524 = vmatpush.bf16.msra.mxu0 0
        %5525 = vmatpush.bf16.msra.mxu0 0
        %5526 = vmatpush.bf16.msra.mxu0 0
        %5527 = vmatpush.bf16.msra.mxu0 0
        %5528 = vmatpush.bf16.msra.mxu0 0
        %5529 = vmatpush.bf16.msra.mxu0 %v5520
        %5530 = vmatmul.bf16.gmra.mxu0 %v5517
        %v5531 = vpop.f32.mrf.mxu0
        %v5532 = vadd.f32 0.0, %v5531
        %v5533 = vpop.f32.mrf.mxu0
        %5534 = vdwg.mxu0
        %v5536 = vunpack.c.l.b16 %v5317
        %v5537 = vpack.c.b16 %v5536, %v5536
        %5538 = vrot.lane.b32.xlu0 %v5537, 96
        %v5539 = vpop.permute.xlu0 %5538
        %v5541 = vsel %vm1894, %v5513, 0
        %v5544 = vsel %vm1998, %v5539, 0
        %5546 = vmatpush.bf16.msra.mxu0 0
        %5547 = vmatpush.bf16.msra.mxu0 0
        %5548 = vmatpush.bf16.msra.mxu0 0
        %5549 = vmatpush.bf16.msra.mxu0 0
        %5550 = vmatpush.bf16.msra.mxu0 0
        %5551 = vmatpush.bf16.msra.mxu0 0
        %5552 = vmatpush.bf16.msra.mxu0 0
        %5553 = vmatpush.bf16.msra.mxu0 %v5544
        %5554 = vmatmul.bf16.gmra.mxu0 %v5541
        %v5555 = vpop.f32.mrf.mxu0
        %v5556 = vadd.f32 0.0, %v5555
        %v5557 = vpop.f32.mrf.mxu0
        %5558 = vdwg.mxu0
        %5559 = vrot.lane.b32.xlu0 %v5537, 64
        %v5560 = vpop.permute.xlu0 %5559
        %v5562 = vsel %vm1894, %v5514, 0
        %v5565 = vsel %vm1998, %v5560, 0
        %5567 = vmatpush.bf16.msra.mxu0 0
        %5568 = vmatpush.bf16.msra.mxu0 0
        %5569 = vmatpush.bf16.msra.mxu0 0
        %5570 = vmatpush.bf16.msra.mxu0 0
        %5571 = vmatpush.bf16.msra.mxu0 0
        %5572 = vmatpush.bf16.msra.mxu0 0
        %5573 = vmatpush.bf16.msra.mxu0 0
        %5574 = vmatpush.bf16.msra.mxu0 %v5565
        %5575 = vmatmul.bf16.gmra.mxu0 %v5562
        %v5576 = vpop.f32.mrf.mxu0
        %v5577 = vadd.f32 0.0, %v5576
        %v5578 = vpop.f32.mrf.mxu0
        %5579 = vdwg.mxu0
        %5580 = vrot.lane.b32.xlu0 %v5537, 32
        %v5581 = vpop.permute.xlu0 %5580
        %v5583 = vsel %vm1894, %v5515, 0
        %v5586 = vsel %vm1998, %v5581, 0
        %5588 = vmatpush.bf16.msra.mxu0 0
        %5589 = vmatpush.bf16.msra.mxu0 0
        %5590 = vmatpush.bf16.msra.mxu0 0
        %5591 = vmatpush.bf16.msra.mxu0 0
        %5592 = vmatpush.bf16.msra.mxu0 0
        %5593 = vmatpush.bf16.msra.mxu0 0
        %5594 = vmatpush.bf16.msra.mxu0 0
        %5595 = vmatpush.bf16.msra.mxu0 %v5586
        %5596 = vmatmul.bf16.gmra.mxu0 %v5583
        %v5597 = vpop.f32.mrf.mxu0
        %v5598 = vadd.f32 0.0, %v5597
        %v5599 = vpop.f32.mrf.mxu0
        %5600 = vdwg.mxu0
        %5602 = vrot.lane.b32.xlu0 %v5556, 32
        %v5603 = vpop.permute.xlu0 %5602
        %5606 = vrot.lane.b32.xlu0 %v5577, 64
        %v5607 = vpop.permute.xlu0 %5606
        %5610 = vrot.lane.b32.xlu0 %v5598, 96
        %v5611 = vpop.permute.xlu0 %5610
        %v5613 = vsel %vm1799, %v5532, %v5603
        %v5614 = vsel %vm2094, %v5613, %v5607
        %v5615 = vsel %vm2096, %v5614, %v5611
        %v5616 = vpack.c.bf16 %v5615, %v5615
        %v5618 = vperm.slane %v5145, 0
        %v5636 = vunpack.c.l.b16 %v5128
        %v5637 = vunpack.c.l.b16 %v5129
        %v5638 = vunpack.c.l.b16 %v5130
        %v5639 = vunpack.c.l.b16 %v5131
        %v5640 = vunpack.c.l.b16 %v5132
        %v5641 = vunpack.c.l.b16 %v5133
        %v5642 = vunpack.c.l.b16 %v5134
        %v5643 = vunpack.c.l.b16 %v5135
        %v5644 = vunpack.c.l.b16 %v5136
        %v5645 = vunpack.c.l.b16 %v5137
        %v5646 = vunpack.c.l.b16 %v5138
        %v5647 = vunpack.c.l.b16 %v5139
        %v5648 = vunpack.c.l.b16 %v5140
        %v5649 = vunpack.c.l.b16 %v5141
        %v5650 = vunpack.c.l.b16 %v5142
        %v5651 = vunpack.c.l.b16 %v5143
        %v5652 = vpack.c.b16 %v5637, %v5636
        %v5653 = vpack.c.b16 %v5639, %v5638
        %v5654 = vpack.c.b16 %v5641, %v5640
        %v5655 = vpack.c.b16 %v5643, %v5642
        %v5656 = vpack.c.b16 %v5645, %v5644
        %v5657 = vpack.c.b16 %v5647, %v5646
        %v5658 = vpack.c.b16 %v5649, %v5648
        %v5659 = vpack.c.b16 %v5651, %v5650
        %5668 = vmatpush.bf16.msra.mxu0 %v5659
        %5669 = vmatpush.bf16.msra.mxu0 %v5658
        %5670 = vmatpush.bf16.msra.mxu0 %v5657
        %5671 = vmatpush.bf16.msra.mxu0 %v5656
        %5672 = vmatpush.bf16.msra.mxu0 %v5655
        %5673 = vmatpush.bf16.msra.mxu0 %v5654
        %5674 = vmatpush.bf16.msra.mxu0 %v5653
        %5675 = vmatpush.bf16.msra.mxu0 %v5652
        %5676 = vmatmul.bf16.gmra.mxu0 %v5616
        %v5677 = vpop.f32.mrf.mxu0
        %v5678 = vadd.f32 %v5618, %v5677
        %v5679 = vpop.f32.mrf.mxu0
        %5680 = vdwg.mxu0
        %v5681 = vadd.f32 %v5061, %v5678
        %s5682 = scalar_lea.vmem [#allocation28], 1
        %v5683 = vld [vmem:[%s5682] sm:$0x1]
        %s5684 = scalar_lea.vmem [#allocation29], 1
        %v5685 = vld [vmem:[%s5684] sm:$0x1]
        %5686 = vadd.xlane.f32.xlu0 %v5681
        %v5687 = vpop.xlane.xlu0 %5686
        %v5688 = vmul.f32 %v5687, %v1551
        %v5689 = vsub.f32 %v5681, %v5688
        %v5690 = vmul.f32 %v5689, %v5689
        %5691 = vadd.xlane.f32.xlu0 %v5690
        %v5692 = vpop.xlane.xlu0 %5691
        %v5693 = vmul.f32 %v5692, %v1551
        %v5694 = vadd.f32 %v5693, 1e-05
        %v5695 = vrsqrt.pop %v5694
        %v5696 = vmul.f32 %v5695, %v5694
        %v5697 = vmul.f32 %v5696, %v5695
        %v5698 = vmul.f32 0.5, %v5697
        %v5699 = vsub.f32 1.5, %v5698
        %v5700 = vmul.f32 %v5695, %v5699
        %vm5701 = vweird.f32 %v5694
        %vm5702 = vweird.f32 %v5695
        %vm5703 = vmor %vm5701, %vm5702
        %v5704 = vsel %vm5703, %v5695, %v5700
        %v5705 = vmul.f32 %v5689, %v5704
        %v5707 = vperm.slane %v5683, 0
        %v5709 = vmul.f32 %v5705, %v5707
        %v5711 = vperm.slane %v5685, 0
        %v5713 = vadd.f32 %v5709, %v5711
        %s5714 = scalar_lea.vmem [#allocation31], 192
        %v5715 = vld [vmem:[%s5714] sm:$0xff]
        %v5716 = vld [vmem:[%s5714 + $0x8] sm:$0xf]
        %v5717 = vld [vmem:[%s5714 + $0xc] sm:$0xff]
        %v5718 = vld [vmem:[%s5714 + $0x14] sm:$0xf]
        %v5719 = vld [vmem:[%s5714 + $0x18] sm:$0xff]
        %v5720 = vld [vmem:[%s5714 + $0x20] sm:$0xf]
        %v5721 = vld [vmem:[%s5714 + $0x24] sm:$0xff]
        %v5722 = vld [vmem:[%s5714 + $0x2c] sm:$0xf]
        %v5723 = vld [vmem:[%s5714 + $0x30] sm:$0xff]
        %v5724 = vld [vmem:[%s5714 + $0x38] sm:$0xf]
        %v5725 = vld [vmem:[%s5714 + $0x3c] sm:$0xff]
        %v5726 = vld [vmem:[%s5714 + $0x44] sm:$0xf]
        %v5727 = vld [vmem:[%s5714 + $0x48] sm:$0xff]
        %v5728 = vld [vmem:[%s5714 + $0x50] sm:$0xf]
        %v5729 = vld [vmem:[%s5714 + $0x54] sm:$0xff]
        %v5730 = vld [vmem:[%s5714 + $0x5c] sm:$0xf]
        %v5731 = vld [vmem:[%s5714 + $0x60] sm:$0xff]
        %v5732 = vld [vmem:[%s5714 + $0x68] sm:$0xf]
        %v5733 = vld [vmem:[%s5714 + $0x6c] sm:$0xff]
        %v5734 = vld [vmem:[%s5714 + $0x74] sm:$0xf]
        %v5735 = vld [vmem:[%s5714 + $0x78] sm:$0xff]
        %v5736 = vld [vmem:[%s5714 + $0x80] sm:$0xf]
        %v5737 = vld [vmem:[%s5714 + $0x84] sm:$0xff]
        %v5738 = vld [vmem:[%s5714 + $0x8c] sm:$0xf]
        %v5739 = vld [vmem:[%s5714 + $0x90] sm:$0xff]
        %v5740 = vld [vmem:[%s5714 + $0x98] sm:$0xf]
        %v5741 = vld [vmem:[%s5714 + $0x9c] sm:$0xff]
        %v5742 = vld [vmem:[%s5714 + $0xa4] sm:$0xf]
        %v5743 = vld [vmem:[%s5714 + $0xa8] sm:$0xff]
        %v5744 = vld [vmem:[%s5714 + $0xb0] sm:$0xf]
        %v5745 = vld [vmem:[%s5714 + $0xb4] sm:$0xff]
        %v5746 = vld [vmem:[%s5714 + $0xbc] sm:$0xf]
        %s5747 = scalar_lea.vmem [#allocation32], 64
        %v5748 = vld [vmem:[%s5747] sm:$0xf]
        %v5749 = vld [vmem:[%s5747 + $0x4] sm:$0xf]
        %v5750 = vld [vmem:[%s5747 + $0x8] sm:$0xf]
        %v5751 = vld [vmem:[%s5747 + $0xc] sm:$0xf]
        %v5752 = vld [vmem:[%s5747 + $0x10] sm:$0xf]
        %v5753 = vld [vmem:[%s5747 + $0x14] sm:$0xf]
        %v5754 = vld [vmem:[%s5747 + $0x18] sm:$0xf]
        %v5755 = vld [vmem:[%s5747 + $0x1c] sm:$0xf]
        %v5756 = vld [vmem:[%s5747 + $0x20] sm:$0xf]
        %v5757 = vld [vmem:[%s5747 + $0x24] sm:$0xf]
        %v5758 = vld [vmem:[%s5747 + $0x28] sm:$0xf]
        %v5759 = vld [vmem:[%s5747 + $0x2c] sm:$0xf]
        %v5760 = vld [vmem:[%s5747 + $0x30] sm:$0xf]
        %v5761 = vld [vmem:[%s5747 + $0x34] sm:$0xf]
        %v5762 = vld [vmem:[%s5747 + $0x38] sm:$0xf]
        %v5763 = vld [vmem:[%s5747 + $0x3c] sm:$0xf]
        %s5764 = scalar_lea.vmem [#allocation34], 1
        %v5765 = vld [vmem:[%s5764] sm:$0x1]
        %v5766 = vpack.c.bf16 %v5713, %v5713
        %v5783 = vunpack.c.l.b16 %v5715
        %v5784 = vunpack.c.l.b16 %v5717
        %v5785 = vunpack.c.l.b16 %v5719
        %v5786 = vunpack.c.l.b16 %v5721
        %v5787 = vunpack.c.l.b16 %v5723
        %v5788 = vunpack.c.l.b16 %v5725
        %v5789 = vunpack.c.l.b16 %v5727
        %v5790 = vunpack.c.l.b16 %v5729
        %v5791 = vunpack.c.l.b16 %v5731
        %v5792 = vunpack.c.l.b16 %v5733
        %v5793 = vunpack.c.l.b16 %v5735
        %v5794 = vunpack.c.l.b16 %v5737
        %v5795 = vunpack.c.l.b16 %v5739
        %v5796 = vunpack.c.l.b16 %v5741
        %v5797 = vunpack.c.l.b16 %v5743
        %v5798 = vunpack.c.l.b16 %v5745
        %v5799 = vpack.c.b16 %v5784, %v5783
        %v5800 = vpack.c.b16 %v5786, %v5785
        %v5801 = vpack.c.b16 %v5788, %v5787
        %v5802 = vpack.c.b16 %v5790, %v5789
        %v5803 = vpack.c.b16 %v5792, %v5791
        %v5804 = vpack.c.b16 %v5794, %v5793
        %v5805 = vpack.c.b16 %v5796, %v5795
        %v5806 = vpack.c.b16 %v5798, %v5797
        %5815 = vmatpush.bf16.msra.mxu0 %v5806
        %5816 = vmatpush.bf16.msra.mxu0 %v5805
        %5817 = vmatpush.bf16.msra.mxu0 %v5804
        %5818 = vmatpush.bf16.msra.mxu0 %v5803
        %5819 = vmatpush.bf16.msra.mxu0 %v5802
        %5820 = vmatpush.bf16.msra.mxu0 %v5801
        %5821 = vmatpush.bf16.msra.mxu0 %v5800
        %5822 = vmatpush.bf16.msra.mxu0 %v5799
        %5823 = vmatmul.bf16.gmra.mxu0 %v5766
        %v5824 = vpop.f32.mrf.mxu0
        %v5825 = vadd.f32 0.0, %v5824
        %v5826 = vpop.f32.mrf.mxu0
        %5827 = vdwg.mxu0
        %v5844 = vunpack.c.h.b16 %v5715
        %v5845 = vunpack.c.l.b16 %v5716
        %v5846 = vunpack.c.h.b16 %v5717
        %v5847 = vunpack.c.l.b16 %v5718
        %v5848 = vunpack.c.h.b16 %v5719
        %v5849 = vunpack.c.l.b16 %v5720
        %v5850 = vunpack.c.h.b16 %v5721
        %v5851 = vunpack.c.l.b16 %v5722
        %v5852 = vunpack.c.h.b16 %v5723
        %v5853 = vunpack.c.l.b16 %v5724
        %v5854 = vunpack.c.h.b16 %v5725
        %v5855 = vunpack.c.l.b16 %v5726
        %v5856 = vunpack.c.h.b16 %v5727
        %v5857 = vunpack.c.l.b16 %v5728
        %v5858 = vunpack.c.h.b16 %v5729
        %v5859 = vunpack.c.l.b16 %v5730
        %v5860 = vunpack.c.h.b16 %v5731
        %v5861 = vunpack.c.l.b16 %v5732
        %v5862 = vunpack.c.h.b16 %v5733
        %v5863 = vunpack.c.l.b16 %v5734
        %v5864 = vunpack.c.h.b16 %v5735
        %v5865 = vunpack.c.l.b16 %v5736
        %v5866 = vunpack.c.h.b16 %v5737
        %v5867 = vunpack.c.l.b16 %v5738
        %v5868 = vunpack.c.h.b16 %v5739
        %v5869 = vunpack.c.l.b16 %v5740
        %v5870 = vunpack.c.h.b16 %v5741
        %v5871 = vunpack.c.l.b16 %v5742
        %v5872 = vunpack.c.h.b16 %v5743
        %v5873 = vunpack.c.l.b16 %v5744
        %v5874 = vunpack.c.h.b16 %v5745
        %v5875 = vunpack.c.l.b16 %v5746
        %v5876 = vpack.c.b16 %v5846, %v5844
        %v5877 = vpack.c.b16 %v5847, %v5845
        %v5878 = vpack.c.b16 %v5850, %v5848
        %v5879 = vpack.c.b16 %v5851, %v5849
        %v5880 = vpack.c.b16 %v5854, %v5852
        %v5881 = vpack.c.b16 %v5855, %v5853
        %v5882 = vpack.c.b16 %v5858, %v5856
        %v5883 = vpack.c.b16 %v5859, %v5857
        %v5884 = vpack.c.b16 %v5862, %v5860
        %v5885 = vpack.c.b16 %v5863, %v5861
        %v5886 = vpack.c.b16 %v5866, %v5864
        %v5887 = vpack.c.b16 %v5867, %v5865
        %v5888 = vpack.c.b16 %v5870, %v5868
        %v5889 = vpack.c.b16 %v5871, %v5869
        %v5890 = vpack.c.b16 %v5874, %v5872
        %v5891 = vpack.c.b16 %v5875, %v5873
        %5908 = vmatpush.bf16.msra.mxu0 %v5890
        %5909 = vmatpush.bf16.msra.mxu0 %v5888
        %5910 = vmatpush.bf16.msra.mxu0 %v5886
        %5911 = vmatpush.bf16.msra.mxu0 %v5884
        %5912 = vmatpush.bf16.msra.mxu0 %v5882
        %5913 = vmatpush.bf16.msra.mxu0 %v5880
        %5914 = vmatpush.bf16.msra.mxu0 %v5878
        %5915 = vmatpush.bf16.msra.mxu0 %v5876
        %5916 = vmatmul.bf16.gmra.mxu0 %v4253
        %v5917 = vpop.f32.mrf.mxu0
        %v5918 = vadd.f32 0.0, %v5917
        %v5919 = vpop.f32.mrf.mxu0
        %5920 = vdwg.mxu0
        %5921 = vmatpush.bf16.msra.mxu0 %v5891
        %5922 = vmatpush.bf16.msra.mxu0 %v5889
        %5923 = vmatpush.bf16.msra.mxu0 %v5887
        %5924 = vmatpush.bf16.msra.mxu0 %v5885
        %5925 = vmatpush.bf16.msra.mxu0 %v5883
        %5926 = vmatpush.bf16.msra.mxu0 %v5881
        %5927 = vmatpush.bf16.msra.mxu0 %v5879
        %5928 = vmatpush.bf16.msra.mxu0 %v5877
        %5929 = vmatmul.bf16.gmra.mxu0 %v4253
        %v5930 = vpop.f32.mrf.mxu0
        %v5931 = vadd.f32 0.0, %v5930
        %v5932 = vpop.f32.mrf.mxu0
        %5933 = vdwg.mxu0
        %v5934 = vmul.f32 %v5825, 0.17677669
        %v5935 = vpack.c.bf16 %v5934, %v5934
        %v5936 = vpack.c.bf16 %v5918, %v5918
        %v5937 = vpack.c.bf16 %v5931, %v5931
        %v5939 = vsel %vm1799, %v5935, 0
        %v5942 = vsel %vm1799, %v5936, 0
        %5944 = vmatpush.bf16.xpose.msra.mxu0 0
        %5945 = vmatpush.bf16.xpose.msra.mxu0 0
        %5946 = vmatpush.bf16.xpose.msra.mxu0 0
        %5947 = vmatpush.bf16.xpose.msra.mxu0 0
        %5948 = vmatpush.bf16.xpose.msra.mxu0 0
        %5949 = vmatpush.bf16.xpose.msra.mxu0 0
        %5950 = vmatpush.bf16.xpose.msra.mxu0 0
        %5951 = vmatpush.bf16.xpose.msra.mxu0 %v5942
        %5952 = vmatmul.bf16.gmra.mxu0 %v5939
        %v5953 = vpop.f32.mrf.mxu0
        %v5954 = vadd.f32 0.0, %v5953
        %v5955 = vpop.f32.mrf.mxu0
        %5956 = vdwg.mxu0
        %v5958 = vunpack.c.l.b16 %v5935
        %v5959 = vpack.c.b16 %v5958, %v5958
        %5960 = vrot.lane.b32.xlu0 %v5959, 96
        %v5961 = vpop.permute.xlu0 %5960
        %v5963 = vunpack.c.l.b16 %v5936
        %v5964 = vpack.c.b16 %v5963, %v5963
        %5965 = vrot.lane.b32.xlu0 %v5964, 96
        %v5966 = vpop.permute.xlu0 %5965
        %v5968 = vsel %vm1799, %v5961, 0
        %v5971 = vsel %vm1799, %v5966, 0
        %5973 = vmatpush.bf16.xpose.msra.mxu0 0
        %5974 = vmatpush.bf16.xpose.msra.mxu0 0
        %5975 = vmatpush.bf16.xpose.msra.mxu0 0
        %5976 = vmatpush.bf16.xpose.msra.mxu0 0
        %5977 = vmatpush.bf16.xpose.msra.mxu0 0
        %5978 = vmatpush.bf16.xpose.msra.mxu0 0
        %5979 = vmatpush.bf16.xpose.msra.mxu0 0
        %5980 = vmatpush.bf16.xpose.msra.mxu0 %v5971
        %5981 = vmatmul.bf16.gmra.mxu0 %v5968
        %v5982 = vpop.f32.mrf.mxu0
        %v5983 = vadd.f32 0.0, %v5982
        %v5984 = vpop.f32.mrf.mxu0
        %5985 = vdwg.mxu0
        %5986 = vrot.lane.b32.xlu0 %v5959, 64
        %v5987 = vpop.permute.xlu0 %5986
        %5988 = vrot.lane.b32.xlu0 %v5964, 64
        %v5989 = vpop.permute.xlu0 %5988
        %v5991 = vsel %vm1799, %v5987, 0
        %v5994 = vsel %vm1799, %v5989, 0
        %5996 = vmatpush.bf16.xpose.msra.mxu0 0
        %5997 = vmatpush.bf16.xpose.msra.mxu0 0
        %5998 = vmatpush.bf16.xpose.msra.mxu0 0
        %5999 = vmatpush.bf16.xpose.msra.mxu0 0
        %6000 = vmatpush.bf16.xpose.msra.mxu0 0
        %6001 = vmatpush.bf16.xpose.msra.mxu0 0
        %6002 = vmatpush.bf16.xpose.msra.mxu0 0
        %6003 = vmatpush.bf16.xpose.msra.mxu0 %v5994
        %6004 = vmatmul.bf16.gmra.mxu0 %v5991
        %v6005 = vpop.f32.mrf.mxu0
        %v6006 = vadd.f32 0.0, %v6005
        %v6007 = vpop.f32.mrf.mxu0
        %6008 = vdwg.mxu0
        %6009 = vrot.lane.b32.xlu0 %v5959, 32
        %v6010 = vpop.permute.xlu0 %6009
        %6011 = vrot.lane.b32.xlu0 %v5964, 32
        %v6012 = vpop.permute.xlu0 %6011
        %v6014 = vsel %vm1799, %v6010, 0
        %v6017 = vsel %vm1799, %v6012, 0
        %6019 = vmatpush.bf16.xpose.msra.mxu0 0
        %6020 = vmatpush.bf16.xpose.msra.mxu0 0
        %6021 = vmatpush.bf16.xpose.msra.mxu0 0
        %6022 = vmatpush.bf16.xpose.msra.mxu0 0
        %6023 = vmatpush.bf16.xpose.msra.mxu0 0
        %6024 = vmatpush.bf16.xpose.msra.mxu0 0
        %6025 = vmatpush.bf16.xpose.msra.mxu0 0
        %6026 = vmatpush.bf16.xpose.msra.mxu0 %v6017
        %6027 = vmatmul.bf16.gmra.mxu0 %v6014
        %v6028 = vpop.f32.mrf.mxu0
        %v6029 = vadd.f32 0.0, %v6028
        %v6030 = vpop.f32.mrf.mxu0
        %6031 = vdwg.mxu0
        %v6032 = vsel %vm1894, %v5954, -inf
        %6033 = vmax.xlane.f32.xlu0 %v6032
        %v6034 = vpop.xlane.xlu0 %6033
        %v6035 = vsel %vm1894, %v5983, -inf
        %6036 = vmax.xlane.f32.xlu0 %v6035
        %v6037 = vpop.xlane.xlu0 %6036
        %v6038 = vsel %vm1894, %v6006, -inf
        %6039 = vmax.xlane.f32.xlu0 %v6038
        %v6040 = vpop.xlane.xlu0 %6039
        %v6041 = vsel %vm1894, %v6029, -inf
        %6042 = vmax.xlane.f32.xlu0 %v6041
        %v6043 = vpop.xlane.xlu0 %6042
        %v6044 = vsub.f32 %v5954, %v6034
        %v6045 = vsub.f32 %v5983, %v6037
        %v6046 = vsub.f32 %v6006, %v6040
        %v6047 = vsub.f32 %v6029, %v6043
        %v6048 = vmul.f32 %v6044, 1.442695
        %v6049 = vpow.pop %v6048
        %v6050 = vmul.f32 %v6045, 1.442695
        %v6051 = vpow.pop %v6050
        %v6052 = vmul.f32 %v6046, 1.442695
        %v6053 = vpow.pop %v6052
        %v6054 = vmul.f32 %v6047, 1.442695
        %v6055 = vpow.pop %v6054
        %v6056 = vsel %vm1894, %v6049, 0.0
        %6057 = vadd.xlane.f32.xlu0 %v6056
        %v6058 = vpop.xlane.xlu0 %6057
        %v6059 = vsel %vm1894, %v6051, 0.0
        %6060 = vadd.xlane.f32.xlu0 %v6059
        %v6061 = vpop.xlane.xlu0 %6060
        %v6062 = vsel %vm1894, %v6053, 0.0
        %6063 = vadd.xlane.f32.xlu0 %v6062
        %v6064 = vpop.xlane.xlu0 %6063
        %v6065 = vsel %vm1894, %v6055, 0.0
        %6066 = vadd.xlane.f32.xlu0 %v6065
        %v6067 = vpop.xlane.xlu0 %6066
        %v6068 = vrcp.pop %v6058
        %v6069 = vmul.f32 %v6058, %v6068
        %v6070 = vsub.f32 1.0, %v6069
        %v6071 = vmul.f32 %v6068, %v6070
        %v6072 = vadd.f32 %v6068, %v6071
        %vm6073 = vweird.f32 %v6058
        %vm6074 = vweird.f32 %v6068
        %vm6075 = vmor %vm6073, %vm6074
        %v6076 = vsel %vm6075, %v6068, %v6072
        %v6077 = vand.u32 2147483647, %v6058
        %vm6078 = vcmp.eq.f32.partialorder %v6077, 8.507059e+37
        %v6079 = vand.u32 %v6058, 2147483648
        %v6080 = vor.u32 1.1754944e-38, %v6079
        %v6081 = vsel %vm6078, %v6080, %v6076
        %v6082 = vrcp.pop %v6061
        %v6083 = vmul.f32 %v6061, %v6082
        %v6084 = vsub.f32 1.0, %v6083
        %v6085 = vmul.f32 %v6082, %v6084
        %v6086 = vadd.f32 %v6082, %v6085
        %vm6087 = vweird.f32 %v6061
        %vm6088 = vweird.f32 %v6082
        %vm6089 = vmor %vm6087, %vm6088
        %v6090 = vsel %vm6089, %v6082, %v6086
        %v6091 = vand.u32 2147483647, %v6061
        %vm6092 = vcmp.eq.f32.partialorder %v6091, 8.507059e+37
        %v6093 = vand.u32 %v6061, 2147483648
        %v6094 = vor.u32 1.1754944e-38, %v6093
        %v6095 = vsel %vm6092, %v6094, %v6090
        %v6096 = vrcp.pop %v6064
        %v6097 = vmul.f32 %v6064, %v6096
        %v6098 = vsub.f32 1.0, %v6097
        %v6099 = vmul.f32 %v6096, %v6098
        %v6100 = vadd.f32 %v6096, %v6099
        %vm6101 = vweird.f32 %v6064
        %vm6102 = vweird.f32 %v6096
        %vm6103 = vmor %vm6101, %vm6102
        %v6104 = vsel %vm6103, %v6096, %v6100
        %v6105 = vand.u32 2147483647, %v6064
        %vm6106 = vcmp.eq.f32.partialorder %v6105, 8.507059e+37
        %v6107 = vand.u32 %v6064, 2147483648
        %v6108 = vor.u32 1.1754944e-38, %v6107
        %v6109 = vsel %vm6106, %v6108, %v6104
        %v6110 = vrcp.pop %v6067
        %v6111 = vmul.f32 %v6067, %v6110
        %v6112 = vsub.f32 1.0, %v6111
        %v6113 = vmul.f32 %v6110, %v6112
        %v6114 = vadd.f32 %v6110, %v6113
        %vm6115 = vweird.f32 %v6067
        %vm6116 = vweird.f32 %v6110
        %vm6117 = vmor %vm6115, %vm6116
        %v6118 = vsel %vm6117, %v6110, %v6114
        %v6119 = vand.u32 2147483647, %v6067
        %vm6120 = vcmp.eq.f32.partialorder %v6119, 8.507059e+37
        %v6121 = vand.u32 %v6067, 2147483648
        %v6122 = vor.u32 1.1754944e-38, %v6121
        %v6123 = vsel %vm6120, %v6122, %v6118
        %v6124 = vmul.f32 %v6049, %v6081
        %v6125 = vmul.f32 %v6051, %v6095
        %v6126 = vmul.f32 %v6053, %v6109
        %v6127 = vmul.f32 %v6055, %v6123
        %v6128 = vpack.c.bf16 %v6124, %v6124
        %v6129 = vpack.c.bf16 %v6125, %v6125
        %v6130 = vpack.c.bf16 %v6126, %v6126
        %v6131 = vpack.c.bf16 %v6127, %v6127
        %v6133 = vsel %vm1894, %v6128, 0
        %v6136 = vsel %vm1998, %v5937, 0
        %6138 = vmatpush.bf16.msra.mxu0 0
        %6139 = vmatpush.bf16.msra.mxu0 0
        %6140 = vmatpush.bf16.msra.mxu0 0
        %6141 = vmatpush.bf16.msra.mxu0 0
        %6142 = vmatpush.bf16.msra.mxu0 0
        %6143 = vmatpush.bf16.msra.mxu0 0
        %6144 = vmatpush.bf16.msra.mxu0 0
        %6145 = vmatpush.bf16.msra.mxu0 %v6136
        %6146 = vmatmul.bf16.gmra.mxu0 %v6133
        %v6147 = vpop.f32.mrf.mxu0
        %v6148 = vadd.f32 0.0, %v6147
        %v6149 = vpop.f32.mrf.mxu0
        %6150 = vdwg.mxu0
        %v6152 = vunpack.c.l.b16 %v5937
        %v6153 = vpack.c.b16 %v6152, %v6152
        %6154 = vrot.lane.b32.xlu0 %v6153, 96
        %v6155 = vpop.permute.xlu0 %6154
        %v6157 = vsel %vm1894, %v6129, 0
        %v6160 = vsel %vm1998, %v6155, 0
        %6162 = vmatpush.bf16.msra.mxu0 0
        %6163 = vmatpush.bf16.msra.mxu0 0
        %6164 = vmatpush.bf16.msra.mxu0 0
        %6165 = vmatpush.bf16.msra.mxu0 0
        %6166 = vmatpush.bf16.msra.mxu0 0
        %6167 = vmatpush.bf16.msra.mxu0 0
        %6168 = vmatpush.bf16.msra.mxu0 0
        %6169 = vmatpush.bf16.msra.mxu0 %v6160
        %6170 = vmatmul.bf16.gmra.mxu0 %v6157
        %v6171 = vpop.f32.mrf.mxu0
        %v6172 = vadd.f32 0.0, %v6171
        %v6173 = vpop.f32.mrf.mxu0
        %6174 = vdwg.mxu0
        %6175 = vrot.lane.b32.xlu0 %v6153, 64
        %v6176 = vpop.permute.xlu0 %6175
        %v6178 = vsel %vm1894, %v6130, 0
        %v6181 = vsel %vm1998, %v6176, 0
        %6183 = vmatpush.bf16.msra.mxu0 0
        %6184 = vmatpush.bf16.msra.mxu0 0
        %6185 = vmatpush.bf16.msra.mxu0 0
        %6186 = vmatpush.bf16.msra.mxu0 0
        %6187 = vmatpush.bf16.msra.mxu0 0
        %6188 = vmatpush.bf16.msra.mxu0 0
        %6189 = vmatpush.bf16.msra.mxu0 0
        %6190 = vmatpush.bf16.msra.mxu0 %v6181
        %6191 = vmatmul.bf16.gmra.mxu0 %v6178
        %v6192 = vpop.f32.mrf.mxu0
        %v6193 = vadd.f32 0.0, %v6192
        %v6194 = vpop.f32.mrf.mxu0
        %6195 = vdwg.mxu0
        %6196 = vrot.lane.b32.xlu0 %v6153, 32
        %v6197 = vpop.permute.xlu0 %6196
        %v6199 = vsel %vm1894, %v6131, 0
        %v6202 = vsel %vm1998, %v6197, 0
        %6204 = vmatpush.bf16.msra.mxu0 0
        %6205 = vmatpush.bf16.msra.mxu0 0
        %6206 = vmatpush.bf16.msra.mxu0 0
        %6207 = vmatpush.bf16.msra.mxu0 0
        %6208 = vmatpush.bf16.msra.mxu0 0
        %6209 = vmatpush.bf16.msra.mxu0 0
        %6210 = vmatpush.bf16.msra.mxu0 0
        %6211 = vmatpush.bf16.msra.mxu0 %v6202
        %6212 = vmatmul.bf16.gmra.mxu0 %v6199
        %v6213 = vpop.f32.mrf.mxu0
        %v6214 = vadd.f32 0.0, %v6213
        %v6215 = vpop.f32.mrf.mxu0
        %6216 = vdwg.mxu0
        %6218 = vrot.lane.b32.xlu0 %v6172, 32
        %v6219 = vpop.permute.xlu0 %6218
        %6222 = vrot.lane.b32.xlu0 %v6193, 64
        %v6223 = vpop.permute.xlu0 %6222
        %6226 = vrot.lane.b32.xlu0 %v6214, 96
        %v6227 = vpop.permute.xlu0 %6226
        %v6229 = vsel %vm1799, %v6148, %v6219
        %v6230 = vsel %vm2094, %v6229, %v6223
        %v6231 = vsel %vm2096, %v6230, %v6227
        %v6232 = vpack.c.bf16 %v6231, %v6231
        %v6234 = vperm.slane %v5765, 0
        %v6252 = vunpack.c.l.b16 %v5748
        %v6253 = vunpack.c.l.b16 %v5749
        %v6254 = vunpack.c.l.b16 %v5750
        %v6255 = vunpack.c.l.b16 %v5751
        %v6256 = vunpack.c.l.b16 %v5752
        %v6257 = vunpack.c.l.b16 %v5753
        %v6258 = vunpack.c.l.b16 %v5754
        %v6259 = vunpack.c.l.b16 %v5755
        %v6260 = vunpack.c.l.b16 %v5756
        %v6261 = vunpack.c.l.b16 %v5757
        %v6262 = vunpack.c.l.b16 %v5758
        %v6263 = vunpack.c.l.b16 %v5759
        %v6264 = vunpack.c.l.b16 %v5760
        %v6265 = vunpack.c.l.b16 %v5761
        %v6266 = vunpack.c.l.b16 %v5762
        %v6267 = vunpack.c.l.b16 %v5763
        %v6268 = vpack.c.b16 %v6253, %v6252
        %v6269 = vpack.c.b16 %v6255, %v6254
        %v6270 = vpack.c.b16 %v6257, %v6256
        %v6271 = vpack.c.b16 %v6259, %v6258
        %v6272 = vpack.c.b16 %v6261, %v6260
        %v6273 = vpack.c.b16 %v6263, %v6262
        %v6274 = vpack.c.b16 %v6265, %v6264
        %v6275 = vpack.c.b16 %v6267, %v6266
        %6284 = vmatpush.bf16.msra.mxu0 %v6275
        %6285 = vmatpush.bf16.msra.mxu0 %v6274
        %6286 = vmatpush.bf16.msra.mxu0 %v6273
        %6287 = vmatpush.bf16.msra.mxu0 %v6272
        %6288 = vmatpush.bf16.msra.mxu0 %v6271
        %6289 = vmatpush.bf16.msra.mxu0 %v6270
        %6290 = vmatpush.bf16.msra.mxu0 %v6269
        %6291 = vmatpush.bf16.msra.mxu0 %v6268
        %6292 = vmatmul.bf16.gmra.mxu0 %v6232
        %v6293 = vpop.f32.mrf.mxu0
        %v6294 = vadd.f32 %v6234, %v6293
        %v6295 = vpop.f32.mrf.mxu0
        %6296 = vdwg.mxu0
        %v6297 = vadd.f32 %v5681, %v6294
        %s6298 = scalar_lea.vmem [#allocation35], 1
        %v6299 = vld [vmem:[%s6298] sm:$0x1]
        %s6300 = scalar_lea.vmem [#allocation37], 1
        %v6301 = vld [vmem:[%s6300] sm:$0x1]
        %6302 = vadd.xlane.f32.xlu0 %v6297
        %v6303 = vpop.xlane.xlu0 %6302
        %v6304 = vmul.f32 %v6303, %v1551
        %v6305 = vsub.f32 %v6297, %v6304
        %v6306 = vmul.f32 %v6305, %v6305
        %6307 = vadd.xlane.f32.xlu0 %v6306
        %v6308 = vpop.xlane.xlu0 %6307
        %v6309 = vmul.f32 %v6308, %v1551
        %v6310 = vadd.f32 %v6309, 1e-05
        %v6311 = vrsqrt.pop %v6310
        %v6312 = vmul.f32 %v6311, %v6310
        %v6313 = vmul.f32 %v6312, %v6311
        %v6314 = vmul.f32 0.5, %v6313
        %v6315 = vsub.f32 1.5, %v6314
        %v6316 = vmul.f32 %v6311, %v6315
        %vm6317 = vweird.f32 %v6310
        %vm6318 = vweird.f32 %v6311
        %vm6319 = vmor %vm6317, %vm6318
        %v6320 = vsel %vm6319, %v6311, %v6316
        %v6321 = vmul.f32 %v6305, %v6320
        %v6323 = vperm.slane %v6299, 0
        %v6325 = vmul.f32 %v6321, %v6323
        %v6327 = vperm.slane %v6301, 0
        %v6329 = vadd.f32 %v6325, %v6327
        %s6330 = scalar_lea.vmem [#allocation38], 128
        %v6331 = vld [vmem:[%s6330] sm:$0xff]
        %v6332 = vld [vmem:[%s6330 + $0x8] sm:$0xff]
        %v6333 = vld [vmem:[%s6330 + $0x10] sm:$0xff]
        %v6334 = vld [vmem:[%s6330 + $0x18] sm:$0xff]
        %v6335 = vld [vmem:[%s6330 + $0x20] sm:$0xff]
        %v6336 = vld [vmem:[%s6330 + $0x28] sm:$0xff]
        %v6337 = vld [vmem:[%s6330 + $0x30] sm:$0xff]
        %v6338 = vld [vmem:[%s6330 + $0x38] sm:$0xff]
        %v6339 = vld [vmem:[%s6330 + $0x40] sm:$0xff]
        %v6340 = vld [vmem:[%s6330 + $0x48] sm:$0xff]
        %v6341 = vld [vmem:[%s6330 + $0x50] sm:$0xff]
        %v6342 = vld [vmem:[%s6330 + $0x58] sm:$0xff]
        %v6343 = vld [vmem:[%s6330 + $0x60] sm:$0xff]
        %v6344 = vld [vmem:[%s6330 + $0x68] sm:$0xff]
        %v6345 = vld [vmem:[%s6330 + $0x70] sm:$0xff]
        %v6346 = vld [vmem:[%s6330 + $0x78] sm:$0xff]
        %s6347 = scalar_lea.vmem %s57, 2
        %v6348 = vld [vmem:[%s6347] sm:$0x3]
        %s6349 = scalar_lea.vmem [#allocation40], 128
        %v6350 = vld [vmem:[%s6349] sm:$0xf]
        %v6351 = vld [vmem:[%s6349 + $0x4] sm:$0xf]
        %v6352 = vld [vmem:[%s6349 + $0x8] sm:$0xf]
        %v6353 = vld [vmem:[%s6349 + $0xc] sm:$0xf]
        %v6354 = vld [vmem:[%s6349 + $0x10] sm:$0xf]
        %v6355 = vld [vmem:[%s6349 + $0x14] sm:$0xf]
        %v6356 = vld [vmem:[%s6349 + $0x18] sm:$0xf]
        %v6357 = vld [vmem:[%s6349 + $0x1c] sm:$0xf]
        %v6358 = vld [vmem:[%s6349 + $0x20] sm:$0xf]
        %v6359 = vld [vmem:[%s6349 + $0x24] sm:$0xf]
        %v6360 = vld [vmem:[%s6349 + $0x28] sm:$0xf]
        %v6361 = vld [vmem:[%s6349 + $0x2c] sm:$0xf]
        %v6362 = vld [vmem:[%s6349 + $0x30] sm:$0xf]
        %v6363 = vld [vmem:[%s6349 + $0x34] sm:$0xf]
        %v6364 = vld [vmem:[%s6349 + $0x38] sm:$0xf]
        %v6365 = vld [vmem:[%s6349 + $0x3c] sm:$0xf]
        %v6366 = vld [vmem:[%s6349 + $0x40] sm:$0xf]
        %v6367 = vld [vmem:[%s6349 + $0x44] sm:$0xf]
        %v6368 = vld [vmem:[%s6349 + $0x48] sm:$0xf]
        %v6369 = vld [vmem:[%s6349 + $0x4c] sm:$0xf]
        %v6370 = vld [vmem:[%s6349 + $0x50] sm:$0xf]
        %v6371 = vld [vmem:[%s6349 + $0x54] sm:$0xf]
        %v6372 = vld [vmem:[%s6349 + $0x58] sm:$0xf]
        %v6373 = vld [vmem:[%s6349 + $0x5c] sm:$0xf]
        %v6374 = vld [vmem:[%s6349 + $0x60] sm:$0xf]
        %v6375 = vld [vmem:[%s6349 + $0x64] sm:$0xf]
        %v6376 = vld [vmem:[%s6349 + $0x68] sm:$0xf]
        %v6377 = vld [vmem:[%s6349 + $0x6c] sm:$0xf]
        %v6378 = vld [vmem:[%s6349 + $0x70] sm:$0xf]
        %v6379 = vld [vmem:[%s6349 + $0x74] sm:$0xf]
        %v6380 = vld [vmem:[%s6349 + $0x78] sm:$0xf]
        %v6381 = vld [vmem:[%s6349 + $0x7c] sm:$0xf]
        %s6382 = scalar_lea.vmem [#allocation41], 1
        %v6383 = vld [vmem:[%s6382] sm:$0x1]
        %v6384 = vpack.c.bf16 %v6329, %v6329
        %v6386 = vperm.slane %v6348, 0
        %v6387 = vperm.slane %v6348, 1
        %v6406 = vunpack.c.l.b16 %v6331
        %v6407 = vunpack.c.h.b16 %v6331
        %v6408 = vunpack.c.l.b16 %v6332
        %v6409 = vunpack.c.h.b16 %v6332
        %v6410 = vunpack.c.l.b16 %v6333
        %v6411 = vunpack.c.h.b16 %v6333
        %v6412 = vunpack.c.l.b16 %v6334
        %v6413 = vunpack.c.h.b16 %v6334
        %v6414 = vunpack.c.l.b16 %v6335
        %v6415 = vunpack.c.h.b16 %v6335
        %v6416 = vunpack.c.l.b16 %v6336
        %v6417 = vunpack.c.h.b16 %v6336
        %v6418 = vunpack.c.l.b16 %v6337
        %v6419 = vunpack.c.h.b16 %v6337
        %v6420 = vunpack.c.l.b16 %v6338
        %v6421 = vunpack.c.h.b16 %v6338
        %v6422 = vunpack.c.l.b16 %v6339
        %v6423 = vunpack.c.h.b16 %v6339
        %v6424 = vunpack.c.l.b16 %v6340
        %v6425 = vunpack.c.h.b16 %v6340
        %v6426 = vunpack.c.l.b16 %v6341
        %v6427 = vunpack.c.h.b16 %v6341
        %v6428 = vunpack.c.l.b16 %v6342
        %v6429 = vunpack.c.h.b16 %v6342
        %v6430 = vunpack.c.l.b16 %v6343
        %v6431 = vunpack.c.h.b16 %v6343
        %v6432 = vunpack.c.l.b16 %v6344
        %v6433 = vunpack.c.h.b16 %v6344
        %v6434 = vunpack.c.l.b16 %v6345
        %v6435 = vunpack.c.h.b16 %v6345
        %v6436 = vunpack.c.l.b16 %v6346
        %v6437 = vunpack.c.h.b16 %v6346
        %v6438 = vpack.c.b16 %v6408, %v6406
        %v6439 = vpack.c.b16 %v6409, %v6407
        %v6440 = vpack.c.b16 %v6412, %v6410
        %v6441 = vpack.c.b16 %v6413, %v6411
        %v6442 = vpack.c.b16 %v6416, %v6414
        %v6443 = vpack.c.b16 %v6417, %v6415
        %v6444 = vpack.c.b16 %v6420, %v6418
        %v6445 = vpack.c.b16 %v6421, %v6419
        %v6446 = vpack.c.b16 %v6424, %v6422
        %v6447 = vpack.c.b16 %v6425, %v6423
        %v6448 = vpack.c.b16 %v6428, %v6426
        %v6449 = vpack.c.b16 %v6429, %v6427
        %v6450 = vpack.c.b16 %v6432, %v6430
        %v6451 = vpack.c.b16 %v6433, %v6431
        %v6452 = vpack.c.b16 %v6436, %v6434
        %v6453 = vpack.c.b16 %v6437, %v6435
        %6470 = vmatpush.bf16.msra.mxu0 %v6452
        %6471 = vmatpush.bf16.msra.mxu0 %v6450
        %6472 = vmatpush.bf16.msra.mxu0 %v6448
        %6473 = vmatpush.bf16.msra.mxu0 %v6446
        %6474 = vmatpush.bf16.msra.mxu0 %v6444
        %6475 = vmatpush.bf16.msra.mxu0 %v6442
        %6476 = vmatpush.bf16.msra.mxu0 %v6440
        %6477 = vmatpush.bf16.msra.mxu0 %v6438
        %6478 = vmatmul.bf16.gmra.mxu0 %v6384
        %v6479 = vpop.f32.mrf.mxu0
        %v6480 = vadd.f32 %v6386, %v6479
        %v6481 = vpop.f32.mrf.mxu0
        %6482 = vdwg.mxu0
        %6483 = vmatpush.bf16.msra.mxu0 %v6453
        %6484 = vmatpush.bf16.msra.mxu0 %v6451
        %6485 = vmatpush.bf16.msra.mxu0 %v6449
        %6486 = vmatpush.bf16.msra.mxu0 %v6447
        %6487 = vmatpush.bf16.msra.mxu0 %v6445
        %6488 = vmatpush.bf16.msra.mxu0 %v6443
        %6489 = vmatpush.bf16.msra.mxu0 %v6441
        %6490 = vmatpush.bf16.msra.mxu0 %v6439
        %6491 = vmatmul.bf16.gmra.mxu0 %v6384
        %v6492 = vpop.f32.mrf.mxu0
        %v6493 = vadd.f32 %v6387, %v6492
        %v6494 = vpop.f32.mrf.mxu0
        %6495 = vdwg.mxu0
        %v6496 = vmul.f32 %v6480, %v6480
        %v6497 = vmul.f32 %v6493, %v6493
        %v6498 = vmul.f32 %v6480, %v6496
        %v6499 = vmul.f32 %v6493, %v6497
        %v6500 = vmul.f32 %v6498, 0.044715
        %v6501 = vmul.f32 %v6499, 0.044715
        %v6502 = vadd.f32 %v6480, %v6500
        %v6503 = vadd.f32 %v6493, %v6501
        %v6504 = vmul.f32 %v6502, 0.7978846
        %v6505 = vmul.f32 %v6503, 0.7978846
        %v6506 = vtanh.pop %v6504
        %v6507 = vtanh.pop %v6505
        %v6508 = vadd.f32 %v6506, 1.0
        %v6509 = vadd.f32 %v6507, 1.0
        %v6510 = vmul.f32 %v6508, 0.5
        %v6511 = vmul.f32 %v6509, 0.5
        %v6512 = vmul.f32 %v6480, %v6510
        %v6513 = vmul.f32 %v6493, %v6511
        %v6514 = vpack.c.bf16 %v6512, %v6512
        %v6515 = vpack.c.bf16 %v6513, %v6513
        %v6517 = vperm.slane %v6383, 0
        %v6551 = vunpack.c.l.b16 %v6350
        %v6552 = vunpack.c.l.b16 %v6351
        %v6553 = vunpack.c.l.b16 %v6352
        %v6554 = vunpack.c.l.b16 %v6353
        %v6555 = vunpack.c.l.b16 %v6354
        %v6556 = vunpack.c.l.b16 %v6355
        %v6557 = vunpack.c.l.b16 %v6356
        %v6558 = vunpack.c.l.b16 %v6357
        %v6559 = vunpack.c.l.b16 %v6358
        %v6560 = vunpack.c.l.b16 %v6359
        %v6561 = vunpack.c.l.b16 %v6360
        %v6562 = vunpack.c.l.b16 %v6361
        %v6563 = vunpack.c.l.b16 %v6362
        %v6564 = vunpack.c.l.b16 %v6363
        %v6565 = vunpack.c.l.b16 %v6364
        %v6566 = vunpack.c.l.b16 %v6365
        %v6567 = vunpack.c.l.b16 %v6366
        %v6568 = vunpack.c.l.b16 %v6367
        %v6569 = vunpack.c.l.b16 %v6368
        %v6570 = vunpack.c.l.b16 %v6369
        %v6571 = vunpack.c.l.b16 %v6370
        %v6572 = vunpack.c.l.b16 %v6371
        %v6573 = vunpack.c.l.b16 %v6372
        %v6574 = vunpack.c.l.b16 %v6373
        %v6575 = vunpack.c.l.b16 %v6374
        %v6576 = vunpack.c.l.b16 %v6375
        %v6577 = vunpack.c.l.b16 %v6376
        %v6578 = vunpack.c.l.b16 %v6377
        %v6579 = vunpack.c.l.b16 %v6378
        %v6580 = vunpack.c.l.b16 %v6379
        %v6581 = vunpack.c.l.b16 %v6380
        %v6582 = vunpack.c.l.b16 %v6381
        %v6583 = vpack.c.b16 %v6552, %v6551
        %v6584 = vpack.c.b16 %v6554, %v6553
        %v6585 = vpack.c.b16 %v6556, %v6555
        %v6586 = vpack.c.b16 %v6558, %v6557
        %v6587 = vpack.c.b16 %v6560, %v6559
        %v6588 = vpack.c.b16 %v6562, %v6561
        %v6589 = vpack.c.b16 %v6564, %v6563
        %v6590 = vpack.c.b16 %v6566, %v6565
        %v6591 = vpack.c.b16 %v6568, %v6567
        %v6592 = vpack.c.b16 %v6570, %v6569
        %v6593 = vpack.c.b16 %v6572, %v6571
        %v6594 = vpack.c.b16 %v6574, %v6573
        %v6595 = vpack.c.b16 %v6576, %v6575
        %v6596 = vpack.c.b16 %v6578, %v6577
        %v6597 = vpack.c.b16 %v6580, %v6579
        %v6598 = vpack.c.b16 %v6582, %v6581
        %6615 = vmatpush.bf16.msra.mxu0 %v6590
        %6616 = vmatpush.bf16.msra.mxu0 %v6589
        %6617 = vmatpush.bf16.msra.mxu0 %v6588
        %6618 = vmatpush.bf16.msra.mxu0 %v6587
        %6619 = vmatpush.bf16.msra.mxu0 %v6586
        %6620 = vmatpush.bf16.msra.mxu0 %v6585
        %6621 = vmatpush.bf16.msra.mxu0 %v6584
        %6622 = vmatpush.bf16.msra.mxu0 %v6583
        %6623 = vmatmul.bf16.gmra.mxu0 %v6514
        %v6624 = vpop.f32.mrf.mxu0
        %v6625 = vadd.f32 %v6517, %v6624
        %v6626 = vpop.f32.mrf.mxu0
        %6627 = vdwg.mxu0
        %6628 = vmatpush.bf16.msra.mxu0 %v6598
        %6629 = vmatpush.bf16.msra.mxu0 %v6597
        %6630 = vmatpush.bf16.msra.mxu0 %v6596
        %6631 = vmatpush.bf16.msra.mxu0 %v6595
        %6632 = vmatpush.bf16.msra.mxu0 %v6594
        %6633 = vmatpush.bf16.msra.mxu0 %v6593
        %6634 = vmatpush.bf16.msra.mxu0 %v6592
        %6635 = vmatpush.bf16.msra.mxu0 %v6591
        %6636 = vmatmul.bf16.gmra.mxu0 %v6515
        %v6637 = vpop.f32.mrf.mxu0
        %v6638 = vadd.f32 %v6625, %v6637
        %v6639 = vpop.f32.mrf.mxu0
        %6640 = vdwg.mxu0
        %v6641 = vadd.f32 %v6297, %v6638
        %v6642 = vld [vmem:[#allocation43] sm:$0x1]
        %v6643 = vld [vmem:[#allocation44] sm:$0x1]
        %6644 = vadd.xlane.f32.xlu0 %v6641
        %v6645 = vpop.xlane.xlu0 %6644
        %v6646 = vmul.f32 %v6645, %v1551
        %v6647 = vsub.f32 %v6641, %v6646
        %v6648 = vmul.f32 %v6647, %v6647
        %6649 = vadd.xlane.f32.xlu0 %v6648
        %v6650 = vpop.xlane.xlu0 %6649
        %v6651 = vmul.f32 %v6650, %v1551
        %v6652 = vadd.f32 %v6651, 1e-05
        %v6653 = vrsqrt.pop %v6652
        %v6654 = vmul.f32 %v6653, %v6652
        %v6655 = vmul.f32 %v6654, %v6653
        %v6656 = vmul.f32 0.5, %v6655
        %v6657 = vsub.f32 1.5, %v6656
        %v6658 = vmul.f32 %v6653, %v6657
        %vm6659 = vweird.f32 %v6652
        %vm6660 = vweird.f32 %v6653
        %vm6661 = vmor %vm6659, %vm6660
        %v6662 = vsel %vm6661, %v6653, %v6658
        %v6663 = vmul.f32 %v6647, %v6662
        %v6665 = vperm.slane %v6642, 0
        %v6667 = vmul.f32 %v6663, %v6665
        %v6669 = vperm.slane %v6643, 0
        %v6671 = vadd.f32 %v6667, %v6669
        %v6672 = vpack.c.bf16 %v6671, %v6671
        %v6673 = vld [vmem:[%s67] sm:$0xf]
        %v6674 = vld [vmem:[%s67 + $0x4] sm:$0xf]
        %v6675 = vld [vmem:[%s67 + $0x8] sm:$0xf]
        %v6676 = vld [vmem:[%s67 + $0xc] sm:$0xf]
        %v6677 = vld [vmem:[%s67 + $0x10] sm:$0xf]
        %v6678 = vld [vmem:[%s67 + $0x14] sm:$0xf]
        %v6679 = vld [vmem:[%s67 + $0x18] sm:$0xf]
        %v6680 = vld [vmem:[%s67 + $0x1c] sm:$0xf]
        %v6681 = vld [vmem:[%s67 + $0x20] sm:$0xf]
        %v6682 = vld [vmem:[%s67 + $0x24] sm:$0xf]
        %v6683 = vld [vmem:[%s67 + $0x28] sm:$0xf]
        %v6684 = vld [vmem:[%s67 + $0x2c] sm:$0xf]
        %v6685 = vld [vmem:[%s67 + $0x30] sm:$0xf]
        %v6686 = vld [vmem:[%s67 + $0x34] sm:$0xf]
        %v6687 = vld [vmem:[%s67 + $0x38] sm:$0xf]
        %v6688 = vld [vmem:[%s67 + $0x3c] sm:$0xf]
        %v6689 = vld [vmem:[%s69] sm:$0x1]
        %v6691 = vperm.slane %v6689, 0
        %v6709 = vunpack.c.l.b16 %v6673
        %v6710 = vunpack.c.l.b16 %v6674
        %v6711 = vunpack.c.l.b16 %v6675
        %v6712 = vunpack.c.l.b16 %v6676
        %v6713 = vunpack.c.l.b16 %v6677
        %v6714 = vunpack.c.l.b16 %v6678
        %v6715 = vunpack.c.l.b16 %v6679
        %v6716 = vunpack.c.l.b16 %v6680
        %v6717 = vunpack.c.l.b16 %v6681
        %v6718 = vunpack.c.l.b16 %v6682
        %v6719 = vunpack.c.l.b16 %v6683
        %v6720 = vunpack.c.l.b16 %v6684
        %v6721 = vunpack.c.l.b16 %v6685
        %v6722 = vunpack.c.l.b16 %v6686
        %v6723 = vunpack.c.l.b16 %v6687
        %v6724 = vunpack.c.l.b16 %v6688
        %v6725 = vpack.c.b16 %v6710, %v6709
        %v6726 = vpack.c.b16 %v6712, %v6711
        %v6727 = vpack.c.b16 %v6714, %v6713
        %v6728 = vpack.c.b16 %v6716, %v6715
        %v6729 = vpack.c.b16 %v6718, %v6717
        %v6730 = vpack.c.b16 %v6720, %v6719
        %v6731 = vpack.c.b16 %v6722, %v6721
        %v6732 = vpack.c.b16 %v6724, %v6723
        %6741 = vmatpush.bf16.msra.mxu0 %v6732
        %6742 = vmatpush.bf16.msra.mxu0 %v6731
        %6743 = vmatpush.bf16.msra.mxu0 %v6730
        %6744 = vmatpush.bf16.msra.mxu0 %v6729
        %6745 = vmatpush.bf16.msra.mxu0 %v6728
        %6746 = vmatpush.bf16.msra.mxu0 %v6727
        %6747 = vmatpush.bf16.msra.mxu0 %v6726
        %6748 = vmatpush.bf16.msra.mxu0 %v6725
        %6749 = vmatmul.bf16.gmra.mxu0 %v6672
        %v6750 = vpop.f32.mrf.mxu0
        %v6751 = vadd.f32 %v6691, %v6750
        %v6752 = vpop.f32.mrf.mxu0
        %6753 = vdwg.mxu0
        %6754 = vst [vmem:[%s1529] sm:$0xff] %v6751
        %s6755 = sand.u32 %s853, 1
        %s6756 = scalar_lea.sflag [#allocation4], %s6755
        %s6757 = sand.u32 %s853, 1
        %s6758 = smul.addr %s6757, 8
        %s6759 = scalar_lea.vmem [#allocation46], %s6758
        // Predicated region
        $region273: #{forward.1} parent=159 // pred_check
          %p6760 = pneg %p863
        $region274: #{forward.1} parent=159 // pred_check_branch
          %6762 = sbr.rel (%p6760) target = $region276
        $region275: #{forward.1} parent=159 // pred_region
          %6764 = vsyncadd %s6756, 0
          %s6765 = smul.addr %s100, 8
          %s6766 = scalar_lea.hbm %s71, %s6765
          %s6768 = sshll.u32 %s6759, 4
          %s6769 = int_to_ptr.vmem [resolvable:$true] %s6768
          %s6770 = sshll.u32 %s6766, 4
          %s6771 = int_to_ptr.hbm [resolvable:$true] %s6770
          %6773 = dma.vmem_to_hbm [thread:$0]  %s6769, 128, %s6771, %s6756
        $region276: #{forward.1} parent=159 // pred_fallthru
          _
      $region160: #{forward.1} parent=5 // pred_fallthru
        _
      %p6774 = scmp.le.s32.totalorder 2, %s95
      // Predicated region
      $region277: #{forward.1} parent=5 // pred_check
        %p6775 = pneg %p6774
      $region278: #{forward.1} parent=5 // pred_check_branch
        %6777 = sbr.rel (%p6775) target = $region280
      $region279: #{forward.1} parent=5 // pred_region
        %s6778 = ssub.s32 %s95, 2
        // Predicated region
        $region281: #{forward.1} parent=279 // pred_check
          %p6779 = pneg %p869
        $region282: #{forward.1} parent=279 // pred_check_branch
          %6781 = sbr.rel (%p6779) target = $region284
        $region283: #{forward.1} parent=279 // pred_region
          %s6782 = sand.u32 %s854, 1
          %s6783 = scalar_lea.sflag [#allocation4], %s6782
          %s6784 = sand.u32 %s854, 1
          %s6785 = smul.addr %s6784, 8
          %s6786 = scalar_lea.vmem [#allocation46], %s6785
          %6788 = dma.done %s6783, 128
        $region284: #{forward.1} parent=279 // pred_fallthru
          _
      $region280: #{forward.1} parent=5 // pred_fallthru
        _
    $region6: #{forward.1} parent=1 // loop_footer
      %s99 = sadd.s32 1, %s95
    $region7: #{forward.1} parent=1 // loop_footer_branch
      %94 = sbr.rel target = $region3
    $region8: #{forward.1} parent=1 // loop_exit
      _
    %6789 = vsyncpa [#allocation3], 1
    %s6790 = scalar_lea.sflag [#allocation3], 1
    %6791 = vsyncpa %s6790, 1
    %6792 = vsyncpa [#allocation6], 1
    %6793 = vsyncpa [#allocation9], 1
    %6794 = vsyncpa [#allocation12], 1
    %6795 = vsyncpa [#allocation15], 1
    %6796 = vsyncpa [#allocation18], 1
    %6797 = vsyncpa [#allocation21], 1
    %6798 = vsyncpa [#allocation24], 1
    %6799 = vsyncpa [#allocation27], 1
    %6800 = vsyncpa [#allocation30], 1
    %6801 = vsyncpa [#allocation33], 1
    %6802 = vsyncpa [#allocation36], 1
    %6803 = vsyncpa [#allocation39], 1
    %6804 = vsyncpa [#allocation42], 1
    %6805 = vsyncpa [#allocation45], 1
    %6806 = vsyncpa [#allocation4], 1
    %s6807 = scalar_lea.sflag [#allocation4], 1
    %6808 = vsyncpa %s6807, 1

</llo_original>
